<compile_context>
chip_gen: v7x
topology: tpu7x:2x2x1
jax: 0.10.0
libtpu: 0.0.40
codegen_flags: <defaults>
</compile_context>

<pallas_src>
import numpy as np
import jax
import jax.numpy as jnp
from jax import lax
from jax.experimental import pallas as pl
from jax.experimental.pallas import tpu as pltpu

# ------------------------- config (small, deterministic) -------------------------
B = 2            # batch
C_IN = 4         # contact_map_in_channels
H = W = 16       # contact-map spatial size
C_OUT = 16       # contact_map_out_channels
K = 3            # contact_map_kernel_size
STRIDE = 1       # contact_map_stride (fused im2col conv assumes stride 1)
RES1_LAYERS = 2  # resnet_block1_layers
RES2_LAYERS = 2  # resnet_block2_layers
D_A = 8          # attention hidden dim (W_s1)
R = 4            # attention heads (W_s2)
EPS = 1e-5       # BatchNorm eps

assert STRIDE == 1, "fused im2col conv assumes stride 1"

NUM_RES = RES1_LAYERS + RES2_LAYERS          # 4 BasicBlocks
NCONV = 1 + 2 * NUM_RES                      # 9 convolutions total
HO = (H - K) // STRIDE + 1                   # 14 (valid conv output height)
WO = (W - K) // STRIDE + 1                   # 14 (sequence length for the attention)
WP = W                                       # frame width (= WO + K - 1)
LE = H * W                                   # 256 per-batch flat conv-output extent (incl. junk rows/cols)
LP = 384                                     # per-batch padded frame length, lane-tile aligned
KC = K * K * C_OUT                           # 144 fused contraction depth

assert LP >= LE + (K - 1) * (WP + 1), "frame guard too small for the tap shifts"

MATMUL_DTYPE = jnp.float32   # flip to jnp.bfloat16 on v6e/v7x for higher MXU throughput (re-check tol)


# --------------------------------- fused kernel -----------------------------------
def _fused_kernel(x_ref, w_ref, sh_ref, ws1t_ref, ws2t_ref, pool_ref, mask_ref,
                  o_ref, frame_ref, slab_ref):
    """Whole DrugVQAProteinEncoder forward, all batches, fully VMEM-resident."""
    f32 = jnp.float32
    C = C_OUT
    mask = mask_ref[...]                                   # (1, B*LE): 1 on valid (ho<HO, wo<WO)

    def conv(src, layer):
        # src: (C, B*LP) zero-padded frames (channels on sublanes, flat spatial on lanes).
        # ONE fused matmul per conv: build the (K*K*C, B*LE) im2col slab from 9*B static
        # lane-shifted slices, then a single (C, KC) @ (KC, B*LE) MXU dot with f32 accumulate.
        for t in range(K * K):
            off = (t // K) * WP + (t % K)
            for b in range(B):
                slab_ref[t * C:(t + 1) * C, b * LE:(b + 1) * LE] = (
                    src[:, b * LP + off:b * LP + off + LE].astype(slab_ref.dtype))
        y = jnp.dot(w_ref[layer], slab_ref[...], preferred_element_type=f32)
        return y + sh_ref[layer]                           # + (C, 1) folded BN/bias shift

    def to_frame(act_m):
        # Write the (junk-masked) activation into the interior of each padded frame: flat
        # position l lands at frame position l + WP + 1 == spatial offset (1, 1).  Masked junk
        # columns land exactly on the frame border and write zeros, keeping the padding intact.
        for b in range(B):
            frame_ref[:, b * LP + WP + 1:b * LP + WP + 1 + LE] = act_m[:, b * LE:(b + 1) * LE]

    # Zero the frames ONCE: border/guard lanes are never written afterwards, so they stay zero
    # for every residual conv (do not reorder/remove without re-checking to_frame()).
    frame_ref[...] = jnp.zeros_like(frame_ref)

    # ---- initial conv (valid) + folded BN + ReLU; slab built straight from the input frames ----
    act = jnp.maximum(conv(x_ref[...], 0), 0.0) * mask     # (C, B*LE)

    # ---- residual BasicBlocks: relu(bn2(conv2(relu(bn1(conv1(x))))) + x) ----
    for blk in range(NUM_RES):
        to_frame(act)
        h = jnp.maximum(conv(frame_ref[...], 1 + 2 * blk), 0.0) * mask
        to_frame(h)
        act = jnp.maximum(conv(frame_ref[...], 2 + 2 * blk) + act, 0.0) * mask

    # ---- mean over H (+ junk-column / batch bookkeeping) as one pooling matmul ----
    seq = jnp.dot(act, pool_ref[...], preferred_element_type=f32)              # (C, B*WO)

    # ---- DrugVQA structured self-attention (B is tiny and static -> unrolled) ----
    outs = []
    for b in range(B):
        seq_b = seq[:, b * WO:(b + 1) * WO]                                    # (C, WO)
        hh = jnp.tanh(jnp.dot(ws1t_ref[...], seq_b, preferred_element_type=f32))   # (D_A, WO)
        e = jnp.dot(ws2t_ref[...], hh, preferred_element_type=f32)             # (R, WO)
        e = e - jnp.max(e, axis=1, keepdims=True)                              # softmax over seq
        p = jnp.exp(e)
        a = p / jnp.sum(p, axis=1, keepdims=True)                              # exact normalize
        wl = jnp.sum(a, axis=0, keepdims=True)                                 # (1, WO)
        # sum_r (A^T @ seq) / R  ==  sum_l (sum_r a[r, l]) * seq[:, l] / R
        outs.append(jnp.sum(seq_b * wl, axis=1, keepdims=True) * (1.0 / R))    # (C, 1)
    o_ref[...] = jnp.concatenate(outs, axis=1).astype(o_ref.dtype)             # (C, B)


# ----------------------------------- wrapper ---------------------------------------
def drugvqa_protein_encoder(x_nchw, params):
    """Full forward. x_nchw: (B, C_IN, H, W) float32 -> (B, C_OUT)."""
    b = x_nchw.shape[0]
    assert b == B
    # Tiny one-time prep: pad channels to C_OUT, flatten spatial, pad to the per-batch frame
    # length, and go channels-first with batch folded onto the flat-spatial (lane) axis.
    x = jnp.pad(x_nchw.astype(jnp.float32), ((0, 0), (0, C_OUT - C_IN), (0, 0), (0, 0)))
    x = jnp.pad(x.reshape(b, C_OUT, H * W), ((0, 0), (0, 0), (0, LP - H * W)))
    x_cf = jnp.transpose(x, (1, 0, 2)).reshape(C_OUT, b * LP)                  # (C, B*LP)

    vmem = pl.BlockSpec(memory_space=pltpu.MemorySpace.VMEM)
    out = pl.pallas_call(
        _fused_kernel,
        out_shape=jax.ShapeDtypeStruct((C_OUT, b), jnp.float32),
        in_specs=[vmem] * 7,                       # whole arrays, single-buffered in VMEM
        out_specs=vmem,
        scratch_shapes=[
            pltpu.VMEM((C_OUT, b * LP), jnp.float32),   # persistent zero-padded frames
            pltpu.VMEM((KC, b * LE), MATMUL_DTYPE),     # im2col slab (one conv at a time)
        ],
    )(x_cf, params["w"], params["shift"], params["ws1_t"], params["ws2_t"],
      params["pool"], params["mask"])
    return out.T                                    # (B, C_OUT)


# ------------------------ parameter folding / packing ------------------------------
def _fold_scale_shift(gamma, beta, mean, var, conv_bias=None):
    """Eval-mode BatchNorm fold: y = conv*scale + shift (conv bias absorbed)."""
    scale = gamma / jnp.sqrt(var + EPS)
    shift = beta - mean * scale
    if conv_bias is not None:
        shift = shift + conv_bias * scale
    return scale, shift


def _conv_taps(w_oihw, scale, cin_pad):
    """(Cout, Cin, K, K) -> (Cout, K*K*cin_pad) with BN scale folded, tap-major then channel."""
    cout, cin, k, _ = w_oihw.shape
    w = jnp.transpose(w_oihw, (0, 2, 3, 1)) * scale[:, None, None, None]     # (Cout, K, K, Cin)
    if cin < cin_pad:
        w = jnp.pad(w, ((0, 0), (0, 0), (0, 0), (0, cin_pad - cin)))
    return w.reshape(cout, k * k * cin_pad)


def _pool_and_mask():
    """Pooling matmul (mean over H, skip junk cols, keep batches separate) + junk-column mask."""
    pool = np.zeros((B * LE, B * WO), np.float32)
    mask = np.zeros((1, B * LE), np.float32)
    for b in range(B):
        for ho in range(HO):
            for wo in range(WO):
                pool[b * LE + ho * WP + wo, b * WO + wo] = 1.0 / HO
                mask[0, b * LE + ho * WP + wo] = 1.0
    return jnp.asarray(pool), jnp.asarray(mask)


def to_pallas_params(raw):
    taps, shifts = [], []
    s, sh = _fold_scale_shift(raw["bn_g"], raw["bn_b"], raw["bn_rm"], raw["bn_rv"], raw["conv_b"])
    taps.append(_conv_taps(raw["conv_w"], s, C_OUT)); shifts.append(sh)
    for blk in raw["res"]:
        s1, sh1 = _fold_scale_shift(blk["g1"], blk["b1"], blk["rm1"], blk["rv1"])
        taps.append(_conv_taps(blk["w1"], s1, C_OUT)); shifts.append(sh1)
        s2, sh2 = _fold_scale_shift(blk["g2"], blk["b2"], blk["rm2"], blk["rv2"])
        taps.append(_conv_taps(blk["w2"], s2, C_OUT)); shifts.append(sh2)
    pool, mask = _pool_and_mask()
    return {
        "w": jnp.stack(taps, axis=0).astype(MATMUL_DTYPE),                    # (NCONV, C, KC)
        "shift": jnp.stack(shifts, axis=0)[:, :, None].astype(jnp.float32),   # (NCONV, C, 1)
        "ws1_t": raw["ws1"].T.astype(jnp.float32),                            # (D_A, C)
        "ws2_t": raw["ws2"].T.astype(jnp.float32),                            # (R, D_A)
        "pool": pool,                                                         # (B*LE, B*WO) f32
        "mask": mask,                                                         # (1, B*LE) f32
    }


# ------------------------ deterministic parameter construction ---------------------
def make_raw_params(key):
    ks = jax.random.split(key, 128)
    it = iter(ks)

    def nrm(shape, scale):
        return (scale * jax.random.normal(next(it), shape)).astype(jnp.float32)

    def stats():
        rm = nrm((C_OUT,), 0.1)
        rv = (1.0 + 0.3 * jnp.abs(jax.random.normal(next(it), (C_OUT,)))).astype(jnp.float32)
        return rm, rv

    raw = {
        "conv_w": nrm((C_OUT, C_IN, K, K), 0.1),
        "conv_b": nrm((C_OUT,), 0.1),
        "bn_g": 1.0 + nrm((C_OUT,), 0.1),
        "bn_b": nrm((C_OUT,), 0.1),
        "res": [],
        "ws1": nrm((C_OUT, D_A), 0.3),
        "ws2": nrm((D_A, R), 0.3),
    }
    raw["bn_rm"], raw["bn_rv"] = stats()
    for _ in range(NUM_RES):
        blk = {
            "w1": nrm((C_OUT, C_OUT, 3, 3), 0.1),
            "g1": 1.0 + nrm((C_OUT,), 0.1),
            "b1": nrm((C_OUT,), 0.1),
            "w2": nrm((C_OUT, C_OUT, 3, 3), 0.1),
            "g2": 1.0 + nrm((C_OUT,), 0.1),
            "b2": nrm((C_OUT,), 0.1),
        }
        blk["rm1"], blk["rv1"] = stats()
        blk["rm2"], blk["rv2"] = stats()
        raw["res"].append(blk)
    return raw


# --------------------------- pure-JAX reference (for checking) ---------------------
def reference(x_nchw, raw):
    def conv(x, w, stride, bias=None):
        y = lax.conv_general_dilated(x, w, (stride, stride), "VALID",
                                     dimension_numbers=("NCHW", "OIHW", "NCHW"))
        if bias is not None:
            y = y + bias[None, :, None, None]
        return y

    def bn(x, g, b, rm, rv):
        s = g / jnp.sqrt(rv + EPS)
        return (x - rm[None, :, None, None]) * s[None, :, None, None] + b[None, :, None, None]

    y = jax.nn.relu(bn(conv(x_nchw, raw["conv_w"], STRIDE, raw["conv_b"]),
                       raw["bn_g"], raw["bn_b"], raw["bn_rm"], raw["bn_rv"]))
    for blk in raw["res"]:
        xp = jnp.pad(y, ((0, 0), (0, 0), (1, 1), (1, 1)))
        h = jax.nn.relu(bn(conv(xp, blk["w1"], 1), blk["g1"], blk["b1"], blk["rm1"], blk["rv1"]))
        hp = jnp.pad(h, ((0, 0), (0, 0), (1, 1), (1, 1)))
        y = jax.nn.relu(bn(conv(hp, blk["w2"], 1), blk["g2"], blk["b2"], blk["rm2"], blk["rv2"]) + y)
    pic_emb = jnp.transpose(jnp.mean(y, axis=2), (0, 2, 1))        # (B, W', C)
    e = jnp.tanh(pic_emb @ raw["ws1"]) @ raw["ws2"]                # (B, L, R)
    a = jax.nn.softmax(e, axis=1)
    m = jnp.einsum("blr,bld->brd", a, pic_emb)
    return jnp.sum(m, axis=1) / R


# --------------------------------------- main ---------------------------------------
if __name__ == "__main__":
    key = jax.random.PRNGKey(0)
    k_x, k_p = jax.random.split(key)
    x = jax.random.normal(k_x, (B, C_IN, H, W), dtype=jnp.float32)

    raw = make_raw_params(k_p)
    params = to_pallas_params(raw)

    out = jax.block_until_ready(jax.jit(drugvqa_protein_encoder)(x, params))
    ref = jax.block_until_ready(reference(x, raw))

    assert out.shape == (B, C_OUT), f"bad output shape {out.shape}"
    # All-f32 with an exact softmax divide -> tight tolerance (was 5e-3 with approx reciprocal).
    if not jnp.allclose(out, ref, rtol=1e-3, atol=1e-3):
        raise AssertionError(f"mismatch vs reference: max abs diff {jnp.max(jnp.abs(out - ref))}")

    print("KERNEL_OK")
</pallas_src>

<mosaic_0001>
module attributes {stable_mosaic.version = 11 : i64} {
  func.func @_fused_kernel(%arg0: memref<16x768xf32, #tpu.memory_space<vmem>>, %arg1: memref<9x16x144xf32, #tpu.memory_space<vmem>>, %arg2: memref<9x16x1xf32, #tpu.memory_space<vmem>>, %arg3: memref<8x16xf32, #tpu.memory_space<vmem>>, %arg4: memref<4x8xf32, #tpu.memory_space<vmem>>, %arg5: memref<512x28xf32, #tpu.memory_space<vmem>>, %arg6: memref<1x512xf32, #tpu.memory_space<vmem>>, %arg7: memref<16x2xf32, #tpu.memory_space<vmem>>, %arg8: memref<16x768xf32, #tpu.memory_space<vmem>>, %arg9: memref<144x512xf32, #tpu.memory_space<vmem>>) attributes {dimension_semantics = [], scalar_prefetch = 0 : i64, scratch_operands = 2 : i64, tpu.core_type = #tpu.core_type<tc>} {
    %c0 = arith.constant 0 : index
    %c0_0 = arith.constant 0 : index
    %0 = vector.load %arg6[%c0, %c0_0] : memref<1x512xf32, #tpu.memory_space<vmem>>, vector<1x512xf32>
    %cst = arith.constant 0.000000e+00 : f32
    %1 = vector.broadcast %cst : f32 to vector<16x768xf32>
    %c0_1 = arith.constant 0 : index
    %c0_2 = arith.constant 0 : index
    %2 = vector.load %arg8[%c0_1, %c0_2] : memref<16x768xf32, #tpu.memory_space<vmem>>, vector<16x768xf32>
    tpu.vector_store %arg8[%c0_1, %c0_2], %1 {strides = array<i32>} : memref<16x768xf32, #tpu.memory_space<vmem>>, vector<16x768xf32>,
    %c0_3 = arith.constant 0 : index
    %c0_4 = arith.constant 0 : index
    %3 = vector.load %arg0[%c0_3, %c0_4] : memref<16x768xf32, #tpu.memory_space<vmem>>, vector<16x768xf32>
    %4 = vector.extract_strided_slice %3 {offsets = [0, 0], sizes = [16, 256], strides = [1, 1]} : vector<16x768xf32> to vector<16x256xf32>
    %c0_5 = arith.constant 0 : index
    %c0_6 = arith.constant 0 : index
    %5 = vector.load %arg9[%c0_5, %c0_6] : memref<144x512xf32, #tpu.memory_space<vmem>>, vector<16x256xf32>
    tpu.vector_store %arg9[%c0_5, %c0_6], %4 {strides = array<i32>} : memref<144x512xf32, #tpu.memory_space<vmem>>, vector<16x256xf32>,
    %6 = vector.extract_strided_slice %3 {offsets = [0, 384], sizes = [16, 256], strides = [1, 1]} : vector<16x768xf32> to vector<16x256xf32>
    %c0_7 = arith.constant 0 : index
    %c256 = arith.constant 256 : index
    %7 = vector.load %arg9[%c0_7, %c256] : memref<144x512xf32, #tpu.memory_space<vmem>>, vector<16x256xf32>
    tpu.vector_store %arg9[%c0_7, %c256], %6 {strides = array<i32>} : memref<144x512xf32, #tpu.memory_space<vmem>>, vector<16x256xf32>,
    %8 = vector.extract_strided_slice %3 {offsets = [0, 1], sizes = [16, 256], strides = [1, 1]} : vector<16x768xf32> to vector<16x256xf32>
    %c16 = arith.constant 16 : index
    %c0_8 = arith.constant 0 : index
    %9 = vector.load %arg9[%c16, %c0_8] : memref<144x512xf32, #tpu.memory_space<vmem>>, vector<16x256xf32>
    tpu.vector_store %arg9[%c16, %c0_8], %8 {strides = array<i32>} : memref<144x512xf32, #tpu.memory_space<vmem>>, vector<16x256xf32>,
    %10 = vector.extract_strided_slice %3 {offsets = [0, 385], sizes = [16, 256], strides = [1, 1]} : vector<16x768xf32> to vector<16x256xf32>
    %c16_9 = arith.constant 16 : index
    %c256_10 = arith.constant 256 : index
    %11 = vector.load %arg9[%c16_9, %c256_10] : memref<144x512xf32, #tpu.memory_space<vmem>>, vector<16x256xf32>
    tpu.vector_store %arg9[%c16_9, %c256_10], %10 {strides = array<i32>} : memref<144x512xf32, #tpu.memory_space<vmem>>, vector<16x256xf32>,
    %12 = vector.extract_strided_slice %3 {offsets = [0, 2], sizes = [16, 256], strides = [1, 1]} : vector<16x768xf32> to vector<16x256xf32>
    %c32 = arith.constant 32 : index
    %c0_11 = arith.constant 0 : index
    %13 = vector.load %arg9[%c32, %c0_11] : memref<144x512xf32, #tpu.memory_space<vmem>>, vector<16x256xf32>
    tpu.vector_store %arg9[%c32, %c0_11], %12 {strides = array<i32>} : memref<144x512xf32, #tpu.memory_space<vmem>>, vector<16x256xf32>,
    %14 = vector.extract_strided_slice %3 {offsets = [0, 386], sizes = [16, 256], strides = [1, 1]} : vector<16x768xf32> to vector<16x256xf32>
    %c32_12 = arith.constant 32 : index
    %c256_13 = arith.constant 256 : index
    %15 = vector.load %arg9[%c32_12, %c256_13] : memref<144x512xf32, #tpu.memory_space<vmem>>, vector<16x256xf32>
    tpu.vector_store %arg9[%c32_12, %c256_13], %14 {strides = array<i32>} : memref<144x512xf32, #tpu.memory_space<vmem>>, vector<16x256xf32>,
    %16 = vector.extract_strided_slice %3 {offsets = [0, 16], sizes = [16, 256], strides = [1, 1]} : vector<16x768xf32> to vector<16x256xf32>
    %c48 = arith.constant 48 : index
    %c0_14 = arith.constant 0 : index
    %17 = vector.load %arg9[%c48, %c0_14] : memref<144x512xf32, #tpu.memory_space<vmem>>, vector<16x256xf32>
    tpu.vector_store %arg9[%c48, %c0_14], %16 {strides = array<i32>} : memref<144x512xf32, #tpu.memory_space<vmem>>, vector<16x256xf32>,
    %18 = vector.extract_strided_slice %3 {offsets = [0, 400], sizes = [16, 256], strides = [1, 1]} : vector<16x768xf32> to vector<16x256xf32>
    %c48_15 = arith.constant 48 : index
    %c256_16 = arith.constant 256 : index
    %19 = vector.load %arg9[%c48_15, %c256_16] : memref<144x512xf32, #tpu.memory_space<vmem>>, vector<16x256xf32>
    tpu.vector_store %arg9[%c48_15, %c256_16], %18 {strides = array<i32>} : memref<144x512xf32, #tpu.memory_space<vmem>>, vector<16x256xf32>,
    %20 = vector.extract_strided_slice %3 {offsets = [0, 17], sizes = [16, 256], strides = [1, 1]} : vector<16x768xf32> to vector<16x256xf32>
    %c64 = arith.constant 64 : index
    %c0_17 = arith.constant 0 : index
    %21 = vector.load %arg9[%c64, %c0_17] : memref<144x512xf32, #tpu.memory_space<vmem>>, vector<16x256xf32>
    tpu.vector_store %arg9[%c64, %c0_17], %20 {strides = array<i32>} : memref<144x512xf32, #tpu.memory_space<vmem>>, vector<16x256xf32>,
    %22 = vector.extract_strided_slice %3 {offsets = [0, 401], sizes = [16, 256], strides = [1, 1]} : vector<16x768xf32> to vector<16x256xf32>
    %c64_18 = arith.constant 64 : index
    %c256_19 = arith.constant 256 : index
    %23 = vector.load %arg9[%c64_18, %c256_19] : memref<144x512xf32, #tpu.memory_space<vmem>>, vector<16x256xf32>
    tpu.vector_store %arg9[%c64_18, %c256_19], %22 {strides = array<i32>} : memref<144x512xf32, #tpu.memory_space<vmem>>, vector<16x256xf32>,
    %24 = vector.extract_strided_slice %3 {offsets = [0, 18], sizes = [16, 256], strides = [1, 1]} : vector<16x768xf32> to vector<16x256xf32>
    %c80 = arith.constant 80 : index
    %c0_20 = arith.constant 0 : index
    %25 = vector.load %arg9[%c80, %c0_20] : memref<144x512xf32, #tpu.memory_space<vmem>>, vector<16x256xf32>
    tpu.vector_store %arg9[%c80, %c0_20], %24 {strides = array<i32>} : memref<144x512xf32, #tpu.memory_space<vmem>>, vector<16x256xf32>,
    %26 = vector.extract_strided_slice %3 {offsets = [0, 402], sizes = [16, 256], strides = [1, 1]} : vector<16x768xf32> to vector<16x256xf32>
    %c80_21 = arith.constant 80 : index
    %c256_22 = arith.constant 256 : index
    %27 = vector.load %arg9[%c80_21, %c256_22] : memref<144x512xf32, #tpu.memory_space<vmem>>, vector<16x256xf32>
    tpu.vector_store %arg9[%c80_21, %c256_22], %26 {strides = array<i32>} : memref<144x512xf32, #tpu.memory_space<vmem>>, vector<16x256xf32>,
    %28 = vector.extract_strided_slice %3 {offsets = [0, 32], sizes = [16, 256], strides = [1, 1]} : vector<16x768xf32> to vector<16x256xf32>
    %c96 = arith.constant 96 : index
    %c0_23 = arith.constant 0 : index
    %29 = vector.load %arg9[%c96, %c0_23] : memref<144x512xf32, #tpu.memory_space<vmem>>, vector<16x256xf32>
    tpu.vector_store %arg9[%c96, %c0_23], %28 {strides = array<i32>} : memref<144x512xf32, #tpu.memory_space<vmem>>, vector<16x256xf32>,
    %30 = vector.extract_strided_slice %3 {offsets = [0, 416], sizes = [16, 256], strides = [1, 1]} : vector<16x768xf32> to vector<16x256xf32>
    %c96_24 = arith.constant 96 : index
    %c256_25 = arith.constant 256 : index
    %31 = vector.load %arg9[%c96_24, %c256_25] : memref<144x512xf32, #tpu.memory_space<vmem>>, vector<16x256xf32>
    tpu.vector_store %arg9[%c96_24, %c256_25], %30 {strides = array<i32>} : memref<144x512xf32, #tpu.memory_space<vmem>>, vector<16x256xf32>,
    %32 = vector.extract_strided_slice %3 {offsets = [0, 33], sizes = [16, 256], strides = [1, 1]} : vector<16x768xf32> to vector<16x256xf32>
    %c112 = arith.constant 112 : index
    %c0_26 = arith.constant 0 : index
    %33 = vector.load %arg9[%c112, %c0_26] : memref<144x512xf32, #tpu.memory_space<vmem>>, vector<16x256xf32>
    tpu.vector_store %arg9[%c112, %c0_26], %32 {strides = array<i32>} : memref<144x512xf32, #tpu.memory_space<vmem>>, vector<16x256xf32>,
    %34 = vector.extract_strided_slice %3 {offsets = [0, 417], sizes = [16, 256], strides = [1, 1]} : vector<16x768xf32> to vector<16x256xf32>
    %c112_27 = arith.constant 112 : index
    %c256_28 = arith.constant 256 : index
    %35 = vector.load %arg9[%c112_27, %c256_28] : memref<144x512xf32, #tpu.memory_space<vmem>>, vector<16x256xf32>
    tpu.vector_store %arg9[%c112_27, %c256_28], %34 {strides = array<i32>} : memref<144x512xf32, #tpu.memory_space<vmem>>, vector<16x256xf32>,
    %36 = vector.extract_strided_slice %3 {offsets = [0, 34], sizes = [16, 256], strides = [1, 1]} : vector<16x768xf32> to vector<16x256xf32>
    %c128 = arith.constant 128 : index
    %c0_29 = arith.constant 0 : index
    %37 = vector.load %arg9[%c128, %c0_29] : memref<144x512xf32, #tpu.memory_space<vmem>>, vector<16x256xf32>
    tpu.vector_store %arg9[%c128, %c0_29], %36 {strides = array<i32>} : memref<144x512xf32, #tpu.memory_space<vmem>>, vector<16x256xf32>,
    %38 = vector.extract_strided_slice %3 {offsets = [0, 418], sizes = [16, 256], strides = [1, 1]} : vector<16x768xf32> to vector<16x256xf32>
    %c128_30 = arith.constant 128 : index
    %c256_31 = arith.constant 256 : index
    %39 = vector.load %arg9[%c128_30, %c256_31] : memref<144x512xf32, #tpu.memory_space<vmem>>, vector<16x256xf32>
    tpu.vector_store %arg9[%c128_30, %c256_31], %38 {strides = array<i32>} : memref<144x512xf32, #tpu.memory_space<vmem>>, vector<16x256xf32>,
    %c0_32 = arith.constant 0 : index
    %c0_33 = arith.constant 0 : index
    %c0_34 = arith.constant 0 : index
    %40 = vector.load %arg1[%c0_32, %c0_33, %c0_34] : memref<9x16x144xf32, #tpu.memory_space<vmem>>, vector<1x16x144xf32>
    %41 = vector.shape_cast %40 : vector<1x16x144xf32> to vector<16x144xf32>
    %c0_35 = arith.constant 0 : index
    %c0_36 = arith.constant 0 : index
    %42 = vector.load %arg9[%c0_35, %c0_36] : memref<144x512xf32, #tpu.memory_space<vmem>>, vector<144x512xf32>
    %cst_37 = arith.constant dense<0.000000e+00> : vector<16x512xf32>
    %43 = tpu.matmul %41, %42, %cst_37 {dimension_numbers = #tpu.dot_dimension_numbers<[1], [0], [0], [1], [0, 0, 1, 1], [], []>} : vector<16x144xf32>, vector<144x512xf32>, vector<16x512xf32> -> vector<16x512xf32>
    %c0_38 = arith.constant 0 : index
    %c0_39 = arith.constant 0 : index
    %c0_40 = arith.constant 0 : index
    %44 = vector.load %arg2[%c0_38, %c0_39, %c0_40] : memref<9x16x1xf32, #tpu.memory_space<vmem>>, vector<1x16x1xf32>
    %45 = vector.shape_cast %44 : vector<1x16x1xf32> to vector<16x1xf32>
    %46 = vector.broadcast %45 : vector<16x1xf32> to vector<16x512xf32>
    %47 = arith.addf %43, %46 : vector<16x512xf32>
    %cst_41 = arith.constant 0.000000e+00 : f32
    %48 = vector.broadcast %cst_41 : f32 to vector<16x512xf32>
    %49 = arith.maximumf %47, %48 : vector<16x512xf32>
    %50 = vector.broadcast %0 : vector<1x512xf32> to vector<16x512xf32>
    %51 = arith.mulf %49, %50 : vector<16x512xf32>
    %52 = vector.extract_strided_slice %51 {offsets = [0, 0], sizes = [16, 256], strides = [1, 1]} : vector<16x512xf32> to vector<16x256xf32>
    %c0_42 = arith.constant 0 : index
    %c17 = arith.constant 17 : index
    %53 = vector.load %arg8[%c0_42, %c17] : memref<16x768xf32, #tpu.memory_space<vmem>>, vector<16x256xf32>
    tpu.vector_store %arg8[%c0_42, %c17], %52 {strides = array<i32>} : memref<16x768xf32, #tpu.memory_space<vmem>>, vector<16x256xf32>,
    %54 = vector.extract_strided_slice %51 {offsets = [0, 256], sizes = [16, 256], strides = [1, 1]} : vector<16x512xf32> to vector<16x256xf32>
    %c0_43 = arith.constant 0 : index
    %c401 = arith.constant 401 : index
    %55 = vector.load %arg8[%c0_43, %c401] : memref<16x768xf32, #tpu.memory_space<vmem>>, vector<16x256xf32>
    tpu.vector_store %arg8[%c0_43, %c401], %54 {strides = array<i32>} : memref<16x768xf32, #tpu.memory_space<vmem>>, vector<16x256xf32>,
    %c0_44 = arith.constant 0 : index
    %c0_45 = arith.constant 0 : index
    %56 = vector.load %arg8[%c0_44, %c0_45] : memref<16x768xf32, #tpu.memory_space<vmem>>, vector<16x768xf32>
    %57 = vector.extract_strided_slice %56 {offsets = [0, 0], sizes = [16, 256], strides = [1, 1]} : vector<16x768xf32> to vector<16x256xf32>
    %c0_46 = arith.constant 0 : index
    %c0_47 = arith.constant 0 : index
    %58 = vector.load %arg9[%c0_46, %c0_47] : memref<144x512xf32, #tpu.memory_space<vmem>>, vector<16x256xf32>
    tpu.vector_store %arg9[%c0_46, %c0_47], %57 {strides = array<i32>} : memref<144x512xf32, #tpu.memory_space<vmem>>, vector<16x256xf32>,
    %59 = vector.extract_strided_slice %56 {offsets = [0, 384], sizes = [16, 256], strides = [1, 1]} : vector<16x768xf32> to vector<16x256xf32>
    %c0_48 = arith.constant 0 : index
    %c256_49 = arith.constant 256 : index
    %60 = vector.load %arg9[%c0_48, %c256_49] : memref<144x512xf32, #tpu.memory_space<vmem>>, vector<16x256xf32>
    tpu.vector_store %arg9[%c0_48, %c256_49], %59 {strides = array<i32>} : memref<144x512xf32, #tpu.memory_space<vmem>>, vector<16x256xf32>,
    %61 = vector.extract_strided_slice %56 {offsets = [0, 1], sizes = [16, 256], strides = [1, 1]} : vector<16x768xf32> to vector<16x256xf32>
    %c16_50 = arith.constant 16 : index
    %c0_51 = arith.constant 0 : index
    %62 = vector.load %arg9[%c16_50, %c0_51] : memref<144x512xf32, #tpu.memory_space<vmem>>, vector<16x256xf32>
    tpu.vector_store %arg9[%c16_50, %c0_51], %61 {strides = array<i32>} : memref<144x512xf32, #tpu.memory_space<vmem>>, vector<16x256xf32>,
    %63 = vector.extract_strided_slice %56 {offsets = [0, 385], sizes = [16, 256], strides = [1, 1]} : vector<16x768xf32> to vector<16x256xf32>
    %c16_52 = arith.constant 16 : index
    %c256_53 = arith.constant 256 : index
    %64 = vector.load %arg9[%c16_52, %c256_53] : memref<144x512xf32, #tpu.memory_space<vmem>>, vector<16x256xf32>
    tpu.vector_store %arg9[%c16_52, %c256_53], %63 {strides = array<i32>} : memref<144x512xf32, #tpu.memory_space<vmem>>, vector<16x256xf32>,
    %65 = vector.extract_strided_slice %56 {offsets = [0, 2], sizes = [16, 256], strides = [1, 1]} : vector<16x768xf32> to vector<16x256xf32>
    %c32_54 = arith.constant 32 : index
    %c0_55 = arith.constant 0 : index
    %66 = vector.load %arg9[%c32_54, %c0_55] : memref<144x512xf32, #tpu.memory_space<vmem>>, vector<16x256xf32>
    tpu.vector_store %arg9[%c32_54, %c0_55], %65 {strides = array<i32>} : memref<144x512xf32, #tpu.memory_space<vmem>>, vector<16x256xf32>,
    %67 = vector.extract_strided_slice %56 {offsets = [0, 386], sizes = [16, 256], strides = [1, 1]} : vector<16x768xf32> to vector<16x256xf32>
    %c32_56 = arith.constant 32 : index
    %c256_57 = arith.constant 256 : index
    %68 = vector.load %arg9[%c32_56, %c256_57] : memref<144x512xf32, #tpu.memory_space<vmem>>, vector<16x256xf32>
    tpu.vector_store %arg9[%c32_56, %c256_57], %67 {strides = array<i32>} : memref<144x512xf32, #tpu.memory_space<vmem>>, vector<16x256xf32>,
    %69 = vector.extract_strided_slice %56 {offsets = [0, 16], sizes = [16, 256], strides = [1, 1]} : vector<16x768xf32> to vector<16x256xf32>
    %c48_58 = arith.constant 48 : index
    %c0_59 = arith.constant 0 : index
    %70 = vector.load %arg9[%c48_58, %c0_59] : memref<144x512xf32, #tpu.memory_space<vmem>>, vector<16x256xf32>
    tpu.vector_store %arg9[%c48_58, %c0_59], %69 {strides = array<i32>} : memref<144x512xf32, #tpu.memory_space<vmem>>, vector<16x256xf32>,
    %71 = vector.extract_strided_slice %56 {offsets = [0, 400], sizes = [16, 256], strides = [1, 1]} : vector<16x768xf32> to vector<16x256xf32>
    %c48_60 = arith.constant 48 : index
    %c256_61 = arith.constant 256 : index
    %72 = vector.load %arg9[%c48_60, %c256_61] : memref<144x512xf32, #tpu.memory_space<vmem>>, vector<16x256xf32>
    tpu.vector_store %arg9[%c48_60, %c256_61], %71 {strides = array<i32>} : memref<144x512xf32, #tpu.memory_space<vmem>>, vector<16x256xf32>,
    %73 = vector.extract_strided_slice %56 {offsets = [0, 17], sizes = [16, 256], strides = [1, 1]} : vector<16x768xf32> to vector<16x256xf32>
    %c64_62 = arith.constant 64 : index
    %c0_63 = arith.constant 0 : index
    %74 = vector.load %arg9[%c64_62, %c0_63] : memref<144x512xf32, #tpu.memory_space<vmem>>, vector<16x256xf32>
    tpu.vector_store %arg9[%c64_62, %c0_63], %73 {strides = array<i32>} : memref<144x512xf32, #tpu.memory_space<vmem>>, vector<16x256xf32>,
    %75 = vector.extract_strided_slice %56 {offsets = [0, 401], sizes = [16, 256], strides = [1, 1]} : vector<16x768xf32> to vector<16x256xf32>
    %c64_64 = arith.constant 64 : index
    %c256_65 = arith.constant 256 : index
    %76 = vector.load %arg9[%c64_64, %c256_65] : memref<144x512xf32, #tpu.memory_space<vmem>>, vector<16x256xf32>
    tpu.vector_store %arg9[%c64_64, %c256_65], %75 {strides = array<i32>} : memref<144x512xf32, #tpu.memory_space<vmem>>, vector<16x256xf32>,
    %77 = vector.extract_strided_slice %56 {offsets = [0, 18], sizes = [16, 256], strides = [1, 1]} : vector<16x768xf32> to vector<16x256xf32>
    %c80_66 = arith.constant 80 : index
    %c0_67 = arith.constant 0 : index
    %78 = vector.load %arg9[%c80_66, %c0_67] : memref<144x512xf32, #tpu.memory_space<vmem>>, vector<16x256xf32>
    tpu.vector_store %arg9[%c80_66, %c0_67], %77 {strides = array<i32>} : memref<144x512xf32, #tpu.memory_space<vmem>>, vector<16x256xf32>,
    %79 = vector.extract_strided_slice %56 {offsets = [0, 402], sizes = [16, 256], strides = [1, 1]} : vector<16x768xf32> to vector<16x256xf32>
    %c80_68 = arith.constant 80 : index
    %c256_69 = arith.constant 256 : index
    %80 = vector.load %arg9[%c80_68, %c256_69] : memref<144x512xf32, #tpu.memory_space<vmem>>, vector<16x256xf32>
    tpu.vector_store %arg9[%c80_68, %c256_69], %79 {strides = array<i32>} : memref<144x512xf32, #tpu.memory_space<vmem>>, vector<16x256xf32>,
    %81 = vector.extract_strided_slice %56 {offsets = [0, 32], sizes = [16, 256], strides = [1, 1]} : vector<16x768xf32> to vector<16x256xf32>
    %c96_70 = arith.constant 96 : index
    %c0_71 = arith.constant 0 : index
    %82 = vector.load %arg9[%c96_70, %c0_71] : memref<144x512xf32, #tpu.memory_space<vmem>>, vector<16x256xf32>
    tpu.vector_store %arg9[%c96_70, %c0_71], %81 {strides = array<i32>} : memref<144x512xf32, #tpu.memory_space<vmem>>, vector<16x256xf32>,
    %83 = vector.extract_strided_slice %56 {offsets = [0, 416], sizes = [16, 256], strides = [1, 1]} : vector<16x768xf32> to vector<16x256xf32>
    %c96_72 = arith.constant 96 : index
    %c256_73 = arith.constant 256 : index
    %84 = vector.load %arg9[%c96_72, %c256_73] : memref<144x512xf32, #tpu.memory_space<vmem>>, vector<16x256xf32>
    tpu.vector_store %arg9[%c96_72, %c256_73], %83 {strides = array<i32>} : memref<144x512xf32, #tpu.memory_space<vmem>>, vector<16x256xf32>,
    %85 = vector.extract_strided_slice %56 {offsets = [0, 33], sizes = [16, 256], strides = [1, 1]} : vector<16x768xf32> to vector<16x256xf32>
    %c112_74 = arith.constant 112 : index
    %c0_75 = arith.constant 0 : index
    %86 = vector.load %arg9[%c112_74, %c0_75] : memref<144x512xf32, #tpu.memory_space<vmem>>, vector<16x256xf32>
    tpu.vector_store %arg9[%c112_74, %c0_75], %85 {strides = array<i32>} : memref<144x512xf32, #tpu.memory_space<vmem>>, vector<16x256xf32>,
    %87 = vector.extract_strided_slice %56 {offsets = [0, 417], sizes = [16, 256], strides = [1, 1]} : vector<16x768xf32> to vector<16x256xf32>
    %c112_76 = arith.constant 112 : index
    %c256_77 = arith.constant 256 : index
    %88 = vector.load %arg9[%c112_76, %c256_77] : memref<144x512xf32, #tpu.memory_space<vmem>>, vector<16x256xf32>
    tpu.vector_store %arg9[%c112_76, %c256_77], %87 {strides = array<i32>} : memref<144x512xf32, #tpu.memory_space<vmem>>, vector<16x256xf32>,
    %89 = vector.extract_strided_slice %56 {offsets = [0, 34], sizes = [16, 256], strides = [1, 1]} : vector<16x768xf32> to vector<16x256xf32>
    %c128_78 = arith.constant 128 : index
    %c0_79 = arith.constant 0 : index
    %90 = vector.load %arg9[%c128_78, %c0_79] : memref<144x512xf32, #tpu.memory_space<vmem>>, vector<16x256xf32>
    tpu.vector_store %arg9[%c128_78, %c0_79], %89 {strides = array<i32>} : memref<144x512xf32, #tpu.memory_space<vmem>>, vector<16x256xf32>,
    %91 = vector.extract_strided_slice %56 {offsets = [0, 418], sizes = [16, 256], strides = [1, 1]} : vector<16x768xf32> to vector<16x256xf32>
    %c128_80 = arith.constant 128 : index
    %c256_81 = arith.constant 256 : index
    %92 = vector.load %arg9[%c128_80, %c256_81] : memref<144x512xf32, #tpu.memory_space<vmem>>, vector<16x256xf32>
    tpu.vector_store %arg9[%c128_80, %c256_81], %91 {strides = array<i32>} : memref<144x512xf32, #tpu.memory_space<vmem>>, vector<16x256xf32>,
    %c1 = arith.constant 1 : index
    %c0_82 = arith.constant 0 : index
    %c0_83 = arith.constant 0 : index
    %93 = vector.load %arg1[%c1, %c0_82, %c0_83] : memref<9x16x144xf32, #tpu.memory_space<vmem>>, vector<1x16x144xf32>
    %94 = vector.shape_cast %93 : vector<1x16x144xf32> to vector<16x144xf32>
    %c0_84 = arith.constant 0 : index
    %c0_85 = arith.constant 0 : index
    %95 = vector.load %arg9[%c0_84, %c0_85] : memref<144x512xf32, #tpu.memory_space<vmem>>, vector<144x512xf32>
    %cst_86 = arith.constant dense<0.000000e+00> : vector<16x512xf32>
    %96 = tpu.matmul %94, %95, %cst_86 {dimension_numbers = #tpu.dot_dimension_numbers<[1], [0], [0], [1], [0, 0, 1, 1], [], []>} : vector<16x144xf32>, vector<144x512xf32>, vector<16x512xf32> -> vector<16x512xf32>
    %c1_87 = arith.constant 1 : index
    %c0_88 = arith.constant 0 : index
    %c0_89 = arith.constant 0 : index
    %97 = vector.load %arg2[%c1_87, %c0_88, %c0_89] : memref<9x16x1xf32, #tpu.memory_space<vmem>>, vector<1x16x1xf32>
    %98 = vector.shape_cast %97 : vector<1x16x1xf32> to vector<16x1xf32>
    %99 = vector.broadcast %98 : vector<16x1xf32> to vector<16x512xf32>
    %100 = arith.addf %96, %99 : vector<16x512xf32>
    %cst_90 = arith.constant 0.000000e+00 : f32
    %101 = vector.broadcast %cst_90 : f32 to vector<16x512xf32>
    %102 = arith.maximumf %100, %101 : vector<16x512xf32>
    %103 = vector.broadcast %0 : vector<1x512xf32> to vector<16x512xf32>
    %104 = arith.mulf %102, %103 : vector<16x512xf32>
    %105 = vector.extract_strided_slice %104 {offsets = [0, 0], sizes = [16, 256], strides = [1, 1]} : vector<16x512xf32> to vector<16x256xf32>
    %c0_91 = arith.constant 0 : index
    %c17_92 = arith.constant 17 : index
    %106 = vector.load %arg8[%c0_91, %c17_92] : memref<16x768xf32, #tpu.memory_space<vmem>>, vector<16x256xf32>
    tpu.vector_store %arg8[%c0_91, %c17_92], %105 {strides = array<i32>} : memref<16x768xf32, #tpu.memory_space<vmem>>, vector<16x256xf32>,
    %107 = vector.extract_strided_slice %104 {offsets = [0, 256], sizes = [16, 256], strides = [1, 1]} : vector<16x512xf32> to vector<16x256xf32>
    %c0_93 = arith.constant 0 : index
    %c401_94 = arith.constant 401 : index
    %108 = vector.load %arg8[%c0_93, %c401_94] : memref<16x768xf32, #tpu.memory_space<vmem>>, vector<16x256xf32>
    tpu.vector_store %arg8[%c0_93, %c401_94], %107 {strides = array<i32>} : memref<16x768xf32, #tpu.memory_space<vmem>>, vector<16x256xf32>,
    %c0_95 = arith.constant 0 : index
    %c0_96 = arith.constant 0 : index
    %109 = vector.load %arg8[%c0_95, %c0_96] : memref<16x768xf32, #tpu.memory_space<vmem>>, vector<16x768xf32>
    %110 = vector.extract_strided_slice %109 {offsets = [0, 0], sizes = [16, 256], strides = [1, 1]} : vector<16x768xf32> to vector<16x256xf32>
    %c0_97 = arith.constant 0 : index
    %c0_98 = arith.constant 0 : index
    %111 = vector.load %arg9[%c0_97, %c0_98] : memref<144x512xf32, #tpu.memory_space<vmem>>, vector<16x256xf32>
    tpu.vector_store %arg9[%c0_97, %c0_98], %110 {strides = array<i32>} : memref<144x512xf32, #tpu.memory_space<vmem>>, vector<16x256xf32>,
    %112 = vector.extract_strided_slice %109 {offsets = [0, 384], sizes = [16, 256], strides = [1, 1]} : vector<16x768xf32> to vector<16x256xf32>
    %c0_99 = arith.constant 0 : index
    %c256_100 = arith.constant 256 : index
    %113 = vector.load %arg9[%c0_99, %c256_100] : memref<144x512xf32, #tpu.memory_space<vmem>>, vector<16x256xf32>
    tpu.vector_store %arg9[%c0_99, %c256_100], %112 {strides = array<i32>} : memref<144x512xf32, #tpu.memory_space<vmem>>, vector<16x256xf32>,
    %114 = vector.extract_strided_slice %109 {offsets = [0, 1], sizes = [16, 256], strides = [1, 1]} : vector<16x768xf32> to vector<16x256xf32>
    %c16_101 = arith.constant 16 : index
    %c0_102 = arith.constant 0 : index
    %115 = vector.load %arg9[%c16_101, %c0_102] : memref<144x512xf32, #tpu.memory_space<vmem>>, vector<16x256xf32>
    tpu.vector_store %arg9[%c16_101, %c0_102], %114 {strides = array<i32>} : memref<144x512xf32, #tpu.memory_space<vmem>>, vector<16x256xf32>,
    %116 = vector.extract_strided_slice %109 {offsets = [0, 385], sizes = [16, 256], strides = [1, 1]} : vector<16x768xf32> to vector<16x256xf32>
    %c16_103 = arith.constant 16 : index
    %c256_104 = arith.constant 256 : index
    %117 = vector.load %arg9[%c16_103, %c256_104] : memref<144x512xf32, #tpu.memory_space<vmem>>, vector<16x256xf32>
    tpu.vector_store %arg9[%c16_103, %c256_104], %116 {strides = array<i32>} : memref<144x512xf32, #tpu.memory_space<vmem>>, vector<16x256xf32>,
    %118 = vector.extract_strided_slice %109 {offsets = [0, 2], sizes = [16, 256], strides = [1, 1]} : vector<16x768xf32> to vector<16x256xf32>
    %c32_105 = arith.constant 32 : index
    %c0_106 = arith.constant 0 : index
    %119 = vector.load %arg9[%c32_105, %c0_106] : memref<144x512xf32, #tpu.memory_space<vmem>>, vector<16x256xf32>
    tpu.vector_store %arg9[%c32_105, %c0_106], %118 {strides = array<i32>} : memref<144x512xf32, #tpu.memory_space<vmem>>, vector<16x256xf32>,
    %120 = vector.extract_strided_slice %109 {offsets = [0, 386], sizes = [16, 256], strides = [1, 1]} : vector<16x768xf32> to vector<16x256xf32>
    %c32_107 = arith.constant 32 : index
    %c256_108 = arith.constant 256 : index
    %121 = vector.load %arg9[%c32_107, %c256_108] : memref<144x512xf32, #tpu.memory_space<vmem>>, vector<16x256xf32>
    tpu.vector_store %arg9[%c32_107, %c256_108], %120 {strides = array<i32>} : memref<144x512xf32, #tpu.memory_space<vmem>>, vector<16x256xf32>,
    %122 = vector.extract_strided_slice %109 {offsets = [0, 16], sizes = [16, 256], strides = [1, 1]} : vector<16x768xf32> to vector<16x256xf32>
    %c48_109 = arith.constant 48 : index
    %c0_110 = arith.constant 0 : index
    %123 = vector.load %arg9[%c48_109, %c0_110] : memref<144x512xf32, #tpu.memory_space<vmem>>, vector<16x256xf32>
    tpu.vector_store %arg9[%c48_109, %c0_110], %122 {strides = array<i32>} : memref<144x512xf32, #tpu.memory_space<vmem>>, vector<16x256xf32>,
    %124 = vector.extract_strided_slice %109 {offsets = [0, 400], sizes = [16, 256], strides = [1, 1]} : vector<16x768xf32> to vector<16x256xf32>
    %c48_111 = arith.constant 48 : index
    %c256_112 = arith.constant 256 : index
    %125 = vector.load %arg9[%c48_111, %c256_112] : memref<144x512xf32, #tpu.memory_space<vmem>>, vector<16x256xf32>
    tpu.vector_store %arg9[%c48_111, %c256_112], %124 {strides = array<i32>} : memref<144x512xf32, #tpu.memory_space<vmem>>, vector<16x256xf32>,
    %126 = vector.extract_strided_slice %109 {offsets = [0, 17], sizes = [16, 256], strides = [1, 1]} : vector<16x768xf32> to vector<16x256xf32>
    %c64_113 = arith.constant 64 : index
    %c0_114 = arith.constant 0 : index
    %127 = vector.load %arg9[%c64_113, %c0_114] : memref<144x512xf32, #tpu.memory_space<vmem>>, vector<16x256xf32>
    tpu.vector_store %arg9[%c64_113, %c0_114], %126 {strides = array<i32>} : memref<144x512xf32, #tpu.memory_space<vmem>>, vector<16x256xf32>,
    %128 = vector.extract_strided_slice %109 {offsets = [0, 401], sizes = [16, 256], strides = [1, 1]} : vector<16x768xf32> to vector<16x256xf32>
    %c64_115 = arith.constant 64 : index
    %c256_116 = arith.constant 256 : index
    %129 = vector.load %arg9[%c64_115, %c256_116] : memref<144x512xf32, #tpu.memory_space<vmem>>, vector<16x256xf32>
    tpu.vector_store %arg9[%c64_115, %c256_116], %128 {strides = array<i32>} : memref<144x512xf32, #tpu.memory_space<vmem>>, vector<16x256xf32>,
    %130 = vector.extract_strided_slice %109 {offsets = [0, 18], sizes = [16, 256], strides = [1, 1]} : vector<16x768xf32> to vector<16x256xf32>
    %c80_117 = arith.constant 80 : index
    %c0_118 = arith.constant 0 : index
    %131 = vector.load %arg9[%c80_117, %c0_118] : memref<144x512xf32, #tpu.memory_space<vmem>>, vector<16x256xf32>
    tpu.vector_store %arg9[%c80_117, %c0_118], %130 {strides = array<i32>} : memref<144x512xf32, #tpu.memory_space<vmem>>, vector<16x256xf32>,
    %132 = vector.extract_strided_slice %109 {offsets = [0, 402], sizes = [16, 256], strides = [1, 1]} : vector<16x768xf32> to vector<16x256xf32>
    %c80_119 = arith.constant 80 : index
    %c256_120 = arith.constant 256 : index
    %133 = vector.load %arg9[%c80_119, %c256_120] : memref<144x512xf32, #tpu.memory_space<vmem>>, vector<16x256xf32>
    tpu.vector_store %arg9[%c80_119, %c256_120], %132 {strides = array<i32>} : memref<144x512xf32, #tpu.memory_space<vmem>>, vector<16x256xf32>,
    %134 = vector.extract_strided_slice %109 {offsets = [0, 32], sizes = [16, 256], strides = [1, 1]} : vector<16x768xf32> to vector<16x256xf32>
    %c96_121 = arith.constant 96 : index
    %c0_122 = arith.constant 0 : index
    %135 = vector.load %arg9[%c96_121, %c0_122] : memref<144x512xf32, #tpu.memory_space<vmem>>, vector<16x256xf32>
    tpu.vector_store %arg9[%c96_121, %c0_122], %134 {strides = array<i32>} : memref<144x512xf32, #tpu.memory_space<vmem>>, vector<16x256xf32>,
    %136 = vector.extract_strided_slice %109 {offsets = [0, 416], sizes = [16, 256], strides = [1, 1]} : vector<16x768xf32> to vector<16x256xf32>
    %c96_123 = arith.constant 96 : index
    %c256_124 = arith.constant 256 : index
    %137 = vector.load %arg9[%c96_123, %c256_124] : memref<144x512xf32, #tpu.memory_space<vmem>>, vector<16x256xf32>
    tpu.vector_store %arg9[%c96_123, %c256_124], %136 {strides = array<i32>} : memref<144x512xf32, #tpu.memory_space<vmem>>, vector<16x256xf32>,
    %138 = vector.extract_strided_slice %109 {offsets = [0, 33], sizes = [16, 256], strides = [1, 1]} : vector<16x768xf32> to vector<16x256xf32>
    %c112_125 = arith.constant 112 : index
    %c0_126 = arith.constant 0 : index
    %139 = vector.load %arg9[%c112_125, %c0_126] : memref<144x512xf32, #tpu.memory_space<vmem>>, vector<16x256xf32>
    tpu.vector_store %arg9[%c112_125, %c0_126], %138 {strides = array<i32>} : memref<144x512xf32, #tpu.memory_space<vmem>>, vector<16x256xf32>,
    %140 = vector.extract_strided_slice %109 {offsets = [0, 417], sizes = [16, 256], strides = [1, 1]} : vector<16x768xf32> to vector<16x256xf32>
    %c112_127 = arith.constant 112 : index
    %c256_128 = arith.constant 256 : index
    %141 = vector.load %arg9[%c112_127, %c256_128] : memref<144x512xf32, #tpu.memory_space<vmem>>, vector<16x256xf32>
    tpu.vector_store %arg9[%c112_127, %c256_128], %140 {strides = array<i32>} : memref<144x512xf32, #tpu.memory_space<vmem>>, vector<16x256xf32>,
    %142 = vector.extract_strided_slice %109 {offsets = [0, 34], sizes = [16, 256], strides = [1, 1]} : vector<16x768xf32> to vector<16x256xf32>
    %c128_129 = arith.constant 128 : index
    %c0_130 = arith.constant 0 : index
    %143 = vector.load %arg9[%c128_129, %c0_130] : memref<144x512xf32, #tpu.memory_space<vmem>>, vector<16x256xf32>
    tpu.vector_store %arg9[%c128_129, %c0_130], %142 {strides = array<i32>} : memref<144x512xf32, #tpu.memory_space<vmem>>, vector<16x256xf32>,
    %144 = vector.extract_strided_slice %109 {offsets = [0, 418], sizes = [16, 256], strides = [1, 1]} : vector<16x768xf32> to vector<16x256xf32>
    %c128_131 = arith.constant 128 : index
    %c256_132 = arith.constant 256 : index
    %145 = vector.load %arg9[%c128_131, %c256_132] : memref<144x512xf32, #tpu.memory_space<vmem>>, vector<16x256xf32>
    tpu.vector_store %arg9[%c128_131, %c256_132], %144 {strides = array<i32>} : memref<144x512xf32, #tpu.memory_space<vmem>>, vector<16x256xf32>,
    %c2 = arith.constant 2 : index
    %c0_133 = arith.constant 0 : index
    %c0_134 = arith.constant 0 : index
    %146 = vector.load %arg1[%c2, %c0_133, %c0_134] : memref<9x16x144xf32, #tpu.memory_space<vmem>>, vector<1x16x144xf32>
    %147 = vector.shape_cast %146 : vector<1x16x144xf32> to vector<16x144xf32>
    %c0_135 = arith.constant 0 : index
    %c0_136 = arith.constant 0 : index
    %148 = vector.load %arg9[%c0_135, %c0_136] : memref<144x512xf32, #tpu.memory_space<vmem>>, vector<144x512xf32>
    %cst_137 = arith.constant dense<0.000000e+00> : vector<16x512xf32>
    %149 = tpu.matmul %147, %148, %cst_137 {dimension_numbers = #tpu.dot_dimension_numbers<[1], [0], [0], [1], [0, 0, 1, 1], [], []>} : vector<16x144xf32>, vector<144x512xf32>, vector<16x512xf32> -> vector<16x512xf32>
    %c2_138 = arith.constant 2 : index
    %c0_139 = arith.constant 0 : index
    %c0_140 = arith.constant 0 : index
    %150 = vector.load %arg2[%c2_138, %c0_139, %c0_140] : memref<9x16x1xf32, #tpu.memory_space<vmem>>, vector<1x16x1xf32>
    %151 = vector.shape_cast %150 : vector<1x16x1xf32> to vector<16x1xf32>
    %152 = vector.broadcast %151 : vector<16x1xf32> to vector<16x512xf32>
    %153 = arith.addf %149, %152 : vector<16x512xf32>
    %154 = arith.addf %153, %51 : vector<16x512xf32>
    %cst_141 = arith.constant 0.000000e+00 : f32
    %155 = vector.broadcast %cst_141 : f32 to vector<16x512xf32>
    %156 = arith.maximumf %154, %155 : vector<16x512xf32>
    %157 = vector.broadcast %0 : vector<1x512xf32> to vector<16x512xf32>
    %158 = arith.mulf %156, %157 : vector<16x512xf32>
    %159 = vector.extract_strided_slice %158 {offsets = [0, 0], sizes = [16, 256], strides = [1, 1]} : vector<16x512xf32> to vector<16x256xf32>
    %c0_142 = arith.constant 0 : index
    %c17_143 = arith.constant 17 : index
    %160 = vector.load %arg8[%c0_142, %c17_143] : memref<16x768xf32, #tpu.memory_space<vmem>>, vector<16x256xf32>
    tpu.vector_store %arg8[%c0_142, %c17_143], %159 {strides = array<i32>} : memref<16x768xf32, #tpu.memory_space<vmem>>, vector<16x256xf32>,
    %161 = vector.extract_strided_slice %158 {offsets = [0, 256], sizes = [16, 256], strides = [1, 1]} : vector<16x512xf32> to vector<16x256xf32>
    %c0_144 = arith.constant 0 : index
    %c401_145 = arith.constant 401 : index
    %162 = vector.load %arg8[%c0_144, %c401_145] : memref<16x768xf32, #tpu.memory_space<vmem>>, vector<16x256xf32>
    tpu.vector_store %arg8[%c0_144, %c401_145], %161 {strides = array<i32>} : memref<16x768xf32, #tpu.memory_space<vmem>>, vector<16x256xf32>,
    %c0_146 = arith.constant 0 : index
    %c0_147 = arith.constant 0 : index
    %163 = vector.load %arg8[%c0_146, %c0_147] : memref<16x768xf32, #tpu.memory_space<vmem>>, vector<16x768xf32>
    %164 = vector.extract_strided_slice %163 {offsets = [0, 0], sizes = [16, 256], strides = [1, 1]} : vector<16x768xf32> to vector<16x256xf32>
    %c0_148 = arith.constant 0 : index
    %c0_149 = arith.constant 0 : index
    %165 = vector.load %arg9[%c0_148, %c0_149] : memref<144x512xf32, #tpu.memory_space<vmem>>, vector<16x256xf32>
    tpu.vector_store %arg9[%c0_148, %c0_149], %164 {strides = array<i32>} : memref<144x512xf32, #tpu.memory_space<vmem>>, vector<16x256xf32>,
    %166 = vector.extract_strided_slice %163 {offsets = [0, 384], sizes = [16, 256], strides = [1, 1]} : vector<16x768xf32> to vector<16x256xf32>
    %c0_150 = arith.constant 0 : index
    %c256_151 = arith.constant 256 : index
    %167 = vector.load %arg9[%c0_150, %c256_151] : memref<144x512xf32, #tpu.memory_space<vmem>>, vector<16x256xf32>
    tpu.vector_store %arg9[%c0_150, %c256_151], %166 {strides = array<i32>} : memref<144x512xf32, #tpu.memory_space<vmem>>, vector<16x256xf32>,
    %168 = vector.extract_strided_slice %163 {offsets = [0, 1], sizes = [16, 256], strides = [1, 1]} : vector<16x768xf32> to vector<16x256xf32>
    %c16_152 = arith.constant 16 : index
    %c0_153 = arith.constant 0 : index
    %169 = vector.load %arg9[%c16_152, %c0_153] : memref<144x512xf32, #tpu.memory_space<vmem>>, vector<16x256xf32>
    tpu.vector_store %arg9[%c16_152, %c0_153], %168 {strides = array<i32>} : memref<144x512xf32, #tpu.memory_space<vmem>>, vector<16x256xf32>,
    %170 = vector.extract_strided_slice %163 {offsets = [0, 385], sizes = [16, 256], strides = [1, 1]} : vector<16x768xf32> to vector<16x256xf32>
    %c16_154 = arith.constant 16 : index
    %c256_155 = arith.constant 256 : index
    %171 = vector.load %arg9[%c16_154, %c256_155] : memref<144x512xf32, #tpu.memory_space<vmem>>, vector<16x256xf32>
    tpu.vector_store %arg9[%c16_154, %c256_155], %170 {strides = array<i32>} : memref<144x512xf32, #tpu.memory_space<vmem>>, vector<16x256xf32>,
    %172 = vector.extract_strided_slice %163 {offsets = [0, 2], sizes = [16, 256], strides = [1, 1]} : vector<16x768xf32> to vector<16x256xf32>
    %c32_156 = arith.constant 32 : index
    %c0_157 = arith.constant 0 : index
    %173 = vector.load %arg9[%c32_156, %c0_157] : memref<144x512xf32, #tpu.memory_space<vmem>>, vector<16x256xf32>
    tpu.vector_store %arg9[%c32_156, %c0_157], %172 {strides = array<i32>} : memref<144x512xf32, #tpu.memory_space<vmem>>, vector<16x256xf32>,
    %174 = vector.extract_strided_slice %163 {offsets = [0, 386], sizes = [16, 256], strides = [1, 1]} : vector<16x768xf32> to vector<16x256xf32>
    %c32_158 = arith.constant 32 : index
    %c256_159 = arith.constant 256 : index
    %175 = vector.load %arg9[%c32_158, %c256_159] : memref<144x512xf32, #tpu.memory_space<vmem>>, vector<16x256xf32>
    tpu.vector_store %arg9[%c32_158, %c256_159], %174 {strides = array<i32>} : memref<144x512xf32, #tpu.memory_space<vmem>>, vector<16x256xf32>,
    %176 = vector.extract_strided_slice %163 {offsets = [0, 16], sizes = [16, 256], strides = [1, 1]} : vector<16x768xf32> to vector<16x256xf32>
    %c48_160 = arith.constant 48 : index
    %c0_161 = arith.constant 0 : index
    %177 = vector.load %arg9[%c48_160, %c0_161] : memref<144x512xf32, #tpu.memory_space<vmem>>, vector<16x256xf32>
    tpu.vector_store %arg9[%c48_160, %c0_161], %176 {strides = array<i32>} : memref<144x512xf32, #tpu.memory_space<vmem>>, vector<16x256xf32>,
    %178 = vector.extract_strided_slice %163 {offsets = [0, 400], sizes = [16, 256], strides = [1, 1]} : vector<16x768xf32> to vector<16x256xf32>
    %c48_162 = arith.constant 48 : index
    %c256_163 = arith.constant 256 : index
    %179 = vector.load %arg9[%c48_162, %c256_163] : memref<144x512xf32, #tpu.memory_space<vmem>>, vector<16x256xf32>
    tpu.vector_store %arg9[%c48_162, %c256_163], %178 {strides = array<i32>} : memref<144x512xf32, #tpu.memory_space<vmem>>, vector<16x256xf32>,
    %180 = vector.extract_strided_slice %163 {offsets = [0, 17], sizes = [16, 256], strides = [1, 1]} : vector<16x768xf32> to vector<16x256xf32>
    %c64_164 = arith.constant 64 : index
    %c0_165 = arith.constant 0 : index
    %181 = vector.load %arg9[%c64_164, %c0_165] : memref<144x512xf32, #tpu.memory_space<vmem>>, vector<16x256xf32>
    tpu.vector_store %arg9[%c64_164, %c0_165], %180 {strides = array<i32>} : memref<144x512xf32, #tpu.memory_space<vmem>>, vector<16x256xf32>,
    %182 = vector.extract_strided_slice %163 {offsets = [0, 401], sizes = [16, 256], strides = [1, 1]} : vector<16x768xf32> to vector<16x256xf32>
    %c64_166 = arith.constant 64 : index
    %c256_167 = arith.constant 256 : index
    %183 = vector.load %arg9[%c64_166, %c256_167] : memref<144x512xf32, #tpu.memory_space<vmem>>, vector<16x256xf32>
    tpu.vector_store %arg9[%c64_166, %c256_167], %182 {strides = array<i32>} : memref<144x512xf32, #tpu.memory_space<vmem>>, vector<16x256xf32>,
    %184 = vector.extract_strided_slice %163 {offsets = [0, 18], sizes = [16, 256], strides = [1, 1]} : vector<16x768xf32> to vector<16x256xf32>
    %c80_168 = arith.constant 80 : index
    %c0_169 = arith.constant 0 : index
    %185 = vector.load %arg9[%c80_168, %c0_169] : memref<144x512xf32, #tpu.memory_space<vmem>>, vector<16x256xf32>
    tpu.vector_store %arg9[%c80_168, %c0_169], %184 {strides = array<i32>} : memref<144x512xf32, #tpu.memory_space<vmem>>, vector<16x256xf32>,
    %186 = vector.extract_strided_slice %163 {offsets = [0, 402], sizes = [16, 256], strides = [1, 1]} : vector<16x768xf32> to vector<16x256xf32>
    %c80_170 = arith.constant 80 : index
    %c256_171 = arith.constant 256 : index
    %187 = vector.load %arg9[%c80_170, %c256_171] : memref<144x512xf32, #tpu.memory_space<vmem>>, vector<16x256xf32>
    tpu.vector_store %arg9[%c80_170, %c256_171], %186 {strides = array<i32>} : memref<144x512xf32, #tpu.memory_space<vmem>>, vector<16x256xf32>,
    %188 = vector.extract_strided_slice %163 {offsets = [0, 32], sizes = [16, 256], strides = [1, 1]} : vector<16x768xf32> to vector<16x256xf32>
    %c96_172 = arith.constant 96 : index
    %c0_173 = arith.constant 0 : index
    %189 = vector.load %arg9[%c96_172, %c0_173] : memref<144x512xf32, #tpu.memory_space<vmem>>, vector<16x256xf32>
    tpu.vector_store %arg9[%c96_172, %c0_173], %188 {strides = array<i32>} : memref<144x512xf32, #tpu.memory_space<vmem>>, vector<16x256xf32>,
    %190 = vector.extract_strided_slice %163 {offsets = [0, 416], sizes = [16, 256], strides = [1, 1]} : vector<16x768xf32> to vector<16x256xf32>
    %c96_174 = arith.constant 96 : index
    %c256_175 = arith.constant 256 : index
    %191 = vector.load %arg9[%c96_174, %c256_175] : memref<144x512xf32, #tpu.memory_space<vmem>>, vector<16x256xf32>
    tpu.vector_store %arg9[%c96_174, %c256_175], %190 {strides = array<i32>} : memref<144x512xf32, #tpu.memory_space<vmem>>, vector<16x256xf32>,
    %192 = vector.extract_strided_slice %163 {offsets = [0, 33], sizes = [16, 256], strides = [1, 1]} : vector<16x768xf32> to vector<16x256xf32>
    %c112_176 = arith.constant 112 : index
    %c0_177 = arith.constant 0 : index
    %193 = vector.load %arg9[%c112_176, %c0_177] : memref<144x512xf32, #tpu.memory_space<vmem>>, vector<16x256xf32>
    tpu.vector_store %arg9[%c112_176, %c0_177], %192 {strides = array<i32>} : memref<144x512xf32, #tpu.memory_space<vmem>>, vector<16x256xf32>,
    %194 = vector.extract_strided_slice %163 {offsets = [0, 417], sizes = [16, 256], strides = [1, 1]} : vector<16x768xf32> to vector<16x256xf32>
    %c112_178 = arith.constant 112 : index
    %c256_179 = arith.constant 256 : index
    %195 = vector.load %arg9[%c112_178, %c256_179] : memref<144x512xf32, #tpu.memory_space<vmem>>, vector<16x256xf32>
    tpu.vector_store %arg9[%c112_178, %c256_179], %194 {strides = array<i32>} : memref<144x512xf32, #tpu.memory_space<vmem>>, vector<16x256xf32>,
    %196 = vector.extract_strided_slice %163 {offsets = [0, 34], sizes = [16, 256], strides = [1, 1]} : vector<16x768xf32> to vector<16x256xf32>
    %c128_180 = arith.constant 128 : index
    %c0_181 = arith.constant 0 : index
    %197 = vector.load %arg9[%c128_180, %c0_181] : memref<144x512xf32, #tpu.memory_space<vmem>>, vector<16x256xf32>
    tpu.vector_store %arg9[%c128_180, %c0_181], %196 {strides = array<i32>} : memref<144x512xf32, #tpu.memory_space<vmem>>, vector<16x256xf32>,
    %198 = vector.extract_strided_slice %163 {offsets = [0, 418], sizes = [16, 256], strides = [1, 1]} : vector<16x768xf32> to vector<16x256xf32>
    %c128_182 = arith.constant 128 : index
    %c256_183 = arith.constant 256 : index
    %199 = vector.load %arg9[%c128_182, %c256_183] : memref<144x512xf32, #tpu.memory_space<vmem>>, vector<16x256xf32>
    tpu.vector_store %arg9[%c128_182, %c256_183], %198 {strides = array<i32>} : memref<144x512xf32, #tpu.memory_space<vmem>>, vector<16x256xf32>,
    %c3 = arith.constant 3 : index
    %c0_184 = arith.constant 0 : index
    %c0_185 = arith.constant 0 : index
    %200 = vector.load %arg1[%c3, %c0_184, %c0_185] : memref<9x16x144xf32, #tpu.memory_space<vmem>>, vector<1x16x144xf32>
    %201 = vector.shape_cast %200 : vector<1x16x144xf32> to vector<16x144xf32>
    %c0_186 = arith.constant 0 : index
    %c0_187 = arith.constant 0 : index
    %202 = vector.load %arg9[%c0_186, %c0_187] : memref<144x512xf32, #tpu.memory_space<vmem>>, vector<144x512xf32>
    %cst_188 = arith.constant dense<0.000000e+00> : vector<16x512xf32>
    %203 = tpu.matmul %201, %202, %cst_188 {dimension_numbers = #tpu.dot_dimension_numbers<[1], [0], [0], [1], [0, 0, 1, 1], [], []>} : vector<16x144xf32>, vector<144x512xf32>, vector<16x512xf32> -> vector<16x512xf32>
    %c3_189 = arith.constant 3 : index
    %c0_190 = arith.constant 0 : index
    %c0_191 = arith.constant 0 : index
    %204 = vector.load %arg2[%c3_189, %c0_190, %c0_191] : memref<9x16x1xf32, #tpu.memory_space<vmem>>, vector<1x16x1xf32>
    %205 = vector.shape_cast %204 : vector<1x16x1xf32> to vector<16x1xf32>
    %206 = vector.broadcast %205 : vector<16x1xf32> to vector<16x512xf32>
    %207 = arith.addf %203, %206 : vector<16x512xf32>
    %cst_192 = arith.constant 0.000000e+00 : f32
    %208 = vector.broadcast %cst_192 : f32 to vector<16x512xf32>
    %209 = arith.maximumf %207, %208 : vector<16x512xf32>
    %210 = vector.broadcast %0 : vector<1x512xf32> to vector<16x512xf32>
    %211 = arith.mulf %209, %210 : vector<16x512xf32>
    %212 = vector.extract_strided_slice %211 {offsets = [0, 0], sizes = [16, 256], strides = [1, 1]} : vector<16x512xf32> to vector<16x256xf32>
    %c0_193 = arith.constant 0 : index
    %c17_194 = arith.constant 17 : index
    %213 = vector.load %arg8[%c0_193, %c17_194] : memref<16x768xf32, #tpu.memory_space<vmem>>, vector<16x256xf32>
    tpu.vector_store %arg8[%c0_193, %c17_194], %212 {strides = array<i32>} : memref<16x768xf32, #tpu.memory_space<vmem>>, vector<16x256xf32>,
    %214 = vector.extract_strided_slice %211 {offsets = [0, 256], sizes = [16, 256], strides = [1, 1]} : vector<16x512xf32> to vector<16x256xf32>
    %c0_195 = arith.constant 0 : index
    %c401_196 = arith.constant 401 : index
    %215 = vector.load %arg8[%c0_195, %c401_196] : memref<16x768xf32, #tpu.memory_space<vmem>>, vector<16x256xf32>
    tpu.vector_store %arg8[%c0_195, %c401_196], %214 {strides = array<i32>} : memref<16x768xf32, #tpu.memory_space<vmem>>, vector<16x256xf32>,
    %c0_197 = arith.constant 0 : index
    %c0_198 = arith.constant 0 : index
    %216 = vector.load %arg8[%c0_197, %c0_198] : memref<16x768xf32, #tpu.memory_space<vmem>>, vector<16x768xf32>
    %217 = vector.extract_strided_slice %216 {offsets = [0, 0], sizes = [16, 256], strides = [1, 1]} : vector<16x768xf32> to vector<16x256xf32>
    %c0_199 = arith.constant 0 : index
    %c0_200 = arith.constant 0 : index
    %218 = vector.load %arg9[%c0_199, %c0_200] : memref<144x512xf32, #tpu.memory_space<vmem>>, vector<16x256xf32>
    tpu.vector_store %arg9[%c0_199, %c0_200], %217 {strides = array<i32>} : memref<144x512xf32, #tpu.memory_space<vmem>>, vector<16x256xf32>,
    %219 = vector.extract_strided_slice %216 {offsets = [0, 384], sizes = [16, 256], strides = [1, 1]} : vector<16x768xf32> to vector<16x256xf32>
    %c0_201 = arith.constant 0 : index
    %c256_202 = arith.constant 256 : index
    %220 = vector.load %arg9[%c0_201, %c256_202] : memref<144x512xf32, #tpu.memory_space<vmem>>, vector<16x256xf32>
    tpu.vector_store %arg9[%c0_201, %c256_202], %219 {strides = array<i32>} : memref<144x512xf32, #tpu.memory_space<vmem>>, vector<16x256xf32>,
    %221 = vector.extract_strided_slice %216 {offsets = [0, 1], sizes = [16, 256], strides = [1, 1]} : vector<16x768xf32> to vector<16x256xf32>
    %c16_203 = arith.constant 16 : index
    %c0_204 = arith.constant 0 : index
    %222 = vector.load %arg9[%c16_203, %c0_204] : memref<144x512xf32, #tpu.memory_space<vmem>>, vector<16x256xf32>
    tpu.vector_store %arg9[%c16_203, %c0_204], %221 {strides = array<i32>} : memref<144x512xf32, #tpu.memory_space<vmem>>, vector<16x256xf32>,
    %223 = vector.extract_strided_slice %216 {offsets = [0, 385], sizes = [16, 256], strides = [1, 1]} : vector<16x768xf32> to vector<16x256xf32>
    %c16_205 = arith.constant 16 : index
    %c256_206 = arith.constant 256 : index
    %224 = vector.load %arg9[%c16_205, %c256_206] : memref<144x512xf32, #tpu.memory_space<vmem>>, vector<16x256xf32>
    tpu.vector_store %arg9[%c16_205, %c256_206], %223 {strides = array<i32>} : memref<144x512xf32, #tpu.memory_space<vmem>>, vector<16x256xf32>,
    %225 = vector.extract_strided_slice %216 {offsets = [0, 2], sizes = [16, 256], strides = [1, 1]} : vector<16x768xf32> to vector<16x256xf32>
    %c32_207 = arith.constant 32 : index
    %c0_208 = arith.constant 0 : index
    %226 = vector.load %arg9[%c32_207, %c0_208] : memref<144x512xf32, #tpu.memory_space<vmem>>, vector<16x256xf32>
    tpu.vector_store %arg9[%c32_207, %c0_208], %225 {strides = array<i32>} : memref<144x512xf32, #tpu.memory_space<vmem>>, vector<16x256xf32>,
    %227 = vector.extract_strided_slice %216 {offsets = [0, 386], sizes = [16, 256], strides = [1, 1]} : vector<16x768xf32> to vector<16x256xf32>
    %c32_209 = arith.constant 32 : index
    %c256_210 = arith.constant 256 : index
    %228 = vector.load %arg9[%c32_209, %c256_210] : memref<144x512xf32, #tpu.memory_space<vmem>>, vector<16x256xf32>
    tpu.vector_store %arg9[%c32_209, %c256_210], %227 {strides = array<i32>} : memref<144x512xf32, #tpu.memory_space<vmem>>, vector<16x256xf32>,
    %229 = vector.extract_strided_slice %216 {offsets = [0, 16], sizes = [16, 256], strides = [1, 1]} : vector<16x768xf32> to vector<16x256xf32>
    %c48_211 = arith.constant 48 : index
    %c0_212 = arith.constant 0 : index
    %230 = vector.load %arg9[%c48_211, %c0_212] : memref<144x512xf32, #tpu.memory_space<vmem>>, vector<16x256xf32>
    tpu.vector_store %arg9[%c48_211, %c0_212], %229 {strides = array<i32>} : memref<144x512xf32, #tpu.memory_space<vmem>>, vector<16x256xf32>,
    %231 = vector.extract_strided_slice %216 {offsets = [0, 400], sizes = [16, 256], strides = [1, 1]} : vector<16x768xf32> to vector<16x256xf32>
    %c48_213 = arith.constant 48 : index
    %c256_214 = arith.constant 256 : index
    %232 = vector.load %arg9[%c48_213, %c256_214] : memref<144x512xf32, #tpu.memory_space<vmem>>, vector<16x256xf32>
    tpu.vector_store %arg9[%c48_213, %c256_214], %231 {strides = array<i32>} : memref<144x512xf32, #tpu.memory_space<vmem>>, vector<16x256xf32>,
    %233 = vector.extract_strided_slice %216 {offsets = [0, 17], sizes = [16, 256], strides = [1, 1]} : vector<16x768xf32> to vector<16x256xf32>
    %c64_215 = arith.constant 64 : index
    %c0_216 = arith.constant 0 : index
    %234 = vector.load %arg9[%c64_215, %c0_216] : memref<144x512xf32, #tpu.memory_space<vmem>>, vector<16x256xf32>
    tpu.vector_store %arg9[%c64_215, %c0_216], %233 {strides = array<i32>} : memref<144x512xf32, #tpu.memory_space<vmem>>, vector<16x256xf32>,
    %235 = vector.extract_strided_slice %216 {offsets = [0, 401], sizes = [16, 256], strides = [1, 1]} : vector<16x768xf32> to vector<16x256xf32>
    %c64_217 = arith.constant 64 : index
    %c256_218 = arith.constant 256 : index
    %236 = vector.load %arg9[%c64_217, %c256_218] : memref<144x512xf32, #tpu.memory_space<vmem>>, vector<16x256xf32>
    tpu.vector_store %arg9[%c64_217, %c256_218], %235 {strides = array<i32>} : memref<144x512xf32, #tpu.memory_space<vmem>>, vector<16x256xf32>,
    %237 = vector.extract_strided_slice %216 {offsets = [0, 18], sizes = [16, 256], strides = [1, 1]} : vector<16x768xf32> to vector<16x256xf32>
    %c80_219 = arith.constant 80 : index
    %c0_220 = arith.constant 0 : index
    %238 = vector.load %arg9[%c80_219, %c0_220] : memref<144x512xf32, #tpu.memory_space<vmem>>, vector<16x256xf32>
    tpu.vector_store %arg9[%c80_219, %c0_220], %237 {strides = array<i32>} : memref<144x512xf32, #tpu.memory_space<vmem>>, vector<16x256xf32>,
    %239 = vector.extract_strided_slice %216 {offsets = [0, 402], sizes = [16, 256], strides = [1, 1]} : vector<16x768xf32> to vector<16x256xf32>
    %c80_221 = arith.constant 80 : index
    %c256_222 = arith.constant 256 : index
    %240 = vector.load %arg9[%c80_221, %c256_222] : memref<144x512xf32, #tpu.memory_space<vmem>>, vector<16x256xf32>
    tpu.vector_store %arg9[%c80_221, %c256_222], %239 {strides = array<i32>} : memref<144x512xf32, #tpu.memory_space<vmem>>, vector<16x256xf32>,
    %241 = vector.extract_strided_slice %216 {offsets = [0, 32], sizes = [16, 256], strides = [1, 1]} : vector<16x768xf32> to vector<16x256xf32>
    %c96_223 = arith.constant 96 : index
    %c0_224 = arith.constant 0 : index
    %242 = vector.load %arg9[%c96_223, %c0_224] : memref<144x512xf32, #tpu.memory_space<vmem>>, vector<16x256xf32>
    tpu.vector_store %arg9[%c96_223, %c0_224], %241 {strides = array<i32>} : memref<144x512xf32, #tpu.memory_space<vmem>>, vector<16x256xf32>,
    %243 = vector.extract_strided_slice %216 {offsets = [0, 416], sizes = [16, 256], strides = [1, 1]} : vector<16x768xf32> to vector<16x256xf32>
    %c96_225 = arith.constant 96 : index
    %c256_226 = arith.constant 256 : index
    %244 = vector.load %arg9[%c96_225, %c256_226] : memref<144x512xf32, #tpu.memory_space<vmem>>, vector<16x256xf32>
    tpu.vector_store %arg9[%c96_225, %c256_226], %243 {strides = array<i32>} : memref<144x512xf32, #tpu.memory_space<vmem>>, vector<16x256xf32>,
    %245 = vector.extract_strided_slice %216 {offsets = [0, 33], sizes = [16, 256], strides = [1, 1]} : vector<16x768xf32> to vector<16x256xf32>
    %c112_227 = arith.constant 112 : index
    %c0_228 = arith.constant 0 : index
    %246 = vector.load %arg9[%c112_227, %c0_228] : memref<144x512xf32, #tpu.memory_space<vmem>>, vector<16x256xf32>
    tpu.vector_store %arg9[%c112_227, %c0_228], %245 {strides = array<i32>} : memref<144x512xf32, #tpu.memory_space<vmem>>, vector<16x256xf32>,
    %247 = vector.extract_strided_slice %216 {offsets = [0, 417], sizes = [16, 256], strides = [1, 1]} : vector<16x768xf32> to vector<16x256xf32>
    %c112_229 = arith.constant 112 : index
    %c256_230 = arith.constant 256 : index
    %248 = vector.load %arg9[%c112_229, %c256_230] : memref<144x512xf32, #tpu.memory_space<vmem>>, vector<16x256xf32>
    tpu.vector_store %arg9[%c112_229, %c256_230], %247 {strides = array<i32>} : memref<144x512xf32, #tpu.memory_space<vmem>>, vector<16x256xf32>,
    %249 = vector.extract_strided_slice %216 {offsets = [0, 34], sizes = [16, 256], strides = [1, 1]} : vector<16x768xf32> to vector<16x256xf32>
    %c128_231 = arith.constant 128 : index
    %c0_232 = arith.constant 0 : index
    %250 = vector.load %arg9[%c128_231, %c0_232] : memref<144x512xf32, #tpu.memory_space<vmem>>, vector<16x256xf32>
    tpu.vector_store %arg9[%c128_231, %c0_232], %249 {strides = array<i32>} : memref<144x512xf32, #tpu.memory_space<vmem>>, vector<16x256xf32>,
    %251 = vector.extract_strided_slice %216 {offsets = [0, 418], sizes = [16, 256], strides = [1, 1]} : vector<16x768xf32> to vector<16x256xf32>
    %c128_233 = arith.constant 128 : index
    %c256_234 = arith.constant 256 : index
    %252 = vector.load %arg9[%c128_233, %c256_234] : memref<144x512xf32, #tpu.memory_space<vmem>>, vector<16x256xf32>
    tpu.vector_store %arg9[%c128_233, %c256_234], %251 {strides = array<i32>} : memref<144x512xf32, #tpu.memory_space<vmem>>, vector<16x256xf32>,
    %c4 = arith.constant 4 : index
    %c0_235 = arith.constant 0 : index
    %c0_236 = arith.constant 0 : index
    %253 = vector.load %arg1[%c4, %c0_235, %c0_236] : memref<9x16x144xf32, #tpu.memory_space<vmem>>, vector<1x16x144xf32>
    %254 = vector.shape_cast %253 : vector<1x16x144xf32> to vector<16x144xf32>
    %c0_237 = arith.constant 0 : index
    %c0_238 = arith.constant 0 : index
    %255 = vector.load %arg9[%c0_237, %c0_238] : memref<144x512xf32, #tpu.memory_space<vmem>>, vector<144x512xf32>
    %cst_239 = arith.constant dense<0.000000e+00> : vector<16x512xf32>
    %256 = tpu.matmul %254, %255, %cst_239 {dimension_numbers = #tpu.dot_dimension_numbers<[1], [0], [0], [1], [0, 0, 1, 1], [], []>} : vector<16x144xf32>, vector<144x512xf32>, vector<16x512xf32> -> vector<16x512xf32>
    %c4_240 = arith.constant 4 : index
    %c0_241 = arith.constant 0 : index
    %c0_242 = arith.constant 0 : index
    %257 = vector.load %arg2[%c4_240, %c0_241, %c0_242] : memref<9x16x1xf32, #tpu.memory_space<vmem>>, vector<1x16x1xf32>
    %258 = vector.shape_cast %257 : vector<1x16x1xf32> to vector<16x1xf32>
    %259 = vector.broadcast %258 : vector<16x1xf32> to vector<16x512xf32>
    %260 = arith.addf %256, %259 : vector<16x512xf32>
    %261 = arith.addf %260, %158 : vector<16x512xf32>
    %cst_243 = arith.constant 0.000000e+00 : f32
    %262 = vector.broadcast %cst_243 : f32 to vector<16x512xf32>
    %263 = arith.maximumf %261, %262 : vector<16x512xf32>
    %264 = vector.broadcast %0 : vector<1x512xf32> to vector<16x512xf32>
    %265 = arith.mulf %263, %264 : vector<16x512xf32>
    %266 = vector.extract_strided_slice %265 {offsets = [0, 0], sizes = [16, 256], strides = [1, 1]} : vector<16x512xf32> to vector<16x256xf32>
    %c0_244 = arith.constant 0 : index
    %c17_245 = arith.constant 17 : index
    %267 = vector.load %arg8[%c0_244, %c17_245] : memref<16x768xf32, #tpu.memory_space<vmem>>, vector<16x256xf32>
    tpu.vector_store %arg8[%c0_244, %c17_245], %266 {strides = array<i32>} : memref<16x768xf32, #tpu.memory_space<vmem>>, vector<16x256xf32>,
    %268 = vector.extract_strided_slice %265 {offsets = [0, 256], sizes = [16, 256], strides = [1, 1]} : vector<16x512xf32> to vector<16x256xf32>
    %c0_246 = arith.constant 0 : index
    %c401_247 = arith.constant 401 : index
    %269 = vector.load %arg8[%c0_246, %c401_247] : memref<16x768xf32, #tpu.memory_space<vmem>>, vector<16x256xf32>
    tpu.vector_store %arg8[%c0_246, %c401_247], %268 {strides = array<i32>} : memref<16x768xf32, #tpu.memory_space<vmem>>, vector<16x256xf32>,
    %c0_248 = arith.constant 0 : index
    %c0_249 = arith.constant 0 : index
    %270 = vector.load %arg8[%c0_248, %c0_249] : memref<16x768xf32, #tpu.memory_space<vmem>>, vector<16x768xf32>
    %271 = vector.extract_strided_slice %270 {offsets = [0, 0], sizes = [16, 256], strides = [1, 1]} : vector<16x768xf32> to vector<16x256xf32>
    %c0_250 = arith.constant 0 : index
    %c0_251 = arith.constant 0 : index
    %272 = vector.load %arg9[%c0_250, %c0_251] : memref<144x512xf32, #tpu.memory_space<vmem>>, vector<16x256xf32>
    tpu.vector_store %arg9[%c0_250, %c0_251], %271 {strides = array<i32>} : memref<144x512xf32, #tpu.memory_space<vmem>>, vector<16x256xf32>,
    %273 = vector.extract_strided_slice %270 {offsets = [0, 384], sizes = [16, 256], strides = [1, 1]} : vector<16x768xf32> to vector<16x256xf32>
    %c0_252 = arith.constant 0 : index
    %c256_253 = arith.constant 256 : index
    %274 = vector.load %arg9[%c0_252, %c256_253] : memref<144x512xf32, #tpu.memory_space<vmem>>, vector<16x256xf32>
    tpu.vector_store %arg9[%c0_252, %c256_253], %273 {strides = array<i32>} : memref<144x512xf32, #tpu.memory_space<vmem>>, vector<16x256xf32>,
    %275 = vector.extract_strided_slice %270 {offsets = [0, 1], sizes = [16, 256], strides = [1, 1]} : vector<16x768xf32> to vector<16x256xf32>
    %c16_254 = arith.constant 16 : index
    %c0_255 = arith.constant 0 : index
    %276 = vector.load %arg9[%c16_254, %c0_255] : memref<144x512xf32, #tpu.memory_space<vmem>>, vector<16x256xf32>
    tpu.vector_store %arg9[%c16_254, %c0_255], %275 {strides = array<i32>} : memref<144x512xf32, #tpu.memory_space<vmem>>, vector<16x256xf32>,
    %277 = vector.extract_strided_slice %270 {offsets = [0, 385], sizes = [16, 256], strides = [1, 1]} : vector<16x768xf32> to vector<16x256xf32>
    %c16_256 = arith.constant 16 : index
    %c256_257 = arith.constant 256 : index
    %278 = vector.load %arg9[%c16_256, %c256_257] : memref<144x512xf32, #tpu.memory_space<vmem>>, vector<16x256xf32>
    tpu.vector_store %arg9[%c16_256, %c256_257], %277 {strides = array<i32>} : memref<144x512xf32, #tpu.memory_space<vmem>>, vector<16x256xf32>,
    %279 = vector.extract_strided_slice %270 {offsets = [0, 2], sizes = [16, 256], strides = [1, 1]} : vector<16x768xf32> to vector<16x256xf32>
    %c32_258 = arith.constant 32 : index
    %c0_259 = arith.constant 0 : index
    %280 = vector.load %arg9[%c32_258, %c0_259] : memref<144x512xf32, #tpu.memory_space<vmem>>, vector<16x256xf32>
    tpu.vector_store %arg9[%c32_258, %c0_259], %279 {strides = array<i32>} : memref<144x512xf32, #tpu.memory_space<vmem>>, vector<16x256xf32>,
    %281 = vector.extract_strided_slice %270 {offsets = [0, 386], sizes = [16, 256], strides = [1, 1]} : vector<16x768xf32> to vector<16x256xf32>
    %c32_260 = arith.constant 32 : index
    %c256_261 = arith.constant 256 : index
    %282 = vector.load %arg9[%c32_260, %c256_261] : memref<144x512xf32, #tpu.memory_space<vmem>>, vector<16x256xf32>
    tpu.vector_store %arg9[%c32_260, %c256_261], %281 {strides = array<i32>} : memref<144x512xf32, #tpu.memory_space<vmem>>, vector<16x256xf32>,
    %283 = vector.extract_strided_slice %270 {offsets = [0, 16], sizes = [16, 256], strides = [1, 1]} : vector<16x768xf32> to vector<16x256xf32>
    %c48_262 = arith.constant 48 : index
    %c0_263 = arith.constant 0 : index
    %284 = vector.load %arg9[%c48_262, %c0_263] : memref<144x512xf32, #tpu.memory_space<vmem>>, vector<16x256xf32>
    tpu.vector_store %arg9[%c48_262, %c0_263], %283 {strides = array<i32>} : memref<144x512xf32, #tpu.memory_space<vmem>>, vector<16x256xf32>,
    %285 = vector.extract_strided_slice %270 {offsets = [0, 400], sizes = [16, 256], strides = [1, 1]} : vector<16x768xf32> to vector<16x256xf32>
    %c48_264 = arith.constant 48 : index
    %c256_265 = arith.constant 256 : index
    %286 = vector.load %arg9[%c48_264, %c256_265] : memref<144x512xf32, #tpu.memory_space<vmem>>, vector<16x256xf32>
    tpu.vector_store %arg9[%c48_264, %c256_265], %285 {strides = array<i32>} : memref<144x512xf32, #tpu.memory_space<vmem>>, vector<16x256xf32>,
    %287 = vector.extract_strided_slice %270 {offsets = [0, 17], sizes = [16, 256], strides = [1, 1]} : vector<16x768xf32> to vector<16x256xf32>
    %c64_266 = arith.constant 64 : index
    %c0_267 = arith.constant 0 : index
    %288 = vector.load %arg9[%c64_266, %c0_267] : memref<144x512xf32, #tpu.memory_space<vmem>>, vector<16x256xf32>
    tpu.vector_store %arg9[%c64_266, %c0_267], %287 {strides = array<i32>} : memref<144x512xf32, #tpu.memory_space<vmem>>, vector<16x256xf32>,
    %289 = vector.extract_strided_slice %270 {offsets = [0, 401], sizes = [16, 256], strides = [1, 1]} : vector<16x768xf32> to vector<16x256xf32>
    %c64_268 = arith.constant 64 : index
    %c256_269 = arith.constant 256 : index
    %290 = vector.load %arg9[%c64_268, %c256_269] : memref<144x512xf32, #tpu.memory_space<vmem>>, vector<16x256xf32>
    tpu.vector_store %arg9[%c64_268, %c256_269], %289 {strides = array<i32>} : memref<144x512xf32, #tpu.memory_space<vmem>>, vector<16x256xf32>,
    %291 = vector.extract_strided_slice %270 {offsets = [0, 18], sizes = [16, 256], strides = [1, 1]} : vector<16x768xf32> to vector<16x256xf32>
    %c80_270 = arith.constant 80 : index
    %c0_271 = arith.constant 0 : index
    %292 = vector.load %arg9[%c80_270, %c0_271] : memref<144x512xf32, #tpu.memory_space<vmem>>, vector<16x256xf32>
    tpu.vector_store %arg9[%c80_270, %c0_271], %291 {strides = array<i32>} : memref<144x512xf32, #tpu.memory_space<vmem>>, vector<16x256xf32>,
    %293 = vector.extract_strided_slice %270 {offsets = [0, 402], sizes = [16, 256], strides = [1, 1]} : vector<16x768xf32> to vector<16x256xf32>
    %c80_272 = arith.constant 80 : index
    %c256_273 = arith.constant 256 : index
    %294 = vector.load %arg9[%c80_272, %c256_273] : memref<144x512xf32, #tpu.memory_space<vmem>>, vector<16x256xf32>
    tpu.vector_store %arg9[%c80_272, %c256_273], %293 {strides = array<i32>} : memref<144x512xf32, #tpu.memory_space<vmem>>, vector<16x256xf32>,
    %295 = vector.extract_strided_slice %270 {offsets = [0, 32], sizes = [16, 256], strides = [1, 1]} : vector<16x768xf32> to vector<16x256xf32>
    %c96_274 = arith.constant 96 : index
    %c0_275 = arith.constant 0 : index
    %296 = vector.load %arg9[%c96_274, %c0_275] : memref<144x512xf32, #tpu.memory_space<vmem>>, vector<16x256xf32>
    tpu.vector_store %arg9[%c96_274, %c0_275], %295 {strides = array<i32>} : memref<144x512xf32, #tpu.memory_space<vmem>>, vector<16x256xf32>,
    %297 = vector.extract_strided_slice %270 {offsets = [0, 416], sizes = [16, 256], strides = [1, 1]} : vector<16x768xf32> to vector<16x256xf32>
    %c96_276 = arith.constant 96 : index
    %c256_277 = arith.constant 256 : index
    %298 = vector.load %arg9[%c96_276, %c256_277] : memref<144x512xf32, #tpu.memory_space<vmem>>, vector<16x256xf32>
    tpu.vector_store %arg9[%c96_276, %c256_277], %297 {strides = array<i32>} : memref<144x512xf32, #tpu.memory_space<vmem>>, vector<16x256xf32>,
    %299 = vector.extract_strided_slice %270 {offsets = [0, 33], sizes = [16, 256], strides = [1, 1]} : vector<16x768xf32> to vector<16x256xf32>
    %c112_278 = arith.constant 112 : index
    %c0_279 = arith.constant 0 : index
    %300 = vector.load %arg9[%c112_278, %c0_279] : memref<144x512xf32, #tpu.memory_space<vmem>>, vector<16x256xf32>
    tpu.vector_store %arg9[%c112_278, %c0_279], %299 {strides = array<i32>} : memref<144x512xf32, #tpu.memory_space<vmem>>, vector<16x256xf32>,
    %301 = vector.extract_strided_slice %270 {offsets = [0, 417], sizes = [16, 256], strides = [1, 1]} : vector<16x768xf32> to vector<16x256xf32>
    %c112_280 = arith.constant 112 : index
    %c256_281 = arith.constant 256 : index
    %302 = vector.load %arg9[%c112_280, %c256_281] : memref<144x512xf32, #tpu.memory_space<vmem>>, vector<16x256xf32>
    tpu.vector_store %arg9[%c112_280, %c256_281], %301 {strides = array<i32>} : memref<144x512xf32, #tpu.memory_space<vmem>>, vector<16x256xf32>,
    %303 = vector.extract_strided_slice %270 {offsets = [0, 34], sizes = [16, 256], strides = [1, 1]} : vector<16x768xf32> to vector<16x256xf32>
    %c128_282 = arith.constant 128 : index
    %c0_283 = arith.constant 0 : index
    %304 = vector.load %arg9[%c128_282, %c0_283] : memref<144x512xf32, #tpu.memory_space<vmem>>, vector<16x256xf32>
    tpu.vector_store %arg9[%c128_282, %c0_283], %303 {strides = array<i32>} : memref<144x512xf32, #tpu.memory_space<vmem>>, vector<16x256xf32>,
    %305 = vector.extract_strided_slice %270 {offsets = [0, 418], sizes = [16, 256], strides = [1, 1]} : vector<16x768xf32> to vector<16x256xf32>
    %c128_284 = arith.constant 128 : index
    %c256_285 = arith.constant 256 : index
    %306 = vector.load %arg9[%c128_284, %c256_285] : memref<144x512xf32, #tpu.memory_space<vmem>>, vector<16x256xf32>
    tpu.vector_store %arg9[%c128_284, %c256_285], %305 {strides = array<i32>} : memref<144x512xf32, #tpu.memory_space<vmem>>, vector<16x256xf32>,
    %c5 = arith.constant 5 : index
    %c0_286 = arith.constant 0 : index
    %c0_287 = arith.constant 0 : index
    %307 = vector.load %arg1[%c5, %c0_286, %c0_287] : memref<9x16x144xf32, #tpu.memory_space<vmem>>, vector<1x16x144xf32>
    %308 = vector.shape_cast %307 : vector<1x16x144xf32> to vector<16x144xf32>
    %c0_288 = arith.constant 0 : index
    %c0_289 = arith.constant 0 : index
    %309 = vector.load %arg9[%c0_288, %c0_289] : memref<144x512xf32, #tpu.memory_space<vmem>>, vector<144x512xf32>
    %cst_290 = arith.constant dense<0.000000e+00> : vector<16x512xf32>
    %310 = tpu.matmul %308, %309, %cst_290 {dimension_numbers = #tpu.dot_dimension_numbers<[1], [0], [0], [1], [0, 0, 1, 1], [], []>} : vector<16x144xf32>, vector<144x512xf32>, vector<16x512xf32> -> vector<16x512xf32>
    %c5_291 = arith.constant 5 : index
    %c0_292 = arith.constant 0 : index
    %c0_293 = arith.constant 0 : index
    %311 = vector.load %arg2[%c5_291, %c0_292, %c0_293] : memref<9x16x1xf32, #tpu.memory_space<vmem>>, vector<1x16x1xf32>
    %312 = vector.shape_cast %311 : vector<1x16x1xf32> to vector<16x1xf32>
    %313 = vector.broadcast %312 : vector<16x1xf32> to vector<16x512xf32>
    %314 = arith.addf %310, %313 : vector<16x512xf32>
    %cst_294 = arith.constant 0.000000e+00 : f32
    %315 = vector.broadcast %cst_294 : f32 to vector<16x512xf32>
    %316 = arith.maximumf %314, %315 : vector<16x512xf32>
    %317 = vector.broadcast %0 : vector<1x512xf32> to vector<16x512xf32>
    %318 = arith.mulf %316, %317 : vector<16x512xf32>
    %319 = vector.extract_strided_slice %318 {offsets = [0, 0], sizes = [16, 256], strides = [1, 1]} : vector<16x512xf32> to vector<16x256xf32>
    %c0_295 = arith.constant 0 : index
    %c17_296 = arith.constant 17 : index
    %320 = vector.load %arg8[%c0_295, %c17_296] : memref<16x768xf32, #tpu.memory_space<vmem>>, vector<16x256xf32>
    tpu.vector_store %arg8[%c0_295, %c17_296], %319 {strides = array<i32>} : memref<16x768xf32, #tpu.memory_space<vmem>>, vector<16x256xf32>,
    %321 = vector.extract_strided_slice %318 {offsets = [0, 256], sizes = [16, 256], strides = [1, 1]} : vector<16x512xf32> to vector<16x256xf32>
    %c0_297 = arith.constant 0 : index
    %c401_298 = arith.constant 401 : index
    %322 = vector.load %arg8[%c0_297, %c401_298] : memref<16x768xf32, #tpu.memory_space<vmem>>, vector<16x256xf32>
    tpu.vector_store %arg8[%c0_297, %c401_298], %321 {strides = array<i32>} : memref<16x768xf32, #tpu.memory_space<vmem>>, vector<16x256xf32>,
    %c0_299 = arith.constant 0 : index
    %c0_300 = arith.constant 0 : index
    %323 = vector.load %arg8[%c0_299, %c0_300] : memref<16x768xf32, #tpu.memory_space<vmem>>, vector<16x768xf32>
    %324 = vector.extract_strided_slice %323 {offsets = [0, 0], sizes = [16, 256], strides = [1, 1]} : vector<16x768xf32> to vector<16x256xf32>
    %c0_301 = arith.constant 0 : index
    %c0_302 = arith.constant 0 : index
    %325 = vector.load %arg9[%c0_301, %c0_302] : memref<144x512xf32, #tpu.memory_space<vmem>>, vector<16x256xf32>
    tpu.vector_store %arg9[%c0_301, %c0_302], %324 {strides = array<i32>} : memref<144x512xf32, #tpu.memory_space<vmem>>, vector<16x256xf32>,
    %326 = vector.extract_strided_slice %323 {offsets = [0, 384], sizes = [16, 256], strides = [1, 1]} : vector<16x768xf32> to vector<16x256xf32>
    %c0_303 = arith.constant 0 : index
    %c256_304 = arith.constant 256 : index
    %327 = vector.load %arg9[%c0_303, %c256_304] : memref<144x512xf32, #tpu.memory_space<vmem>>, vector<16x256xf32>
    tpu.vector_store %arg9[%c0_303, %c256_304], %326 {strides = array<i32>} : memref<144x512xf32, #tpu.memory_space<vmem>>, vector<16x256xf32>,
    %328 = vector.extract_strided_slice %323 {offsets = [0, 1], sizes = [16, 256], strides = [1, 1]} : vector<16x768xf32> to vector<16x256xf32>
    %c16_305 = arith.constant 16 : index
    %c0_306 = arith.constant 0 : index
    %329 = vector.load %arg9[%c16_305, %c0_306] : memref<144x512xf32, #tpu.memory_space<vmem>>, vector<16x256xf32>
    tpu.vector_store %arg9[%c16_305, %c0_306], %328 {strides = array<i32>} : memref<144x512xf32, #tpu.memory_space<vmem>>, vector<16x256xf32>,
    %330 = vector.extract_strided_slice %323 {offsets = [0, 385], sizes = [16, 256], strides = [1, 1]} : vector<16x768xf32> to vector<16x256xf32>
    %c16_307 = arith.constant 16 : index
    %c256_308 = arith.constant 256 : index
    %331 = vector.load %arg9[%c16_307, %c256_308] : memref<144x512xf32, #tpu.memory_space<vmem>>, vector<16x256xf32>
    tpu.vector_store %arg9[%c16_307, %c256_308], %330 {strides = array<i32>} : memref<144x512xf32, #tpu.memory_space<vmem>>, vector<16x256xf32>,
    %332 = vector.extract_strided_slice %323 {offsets = [0, 2], sizes = [16, 256], strides = [1, 1]} : vector<16x768xf32> to vector<16x256xf32>
    %c32_309 = arith.constant 32 : index
    %c0_310 = arith.constant 0 : index
    %333 = vector.load %arg9[%c32_309, %c0_310] : memref<144x512xf32, #tpu.memory_space<vmem>>, vector<16x256xf32>
    tpu.vector_store %arg9[%c32_309, %c0_310], %332 {strides = array<i32>} : memref<144x512xf32, #tpu.memory_space<vmem>>, vector<16x256xf32>,
    %334 = vector.extract_strided_slice %323 {offsets = [0, 386], sizes = [16, 256], strides = [1, 1]} : vector<16x768xf32> to vector<16x256xf32>
    %c32_311 = arith.constant 32 : index
    %c256_312 = arith.constant 256 : index
    %335 = vector.load %arg9[%c32_311, %c256_312] : memref<144x512xf32, #tpu.memory_space<vmem>>, vector<16x256xf32>
    tpu.vector_store %arg9[%c32_311, %c256_312], %334 {strides = array<i32>} : memref<144x512xf32, #tpu.memory_space<vmem>>, vector<16x256xf32>,
    %336 = vector.extract_strided_slice %323 {offsets = [0, 16], sizes = [16, 256], strides = [1, 1]} : vector<16x768xf32> to vector<16x256xf32>
    %c48_313 = arith.constant 48 : index
    %c0_314 = arith.constant 0 : index
    %337 = vector.load %arg9[%c48_313, %c0_314] : memref<144x512xf32, #tpu.memory_space<vmem>>, vector<16x256xf32>
    tpu.vector_store %arg9[%c48_313, %c0_314], %336 {strides = array<i32>} : memref<144x512xf32, #tpu.memory_space<vmem>>, vector<16x256xf32>,
    %338 = vector.extract_strided_slice %323 {offsets = [0, 400], sizes = [16, 256], strides = [1, 1]} : vector<16x768xf32> to vector<16x256xf32>
    %c48_315 = arith.constant 48 : index
    %c256_316 = arith.constant 256 : index
    %339 = vector.load %arg9[%c48_315, %c256_316] : memref<144x512xf32, #tpu.memory_space<vmem>>, vector<16x256xf32>
    tpu.vector_store %arg9[%c48_315, %c256_316], %338 {strides = array<i32>} : memref<144x512xf32, #tpu.memory_space<vmem>>, vector<16x256xf32>,
    %340 = vector.extract_strided_slice %323 {offsets = [0, 17], sizes = [16, 256], strides = [1, 1]} : vector<16x768xf32> to vector<16x256xf32>
    %c64_317 = arith.constant 64 : index
    %c0_318 = arith.constant 0 : index
    %341 = vector.load %arg9[%c64_317, %c0_318] : memref<144x512xf32, #tpu.memory_space<vmem>>, vector<16x256xf32>
    tpu.vector_store %arg9[%c64_317, %c0_318], %340 {strides = array<i32>} : memref<144x512xf32, #tpu.memory_space<vmem>>, vector<16x256xf32>,
    %342 = vector.extract_strided_slice %323 {offsets = [0, 401], sizes = [16, 256], strides = [1, 1]} : vector<16x768xf32> to vector<16x256xf32>
    %c64_319 = arith.constant 64 : index
    %c256_320 = arith.constant 256 : index
    %343 = vector.load %arg9[%c64_319, %c256_320] : memref<144x512xf32, #tpu.memory_space<vmem>>, vector<16x256xf32>
    tpu.vector_store %arg9[%c64_319, %c256_320], %342 {strides = array<i32>} : memref<144x512xf32, #tpu.memory_space<vmem>>, vector<16x256xf32>,
    %344 = vector.extract_strided_slice %323 {offsets = [0, 18], sizes = [16, 256], strides = [1, 1]} : vector<16x768xf32> to vector<16x256xf32>
    %c80_321 = arith.constant 80 : index
    %c0_322 = arith.constant 0 : index
    %345 = vector.load %arg9[%c80_321, %c0_322] : memref<144x512xf32, #tpu.memory_space<vmem>>, vector<16x256xf32>
    tpu.vector_store %arg9[%c80_321, %c0_322], %344 {strides = array<i32>} : memref<144x512xf32, #tpu.memory_space<vmem>>, vector<16x256xf32>,
    %346 = vector.extract_strided_slice %323 {offsets = [0, 402], sizes = [16, 256], strides = [1, 1]} : vector<16x768xf32> to vector<16x256xf32>
    %c80_323 = arith.constant 80 : index
    %c256_324 = arith.constant 256 : index
    %347 = vector.load %arg9[%c80_323, %c256_324] : memref<144x512xf32, #tpu.memory_space<vmem>>, vector<16x256xf32>
    tpu.vector_store %arg9[%c80_323, %c256_324], %346 {strides = array<i32>} : memref<144x512xf32, #tpu.memory_space<vmem>>, vector<16x256xf32>,
    %348 = vector.extract_strided_slice %323 {offsets = [0, 32], sizes = [16, 256], strides = [1, 1]} : vector<16x768xf32> to vector<16x256xf32>
    %c96_325 = arith.constant 96 : index
    %c0_326 = arith.constant 0 : index
    %349 = vector.load %arg9[%c96_325, %c0_326] : memref<144x512xf32, #tpu.memory_space<vmem>>, vector<16x256xf32>
    tpu.vector_store %arg9[%c96_325, %c0_326], %348 {strides = array<i32>} : memref<144x512xf32, #tpu.memory_space<vmem>>, vector<16x256xf32>,
    %350 = vector.extract_strided_slice %323 {offsets = [0, 416], sizes = [16, 256], strides = [1, 1]} : vector<16x768xf32> to vector<16x256xf32>
    %c96_327 = arith.constant 96 : index
    %c256_328 = arith.constant 256 : index
    %351 = vector.load %arg9[%c96_327, %c256_328] : memref<144x512xf32, #tpu.memory_space<vmem>>, vector<16x256xf32>
    tpu.vector_store %arg9[%c96_327, %c256_328], %350 {strides = array<i32>} : memref<144x512xf32, #tpu.memory_space<vmem>>, vector<16x256xf32>,
    %352 = vector.extract_strided_slice %323 {offsets = [0, 33], sizes = [16, 256], strides = [1, 1]} : vector<16x768xf32> to vector<16x256xf32>
    %c112_329 = arith.constant 112 : index
    %c0_330 = arith.constant 0 : index
    %353 = vector.load %arg9[%c112_329, %c0_330] : memref<144x512xf32, #tpu.memory_space<vmem>>, vector<16x256xf32>
    tpu.vector_store %arg9[%c112_329, %c0_330], %352 {strides = array<i32>} : memref<144x512xf32, #tpu.memory_space<vmem>>, vector<16x256xf32>,
    %354 = vector.extract_strided_slice %323 {offsets = [0, 417], sizes = [16, 256], strides = [1, 1]} : vector<16x768xf32> to vector<16x256xf32>
    %c112_331 = arith.constant 112 : index
    %c256_332 = arith.constant 256 : index
    %355 = vector.load %arg9[%c112_331, %c256_332] : memref<144x512xf32, #tpu.memory_space<vmem>>, vector<16x256xf32>
    tpu.vector_store %arg9[%c112_331, %c256_332], %354 {strides = array<i32>} : memref<144x512xf32, #tpu.memory_space<vmem>>, vector<16x256xf32>,
    %356 = vector.extract_strided_slice %323 {offsets = [0, 34], sizes = [16, 256], strides = [1, 1]} : vector<16x768xf32> to vector<16x256xf32>
    %c128_333 = arith.constant 128 : index
    %c0_334 = arith.constant 0 : index
    %357 = vector.load %arg9[%c128_333, %c0_334] : memref<144x512xf32, #tpu.memory_space<vmem>>, vector<16x256xf32>
    tpu.vector_store %arg9[%c128_333, %c0_334], %356 {strides = array<i32>} : memref<144x512xf32, #tpu.memory_space<vmem>>, vector<16x256xf32>,
    %358 = vector.extract_strided_slice %323 {offsets = [0, 418], sizes = [16, 256], strides = [1, 1]} : vector<16x768xf32> to vector<16x256xf32>
    %c128_335 = arith.constant 128 : index
    %c256_336 = arith.constant 256 : index
    %359 = vector.load %arg9[%c128_335, %c256_336] : memref<144x512xf32, #tpu.memory_space<vmem>>, vector<16x256xf32>
    tpu.vector_store %arg9[%c128_335, %c256_336], %358 {strides = array<i32>} : memref<144x512xf32, #tpu.memory_space<vmem>>, vector<16x256xf32>,
    %c6 = arith.constant 6 : index
    %c0_337 = arith.constant 0 : index
    %c0_338 = arith.constant 0 : index
    %360 = vector.load %arg1[%c6, %c0_337, %c0_338] : memref<9x16x144xf32, #tpu.memory_space<vmem>>, vector<1x16x144xf32>
    %361 = vector.shape_cast %360 : vector<1x16x144xf32> to vector<16x144xf32>
    %c0_339 = arith.constant 0 : index
    %c0_340 = arith.constant 0 : index
    %362 = vector.load %arg9[%c0_339, %c0_340] : memref<144x512xf32, #tpu.memory_space<vmem>>, vector<144x512xf32>
    %cst_341 = arith.constant dense<0.000000e+00> : vector<16x512xf32>
    %363 = tpu.matmul %361, %362, %cst_341 {dimension_numbers = #tpu.dot_dimension_numbers<[1], [0], [0], [1], [0, 0, 1, 1], [], []>} : vector<16x144xf32>, vector<144x512xf32>, vector<16x512xf32> -> vector<16x512xf32>
    %c6_342 = arith.constant 6 : index
    %c0_343 = arith.constant 0 : index
    %c0_344 = arith.constant 0 : index
    %364 = vector.load %arg2[%c6_342, %c0_343, %c0_344] : memref<9x16x1xf32, #tpu.memory_space<vmem>>, vector<1x16x1xf32>
    %365 = vector.shape_cast %364 : vector<1x16x1xf32> to vector<16x1xf32>
    %366 = vector.broadcast %365 : vector<16x1xf32> to vector<16x512xf32>
    %367 = arith.addf %363, %366 : vector<16x512xf32>
    %368 = arith.addf %367, %265 : vector<16x512xf32>
    %cst_345 = arith.constant 0.000000e+00 : f32
    %369 = vector.broadcast %cst_345 : f32 to vector<16x512xf32>
    %370 = arith.maximumf %368, %369 : vector<16x512xf32>
    %371 = vector.broadcast %0 : vector<1x512xf32> to vector<16x512xf32>
    %372 = arith.mulf %370, %371 : vector<16x512xf32>
    %373 = vector.extract_strided_slice %372 {offsets = [0, 0], sizes = [16, 256], strides = [1, 1]} : vector<16x512xf32> to vector<16x256xf32>
    %c0_346 = arith.constant 0 : index
    %c17_347 = arith.constant 17 : index
    %374 = vector.load %arg8[%c0_346, %c17_347] : memref<16x768xf32, #tpu.memory_space<vmem>>, vector<16x256xf32>
    tpu.vector_store %arg8[%c0_346, %c17_347], %373 {strides = array<i32>} : memref<16x768xf32, #tpu.memory_space<vmem>>, vector<16x256xf32>,
    %375 = vector.extract_strided_slice %372 {offsets = [0, 256], sizes = [16, 256], strides = [1, 1]} : vector<16x512xf32> to vector<16x256xf32>
    %c0_348 = arith.constant 0 : index
    %c401_349 = arith.constant 401 : index
    %376 = vector.load %arg8[%c0_348, %c401_349] : memref<16x768xf32, #tpu.memory_space<vmem>>, vector<16x256xf32>
    tpu.vector_store %arg8[%c0_348, %c401_349], %375 {strides = array<i32>} : memref<16x768xf32, #tpu.memory_space<vmem>>, vector<16x256xf32>,
    %c0_350 = arith.constant 0 : index
    %c0_351 = arith.constant 0 : index
    %377 = vector.load %arg8[%c0_350, %c0_351] : memref<16x768xf32, #tpu.memory_space<vmem>>, vector<16x768xf32>
    %378 = vector.extract_strided_slice %377 {offsets = [0, 0], sizes = [16, 256], strides = [1, 1]} : vector<16x768xf32> to vector<16x256xf32>
    %c0_352 = arith.constant 0 : index
    %c0_353 = arith.constant 0 : index
    %379 = vector.load %arg9[%c0_352, %c0_353] : memref<144x512xf32, #tpu.memory_space<vmem>>, vector<16x256xf32>
    tpu.vector_store %arg9[%c0_352, %c0_353], %378 {strides = array<i32>} : memref<144x512xf32, #tpu.memory_space<vmem>>, vector<16x256xf32>,
    %380 = vector.extract_strided_slice %377 {offsets = [0, 384], sizes = [16, 256], strides = [1, 1]} : vector<16x768xf32> to vector<16x256xf32>
    %c0_354 = arith.constant 0 : index
    %c256_355 = arith.constant 256 : index
    %381 = vector.load %arg9[%c0_354, %c256_355] : memref<144x512xf32, #tpu.memory_space<vmem>>, vector<16x256xf32>
    tpu.vector_store %arg9[%c0_354, %c256_355], %380 {strides = array<i32>} : memref<144x512xf32, #tpu.memory_space<vmem>>, vector<16x256xf32>,
    %382 = vector.extract_strided_slice %377 {offsets = [0, 1], sizes = [16, 256], strides = [1, 1]} : vector<16x768xf32> to vector<16x256xf32>
    %c16_356 = arith.constant 16 : index
    %c0_357 = arith.constant 0 : index
    %383 = vector.load %arg9[%c16_356, %c0_357] : memref<144x512xf32, #tpu.memory_space<vmem>>, vector<16x256xf32>
    tpu.vector_store %arg9[%c16_356, %c0_357], %382 {strides = array<i32>} : memref<144x512xf32, #tpu.memory_space<vmem>>, vector<16x256xf32>,
    %384 = vector.extract_strided_slice %377 {offsets = [0, 385], sizes = [16, 256], strides = [1, 1]} : vector<16x768xf32> to vector<16x256xf32>
    %c16_358 = arith.constant 16 : index
    %c256_359 = arith.constant 256 : index
    %385 = vector.load %arg9[%c16_358, %c256_359] : memref<144x512xf32, #tpu.memory_space<vmem>>, vector<16x256xf32>
    tpu.vector_store %arg9[%c16_358, %c256_359], %384 {strides = array<i32>} : memref<144x512xf32, #tpu.memory_space<vmem>>, vector<16x256xf32>,
    %386 = vector.extract_strided_slice %377 {offsets = [0, 2], sizes = [16, 256], strides = [1, 1]} : vector<16x768xf32> to vector<16x256xf32>
    %c32_360 = arith.constant 32 : index
    %c0_361 = arith.constant 0 : index
    %387 = vector.load %arg9[%c32_360, %c0_361] : memref<144x512xf32, #tpu.memory_space<vmem>>, vector<16x256xf32>
    tpu.vector_store %arg9[%c32_360, %c0_361], %386 {strides = array<i32>} : memref<144x512xf32, #tpu.memory_space<vmem>>, vector<16x256xf32>,
    %388 = vector.extract_strided_slice %377 {offsets = [0, 386], sizes = [16, 256], strides = [1, 1]} : vector<16x768xf32> to vector<16x256xf32>
    %c32_362 = arith.constant 32 : index
    %c256_363 = arith.constant 256 : index
    %389 = vector.load %arg9[%c32_362, %c256_363] : memref<144x512xf32, #tpu.memory_space<vmem>>, vector<16x256xf32>
    tpu.vector_store %arg9[%c32_362, %c256_363], %388 {strides = array<i32>} : memref<144x512xf32, #tpu.memory_space<vmem>>, vector<16x256xf32>,
    %390 = vector.extract_strided_slice %377 {offsets = [0, 16], sizes = [16, 256], strides = [1, 1]} : vector<16x768xf32> to vector<16x256xf32>
    %c48_364 = arith.constant 48 : index
    %c0_365 = arith.constant 0 : index
    %391 = vector.load %arg9[%c48_364, %c0_365] : memref<144x512xf32, #tpu.memory_space<vmem>>, vector<16x256xf32>
    tpu.vector_store %arg9[%c48_364, %c0_365], %390 {strides = array<i32>} : memref<144x512xf32, #tpu.memory_space<vmem>>, vector<16x256xf32>,
    %392 = vector.extract_strided_slice %377 {offsets = [0, 400], sizes = [16, 256], strides = [1, 1]} : vector<16x768xf32> to vector<16x256xf32>
    %c48_366 = arith.constant 48 : index
    %c256_367 = arith.constant 256 : index
    %393 = vector.load %arg9[%c48_366, %c256_367] : memref<144x512xf32, #tpu.memory_space<vmem>>, vector<16x256xf32>
    tpu.vector_store %arg9[%c48_366, %c256_367], %392 {strides = array<i32>} : memref<144x512xf32, #tpu.memory_space<vmem>>, vector<16x256xf32>,
    %394 = vector.extract_strided_slice %377 {offsets = [0, 17], sizes = [16, 256], strides = [1, 1]} : vector<16x768xf32> to vector<16x256xf32>
    %c64_368 = arith.constant 64 : index
    %c0_369 = arith.constant 0 : index
    %395 = vector.load %arg9[%c64_368, %c0_369] : memref<144x512xf32, #tpu.memory_space<vmem>>, vector<16x256xf32>
    tpu.vector_store %arg9[%c64_368, %c0_369], %394 {strides = array<i32>} : memref<144x512xf32, #tpu.memory_space<vmem>>, vector<16x256xf32>,
    %396 = vector.extract_strided_slice %377 {offsets = [0, 401], sizes = [16, 256], strides = [1, 1]} : vector<16x768xf32> to vector<16x256xf32>
    %c64_370 = arith.constant 64 : index
    %c256_371 = arith.constant 256 : index
    %397 = vector.load %arg9[%c64_370, %c256_371] : memref<144x512xf32, #tpu.memory_space<vmem>>, vector<16x256xf32>
    tpu.vector_store %arg9[%c64_370, %c256_371], %396 {strides = array<i32>} : memref<144x512xf32, #tpu.memory_space<vmem>>, vector<16x256xf32>,
    %398 = vector.extract_strided_slice %377 {offsets = [0, 18], sizes = [16, 256], strides = [1, 1]} : vector<16x768xf32> to vector<16x256xf32>
    %c80_372 = arith.constant 80 : index
    %c0_373 = arith.constant 0 : index
    %399 = vector.load %arg9[%c80_372, %c0_373] : memref<144x512xf32, #tpu.memory_space<vmem>>, vector<16x256xf32>
    tpu.vector_store %arg9[%c80_372, %c0_373], %398 {strides = array<i32>} : memref<144x512xf32, #tpu.memory_space<vmem>>, vector<16x256xf32>,
    %400 = vector.extract_strided_slice %377 {offsets = [0, 402], sizes = [16, 256], strides = [1, 1]} : vector<16x768xf32> to vector<16x256xf32>
    %c80_374 = arith.constant 80 : index
    %c256_375 = arith.constant 256 : index
    %401 = vector.load %arg9[%c80_374, %c256_375] : memref<144x512xf32, #tpu.memory_space<vmem>>, vector<16x256xf32>
    tpu.vector_store %arg9[%c80_374, %c256_375], %400 {strides = array<i32>} : memref<144x512xf32, #tpu.memory_space<vmem>>, vector<16x256xf32>,
    %402 = vector.extract_strided_slice %377 {offsets = [0, 32], sizes = [16, 256], strides = [1, 1]} : vector<16x768xf32> to vector<16x256xf32>
    %c96_376 = arith.constant 96 : index
    %c0_377 = arith.constant 0 : index
    %403 = vector.load %arg9[%c96_376, %c0_377] : memref<144x512xf32, #tpu.memory_space<vmem>>, vector<16x256xf32>
    tpu.vector_store %arg9[%c96_376, %c0_377], %402 {strides = array<i32>} : memref<144x512xf32, #tpu.memory_space<vmem>>, vector<16x256xf32>,
    %404 = vector.extract_strided_slice %377 {offsets = [0, 416], sizes = [16, 256], strides = [1, 1]} : vector<16x768xf32> to vector<16x256xf32>
    %c96_378 = arith.constant 96 : index
    %c256_379 = arith.constant 256 : index
    %405 = vector.load %arg9[%c96_378, %c256_379] : memref<144x512xf32, #tpu.memory_space<vmem>>, vector<16x256xf32>
    tpu.vector_store %arg9[%c96_378, %c256_379], %404 {strides = array<i32>} : memref<144x512xf32, #tpu.memory_space<vmem>>, vector<16x256xf32>,
    %406 = vector.extract_strided_slice %377 {offsets = [0, 33], sizes = [16, 256], strides = [1, 1]} : vector<16x768xf32> to vector<16x256xf32>
    %c112_380 = arith.constant 112 : index
    %c0_381 = arith.constant 0 : index
    %407 = vector.load %arg9[%c112_380, %c0_381] : memref<144x512xf32, #tpu.memory_space<vmem>>, vector<16x256xf32>
    tpu.vector_store %arg9[%c112_380, %c0_381], %406 {strides = array<i32>} : memref<144x512xf32, #tpu.memory_space<vmem>>, vector<16x256xf32>,
    %408 = vector.extract_strided_slice %377 {offsets = [0, 417], sizes = [16, 256], strides = [1, 1]} : vector<16x768xf32> to vector<16x256xf32>
    %c112_382 = arith.constant 112 : index
    %c256_383 = arith.constant 256 : index
    %409 = vector.load %arg9[%c112_382, %c256_383] : memref<144x512xf32, #tpu.memory_space<vmem>>, vector<16x256xf32>
    tpu.vector_store %arg9[%c112_382, %c256_383], %408 {strides = array<i32>} : memref<144x512xf32, #tpu.memory_space<vmem>>, vector<16x256xf32>,
    %410 = vector.extract_strided_slice %377 {offsets = [0, 34], sizes = [16, 256], strides = [1, 1]} : vector<16x768xf32> to vector<16x256xf32>
    %c128_384 = arith.constant 128 : index
    %c0_385 = arith.constant 0 : index
    %411 = vector.load %arg9[%c128_384, %c0_385] : memref<144x512xf32, #tpu.memory_space<vmem>>, vector<16x256xf32>
    tpu.vector_store %arg9[%c128_384, %c0_385], %410 {strides = array<i32>} : memref<144x512xf32, #tpu.memory_space<vmem>>, vector<16x256xf32>,
    %412 = vector.extract_strided_slice %377 {offsets = [0, 418], sizes = [16, 256], strides = [1, 1]} : vector<16x768xf32> to vector<16x256xf32>
    %c128_386 = arith.constant 128 : index
    %c256_387 = arith.constant 256 : index
    %413 = vector.load %arg9[%c128_386, %c256_387] : memref<144x512xf32, #tpu.memory_space<vmem>>, vector<16x256xf32>
    tpu.vector_store %arg9[%c128_386, %c256_387], %412 {strides = array<i32>} : memref<144x512xf32, #tpu.memory_space<vmem>>, vector<16x256xf32>,
    %c7 = arith.constant 7 : index
    %c0_388 = arith.constant 0 : index
    %c0_389 = arith.constant 0 : index
    %414 = vector.load %arg1[%c7, %c0_388, %c0_389] : memref<9x16x144xf32, #tpu.memory_space<vmem>>, vector<1x16x144xf32>
    %415 = vector.shape_cast %414 : vector<1x16x144xf32> to vector<16x144xf32>
    %c0_390 = arith.constant 0 : index
    %c0_391 = arith.constant 0 : index
    %416 = vector.load %arg9[%c0_390, %c0_391] : memref<144x512xf32, #tpu.memory_space<vmem>>, vector<144x512xf32>
    %cst_392 = arith.constant dense<0.000000e+00> : vector<16x512xf32>
    %417 = tpu.matmul %415, %416, %cst_392 {dimension_numbers = #tpu.dot_dimension_numbers<[1], [0], [0], [1], [0, 0, 1, 1], [], []>} : vector<16x144xf32>, vector<144x512xf32>, vector<16x512xf32> -> vector<16x512xf32>
    %c7_393 = arith.constant 7 : index
    %c0_394 = arith.constant 0 : index
    %c0_395 = arith.constant 0 : index
    %418 = vector.load %arg2[%c7_393, %c0_394, %c0_395] : memref<9x16x1xf32, #tpu.memory_space<vmem>>, vector<1x16x1xf32>
    %419 = vector.shape_cast %418 : vector<1x16x1xf32> to vector<16x1xf32>
    %420 = vector.broadcast %419 : vector<16x1xf32> to vector<16x512xf32>
    %421 = arith.addf %417, %420 : vector<16x512xf32>
    %cst_396 = arith.constant 0.000000e+00 : f32
    %422 = vector.broadcast %cst_396 : f32 to vector<16x512xf32>
    %423 = arith.maximumf %421, %422 : vector<16x512xf32>
    %424 = vector.broadcast %0 : vector<1x512xf32> to vector<16x512xf32>
    %425 = arith.mulf %423, %424 : vector<16x512xf32>
    %426 = vector.extract_strided_slice %425 {offsets = [0, 0], sizes = [16, 256], strides = [1, 1]} : vector<16x512xf32> to vector<16x256xf32>
    %c0_397 = arith.constant 0 : index
    %c17_398 = arith.constant 17 : index
    %427 = vector.load %arg8[%c0_397, %c17_398] : memref<16x768xf32, #tpu.memory_space<vmem>>, vector<16x256xf32>
    tpu.vector_store %arg8[%c0_397, %c17_398], %426 {strides = array<i32>} : memref<16x768xf32, #tpu.memory_space<vmem>>, vector<16x256xf32>,
    %428 = vector.extract_strided_slice %425 {offsets = [0, 256], sizes = [16, 256], strides = [1, 1]} : vector<16x512xf32> to vector<16x256xf32>
    %c0_399 = arith.constant 0 : index
    %c401_400 = arith.constant 401 : index
    %429 = vector.load %arg8[%c0_399, %c401_400] : memref<16x768xf32, #tpu.memory_space<vmem>>, vector<16x256xf32>
    tpu.vector_store %arg8[%c0_399, %c401_400], %428 {strides = array<i32>} : memref<16x768xf32, #tpu.memory_space<vmem>>, vector<16x256xf32>,
    %c0_401 = arith.constant 0 : index
    %c0_402 = arith.constant 0 : index
    %430 = vector.load %arg8[%c0_401, %c0_402] : memref<16x768xf32, #tpu.memory_space<vmem>>, vector<16x768xf32>
    %431 = vector.extract_strided_slice %430 {offsets = [0, 0], sizes = [16, 256], strides = [1, 1]} : vector<16x768xf32> to vector<16x256xf32>
    %c0_403 = arith.constant 0 : index
    %c0_404 = arith.constant 0 : index
    %432 = vector.load %arg9[%c0_403, %c0_404] : memref<144x512xf32, #tpu.memory_space<vmem>>, vector<16x256xf32>
    tpu.vector_store %arg9[%c0_403, %c0_404], %431 {strides = array<i32>} : memref<144x512xf32, #tpu.memory_space<vmem>>, vector<16x256xf32>,
    %433 = vector.extract_strided_slice %430 {offsets = [0, 384], sizes = [16, 256], strides = [1, 1]} : vector<16x768xf32> to vector<16x256xf32>
    %c0_405 = arith.constant 0 : index
    %c256_406 = arith.constant 256 : index
    %434 = vector.load %arg9[%c0_405, %c256_406] : memref<144x512xf32, #tpu.memory_space<vmem>>, vector<16x256xf32>
    tpu.vector_store %arg9[%c0_405, %c256_406], %433 {strides = array<i32>} : memref<144x512xf32, #tpu.memory_space<vmem>>, vector<16x256xf32>,
    %435 = vector.extract_strided_slice %430 {offsets = [0, 1], sizes = [16, 256], strides = [1, 1]} : vector<16x768xf32> to vector<16x256xf32>
    %c16_407 = arith.constant 16 : index
    %c0_408 = arith.constant 0 : index
    %436 = vector.load %arg9[%c16_407, %c0_408] : memref<144x512xf32, #tpu.memory_space<vmem>>, vector<16x256xf32>
    tpu.vector_store %arg9[%c16_407, %c0_408], %435 {strides = array<i32>} : memref<144x512xf32, #tpu.memory_space<vmem>>, vector<16x256xf32>,
    %437 = vector.extract_strided_slice %430 {offsets = [0, 385], sizes = [16, 256], strides = [1, 1]} : vector<16x768xf32> to vector<16x256xf32>
    %c16_409 = arith.constant 16 : index
    %c256_410 = arith.constant 256 : index
    %438 = vector.load %arg9[%c16_409, %c256_410] : memref<144x512xf32, #tpu.memory_space<vmem>>, vector<16x256xf32>
    tpu.vector_store %arg9[%c16_409, %c256_410], %437 {strides = array<i32>} : memref<144x512xf32, #tpu.memory_space<vmem>>, vector<16x256xf32>,
    %439 = vector.extract_strided_slice %430 {offsets = [0, 2], sizes = [16, 256], strides = [1, 1]} : vector<16x768xf32> to vector<16x256xf32>
    %c32_411 = arith.constant 32 : index
    %c0_412 = arith.constant 0 : index
    %440 = vector.load %arg9[%c32_411, %c0_412] : memref<144x512xf32, #tpu.memory_space<vmem>>, vector<16x256xf32>
    tpu.vector_store %arg9[%c32_411, %c0_412], %439 {strides = array<i32>} : memref<144x512xf32, #tpu.memory_space<vmem>>, vector<16x256xf32>,
    %441 = vector.extract_strided_slice %430 {offsets = [0, 386], sizes = [16, 256], strides = [1, 1]} : vector<16x768xf32> to vector<16x256xf32>
    %c32_413 = arith.constant 32 : index
    %c256_414 = arith.constant 256 : index
    %442 = vector.load %arg9[%c32_413, %c256_414] : memref<144x512xf32, #tpu.memory_space<vmem>>, vector<16x256xf32>
    tpu.vector_store %arg9[%c32_413, %c256_414], %441 {strides = array<i32>} : memref<144x512xf32, #tpu.memory_space<vmem>>, vector<16x256xf32>,
    %443 = vector.extract_strided_slice %430 {offsets = [0, 16], sizes = [16, 256], strides = [1, 1]} : vector<16x768xf32> to vector<16x256xf32>
    %c48_415 = arith.constant 48 : index
    %c0_416 = arith.constant 0 : index
    %444 = vector.load %arg9[%c48_415, %c0_416] : memref<144x512xf32, #tpu.memory_space<vmem>>, vector<16x256xf32>
    tpu.vector_store %arg9[%c48_415, %c0_416], %443 {strides = array<i32>} : memref<144x512xf32, #tpu.memory_space<vmem>>, vector<16x256xf32>,
    %445 = vector.extract_strided_slice %430 {offsets = [0, 400], sizes = [16, 256], strides = [1, 1]} : vector<16x768xf32> to vector<16x256xf32>
    %c48_417 = arith.constant 48 : index
    %c256_418 = arith.constant 256 : index
    %446 = vector.load %arg9[%c48_417, %c256_418] : memref<144x512xf32, #tpu.memory_space<vmem>>, vector<16x256xf32>
    tpu.vector_store %arg9[%c48_417, %c256_418], %445 {strides = array<i32>} : memref<144x512xf32, #tpu.memory_space<vmem>>, vector<16x256xf32>,
    %447 = vector.extract_strided_slice %430 {offsets = [0, 17], sizes = [16, 256], strides = [1, 1]} : vector<16x768xf32> to vector<16x256xf32>
    %c64_419 = arith.constant 64 : index
    %c0_420 = arith.constant 0 : index
    %448 = vector.load %arg9[%c64_419, %c0_420] : memref<144x512xf32, #tpu.memory_space<vmem>>, vector<16x256xf32>
    tpu.vector_store %arg9[%c64_419, %c0_420], %447 {strides = array<i32>} : memref<144x512xf32, #tpu.memory_space<vmem>>, vector<16x256xf32>,
    %449 = vector.extract_strided_slice %430 {offsets = [0, 401], sizes = [16, 256], strides = [1, 1]} : vector<16x768xf32> to vector<16x256xf32>
    %c64_421 = arith.constant 64 : index
    %c256_422 = arith.constant 256 : index
    %450 = vector.load %arg9[%c64_421, %c256_422] : memref<144x512xf32, #tpu.memory_space<vmem>>, vector<16x256xf32>
    tpu.vector_store %arg9[%c64_421, %c256_422], %449 {strides = array<i32>} : memref<144x512xf32, #tpu.memory_space<vmem>>, vector<16x256xf32>,
    %451 = vector.extract_strided_slice %430 {offsets = [0, 18], sizes = [16, 256], strides = [1, 1]} : vector<16x768xf32> to vector<16x256xf32>
    %c80_423 = arith.constant 80 : index
    %c0_424 = arith.constant 0 : index
    %452 = vector.load %arg9[%c80_423, %c0_424] : memref<144x512xf32, #tpu.memory_space<vmem>>, vector<16x256xf32>
    tpu.vector_store %arg9[%c80_423, %c0_424], %451 {strides = array<i32>} : memref<144x512xf32, #tpu.memory_space<vmem>>, vector<16x256xf32>,
    %453 = vector.extract_strided_slice %430 {offsets = [0, 402], sizes = [16, 256], strides = [1, 1]} : vector<16x768xf32> to vector<16x256xf32>
    %c80_425 = arith.constant 80 : index
    %c256_426 = arith.constant 256 : index
    %454 = vector.load %arg9[%c80_425, %c256_426] : memref<144x512xf32, #tpu.memory_space<vmem>>, vector<16x256xf32>
    tpu.vector_store %arg9[%c80_425, %c256_426], %453 {strides = array<i32>} : memref<144x512xf32, #tpu.memory_space<vmem>>, vector<16x256xf32>,
    %455 = vector.extract_strided_slice %430 {offsets = [0, 32], sizes = [16, 256], strides = [1, 1]} : vector<16x768xf32> to vector<16x256xf32>
    %c96_427 = arith.constant 96 : index
    %c0_428 = arith.constant 0 : index
    %456 = vector.load %arg9[%c96_427, %c0_428] : memref<144x512xf32, #tpu.memory_space<vmem>>, vector<16x256xf32>
    tpu.vector_store %arg9[%c96_427, %c0_428], %455 {strides = array<i32>} : memref<144x512xf32, #tpu.memory_space<vmem>>, vector<16x256xf32>,
    %457 = vector.extract_strided_slice %430 {offsets = [0, 416], sizes = [16, 256], strides = [1, 1]} : vector<16x768xf32> to vector<16x256xf32>
    %c96_429 = arith.constant 96 : index
    %c256_430 = arith.constant 256 : index
    %458 = vector.load %arg9[%c96_429, %c256_430] : memref<144x512xf32, #tpu.memory_space<vmem>>, vector<16x256xf32>
    tpu.vector_store %arg9[%c96_429, %c256_430], %457 {strides = array<i32>} : memref<144x512xf32, #tpu.memory_space<vmem>>, vector<16x256xf32>,
    %459 = vector.extract_strided_slice %430 {offsets = [0, 33], sizes = [16, 256], strides = [1, 1]} : vector<16x768xf32> to vector<16x256xf32>
    %c112_431 = arith.constant 112 : index
    %c0_432 = arith.constant 0 : index
    %460 = vector.load %arg9[%c112_431, %c0_432] : memref<144x512xf32, #tpu.memory_space<vmem>>, vector<16x256xf32>
    tpu.vector_store %arg9[%c112_431, %c0_432], %459 {strides = array<i32>} : memref<144x512xf32, #tpu.memory_space<vmem>>, vector<16x256xf32>,
    %461 = vector.extract_strided_slice %430 {offsets = [0, 417], sizes = [16, 256], strides = [1, 1]} : vector<16x768xf32> to vector<16x256xf32>
    %c112_433 = arith.constant 112 : index
    %c256_434 = arith.constant 256 : index
    %462 = vector.load %arg9[%c112_433, %c256_434] : memref<144x512xf32, #tpu.memory_space<vmem>>, vector<16x256xf32>
    tpu.vector_store %arg9[%c112_433, %c256_434], %461 {strides = array<i32>} : memref<144x512xf32, #tpu.memory_space<vmem>>, vector<16x256xf32>,
    %463 = vector.extract_strided_slice %430 {offsets = [0, 34], sizes = [16, 256], strides = [1, 1]} : vector<16x768xf32> to vector<16x256xf32>
    %c128_435 = arith.constant 128 : index
    %c0_436 = arith.constant 0 : index
    %464 = vector.load %arg9[%c128_435, %c0_436] : memref<144x512xf32, #tpu.memory_space<vmem>>, vector<16x256xf32>
    tpu.vector_store %arg9[%c128_435, %c0_436], %463 {strides = array<i32>} : memref<144x512xf32, #tpu.memory_space<vmem>>, vector<16x256xf32>,
    %465 = vector.extract_strided_slice %430 {offsets = [0, 418], sizes = [16, 256], strides = [1, 1]} : vector<16x768xf32> to vector<16x256xf32>
    %c128_437 = arith.constant 128 : index
    %c256_438 = arith.constant 256 : index
    %466 = vector.load %arg9[%c128_437, %c256_438] : memref<144x512xf32, #tpu.memory_space<vmem>>, vector<16x256xf32>
    tpu.vector_store %arg9[%c128_437, %c256_438], %465 {strides = array<i32>} : memref<144x512xf32, #tpu.memory_space<vmem>>, vector<16x256xf32>,
    %c8 = arith.constant 8 : index
    %c0_439 = arith.constant 0 : index
    %c0_440 = arith.constant 0 : index
    %467 = vector.load %arg1[%c8, %c0_439, %c0_440] : memref<9x16x144xf32, #tpu.memory_space<vmem>>, vector<1x16x144xf32>
    %468 = vector.shape_cast %467 : vector<1x16x144xf32> to vector<16x144xf32>
    %c0_441 = arith.constant 0 : index
    %c0_442 = arith.constant 0 : index
    %469 = vector.load %arg9[%c0_441, %c0_442] : memref<144x512xf32, #tpu.memory_space<vmem>>, vector<144x512xf32>
    %cst_443 = arith.constant dense<0.000000e+00> : vector<16x512xf32>
    %470 = tpu.matmul %468, %469, %cst_443 {dimension_numbers = #tpu.dot_dimension_numbers<[1], [0], [0], [1], [0, 0, 1, 1], [], []>} : vector<16x144xf32>, vector<144x512xf32>, vector<16x512xf32> -> vector<16x512xf32>
    %c8_444 = arith.constant 8 : index
    %c0_445 = arith.constant 0 : index
    %c0_446 = arith.constant 0 : index
    %471 = vector.load %arg2[%c8_444, %c0_445, %c0_446] : memref<9x16x1xf32, #tpu.memory_space<vmem>>, vector<1x16x1xf32>
    %472 = vector.shape_cast %471 : vector<1x16x1xf32> to vector<16x1xf32>
    %473 = vector.broadcast %472 : vector<16x1xf32> to vector<16x512xf32>
    %474 = arith.addf %470, %473 : vector<16x512xf32>
    %475 = arith.addf %474, %372 : vector<16x512xf32>
    %cst_447 = arith.constant 0.000000e+00 : f32
    %476 = vector.broadcast %cst_447 : f32 to vector<16x512xf32>
    %477 = arith.maximumf %475, %476 : vector<16x512xf32>
    %478 = vector.broadcast %0 : vector<1x512xf32> to vector<16x512xf32>
    %479 = arith.mulf %477, %478 : vector<16x512xf32>
    %c0_448 = arith.constant 0 : index
    %c0_449 = arith.constant 0 : index
    %480 = vector.load %arg5[%c0_448, %c0_449] : memref<512x28xf32, #tpu.memory_space<vmem>>, vector<512x28xf32>
    %cst_450 = arith.constant dense<0.000000e+00> : vector<16x28xf32>
    %481 = tpu.matmul %479, %480, %cst_450 {dimension_numbers = #tpu.dot_dimension_numbers<[1], [0], [0], [1], [0, 0, 1, 1], [], []>} : vector<16x512xf32>, vector<512x28xf32>, vector<16x28xf32> -> vector<16x28xf32>
    %482 = vector.extract_strided_slice %481 {offsets = [0, 0], sizes = [16, 14], strides = [1, 1]} : vector<16x28xf32> to vector<16x14xf32>
    %c0_451 = arith.constant 0 : index
    %c0_452 = arith.constant 0 : index
    %483 = vector.load %arg3[%c0_451, %c0_452] : memref<8x16xf32, #tpu.memory_space<vmem>>, vector<8x16xf32>
    %cst_453 = arith.constant dense<0.000000e+00> : vector<8x14xf32>
    %484 = tpu.matmul %483, %482, %cst_453 {dimension_numbers = #tpu.dot_dimension_numbers<[1], [0], [0], [1], [0, 0, 1, 1], [], []>} : vector<8x16xf32>, vector<16x14xf32>, vector<8x14xf32> -> vector<8x14xf32>
    %485 = math.tanh %484 : vector<8x14xf32>
    %c0_454 = arith.constant 0 : index
    %c0_455 = arith.constant 0 : index
    %486 = vector.load %arg4[%c0_454, %c0_455] : memref<4x8xf32, #tpu.memory_space<vmem>>, vector<4x8xf32>
    %cst_456 = arith.constant dense<0.000000e+00> : vector<4x14xf32>
    %487 = tpu.matmul %486, %485, %cst_456 {dimension_numbers = #tpu.dot_dimension_numbers<[1], [0], [0], [1], [0, 0, 1, 1], [], []>} : vector<4x8xf32>, vector<8x14xf32>, vector<4x14xf32> -> vector<4x14xf32>
    %cst_457 = arith.constant dense<0xFF800000> : vector<4xf32>
    %488 = vector.multi_reduction <maximumf>, %487, %cst_457 [1] : vector<4x14xf32> to vector<4xf32>
    %489 = vector.shape_cast %488 : vector<4xf32> to vector<4x1xf32>
    %490 = vector.broadcast %489 : vector<4x1xf32> to vector<4x14xf32>
    %491 = arith.subf %487, %490 : vector<4x14xf32>
    %492 = math.exp %491 : vector<4x14xf32>
    %cst_458 = arith.constant dense<0.000000e+00> : vector<4xf32>
    %493 = vector.multi_reduction <add>, %492, %cst_458 [1] : vector<4x14xf32> to vector<4xf32>
    %494 = vector.shape_cast %493 : vector<4xf32> to vector<4x1xf32>
    %495 = vector.broadcast %494 : vector<4x1xf32> to vector<4x14xf32>
    %496 = arith.divf %492, %495 : vector<4x14xf32>
    %cst_459 = arith.constant dense<0.000000e+00> : vector<14xf32>
    %497 = vector.multi_reduction <add>, %496, %cst_459 [0] : vector<4x14xf32> to vector<14xf32>
    %498 = vector.shape_cast %497 : vector<14xf32> to vector<1x14xf32>
    %499 = vector.broadcast %498 : vector<1x14xf32> to vector<16x14xf32>
    %500 = arith.mulf %482, %499 : vector<16x14xf32>
    %cst_460 = arith.constant dense<0.000000e+00> : vector<16xf32>
    %501 = vector.multi_reduction <add>, %500, %cst_460 [1] : vector<16x14xf32> to vector<16xf32>
    %502 = vector.shape_cast %501 : vector<16xf32> to vector<16x1xf32>
    %cst_461 = arith.constant 2.500000e-01 : f32
    %503 = vector.broadcast %cst_461 : f32 to vector<16x1xf32>
    %504 = arith.mulf %502, %503 : vector<16x1xf32>
    %505 = vector.extract_strided_slice %481 {offsets = [0, 14], sizes = [16, 14], strides = [1, 1]} : vector<16x28xf32> to vector<16x14xf32>
    %c0_462 = arith.constant 0 : index
    %c0_463 = arith.constant 0 : index
    %506 = vector.load %arg3[%c0_462, %c0_463] : memref<8x16xf32, #tpu.memory_space<vmem>>, vector<8x16xf32>
    %cst_464 = arith.constant dense<0.000000e+00> : vector<8x14xf32>
    %507 = tpu.matmul %506, %505, %cst_464 {dimension_numbers = #tpu.dot_dimension_numbers<[1], [0], [0], [1], [0, 0, 1, 1], [], []>} : vector<8x16xf32>, vector<16x14xf32>, vector<8x14xf32> -> vector<8x14xf32>
    %508 = math.tanh %507 : vector<8x14xf32>
    %c0_465 = arith.constant 0 : index
    %c0_466 = arith.constant 0 : index
    %509 = vector.load %arg4[%c0_465, %c0_466] : memref<4x8xf32, #tpu.memory_space<vmem>>, vector<4x8xf32>
    %cst_467 = arith.constant dense<0.000000e+00> : vector<4x14xf32>
    %510 = tpu.matmul %509, %508, %cst_467 {dimension_numbers = #tpu.dot_dimension_numbers<[1], [0], [0], [1], [0, 0, 1, 1], [], []>} : vector<4x8xf32>, vector<8x14xf32>, vector<4x14xf32> -> vector<4x14xf32>
    %cst_468 = arith.constant dense<0xFF800000> : vector<4xf32>
    %511 = vector.multi_reduction <maximumf>, %510, %cst_468 [1] : vector<4x14xf32> to vector<4xf32>
    %512 = vector.shape_cast %511 : vector<4xf32> to vector<4x1xf32>
    %513 = vector.broadcast %512 : vector<4x1xf32> to vector<4x14xf32>
    %514 = arith.subf %510, %513 : vector<4x14xf32>
    %515 = math.exp %514 : vector<4x14xf32>
    %cst_469 = arith.constant dense<0.000000e+00> : vector<4xf32>
    %516 = vector.multi_reduction <add>, %515, %cst_469 [1] : vector<4x14xf32> to vector<4xf32>
    %517 = vector.shape_cast %516 : vector<4xf32> to vector<4x1xf32>
    %518 = vector.broadcast %517 : vector<4x1xf32> to vector<4x14xf32>
    %519 = arith.divf %515, %518 : vector<4x14xf32>
    %cst_470 = arith.constant dense<0.000000e+00> : vector<14xf32>
    %520 = vector.multi_reduction <add>, %519, %cst_470 [0] : vector<4x14xf32> to vector<14xf32>
    %521 = vector.shape_cast %520 : vector<14xf32> to vector<1x14xf32>
    %522 = vector.broadcast %521 : vector<1x14xf32> to vector<16x14xf32>
    %523 = arith.mulf %505, %522 : vector<16x14xf32>
    %cst_471 = arith.constant dense<0.000000e+00> : vector<16xf32>
    %524 = vector.multi_reduction <add>, %523, %cst_471 [1] : vector<16x14xf32> to vector<16xf32>
    %525 = vector.shape_cast %524 : vector<16xf32> to vector<16x1xf32>
    %cst_472 = arith.constant 2.500000e-01 : f32
    %526 = vector.broadcast %cst_472 : f32 to vector<16x1xf32>
    %527 = arith.mulf %525, %526 : vector<16x1xf32>
    %528 = tpu.concatenate %504, %527 in 1 : vector<16x1xf32>, vector<16x1xf32> -> vector<16x2xf32>
    %c0_473 = arith.constant 0 : index
    %c0_474 = arith.constant 0 : index
    %529 = vector.load %arg7[%c0_473, %c0_474] : memref<16x2xf32, #tpu.memory_space<vmem>>, vector<16x2xf32>
    tpu.vector_store %arg7[%c0_473, %c0_474], %528 {strides = array<i32>} : memref<16x2xf32, #tpu.memory_space<vmem>>, vector<16x2xf32>,
    return
  }
}

</mosaic_0001>

<llo_original>
// kernel: drugvqa_protein_encoder.1
$region0: #{drugvqa_protein_encoder.1}
  #allocation0 [shape = 'u32[]', space=smem, size = 0x4, offset = 0x4, fixed_abs, tag = 'smem constant byte address 0x4 - core index']
  #allocation1 [shape = 'u32[144,128]{1,0:T(1,128)}', space=vmem, size = 0x12000, scoped, tag = 'internal scratch']
  #allocation2 [shape = 'f32[16,768]{1,0:T(8,128)}', space=vmem, size = 0xc000, scoped, tag = 'scratch operand']
  #allocation3 [shape = 'f32[144,512]{1,0:T(8,128)}', space=vmem, size = 0x48000, scoped, tag = 'scratch operand']
  %s0 = inlined_call_operand.vmem [shape: f32[16,768], index: 0, kind: input, shape index: {}]
  %s1 = inlined_call_operand.vmem [shape: f32[9,16,144], index: 1, kind: input, shape index: {}]
  %s2 = inlined_call_operand.vmem [shape: f32[9,16,1], index: 2, kind: input, shape index: {}]
  %s3 = inlined_call_operand.vmem [shape: f32[8,16], index: 3, kind: input, shape index: {}]
  %s4 = inlined_call_operand.vmem [shape: f32[4,8], index: 4, kind: input, shape index: {}]
  %s5 = inlined_call_operand.vmem [shape: f32[512,28], index: 5, kind: input, shape index: {}]
  %s6 = inlined_call_operand.vmem [shape: f32[1,512], index: 6, kind: input, shape index: {}]
  %s7 = inlined_call_operand.vmem [shape: f32[16,2], index: 7, kind: output, shape index: {}]
  %s8 = sld [smem:[#allocation0]]
  $region38: #{drugvqa_protein_encoder.1} parent=0
    _
  %s10 = ssub.s32 1, %s8
  %s11 = scalar_select 0, %s10, %s8
  // Predicated region
  $region2: #{drugvqa_protein_encoder.1} parent=0 // pred_check
    _
  $region3: #{drugvqa_protein_encoder.1} parent=0 // pred_check_branch
    %13 = sbr.rel (0) target = $region5
  $region4: #{drugvqa_protein_encoder.1} parent=0 // pred_region
    _
  $region5: #{drugvqa_protein_encoder.1} parent=0 // pred_fallthru
    _
  // Predicated region
  $region6: #{drugvqa_protein_encoder.1} parent=0 // pred_check
    _
  $region7: #{drugvqa_protein_encoder.1} parent=0 // pred_check_branch
    %15 = sbr.rel (0) target = $region9
  $region8: #{drugvqa_protein_encoder.1} parent=0 // pred_region
    _
  $region9: #{drugvqa_protein_encoder.1} parent=0 // pred_fallthru
    _
  // Predicated region
  $region10: #{drugvqa_protein_encoder.1} parent=0 // pred_check
    _
  $region11: #{drugvqa_protein_encoder.1} parent=0 // pred_check_branch
    %17 = sbr.rel (0) target = $region13
  $region12: #{drugvqa_protein_encoder.1} parent=0 // pred_region
    _
  $region13: #{drugvqa_protein_encoder.1} parent=0 // pred_fallthru
    _
  // Predicated region
  $region14: #{drugvqa_protein_encoder.1} parent=0 // pred_check
    _
  $region15: #{drugvqa_protein_encoder.1} parent=0 // pred_check_branch
    %19 = sbr.rel (0) target = $region17
  $region16: #{drugvqa_protein_encoder.1} parent=0 // pred_region
    _
  $region17: #{drugvqa_protein_encoder.1} parent=0 // pred_fallthru
    _
  // Predicated region
  $region18: #{drugvqa_protein_encoder.1} parent=0 // pred_check
    _
  $region19: #{drugvqa_protein_encoder.1} parent=0 // pred_check_branch
    %21 = sbr.rel (0) target = $region21
  $region20: #{drugvqa_protein_encoder.1} parent=0 // pred_region
    _
  $region21: #{drugvqa_protein_encoder.1} parent=0 // pred_fallthru
    _
  // Predicated region
  $region22: #{drugvqa_protein_encoder.1} parent=0 // pred_check
    _
  $region23: #{drugvqa_protein_encoder.1} parent=0 // pred_check_branch
    %23 = sbr.rel (0) target = $region25
  $region24: #{drugvqa_protein_encoder.1} parent=0 // pred_region
    _
  $region25: #{drugvqa_protein_encoder.1} parent=0 // pred_fallthru
    _
  // Predicated region
  $region26: #{drugvqa_protein_encoder.1} parent=0 // pred_check
    _
  $region27: #{drugvqa_protein_encoder.1} parent=0 // pred_check_branch
    %25 = sbr.rel (0) target = $region29
  $region28: #{drugvqa_protein_encoder.1} parent=0 // pred_region
    _
  $region29: #{drugvqa_protein_encoder.1} parent=0 // pred_fallthru
    _
  %v26 = vld [vmem:[%s6] sm:$0xf]
  %27 = vst [vmem:[#allocation2] sm:$0xff] 0.0
  %28 = vst [vmem:[#allocation2 + $0x8] sm:$0xff] 0.0
  %29 = vst [vmem:[#allocation2 + $0x10] sm:$0xff] 0.0
  %30 = vst [vmem:[#allocation2 + $0x18] sm:$0xff] 0.0
  %31 = vst [vmem:[#allocation2 + $0x20] sm:$0xff] 0.0
  %32 = vst [vmem:[#allocation2 + $0x28] sm:$0xff] 0.0
  %33 = vst [vmem:[#allocation2 + $0x30] sm:$0xff] 0.0
  %34 = vst [vmem:[#allocation2 + $0x38] sm:$0xff] 0.0
  %35 = vst [vmem:[#allocation2 + $0x40] sm:$0xff] 0.0
  %36 = vst [vmem:[#allocation2 + $0x48] sm:$0xff] 0.0
  %37 = vst [vmem:[#allocation2 + $0x50] sm:$0xff] 0.0
  %38 = vst [vmem:[#allocation2 + $0x58] sm:$0xff] 0.0
  %v39 = vld [vmem:[%s0] sm:$0xff]
  %v40 = vld [vmem:[%s0 + $0x8] sm:$0xff]
  %v41 = vld [vmem:[%s0 + $0x10] sm:$0xff]
  %v42 = vld [vmem:[%s0 + $0x18] sm:$0xff]
  %v43 = vld [vmem:[%s0 + $0x20] sm:$0xff]
  %v44 = vld [vmem:[%s0 + $0x28] sm:$0xff]
  %v45 = vld [vmem:[%s0 + $0x30] sm:$0xff]
  %v46 = vld [vmem:[%s0 + $0x38] sm:$0xff]
  %v47 = vld [vmem:[%s0 + $0x40] sm:$0xff]
  %v48 = vld [vmem:[%s0 + $0x48] sm:$0xff]
  %v49 = vld [vmem:[%s0 + $0x50] sm:$0xff]
  %v50 = vld [vmem:[%s0 + $0x58] sm:$0xff]
  %51 = vst [vmem:[#allocation3] sm:$0xff] %v39
  %52 = vst [vmem:[#allocation3 + $0x8] sm:$0xff] %v40
  %53 = vst [vmem:[#allocation3 + $0x20] sm:$0xff] %v45
  %54 = vst [vmem:[#allocation3 + $0x28] sm:$0xff] %v46
  %55 = vst [vmem:[#allocation3 + $0x10] sm:$0xff] %v42
  %56 = vst [vmem:[#allocation3 + $0x18] sm:$0xff] %v43
  %57 = vst [vmem:[#allocation3 + $0x30] sm:$0xff] %v48
  %58 = vst [vmem:[#allocation3 + $0x38] sm:$0xff] %v49
  %65 = vrot.lane.b32.xlu0 %v39, 127
  %v66 = vpop.permute.xlu0 %65
  %67 = vrot.lane.b32.xlu0 %v40, 127
  %v68 = vpop.permute.xlu0 %67
  %69 = vrot.lane.b32.xlu0 %v41, 127
  %v70 = vpop.permute.xlu0 %69
  %71 = vrot.lane.b32.xlu0 %v45, 127
  %v72 = vpop.permute.xlu0 %71
  %73 = vrot.lane.b32.xlu0 %v46, 127
  %v74 = vpop.permute.xlu0 %73
  %75 = vrot.lane.b32.xlu0 %v47, 127
  %v76 = vpop.permute.xlu0 %75
  %vm77 = vcmask 1039360
  %v78 = vsel %vm77, %v66, %v68
  %v79 = vsel %vm77, %v68, %v70
  %v80 = vsel %vm77, %v72, %v74
  %v81 = vsel %vm77, %v74, %v76
  %86 = vst [vmem:[#allocation3 + $0x40] sm:$0xff] %v78
  %87 = vst [vmem:[#allocation3 + $0x48] sm:$0xff] %v79
  %88 = vst [vmem:[#allocation3 + $0x60] sm:$0xff] %v80
  %89 = vst [vmem:[#allocation3 + $0x68] sm:$0xff] %v81
  %96 = vrot.lane.b32.xlu0 %v42, 127
  %v97 = vpop.permute.xlu0 %96
  %98 = vrot.lane.b32.xlu0 %v43, 127
  %v99 = vpop.permute.xlu0 %98
  %100 = vrot.lane.b32.xlu0 %v44, 127
  %v101 = vpop.permute.xlu0 %100
  %102 = vrot.lane.b32.xlu0 %v48, 127
  %v103 = vpop.permute.xlu0 %102
  %104 = vrot.lane.b32.xlu0 %v49, 127
  %v105 = vpop.permute.xlu0 %104
  %106 = vrot.lane.b32.xlu0 %v50, 127
  %v107 = vpop.permute.xlu0 %106
  %v108 = vsel %vm77, %v97, %v99
  %v109 = vsel %vm77, %v99, %v101
  %v110 = vsel %vm77, %v103, %v105
  %v111 = vsel %vm77, %v105, %v107
  %116 = vst [vmem:[#allocation3 + $0x50] sm:$0xff] %v108
  %117 = vst [vmem:[#allocation3 + $0x58] sm:$0xff] %v109
  %118 = vst [vmem:[#allocation3 + $0x70] sm:$0xff] %v110
  %119 = vst [vmem:[#allocation3 + $0x78] sm:$0xff] %v111
  %120 = vrot.lane.b32.xlu0 %v39, 126
  %v121 = vpop.permute.xlu0 %120
  %122 = vrot.lane.b32.xlu0 %v40, 126
  %v123 = vpop.permute.xlu0 %122
  %124 = vrot.lane.b32.xlu0 %v41, 126
  %v125 = vpop.permute.xlu0 %124
  %126 = vrot.lane.b32.xlu0 %v45, 126
  %v127 = vpop.permute.xlu0 %126
  %128 = vrot.lane.b32.xlu0 %v46, 126
  %v129 = vpop.permute.xlu0 %128
  %130 = vrot.lane.b32.xlu0 %v47, 126
  %v131 = vpop.permute.xlu0 %130
  %vm132 = vcmask 1031168
  %v133 = vsel %vm132, %v121, %v123
  %v134 = vsel %vm132, %v123, %v125
  %v135 = vsel %vm132, %v127, %v129
  %v136 = vsel %vm132, %v129, %v131
  %141 = vst [vmem:[#allocation3 + $0x80] sm:$0xff] %v133
  %142 = vst [vmem:[#allocation3 + $0x88] sm:$0xff] %v134
  %143 = vst [vmem:[#allocation3 + $0xa0] sm:$0xff] %v135
  %144 = vst [vmem:[#allocation3 + $0xa8] sm:$0xff] %v136
  %145 = vrot.lane.b32.xlu0 %v42, 126
  %v146 = vpop.permute.xlu0 %145
  %147 = vrot.lane.b32.xlu0 %v43, 126
  %v148 = vpop.permute.xlu0 %147
  %149 = vrot.lane.b32.xlu0 %v44, 126
  %v150 = vpop.permute.xlu0 %149
  %151 = vrot.lane.b32.xlu0 %v48, 126
  %v152 = vpop.permute.xlu0 %151
  %153 = vrot.lane.b32.xlu0 %v49, 126
  %v154 = vpop.permute.xlu0 %153
  %155 = vrot.lane.b32.xlu0 %v50, 126
  %v156 = vpop.permute.xlu0 %155
  %v157 = vsel %vm132, %v146, %v148
  %v158 = vsel %vm132, %v148, %v150
  %v159 = vsel %vm132, %v152, %v154
  %v160 = vsel %vm132, %v154, %v156
  %165 = vst [vmem:[#allocation3 + $0x90] sm:$0xff] %v157
  %166 = vst [vmem:[#allocation3 + $0x98] sm:$0xff] %v158
  %167 = vst [vmem:[#allocation3 + $0xb0] sm:$0xff] %v159
  %168 = vst [vmem:[#allocation3 + $0xb8] sm:$0xff] %v160
  %169 = vrot.lane.b32.xlu0 %v39, 112
  %v170 = vpop.permute.xlu0 %169
  %171 = vrot.lane.b32.xlu0 %v40, 112
  %v172 = vpop.permute.xlu0 %171
  %173 = vrot.lane.b32.xlu0 %v41, 112
  %v174 = vpop.permute.xlu0 %173
  %175 = vrot.lane.b32.xlu0 %v45, 112
  %v176 = vpop.permute.xlu0 %175
  %177 = vrot.lane.b32.xlu0 %v46, 112
  %v178 = vpop.permute.xlu0 %177
  %179 = vrot.lane.b32.xlu0 %v47, 112
  %v180 = vpop.permute.xlu0 %179
  %vm181 = vcmask 916480
  %v182 = vsel %vm181, %v170, %v172
  %v183 = vsel %vm181, %v172, %v174
  %v184 = vsel %vm181, %v176, %v178
  %v185 = vsel %vm181, %v178, %v180
  %190 = vst [vmem:[#allocation3 + $0xc0] sm:$0xff] %v182
  %191 = vst [vmem:[#allocation3 + $0xc8] sm:$0xff] %v183
  %192 = vst [vmem:[#allocation3 + $0xe0] sm:$0xff] %v184
  %193 = vst [vmem:[#allocation3 + $0xe8] sm:$0xff] %v185
  %194 = vrot.lane.b32.xlu0 %v42, 112
  %v195 = vpop.permute.xlu0 %194
  %196 = vrot.lane.b32.xlu0 %v43, 112
  %v197 = vpop.permute.xlu0 %196
  %198 = vrot.lane.b32.xlu0 %v44, 112
  %v199 = vpop.permute.xlu0 %198
  %200 = vrot.lane.b32.xlu0 %v48, 112
  %v201 = vpop.permute.xlu0 %200
  %202 = vrot.lane.b32.xlu0 %v49, 112
  %v203 = vpop.permute.xlu0 %202
  %204 = vrot.lane.b32.xlu0 %v50, 112
  %v205 = vpop.permute.xlu0 %204
  %v206 = vsel %vm181, %v195, %v197
  %v207 = vsel %vm181, %v197, %v199
  %v208 = vsel %vm181, %v201, %v203
  %v209 = vsel %vm181, %v203, %v205
  %214 = vst [vmem:[#allocation3 + $0xd0] sm:$0xff] %v206
  %215 = vst [vmem:[#allocation3 + $0xd8] sm:$0xff] %v207
  %216 = vst [vmem:[#allocation3 + $0xf0] sm:$0xff] %v208
  %217 = vst [vmem:[#allocation3 + $0xf8] sm:$0xff] %v209
  %218 = vrot.lane.b32.xlu0 %v39, 111
  %v219 = vpop.permute.xlu0 %218
  %220 = vrot.lane.b32.xlu0 %v40, 111
  %v221 = vpop.permute.xlu0 %220
  %222 = vrot.lane.b32.xlu0 %v41, 111
  %v223 = vpop.permute.xlu0 %222
  %224 = vrot.lane.b32.xlu0 %v45, 111
  %v225 = vpop.permute.xlu0 %224
  %226 = vrot.lane.b32.xlu0 %v46, 111
  %v227 = vpop.permute.xlu0 %226
  %228 = vrot.lane.b32.xlu0 %v47, 111
  %v229 = vpop.permute.xlu0 %228
  %vm230 = vcmask 908288
  %v231 = vsel %vm230, %v219, %v221
  %v232 = vsel %vm230, %v221, %v223
  %v233 = vsel %vm230, %v225, %v227
  %v234 = vsel %vm230, %v227, %v229
  %239 = vst [vmem:[#allocation3 + $0x100] sm:$0xff] %v231
  %240 = vst [vmem:[#allocation3 + $0x108] sm:$0xff] %v232
  %241 = vst [vmem:[#allocation3 + $0x120] sm:$0xff] %v233
  %242 = vst [vmem:[#allocation3 + $0x128] sm:$0xff] %v234
  %243 = vrot.lane.b32.xlu0 %v42, 111
  %v244 = vpop.permute.xlu0 %243
  %245 = vrot.lane.b32.xlu0 %v43, 111
  %v246 = vpop.permute.xlu0 %245
  %247 = vrot.lane.b32.xlu0 %v44, 111
  %v248 = vpop.permute.xlu0 %247
  %249 = vrot.lane.b32.xlu0 %v48, 111
  %v250 = vpop.permute.xlu0 %249
  %251 = vrot.lane.b32.xlu0 %v49, 111
  %v252 = vpop.permute.xlu0 %251
  %253 = vrot.lane.b32.xlu0 %v50, 111
  %v254 = vpop.permute.xlu0 %253
  %v255 = vsel %vm230, %v244, %v246
  %v256 = vsel %vm230, %v246, %v248
  %v257 = vsel %vm230, %v250, %v252
  %v258 = vsel %vm230, %v252, %v254
  %263 = vst [vmem:[#allocation3 + $0x110] sm:$0xff] %v255
  %264 = vst [vmem:[#allocation3 + $0x118] sm:$0xff] %v256
  %265 = vst [vmem:[#allocation3 + $0x130] sm:$0xff] %v257
  %266 = vst [vmem:[#allocation3 + $0x138] sm:$0xff] %v258
  %267 = vrot.lane.b32.xlu0 %v39, 110
  %v268 = vpop.permute.xlu0 %267
  %269 = vrot.lane.b32.xlu0 %v40, 110
  %v270 = vpop.permute.xlu0 %269
  %271 = vrot.lane.b32.xlu0 %v41, 110
  %v272 = vpop.permute.xlu0 %271
  %273 = vrot.lane.b32.xlu0 %v45, 110
  %v274 = vpop.permute.xlu0 %273
  %275 = vrot.lane.b32.xlu0 %v46, 110
  %v276 = vpop.permute.xlu0 %275
  %277 = vrot.lane.b32.xlu0 %v47, 110
  %v278 = vpop.permute.xlu0 %277
  %vm279 = vcmask 900096
  %v280 = vsel %vm279, %v268, %v270
  %v281 = vsel %vm279, %v270, %v272
  %v282 = vsel %vm279, %v274, %v276
  %v283 = vsel %vm279, %v276, %v278
  %288 = vst [vmem:[#allocation3 + $0x140] sm:$0xff] %v280
  %289 = vst [vmem:[#allocation3 + $0x148] sm:$0xff] %v281
  %290 = vst [vmem:[#allocation3 + $0x160] sm:$0xff] %v282
  %291 = vst [vmem:[#allocation3 + $0x168] sm:$0xff] %v283
  %292 = vrot.lane.b32.xlu0 %v42, 110
  %v293 = vpop.permute.xlu0 %292
  %294 = vrot.lane.b32.xlu0 %v43, 110
  %v295 = vpop.permute.xlu0 %294
  %296 = vrot.lane.b32.xlu0 %v44, 110
  %v297 = vpop.permute.xlu0 %296
  %298 = vrot.lane.b32.xlu0 %v48, 110
  %v299 = vpop.permute.xlu0 %298
  %300 = vrot.lane.b32.xlu0 %v49, 110
  %v301 = vpop.permute.xlu0 %300
  %302 = vrot.lane.b32.xlu0 %v50, 110
  %v303 = vpop.permute.xlu0 %302
  %v304 = vsel %vm279, %v293, %v295
  %v305 = vsel %vm279, %v295, %v297
  %v306 = vsel %vm279, %v299, %v301
  %v307 = vsel %vm279, %v301, %v303
  %312 = vst [vmem:[#allocation3 + $0x150] sm:$0xff] %v304
  %313 = vst [vmem:[#allocation3 + $0x158] sm:$0xff] %v305
  %314 = vst [vmem:[#allocation3 + $0x170] sm:$0xff] %v306
  %315 = vst [vmem:[#allocation3 + $0x178] sm:$0xff] %v307
  %316 = vrot.lane.b32.xlu0 %v39, 96
  %v317 = vpop.permute.xlu0 %316
  %318 = vrot.lane.b32.xlu0 %v40, 96
  %v319 = vpop.permute.xlu0 %318
  %320 = vrot.lane.b32.xlu0 %v41, 96
  %v321 = vpop.permute.xlu0 %320
  %322 = vrot.lane.b32.xlu0 %v45, 96
  %v323 = vpop.permute.xlu0 %322
  %324 = vrot.lane.b32.xlu0 %v46, 96
  %v325 = vpop.permute.xlu0 %324
  %326 = vrot.lane.b32.xlu0 %v47, 96
  %v327 = vpop.permute.xlu0 %326
  %vm328 = vcmask 785408
  %v329 = vsel %vm328, %v317, %v319
  %v330 = vsel %vm328, %v319, %v321
  %v331 = vsel %vm328, %v323, %v325
  %v332 = vsel %vm328, %v325, %v327
  %337 = vst [vmem:[#allocation3 + $0x180] sm:$0xff] %v329
  %338 = vst [vmem:[#allocation3 + $0x188] sm:$0xff] %v330
  %339 = vst [vmem:[#allocation3 + $0x1a0] sm:$0xff] %v331
  %340 = vst [vmem:[#allocation3 + $0x1a8] sm:$0xff] %v332
  %341 = vrot.lane.b32.xlu0 %v42, 96
  %v342 = vpop.permute.xlu0 %341
  %343 = vrot.lane.b32.xlu0 %v43, 96
  %v344 = vpop.permute.xlu0 %343
  %345 = vrot.lane.b32.xlu0 %v44, 96
  %v346 = vpop.permute.xlu0 %345
  %347 = vrot.lane.b32.xlu0 %v48, 96
  %v348 = vpop.permute.xlu0 %347
  %349 = vrot.lane.b32.xlu0 %v49, 96
  %v350 = vpop.permute.xlu0 %349
  %351 = vrot.lane.b32.xlu0 %v50, 96
  %v352 = vpop.permute.xlu0 %351
  %v353 = vsel %vm328, %v342, %v344
  %v354 = vsel %vm328, %v344, %v346
  %v355 = vsel %vm328, %v348, %v350
  %v356 = vsel %vm328, %v350, %v352
  %361 = vst [vmem:[#allocation3 + $0x190] sm:$0xff] %v353
  %362 = vst [vmem:[#allocation3 + $0x198] sm:$0xff] %v354
  %363 = vst [vmem:[#allocation3 + $0x1b0] sm:$0xff] %v355
  %364 = vst [vmem:[#allocation3 + $0x1b8] sm:$0xff] %v356
  %365 = vrot.lane.b32.xlu0 %v39, 95
  %v366 = vpop.permute.xlu0 %365
  %367 = vrot.lane.b32.xlu0 %v40, 95
  %v368 = vpop.permute.xlu0 %367
  %369 = vrot.lane.b32.xlu0 %v41, 95
  %v370 = vpop.permute.xlu0 %369
  %371 = vrot.lane.b32.xlu0 %v45, 95
  %v372 = vpop.permute.xlu0 %371
  %373 = vrot.lane.b32.xlu0 %v46, 95
  %v374 = vpop.permute.xlu0 %373
  %375 = vrot.lane.b32.xlu0 %v47, 95
  %v376 = vpop.permute.xlu0 %375
  %vm377 = vcmask 777216
  %v378 = vsel %vm377, %v366, %v368
  %v379 = vsel %vm377, %v368, %v370
  %v380 = vsel %vm377, %v372, %v374
  %v381 = vsel %vm377, %v374, %v376
  %386 = vst [vmem:[#allocation3 + $0x1c0] sm:$0xff] %v378
  %387 = vst [vmem:[#allocation3 + $0x1c8] sm:$0xff] %v379
  %388 = vst [vmem:[#allocation3 + $0x1e0] sm:$0xff] %v380
  %389 = vst [vmem:[#allocation3 + $0x1e8] sm:$0xff] %v381
  %390 = vrot.lane.b32.xlu0 %v42, 95
  %v391 = vpop.permute.xlu0 %390
  %392 = vrot.lane.b32.xlu0 %v43, 95
  %v393 = vpop.permute.xlu0 %392
  %394 = vrot.lane.b32.xlu0 %v44, 95
  %v395 = vpop.permute.xlu0 %394
  %396 = vrot.lane.b32.xlu0 %v48, 95
  %v397 = vpop.permute.xlu0 %396
  %398 = vrot.lane.b32.xlu0 %v49, 95
  %v399 = vpop.permute.xlu0 %398
  %400 = vrot.lane.b32.xlu0 %v50, 95
  %v401 = vpop.permute.xlu0 %400
  %v402 = vsel %vm377, %v391, %v393
  %v403 = vsel %vm377, %v393, %v395
  %v404 = vsel %vm377, %v397, %v399
  %v405 = vsel %vm377, %v399, %v401
  %410 = vst [vmem:[#allocation3 + $0x1d0] sm:$0xff] %v402
  %411 = vst [vmem:[#allocation3 + $0x1d8] sm:$0xff] %v403
  %412 = vst [vmem:[#allocation3 + $0x1f0] sm:$0xff] %v404
  %413 = vst [vmem:[#allocation3 + $0x1f8] sm:$0xff] %v405
  %414 = vrot.lane.b32.xlu0 %v39, 94
  %v415 = vpop.permute.xlu0 %414
  %416 = vrot.lane.b32.xlu0 %v40, 94
  %v417 = vpop.permute.xlu0 %416
  %418 = vrot.lane.b32.xlu0 %v41, 94
  %v419 = vpop.permute.xlu0 %418
  %420 = vrot.lane.b32.xlu0 %v45, 94
  %v421 = vpop.permute.xlu0 %420
  %422 = vrot.lane.b32.xlu0 %v46, 94
  %v423 = vpop.permute.xlu0 %422
  %424 = vrot.lane.b32.xlu0 %v47, 94
  %v425 = vpop.permute.xlu0 %424
  %vm426 = vcmask 769024
  %v427 = vsel %vm426, %v415, %v417
  %v428 = vsel %vm426, %v417, %v419
  %v429 = vsel %vm426, %v421, %v423
  %v430 = vsel %vm426, %v423, %v425
  %435 = vst [vmem:[#allocation3 + $0x200] sm:$0xff] %v427
  %436 = vst [vmem:[#allocation3 + $0x208] sm:$0xff] %v428
  %437 = vst [vmem:[#allocation3 + $0x220] sm:$0xff] %v429
  %438 = vst [vmem:[#allocation3 + $0x228] sm:$0xff] %v430
  %439 = vrot.lane.b32.xlu0 %v42, 94
  %v440 = vpop.permute.xlu0 %439
  %441 = vrot.lane.b32.xlu0 %v43, 94
  %v442 = vpop.permute.xlu0 %441
  %443 = vrot.lane.b32.xlu0 %v44, 94
  %v444 = vpop.permute.xlu0 %443
  %445 = vrot.lane.b32.xlu0 %v48, 94
  %v446 = vpop.permute.xlu0 %445
  %447 = vrot.lane.b32.xlu0 %v49, 94
  %v448 = vpop.permute.xlu0 %447
  %449 = vrot.lane.b32.xlu0 %v50, 94
  %v450 = vpop.permute.xlu0 %449
  %v451 = vsel %vm426, %v440, %v442
  %v452 = vsel %vm426, %v442, %v444
  %v453 = vsel %vm426, %v446, %v448
  %v454 = vsel %vm426, %v448, %v450
  %459 = vst [vmem:[#allocation3 + $0x210] sm:$0xff] %v451
  %460 = vst [vmem:[#allocation3 + $0x218] sm:$0xff] %v452
  %461 = vst [vmem:[#allocation3 + $0x230] sm:$0xff] %v453
  %462 = vst [vmem:[#allocation3 + $0x238] sm:$0xff] %v454
  %v463 = vld [vmem:[%s1] sm:$0xff]
  %v464 = vld [vmem:[%s1 + $0x8] sm:$0xff]
  %v465 = vld [vmem:[%s1 + $0x10] sm:$0xff]
  %v466 = vld [vmem:[%s1 + $0x18] sm:$0xff]
  %v467 = vld [vmem:[#allocation3] sm:$0xff]
  %v468 = vld [vmem:[#allocation3 + $0x8] sm:$0xff]
  %v469 = vld [vmem:[#allocation3 + $0x10] sm:$0xff]
  %v470 = vld [vmem:[#allocation3 + $0x18] sm:$0xff]
  %v471 = vld [vmem:[#allocation3 + $0x20] sm:$0xff]
  %v472 = vld [vmem:[#allocation3 + $0x28] sm:$0xff]
  %v473 = vld [vmem:[#allocation3 + $0x30] sm:$0xff]
  %v474 = vld [vmem:[#allocation3 + $0x38] sm:$0xff]
  %v475 = vld [vmem:[#allocation3 + $0x40] sm:$0xff]
  %v476 = vld [vmem:[#allocation3 + $0x48] sm:$0xff]
  %v477 = vld [vmem:[#allocation3 + $0x50] sm:$0xff]
  %v478 = vld [vmem:[#allocation3 + $0x58] sm:$0xff]
  %v479 = vld [vmem:[#allocation3 + $0x60] sm:$0xff]
  %v480 = vld [vmem:[#allocation3 + $0x68] sm:$0xff]
  %v481 = vld [vmem:[#allocation3 + $0x70] sm:$0xff]
  %v482 = vld [vmem:[#allocation3 + $0x78] sm:$0xff]
  %v483 = vld [vmem:[#allocation3 + $0x80] sm:$0xff]
  %v484 = vld [vmem:[#allocation3 + $0x88] sm:$0xff]
  %v485 = vld [vmem:[#allocation3 + $0x90] sm:$0xff]
  %v486 = vld [vmem:[#allocation3 + $0x98] sm:$0xff]
  %v487 = vld [vmem:[#allocation3 + $0xa0] sm:$0xff]
  %v488 = vld [vmem:[#allocation3 + $0xa8] sm:$0xff]
  %v489 = vld [vmem:[#allocation3 + $0xb0] sm:$0xff]
  %v490 = vld [vmem:[#allocation3 + $0xb8] sm:$0xff]
  %v491 = vld [vmem:[#allocation3 + $0xc0] sm:$0xff]
  %v492 = vld [vmem:[#allocation3 + $0xc8] sm:$0xff]
  %v493 = vld [vmem:[#allocation3 + $0xd0] sm:$0xff]
  %v494 = vld [vmem:[#allocation3 + $0xd8] sm:$0xff]
  %v495 = vld [vmem:[#allocation3 + $0xe0] sm:$0xff]
  %v496 = vld [vmem:[#allocation3 + $0xe8] sm:$0xff]
  %v497 = vld [vmem:[#allocation3 + $0xf0] sm:$0xff]
  %v498 = vld [vmem:[#allocation3 + $0xf8] sm:$0xff]
  %v499 = vld [vmem:[#allocation3 + $0x100] sm:$0xff]
  %v500 = vld [vmem:[#allocation3 + $0x108] sm:$0xff]
  %v501 = vld [vmem:[#allocation3 + $0x110] sm:$0xff]
  %v502 = vld [vmem:[#allocation3 + $0x118] sm:$0xff]
  %v503 = vld [vmem:[#allocation3 + $0x120] sm:$0xff]
  %v504 = vld [vmem:[#allocation3 + $0x128] sm:$0xff]
  %v505 = vld [vmem:[#allocation3 + $0x130] sm:$0xff]
  %v506 = vld [vmem:[#allocation3 + $0x138] sm:$0xff]
  %v507 = vld [vmem:[#allocation3 + $0x140] sm:$0xff]
  %v508 = vld [vmem:[#allocation3 + $0x148] sm:$0xff]
  %v509 = vld [vmem:[#allocation3 + $0x150] sm:$0xff]
  %v510 = vld [vmem:[#allocation3 + $0x158] sm:$0xff]
  %v511 = vld [vmem:[#allocation3 + $0x160] sm:$0xff]
  %v512 = vld [vmem:[#allocation3 + $0x168] sm:$0xff]
  %v513 = vld [vmem:[#allocation3 + $0x170] sm:$0xff]
  %v514 = vld [vmem:[#allocation3 + $0x178] sm:$0xff]
  %v515 = vld [vmem:[#allocation3 + $0x180] sm:$0xff]
  %v516 = vld [vmem:[#allocation3 + $0x188] sm:$0xff]
  %v517 = vld [vmem:[#allocation3 + $0x190] sm:$0xff]
  %v518 = vld [vmem:[#allocation3 + $0x198] sm:$0xff]
  %v519 = vld [vmem:[#allocation3 + $0x1a0] sm:$0xff]
  %v520 = vld [vmem:[#allocation3 + $0x1a8] sm:$0xff]
  %v521 = vld [vmem:[#allocation3 + $0x1b0] sm:$0xff]
  %v522 = vld [vmem:[#allocation3 + $0x1b8] sm:$0xff]
  %v523 = vld [vmem:[#allocation3 + $0x1c0] sm:$0xff]
  %v524 = vld [vmem:[#allocation3 + $0x1c8] sm:$0xff]
  %v525 = vld [vmem:[#allocation3 + $0x1d0] sm:$0xff]
  %v526 = vld [vmem:[#allocation3 + $0x1d8] sm:$0xff]
  %v527 = vld [vmem:[#allocation3 + $0x1e0] sm:$0xff]
  %v528 = vld [vmem:[#allocation3 + $0x1e8] sm:$0xff]
  %v529 = vld [vmem:[#allocation3 + $0x1f0] sm:$0xff]
  %v530 = vld [vmem:[#allocation3 + $0x1f8] sm:$0xff]
  %v531 = vld [vmem:[#allocation3 + $0x200] sm:$0xff]
  %v532 = vld [vmem:[#allocation3 + $0x208] sm:$0xff]
  %v533 = vld [vmem:[#allocation3 + $0x210] sm:$0xff]
  %v534 = vld [vmem:[#allocation3 + $0x218] sm:$0xff]
  %v535 = vld [vmem:[#allocation3 + $0x220] sm:$0xff]
  %v536 = vld [vmem:[#allocation3 + $0x228] sm:$0xff]
  %v537 = vld [vmem:[#allocation3 + $0x230] sm:$0xff]
  %v538 = vld [vmem:[#allocation3 + $0x238] sm:$0xff]
  %v539 = vld [vmem:[%s2] sm:$0xff]
  %v540 = vld [vmem:[%s2 + $0x8] sm:$0xff]
  %542 = vset.pattern.permute.xlu0 0
  %543 = vperm.xlu0 %542, %v539
  %v544 = vpop.permute.xlu0 %543
  %547 = vset.pattern.permute.xlu0 0
  %548 = vperm.xlu0 %547, %v540
  %v549 = vpop.permute.xlu0 %548
  %vm551 = vcmask 130048
  %v553 = vsel %vm551, %v464, 0
  %v556 = vsel %vm551, %v466, 0
  %558 = vmatprep.subr.mxu0 %v468
  %559 = vmatpush1.msra.mxu0 %v467
  %560 = vmatprep.subr.mxu0 %v472
  %561 = vmatpush1.msra.mxu0 %v471
  %562 = vmatprep.subr.mxu0 %v476
  %563 = vmatpush1.msra.mxu0 %v475
  %564 = vmatprep.subr.mxu0 %v480
  %565 = vmatpush1.msra.mxu0 %v479
  %566 = vmatprep.subr.mxu0 %v484
  %567 = vmatpush1.msra.mxu0 %v483
  %568 = vmatprep.subr.mxu0 %v488
  %569 = vmatpush1.msra.mxu0 %v487
  %570 = vmatprep.subr.mxu0 %v492
  %571 = vmatpush1.msra.mxu0 %v491
  %572 = vmatprep.subr.mxu0 %v496
  %573 = vmatpush1.msra.mxu0 %v495
  %574 = vmatprep.subr.mxu0 %v500
  %575 = vmatpush1.msra.mxu0 %v499
  %576 = vmatprep.subr.mxu0 %v504
  %577 = vmatpush1.msra.mxu0 %v503
  %578 = vmatprep.subr.mxu0 %v508
  %579 = vmatpush1.msra.mxu0 %v507
  %580 = vmatprep.subr.mxu0 %v512
  %581 = vmatpush1.msra.mxu0 %v511
  %582 = vmatprep.subr.mxu0 %v516
  %583 = vmatpush1.msra.mxu0 %v515
  %584 = vmatprep.subr.mxu0 %v520
  %585 = vmatpush1.msra.mxu0 %v519
  %586 = vmatprep.subr.mxu0 %v524
  %587 = vmatpush1.msra.mxu0 %v523
  %588 = vmatprep.subr.mxu0 %v528
  %589 = vmatpush1.msra.mxu0 %v527
  %590 = vmatprep.subr.mxu0 %v532
  %591 = vmatpush1.msra.mxu0 %v531
  %592 = vmatprep.subr.mxu0 %v536
  %593 = vmatpush1.msra.mxu0 %v535
  %594 = vmatprep.subr.mxu0 0.0
  %595 = vmatpush1.msra.mxu0 0.0
  %596 = vmatprep.subr.mxu0 0.0
  %597 = vmatpush1.msra.mxu0 0.0
  %598 = vmatprep.subr.mxu0 0.0
  %599 = vmatpush1.msra.mxu0 0.0
  %600 = vmatprep.subr.mxu0 0.0
  %601 = vmatpush1.msra.mxu0 0.0
  %602 = vmatprep.subr.mxu0 0.0
  %603 = vmatpush1.msra.mxu0 0.0
  %604 = vmatprep.subr.mxu0 0.0
  %605 = vmatpush1.msra.mxu0 0.0
  %606 = vmatprep.subr.mxu0 0.0
  %607 = vmatpush1.msra.mxu0 0.0
  %608 = vmatprep.subr.mxu0 0.0
  %609 = vmatpush1.msra.mxu0 0.0
  %610 = vmatprep.subr.mxu0 0.0
  %611 = vmatpush1.msra.mxu0 0.0
  %612 = vmatprep.subr.mxu0 0.0
  %613 = vmatpush1.msra.mxu0 0.0
  %614 = vmatprep.subr.mxu0 0.0
  %615 = vmatpush1.msra.mxu0 0.0
  %616 = vmatprep.subr.mxu0 0.0
  %617 = vmatpush1.msra.mxu0 0.0
  %618 = vmatprep.subr.mxu0 0.0
  %619 = vmatpush1.msra.mxu0 0.0
  %620 = vmatprep.subr.mxu0 0.0
  %621 = vmatpush1.msra.mxu0 0.0
  %622 = vmatprep.mubr.f32.mxu0 %v553
  %623 = vmatmul.mubr.f32.gmra.mrb[0].mxu0 %v463
  %v624 = vpop.f32.mrb[0].mxu0
  %v625 = vadd.f32 %v544, %v624
  %v626 = vpop.f32.mrb[0].mxu0
  %v627 = vadd.f32 %v544, %v626
  %628 = vmatprep.mubr.f32.mxu0 %v556
  %629 = vmatmul.mubr.f32.gmra.mrb[0].mxu0 %v465
  %v630 = vpop.f32.mrb[0].mxu0
  %v631 = vadd.f32 %v549, %v630
  %v632 = vpop.f32.mrb[0].mxu0
  %v633 = vadd.f32 %v549, %v632
  %634 = vdwg.mxu0
  %635 = vmatprep.subr.mxu0 %v470
  %636 = vmatpush1.msra.mxu0 %v469
  %637 = vmatprep.subr.mxu0 %v474
  %638 = vmatpush1.msra.mxu0 %v473
  %639 = vmatprep.subr.mxu0 %v478
  %640 = vmatpush1.msra.mxu0 %v477
  %641 = vmatprep.subr.mxu0 %v482
  %642 = vmatpush1.msra.mxu0 %v481
  %643 = vmatprep.subr.mxu0 %v486
  %644 = vmatpush1.msra.mxu0 %v485
  %645 = vmatprep.subr.mxu0 %v490
  %646 = vmatpush1.msra.mxu0 %v489
  %647 = vmatprep.subr.mxu0 %v494
  %648 = vmatpush1.msra.mxu0 %v493
  %649 = vmatprep.subr.mxu0 %v498
  %650 = vmatpush1.msra.mxu0 %v497
  %651 = vmatprep.subr.mxu0 %v502
  %652 = vmatpush1.msra.mxu0 %v501
  %653 = vmatprep.subr.mxu0 %v506
  %654 = vmatpush1.msra.mxu0 %v505
  %655 = vmatprep.subr.mxu0 %v510
  %656 = vmatpush1.msra.mxu0 %v509
  %657 = vmatprep.subr.mxu0 %v514
  %658 = vmatpush1.msra.mxu0 %v513
  %659 = vmatprep.subr.mxu0 %v518
  %660 = vmatpush1.msra.mxu0 %v517
  %661 = vmatprep.subr.mxu0 %v522
  %662 = vmatpush1.msra.mxu0 %v521
  %663 = vmatprep.subr.mxu0 %v526
  %664 = vmatpush1.msra.mxu0 %v525
  %665 = vmatprep.subr.mxu0 %v530
  %666 = vmatpush1.msra.mxu0 %v529
  %667 = vmatprep.subr.mxu0 %v534
  %668 = vmatpush1.msra.mxu0 %v533
  %669 = vmatprep.subr.mxu0 %v538
  %670 = vmatpush1.msra.mxu0 %v537
  %671 = vmatprep.subr.mxu0 0.0
  %672 = vmatpush1.msra.mxu0 0.0
  %673 = vmatprep.subr.mxu0 0.0
  %674 = vmatpush1.msra.mxu0 0.0
  %675 = vmatprep.subr.mxu0 0.0
  %676 = vmatpush1.msra.mxu0 0.0
  %677 = vmatprep.subr.mxu0 0.0
  %678 = vmatpush1.msra.mxu0 0.0
  %679 = vmatprep.subr.mxu0 0.0
  %680 = vmatpush1.msra.mxu0 0.0
  %681 = vmatprep.subr.mxu0 0.0
  %682 = vmatpush1.msra.mxu0 0.0
  %683 = vmatprep.subr.mxu0 0.0
  %684 = vmatpush1.msra.mxu0 0.0
  %685 = vmatprep.subr.mxu0 0.0
  %686 = vmatpush1.msra.mxu0 0.0
  %687 = vmatprep.subr.mxu0 0.0
  %688 = vmatpush1.msra.mxu0 0.0
  %689 = vmatprep.subr.mxu0 0.0
  %690 = vmatpush1.msra.mxu0 0.0
  %691 = vmatprep.subr.mxu0 0.0
  %692 = vmatpush1.msra.mxu0 0.0
  %693 = vmatprep.subr.mxu0 0.0
  %694 = vmatpush1.msra.mxu0 0.0
  %695 = vmatprep.subr.mxu0 0.0
  %696 = vmatpush1.msra.mxu0 0.0
  %697 = vmatprep.subr.mxu0 0.0
  %698 = vmatpush1.msra.mxu0 0.0
  %699 = vmatprep.mubr.f32.mxu0 %v553
  %700 = vmatmul.mubr.f32.gmra.mrb[0].mxu0 %v463
  %v701 = vpop.f32.mrb[0].mxu0
  %v702 = vadd.f32 %v544, %v701
  %v703 = vpop.f32.mrb[0].mxu0
  %v704 = vadd.f32 %v544, %v703
  %705 = vmatprep.mubr.f32.mxu0 %v556
  %706 = vmatmul.mubr.f32.gmra.mrb[0].mxu0 %v465
  %v707 = vpop.f32.mrb[0].mxu0
  %v708 = vadd.f32 %v549, %v707
  %v709 = vpop.f32.mrb[0].mxu0
  %v710 = vadd.f32 %v549, %v709
  %711 = vdwg.mxu0
  %v712 = vmax.f32 %v625, 0.0
  %v713 = vmax.f32 %v627, 0.0
  %v714 = vmax.f32 %v702, 0.0
  %v715 = vmax.f32 %v704, 0.0
  %v716 = vmax.f32 %v631, 0.0
  %v717 = vmax.f32 %v633, 0.0
  %v718 = vmax.f32 %v708, 0.0
  %v719 = vmax.f32 %v710, 0.0
  %v721 = vlaneseq
  %v722 = vshrl.u32 %v721, 7
  %v723 = vsub.s32 0, %v722
  %v724 = vrot.slane %v26, %v723
  %v725 = vlaneseq
  %v726 = vshrl.u32 %v725, 7
  %v727 = vsub.s32 1, %v726
  %v728 = vrot.slane %v26, %v727
  %v729 = vlaneseq
  %v730 = vshrl.u32 %v729, 7
  %v731 = vsub.s32 2, %v730
  %v732 = vrot.slane %v26, %v731
  %v733 = vlaneseq
  %v734 = vshrl.u32 %v733, 7
  %v735 = vsub.s32 3, %v734
  %v736 = vrot.slane %v26, %v735
  %v741 = vmul.f32 %v712, %v724
  %v742 = vmul.f32 %v713, %v728
  %v743 = vmul.f32 %v714, %v732
  %v744 = vmul.f32 %v715, %v736
  %v745 = vmul.f32 %v716, %v724
  %v746 = vmul.f32 %v717, %v728
  %v747 = vmul.f32 %v718, %v732
  %v748 = vmul.f32 %v719, %v736
  %753 = vrot.lane.b32.xlu0 %v741, 17
  %v754 = vpop.permute.xlu0 %753
  %755 = vrot.lane.b32.xlu0 %v742, 17
  %v756 = vpop.permute.xlu0 %755
  %757 = vrot.lane.b32.xlu0 %v745, 17
  %v758 = vpop.permute.xlu0 %757
  %759 = vrot.lane.b32.xlu0 %v746, 17
  %v760 = vpop.permute.xlu0 %759
  %vm761 = vcmask 138240
  %v762 = vsel %vm761, %v754, %v756
  %v763 = vsel %vm761, %v758, %v760
  %vm770 = vcmask 1047688
  %771 = vst.msk [vmem:[#allocation2] sm:$0xff] %vm770, %v754
  %772 = vst [vmem:[#allocation2 + $0x8] sm:$0xff] %v762
  %773 = vst.msk [vmem:[#allocation2 + $0x10] sm:$0xff] %vm761, %v756
  %774 = vst.msk [vmem:[#allocation2 + $0x30] sm:$0xff] %vm770, %v758
  %775 = vst [vmem:[#allocation2 + $0x38] sm:$0xff] %v763
  %776 = vst.msk [vmem:[#allocation2 + $0x40] sm:$0xff] %vm761, %v760
  %781 = vrot.lane.b32.xlu0 %v743, 17
  %v782 = vpop.permute.xlu0 %781
  %783 = vrot.lane.b32.xlu0 %v744, 17
  %v784 = vpop.permute.xlu0 %783
  %785 = vrot.lane.b32.xlu0 %v747, 17
  %v786 = vpop.permute.xlu0 %785
  %787 = vrot.lane.b32.xlu0 %v748, 17
  %v788 = vpop.permute.xlu0 %787
  %v789 = vsel %vm761, %v782, %v784
  %v790 = vsel %vm761, %v786, %v788
  %797 = vst.msk [vmem:[#allocation2 + $0x18] sm:$0xff] %vm770, %v782
  %798 = vst [vmem:[#allocation2 + $0x20] sm:$0xff] %v789
  %799 = vst.msk [vmem:[#allocation2 + $0x28] sm:$0xff] %vm761, %v784
  %800 = vst.msk [vmem:[#allocation2 + $0x48] sm:$0xff] %vm770, %v786
  %801 = vst [vmem:[#allocation2 + $0x50] sm:$0xff] %v790
  %802 = vst.msk [vmem:[#allocation2 + $0x58] sm:$0xff] %vm761, %v788
  %v803 = vld [vmem:[#allocation2] sm:$0xff]
  %v804 = vld [vmem:[#allocation2 + $0x8] sm:$0xff]
  %v805 = vld [vmem:[#allocation2 + $0x10] sm:$0xff]
  %v806 = vld [vmem:[#allocation2 + $0x18] sm:$0xff]
  %v807 = vld [vmem:[#allocation2 + $0x20] sm:$0xff]
  %v808 = vld [vmem:[#allocation2 + $0x28] sm:$0xff]
  %v809 = vld [vmem:[#allocation2 + $0x30] sm:$0xff]
  %v810 = vld [vmem:[#allocation2 + $0x38] sm:$0xff]
  %v811 = vld [vmem:[#allocation2 + $0x40] sm:$0xff]
  %v812 = vld [vmem:[#allocation2 + $0x48] sm:$0xff]
  %v813 = vld [vmem:[#allocation2 + $0x50] sm:$0xff]
  %v814 = vld [vmem:[#allocation2 + $0x58] sm:$0xff]
  %815 = vst [vmem:[#allocation3] sm:$0xff] %v803
  %816 = vst [vmem:[#allocation3 + $0x8] sm:$0xff] %v804
  %817 = vst [vmem:[#allocation3 + $0x20] sm:$0xff] %v809
  %818 = vst [vmem:[#allocation3 + $0x28] sm:$0xff] %v810
  %819 = vst [vmem:[#allocation3 + $0x10] sm:$0xff] %v806
  %820 = vst [vmem:[#allocation3 + $0x18] sm:$0xff] %v807
  %821 = vst [vmem:[#allocation3 + $0x30] sm:$0xff] %v812
  %822 = vst [vmem:[#allocation3 + $0x38] sm:$0xff] %v813
  %829 = vrot.lane.b32.xlu0 %v803, 127
  %v830 = vpop.permute.xlu0 %829
  %831 = vrot.lane.b32.xlu0 %v804, 127
  %v832 = vpop.permute.xlu0 %831
  %833 = vrot.lane.b32.xlu0 %v805, 127
  %v834 = vpop.permute.xlu0 %833
  %835 = vrot.lane.b32.xlu0 %v809, 127
  %v836 = vpop.permute.xlu0 %835
  %837 = vrot.lane.b32.xlu0 %v810, 127
  %v838 = vpop.permute.xlu0 %837
  %839 = vrot.lane.b32.xlu0 %v811, 127
  %v840 = vpop.permute.xlu0 %839
  %v841 = vsel %vm77, %v830, %v832
  %v842 = vsel %vm77, %v832, %v834
  %v843 = vsel %vm77, %v836, %v838
  %v844 = vsel %vm77, %v838, %v840
  %849 = vst [vmem:[#allocation3 + $0x40] sm:$0xff] %v841
  %850 = vst [vmem:[#allocation3 + $0x48] sm:$0xff] %v842
  %851 = vst [vmem:[#allocation3 + $0x60] sm:$0xff] %v843
  %852 = vst [vmem:[#allocation3 + $0x68] sm:$0xff] %v844
  %859 = vrot.lane.b32.xlu0 %v806, 127
  %v860 = vpop.permute.xlu0 %859
  %861 = vrot.lane.b32.xlu0 %v807, 127
  %v862 = vpop.permute.xlu0 %861
  %863 = vrot.lane.b32.xlu0 %v808, 127
  %v864 = vpop.permute.xlu0 %863
  %865 = vrot.lane.b32.xlu0 %v812, 127
  %v866 = vpop.permute.xlu0 %865
  %867 = vrot.lane.b32.xlu0 %v813, 127
  %v868 = vpop.permute.xlu0 %867
  %869 = vrot.lane.b32.xlu0 %v814, 127
  %v870 = vpop.permute.xlu0 %869
  %v871 = vsel %vm77, %v860, %v862
  %v872 = vsel %vm77, %v862, %v864
  %v873 = vsel %vm77, %v866, %v868
  %v874 = vsel %vm77, %v868, %v870
  %879 = vst [vmem:[#allocation3 + $0x50] sm:$0xff] %v871
  %880 = vst [vmem:[#allocation3 + $0x58] sm:$0xff] %v872
  %881 = vst [vmem:[#allocation3 + $0x70] sm:$0xff] %v873
  %882 = vst [vmem:[#allocation3 + $0x78] sm:$0xff] %v874
  %883 = vrot.lane.b32.xlu0 %v803, 126
  %v884 = vpop.permute.xlu0 %883
  %885 = vrot.lane.b32.xlu0 %v804, 126
  %v886 = vpop.permute.xlu0 %885
  %887 = vrot.lane.b32.xlu0 %v805, 126
  %v888 = vpop.permute.xlu0 %887
  %889 = vrot.lane.b32.xlu0 %v809, 126
  %v890 = vpop.permute.xlu0 %889
  %891 = vrot.lane.b32.xlu0 %v810, 126
  %v892 = vpop.permute.xlu0 %891
  %893 = vrot.lane.b32.xlu0 %v811, 126
  %v894 = vpop.permute.xlu0 %893
  %v895 = vsel %vm132, %v884, %v886
  %v896 = vsel %vm132, %v886, %v888
  %v897 = vsel %vm132, %v890, %v892
  %v898 = vsel %vm132, %v892, %v894
  %903 = vst [vmem:[#allocation3 + $0x80] sm:$0xff] %v895
  %904 = vst [vmem:[#allocation3 + $0x88] sm:$0xff] %v896
  %905 = vst [vmem:[#allocation3 + $0xa0] sm:$0xff] %v897
  %906 = vst [vmem:[#allocation3 + $0xa8] sm:$0xff] %v898
  %907 = vrot.lane.b32.xlu0 %v806, 126
  %v908 = vpop.permute.xlu0 %907
  %909 = vrot.lane.b32.xlu0 %v807, 126
  %v910 = vpop.permute.xlu0 %909
  %911 = vrot.lane.b32.xlu0 %v808, 126
  %v912 = vpop.permute.xlu0 %911
  %913 = vrot.lane.b32.xlu0 %v812, 126
  %v914 = vpop.permute.xlu0 %913
  %915 = vrot.lane.b32.xlu0 %v813, 126
  %v916 = vpop.permute.xlu0 %915
  %917 = vrot.lane.b32.xlu0 %v814, 126
  %v918 = vpop.permute.xlu0 %917
  %v919 = vsel %vm132, %v908, %v910
  %v920 = vsel %vm132, %v910, %v912
  %v921 = vsel %vm132, %v914, %v916
  %v922 = vsel %vm132, %v916, %v918
  %927 = vst [vmem:[#allocation3 + $0x90] sm:$0xff] %v919
  %928 = vst [vmem:[#allocation3 + $0x98] sm:$0xff] %v920
  %929 = vst [vmem:[#allocation3 + $0xb0] sm:$0xff] %v921
  %930 = vst [vmem:[#allocation3 + $0xb8] sm:$0xff] %v922
  %931 = vrot.lane.b32.xlu0 %v803, 112
  %v932 = vpop.permute.xlu0 %931
  %933 = vrot.lane.b32.xlu0 %v804, 112
  %v934 = vpop.permute.xlu0 %933
  %935 = vrot.lane.b32.xlu0 %v805, 112
  %v936 = vpop.permute.xlu0 %935
  %937 = vrot.lane.b32.xlu0 %v809, 112
  %v938 = vpop.permute.xlu0 %937
  %939 = vrot.lane.b32.xlu0 %v810, 112
  %v940 = vpop.permute.xlu0 %939
  %941 = vrot.lane.b32.xlu0 %v811, 112
  %v942 = vpop.permute.xlu0 %941
  %v943 = vsel %vm181, %v932, %v934
  %v944 = vsel %vm181, %v934, %v936
  %v945 = vsel %vm181, %v938, %v940
  %v946 = vsel %vm181, %v940, %v942
  %951 = vst [vmem:[#allocation3 + $0xc0] sm:$0xff] %v943
  %952 = vst [vmem:[#allocation3 + $0xc8] sm:$0xff] %v944
  %953 = vst [vmem:[#allocation3 + $0xe0] sm:$0xff] %v945
  %954 = vst [vmem:[#allocation3 + $0xe8] sm:$0xff] %v946
  %955 = vrot.lane.b32.xlu0 %v806, 112
  %v956 = vpop.permute.xlu0 %955
  %957 = vrot.lane.b32.xlu0 %v807, 112
  %v958 = vpop.permute.xlu0 %957
  %959 = vrot.lane.b32.xlu0 %v808, 112
  %v960 = vpop.permute.xlu0 %959
  %961 = vrot.lane.b32.xlu0 %v812, 112
  %v962 = vpop.permute.xlu0 %961
  %963 = vrot.lane.b32.xlu0 %v813, 112
  %v964 = vpop.permute.xlu0 %963
  %965 = vrot.lane.b32.xlu0 %v814, 112
  %v966 = vpop.permute.xlu0 %965
  %v967 = vsel %vm181, %v956, %v958
  %v968 = vsel %vm181, %v958, %v960
  %v969 = vsel %vm181, %v962, %v964
  %v970 = vsel %vm181, %v964, %v966
  %975 = vst [vmem:[#allocation3 + $0xd0] sm:$0xff] %v967
  %976 = vst [vmem:[#allocation3 + $0xd8] sm:$0xff] %v968
  %977 = vst [vmem:[#allocation3 + $0xf0] sm:$0xff] %v969
  %978 = vst [vmem:[#allocation3 + $0xf8] sm:$0xff] %v970
  %979 = vrot.lane.b32.xlu0 %v803, 111
  %v980 = vpop.permute.xlu0 %979
  %981 = vrot.lane.b32.xlu0 %v804, 111
  %v982 = vpop.permute.xlu0 %981
  %983 = vrot.lane.b32.xlu0 %v805, 111
  %v984 = vpop.permute.xlu0 %983
  %985 = vrot.lane.b32.xlu0 %v809, 111
  %v986 = vpop.permute.xlu0 %985
  %987 = vrot.lane.b32.xlu0 %v810, 111
  %v988 = vpop.permute.xlu0 %987
  %989 = vrot.lane.b32.xlu0 %v811, 111
  %v990 = vpop.permute.xlu0 %989
  %v991 = vsel %vm230, %v980, %v982
  %v992 = vsel %vm230, %v982, %v984
  %v993 = vsel %vm230, %v986, %v988
  %v994 = vsel %vm230, %v988, %v990
  %999 = vst [vmem:[#allocation3 + $0x100] sm:$0xff] %v991
  %1000 = vst [vmem:[#allocation3 + $0x108] sm:$0xff] %v992
  %1001 = vst [vmem:[#allocation3 + $0x120] sm:$0xff] %v993
  %1002 = vst [vmem:[#allocation3 + $0x128] sm:$0xff] %v994
  %1003 = vrot.lane.b32.xlu0 %v806, 111
  %v1004 = vpop.permute.xlu0 %1003
  %1005 = vrot.lane.b32.xlu0 %v807, 111
  %v1006 = vpop.permute.xlu0 %1005
  %1007 = vrot.lane.b32.xlu0 %v808, 111
  %v1008 = vpop.permute.xlu0 %1007
  %1009 = vrot.lane.b32.xlu0 %v812, 111
  %v1010 = vpop.permute.xlu0 %1009
  %1011 = vrot.lane.b32.xlu0 %v813, 111
  %v1012 = vpop.permute.xlu0 %1011
  %1013 = vrot.lane.b32.xlu0 %v814, 111
  %v1014 = vpop.permute.xlu0 %1013
  %v1015 = vsel %vm230, %v1004, %v1006
  %v1016 = vsel %vm230, %v1006, %v1008
  %v1017 = vsel %vm230, %v1010, %v1012
  %v1018 = vsel %vm230, %v1012, %v1014
  %1023 = vst [vmem:[#allocation3 + $0x110] sm:$0xff] %v1015
  %1024 = vst [vmem:[#allocation3 + $0x118] sm:$0xff] %v1016
  %1025 = vst [vmem:[#allocation3 + $0x130] sm:$0xff] %v1017
  %1026 = vst [vmem:[#allocation3 + $0x138] sm:$0xff] %v1018
  %1027 = vrot.lane.b32.xlu0 %v803, 110
  %v1028 = vpop.permute.xlu0 %1027
  %1029 = vrot.lane.b32.xlu0 %v804, 110
  %v1030 = vpop.permute.xlu0 %1029
  %1031 = vrot.lane.b32.xlu0 %v805, 110
  %v1032 = vpop.permute.xlu0 %1031
  %1033 = vrot.lane.b32.xlu0 %v809, 110
  %v1034 = vpop.permute.xlu0 %1033
  %1035 = vrot.lane.b32.xlu0 %v810, 110
  %v1036 = vpop.permute.xlu0 %1035
  %1037 = vrot.lane.b32.xlu0 %v811, 110
  %v1038 = vpop.permute.xlu0 %1037
  %v1039 = vsel %vm279, %v1028, %v1030
  %v1040 = vsel %vm279, %v1030, %v1032
  %v1041 = vsel %vm279, %v1034, %v1036
  %v1042 = vsel %vm279, %v1036, %v1038
  %1047 = vst [vmem:[#allocation3 + $0x140] sm:$0xff] %v1039
  %1048 = vst [vmem:[#allocation3 + $0x148] sm:$0xff] %v1040
  %1049 = vst [vmem:[#allocation3 + $0x160] sm:$0xff] %v1041
  %1050 = vst [vmem:[#allocation3 + $0x168] sm:$0xff] %v1042
  %1051 = vrot.lane.b32.xlu0 %v806, 110
  %v1052 = vpop.permute.xlu0 %1051
  %1053 = vrot.lane.b32.xlu0 %v807, 110
  %v1054 = vpop.permute.xlu0 %1053
  %1055 = vrot.lane.b32.xlu0 %v808, 110
  %v1056 = vpop.permute.xlu0 %1055
  %1057 = vrot.lane.b32.xlu0 %v812, 110
  %v1058 = vpop.permute.xlu0 %1057
  %1059 = vrot.lane.b32.xlu0 %v813, 110
  %v1060 = vpop.permute.xlu0 %1059
  %1061 = vrot.lane.b32.xlu0 %v814, 110
  %v1062 = vpop.permute.xlu0 %1061
  %v1063 = vsel %vm279, %v1052, %v1054
  %v1064 = vsel %vm279, %v1054, %v1056
  %v1065 = vsel %vm279, %v1058, %v1060
  %v1066 = vsel %vm279, %v1060, %v1062
  %1071 = vst [vmem:[#allocation3 + $0x150] sm:$0xff] %v1063
  %1072 = vst [vmem:[#allocation3 + $0x158] sm:$0xff] %v1064
  %1073 = vst [vmem:[#allocation3 + $0x170] sm:$0xff] %v1065
  %1074 = vst [vmem:[#allocation3 + $0x178] sm:$0xff] %v1066
  %1075 = vrot.lane.b32.xlu0 %v803, 96
  %v1076 = vpop.permute.xlu0 %1075
  %1077 = vrot.lane.b32.xlu0 %v804, 96
  %v1078 = vpop.permute.xlu0 %1077
  %1079 = vrot.lane.b32.xlu0 %v805, 96
  %v1080 = vpop.permute.xlu0 %1079
  %1081 = vrot.lane.b32.xlu0 %v809, 96
  %v1082 = vpop.permute.xlu0 %1081
  %1083 = vrot.lane.b32.xlu0 %v810, 96
  %v1084 = vpop.permute.xlu0 %1083
  %1085 = vrot.lane.b32.xlu0 %v811, 96
  %v1086 = vpop.permute.xlu0 %1085
  %v1087 = vsel %vm328, %v1076, %v1078
  %v1088 = vsel %vm328, %v1078, %v1080
  %v1089 = vsel %vm328, %v1082, %v1084
  %v1090 = vsel %vm328, %v1084, %v1086
  %1095 = vst [vmem:[#allocation3 + $0x180] sm:$0xff] %v1087
  %1096 = vst [vmem:[#allocation3 + $0x188] sm:$0xff] %v1088
  %1097 = vst [vmem:[#allocation3 + $0x1a0] sm:$0xff] %v1089
  %1098 = vst [vmem:[#allocation3 + $0x1a8] sm:$0xff] %v1090
  %1099 = vrot.lane.b32.xlu0 %v806, 96
  %v1100 = vpop.permute.xlu0 %1099
  %1101 = vrot.lane.b32.xlu0 %v807, 96
  %v1102 = vpop.permute.xlu0 %1101
  %1103 = vrot.lane.b32.xlu0 %v808, 96
  %v1104 = vpop.permute.xlu0 %1103
  %1105 = vrot.lane.b32.xlu0 %v812, 96
  %v1106 = vpop.permute.xlu0 %1105
  %1107 = vrot.lane.b32.xlu0 %v813, 96
  %v1108 = vpop.permute.xlu0 %1107
  %1109 = vrot.lane.b32.xlu0 %v814, 96
  %v1110 = vpop.permute.xlu0 %1109
  %v1111 = vsel %vm328, %v1100, %v1102
  %v1112 = vsel %vm328, %v1102, %v1104
  %v1113 = vsel %vm328, %v1106, %v1108
  %v1114 = vsel %vm328, %v1108, %v1110
  %1119 = vst [vmem:[#allocation3 + $0x190] sm:$0xff] %v1111
  %1120 = vst [vmem:[#allocation3 + $0x198] sm:$0xff] %v1112
  %1121 = vst [vmem:[#allocation3 + $0x1b0] sm:$0xff] %v1113
  %1122 = vst [vmem:[#allocation3 + $0x1b8] sm:$0xff] %v1114
  %1123 = vrot.lane.b32.xlu0 %v803, 95
  %v1124 = vpop.permute.xlu0 %1123
  %1125 = vrot.lane.b32.xlu0 %v804, 95
  %v1126 = vpop.permute.xlu0 %1125
  %1127 = vrot.lane.b32.xlu0 %v805, 95
  %v1128 = vpop.permute.xlu0 %1127
  %1129 = vrot.lane.b32.xlu0 %v809, 95
  %v1130 = vpop.permute.xlu0 %1129
  %1131 = vrot.lane.b32.xlu0 %v810, 95
  %v1132 = vpop.permute.xlu0 %1131
  %1133 = vrot.lane.b32.xlu0 %v811, 95
  %v1134 = vpop.permute.xlu0 %1133
  %v1135 = vsel %vm377, %v1124, %v1126
  %v1136 = vsel %vm377, %v1126, %v1128
  %v1137 = vsel %vm377, %v1130, %v1132
  %v1138 = vsel %vm377, %v1132, %v1134
  %1143 = vst [vmem:[#allocation3 + $0x1c0] sm:$0xff] %v1135
  %1144 = vst [vmem:[#allocation3 + $0x1c8] sm:$0xff] %v1136
  %1145 = vst [vmem:[#allocation3 + $0x1e0] sm:$0xff] %v1137
  %1146 = vst [vmem:[#allocation3 + $0x1e8] sm:$0xff] %v1138
  %1147 = vrot.lane.b32.xlu0 %v806, 95
  %v1148 = vpop.permute.xlu0 %1147
  %1149 = vrot.lane.b32.xlu0 %v807, 95
  %v1150 = vpop.permute.xlu0 %1149
  %1151 = vrot.lane.b32.xlu0 %v808, 95
  %v1152 = vpop.permute.xlu0 %1151
  %1153 = vrot.lane.b32.xlu0 %v812, 95
  %v1154 = vpop.permute.xlu0 %1153
  %1155 = vrot.lane.b32.xlu0 %v813, 95
  %v1156 = vpop.permute.xlu0 %1155
  %1157 = vrot.lane.b32.xlu0 %v814, 95
  %v1158 = vpop.permute.xlu0 %1157
  %v1159 = vsel %vm377, %v1148, %v1150
  %v1160 = vsel %vm377, %v1150, %v1152
  %v1161 = vsel %vm377, %v1154, %v1156
  %v1162 = vsel %vm377, %v1156, %v1158
  %1167 = vst [vmem:[#allocation3 + $0x1d0] sm:$0xff] %v1159
  %1168 = vst [vmem:[#allocation3 + $0x1d8] sm:$0xff] %v1160
  %1169 = vst [vmem:[#allocation3 + $0x1f0] sm:$0xff] %v1161
  %1170 = vst [vmem:[#allocation3 + $0x1f8] sm:$0xff] %v1162
  %1171 = vrot.lane.b32.xlu0 %v803, 94
  %v1172 = vpop.permute.xlu0 %1171
  %1173 = vrot.lane.b32.xlu0 %v804, 94
  %v1174 = vpop.permute.xlu0 %1173
  %1175 = vrot.lane.b32.xlu0 %v805, 94
  %v1176 = vpop.permute.xlu0 %1175
  %1177 = vrot.lane.b32.xlu0 %v809, 94
  %v1178 = vpop.permute.xlu0 %1177
  %1179 = vrot.lane.b32.xlu0 %v810, 94
  %v1180 = vpop.permute.xlu0 %1179
  %1181 = vrot.lane.b32.xlu0 %v811, 94
  %v1182 = vpop.permute.xlu0 %1181
  %v1183 = vsel %vm426, %v1172, %v1174
  %v1184 = vsel %vm426, %v1174, %v1176
  %v1185 = vsel %vm426, %v1178, %v1180
  %v1186 = vsel %vm426, %v1180, %v1182
  %1191 = vst [vmem:[#allocation3 + $0x200] sm:$0xff] %v1183
  %1192 = vst [vmem:[#allocation3 + $0x208] sm:$0xff] %v1184
  %1193 = vst [vmem:[#allocation3 + $0x220] sm:$0xff] %v1185
  %1194 = vst [vmem:[#allocation3 + $0x228] sm:$0xff] %v1186
  %1195 = vrot.lane.b32.xlu0 %v806, 94
  %v1196 = vpop.permute.xlu0 %1195
  %1197 = vrot.lane.b32.xlu0 %v807, 94
  %v1198 = vpop.permute.xlu0 %1197
  %1199 = vrot.lane.b32.xlu0 %v808, 94
  %v1200 = vpop.permute.xlu0 %1199
  %1201 = vrot.lane.b32.xlu0 %v812, 94
  %v1202 = vpop.permute.xlu0 %1201
  %1203 = vrot.lane.b32.xlu0 %v813, 94
  %v1204 = vpop.permute.xlu0 %1203
  %1205 = vrot.lane.b32.xlu0 %v814, 94
  %v1206 = vpop.permute.xlu0 %1205
  %v1207 = vsel %vm426, %v1196, %v1198
  %v1208 = vsel %vm426, %v1198, %v1200
  %v1209 = vsel %vm426, %v1202, %v1204
  %v1210 = vsel %vm426, %v1204, %v1206
  %1215 = vst [vmem:[#allocation3 + $0x210] sm:$0xff] %v1207
  %1216 = vst [vmem:[#allocation3 + $0x218] sm:$0xff] %v1208
  %1217 = vst [vmem:[#allocation3 + $0x230] sm:$0xff] %v1209
  %1218 = vst [vmem:[#allocation3 + $0x238] sm:$0xff] %v1210
  %s1219 = scalar_lea.vmem %s1, 32
  %v1220 = vld [vmem:[%s1219] sm:$0xff]
  %v1221 = vld [vmem:[%s1219 + $0x8] sm:$0xff]
  %v1222 = vld [vmem:[%s1219 + $0x10] sm:$0xff]
  %v1223 = vld [vmem:[%s1219 + $0x18] sm:$0xff]
  %v1224 = vld [vmem:[#allocation3] sm:$0xff]
  %v1225 = vld [vmem:[#allocation3 + $0x8] sm:$0xff]
  %v1226 = vld [vmem:[#allocation3 + $0x10] sm:$0xff]
  %v1227 = vld [vmem:[#allocation3 + $0x18] sm:$0xff]
  %v1228 = vld [vmem:[#allocation3 + $0x20] sm:$0xff]
  %v1229 = vld [vmem:[#allocation3 + $0x28] sm:$0xff]
  %v1230 = vld [vmem:[#allocation3 + $0x30] sm:$0xff]
  %v1231 = vld [vmem:[#allocation3 + $0x38] sm:$0xff]
  %v1232 = vld [vmem:[#allocation3 + $0x40] sm:$0xff]
  %v1233 = vld [vmem:[#allocation3 + $0x48] sm:$0xff]
  %v1234 = vld [vmem:[#allocation3 + $0x50] sm:$0xff]
  %v1235 = vld [vmem:[#allocation3 + $0x58] sm:$0xff]
  %v1236 = vld [vmem:[#allocation3 + $0x60] sm:$0xff]
  %v1237 = vld [vmem:[#allocation3 + $0x68] sm:$0xff]
  %v1238 = vld [vmem:[#allocation3 + $0x70] sm:$0xff]
  %v1239 = vld [vmem:[#allocation3 + $0x78] sm:$0xff]
  %v1240 = vld [vmem:[#allocation3 + $0x80] sm:$0xff]
  %v1241 = vld [vmem:[#allocation3 + $0x88] sm:$0xff]
  %v1242 = vld [vmem:[#allocation3 + $0x90] sm:$0xff]
  %v1243 = vld [vmem:[#allocation3 + $0x98] sm:$0xff]
  %v1244 = vld [vmem:[#allocation3 + $0xa0] sm:$0xff]
  %v1245 = vld [vmem:[#allocation3 + $0xa8] sm:$0xff]
  %v1246 = vld [vmem:[#allocation3 + $0xb0] sm:$0xff]
  %v1247 = vld [vmem:[#allocation3 + $0xb8] sm:$0xff]
  %v1248 = vld [vmem:[#allocation3 + $0xc0] sm:$0xff]
  %v1249 = vld [vmem:[#allocation3 + $0xc8] sm:$0xff]
  %v1250 = vld [vmem:[#allocation3 + $0xd0] sm:$0xff]
  %v1251 = vld [vmem:[#allocation3 + $0xd8] sm:$0xff]
  %v1252 = vld [vmem:[#allocation3 + $0xe0] sm:$0xff]
  %v1253 = vld [vmem:[#allocation3 + $0xe8] sm:$0xff]
  %v1254 = vld [vmem:[#allocation3 + $0xf0] sm:$0xff]
  %v1255 = vld [vmem:[#allocation3 + $0xf8] sm:$0xff]
  %v1256 = vld [vmem:[#allocation3 + $0x100] sm:$0xff]
  %v1257 = vld [vmem:[#allocation3 + $0x108] sm:$0xff]
  %v1258 = vld [vmem:[#allocation3 + $0x110] sm:$0xff]
  %v1259 = vld [vmem:[#allocation3 + $0x118] sm:$0xff]
  %v1260 = vld [vmem:[#allocation3 + $0x120] sm:$0xff]
  %v1261 = vld [vmem:[#allocation3 + $0x128] sm:$0xff]
  %v1262 = vld [vmem:[#allocation3 + $0x130] sm:$0xff]
  %v1263 = vld [vmem:[#allocation3 + $0x138] sm:$0xff]
  %v1264 = vld [vmem:[#allocation3 + $0x140] sm:$0xff]
  %v1265 = vld [vmem:[#allocation3 + $0x148] sm:$0xff]
  %v1266 = vld [vmem:[#allocation3 + $0x150] sm:$0xff]
  %v1267 = vld [vmem:[#allocation3 + $0x158] sm:$0xff]
  %v1268 = vld [vmem:[#allocation3 + $0x160] sm:$0xff]
  %v1269 = vld [vmem:[#allocation3 + $0x168] sm:$0xff]
  %v1270 = vld [vmem:[#allocation3 + $0x170] sm:$0xff]
  %v1271 = vld [vmem:[#allocation3 + $0x178] sm:$0xff]
  %v1272 = vld [vmem:[#allocation3 + $0x180] sm:$0xff]
  %v1273 = vld [vmem:[#allocation3 + $0x188] sm:$0xff]
  %v1274 = vld [vmem:[#allocation3 + $0x190] sm:$0xff]
  %v1275 = vld [vmem:[#allocation3 + $0x198] sm:$0xff]
  %v1276 = vld [vmem:[#allocation3 + $0x1a0] sm:$0xff]
  %v1277 = vld [vmem:[#allocation3 + $0x1a8] sm:$0xff]
  %v1278 = vld [vmem:[#allocation3 + $0x1b0] sm:$0xff]
  %v1279 = vld [vmem:[#allocation3 + $0x1b8] sm:$0xff]
  %v1280 = vld [vmem:[#allocation3 + $0x1c0] sm:$0xff]
  %v1281 = vld [vmem:[#allocation3 + $0x1c8] sm:$0xff]
  %v1282 = vld [vmem:[#allocation3 + $0x1d0] sm:$0xff]
  %v1283 = vld [vmem:[#allocation3 + $0x1d8] sm:$0xff]
  %v1284 = vld [vmem:[#allocation3 + $0x1e0] sm:$0xff]
  %v1285 = vld [vmem:[#allocation3 + $0x1e8] sm:$0xff]
  %v1286 = vld [vmem:[#allocation3 + $0x1f0] sm:$0xff]
  %v1287 = vld [vmem:[#allocation3 + $0x1f8] sm:$0xff]
  %v1288 = vld [vmem:[#allocation3 + $0x200] sm:$0xff]
  %v1289 = vld [vmem:[#allocation3 + $0x208] sm:$0xff]
  %v1290 = vld [vmem:[#allocation3 + $0x210] sm:$0xff]
  %v1291 = vld [vmem:[#allocation3 + $0x218] sm:$0xff]
  %v1292 = vld [vmem:[#allocation3 + $0x220] sm:$0xff]
  %v1293 = vld [vmem:[#allocation3 + $0x228] sm:$0xff]
  %v1294 = vld [vmem:[#allocation3 + $0x230] sm:$0xff]
  %v1295 = vld [vmem:[#allocation3 + $0x238] sm:$0xff]
  %s1296 = scalar_lea.vmem %s2, 16
  %v1297 = vld [vmem:[%s1296] sm:$0xff]
  %v1298 = vld [vmem:[%s1296 + $0x8] sm:$0xff]
  %1300 = vset.pattern.permute.xlu0 0
  %1301 = vperm.xlu0 %1300, %v1297
  %v1302 = vpop.permute.xlu0 %1301
  %1305 = vset.pattern.permute.xlu0 0
  %1306 = vperm.xlu0 %1305, %v1298
  %v1307 = vpop.permute.xlu0 %1306
  %v1310 = vsel %vm551, %v1221, 0
  %v1313 = vsel %vm551, %v1223, 0
  %1315 = vmatprep.subr.mxu0 %v1225
  %1316 = vmatpush1.msra.mxu0 %v1224
  %1317 = vmatprep.subr.mxu0 %v1229
  %1318 = vmatpush1.msra.mxu0 %v1228
  %1319 = vmatprep.subr.mxu0 %v1233
  %1320 = vmatpush1.msra.mxu0 %v1232
  %1321 = vmatprep.subr.mxu0 %v1237
  %1322 = vmatpush1.msra.mxu0 %v1236
  %1323 = vmatprep.subr.mxu0 %v1241
  %1324 = vmatpush1.msra.mxu0 %v1240
  %1325 = vmatprep.subr.mxu0 %v1245
  %1326 = vmatpush1.msra.mxu0 %v1244
  %1327 = vmatprep.subr.mxu0 %v1249
  %1328 = vmatpush1.msra.mxu0 %v1248
  %1329 = vmatprep.subr.mxu0 %v1253
  %1330 = vmatpush1.msra.mxu0 %v1252
  %1331 = vmatprep.subr.mxu0 %v1257
  %1332 = vmatpush1.msra.mxu0 %v1256
  %1333 = vmatprep.subr.mxu0 %v1261
  %1334 = vmatpush1.msra.mxu0 %v1260
  %1335 = vmatprep.subr.mxu0 %v1265
  %1336 = vmatpush1.msra.mxu0 %v1264
  %1337 = vmatprep.subr.mxu0 %v1269
  %1338 = vmatpush1.msra.mxu0 %v1268
  %1339 = vmatprep.subr.mxu0 %v1273
  %1340 = vmatpush1.msra.mxu0 %v1272
  %1341 = vmatprep.subr.mxu0 %v1277
  %1342 = vmatpush1.msra.mxu0 %v1276
  %1343 = vmatprep.subr.mxu0 %v1281
  %1344 = vmatpush1.msra.mxu0 %v1280
  %1345 = vmatprep.subr.mxu0 %v1285
  %1346 = vmatpush1.msra.mxu0 %v1284
  %1347 = vmatprep.subr.mxu0 %v1289
  %1348 = vmatpush1.msra.mxu0 %v1288
  %1349 = vmatprep.subr.mxu0 %v1293
  %1350 = vmatpush1.msra.mxu0 %v1292
  %1351 = vmatprep.subr.mxu0 0.0
  %1352 = vmatpush1.msra.mxu0 0.0
  %1353 = vmatprep.subr.mxu0 0.0
  %1354 = vmatpush1.msra.mxu0 0.0
  %1355 = vmatprep.subr.mxu0 0.0
  %1356 = vmatpush1.msra.mxu0 0.0
  %1357 = vmatprep.subr.mxu0 0.0
  %1358 = vmatpush1.msra.mxu0 0.0
  %1359 = vmatprep.subr.mxu0 0.0
  %1360 = vmatpush1.msra.mxu0 0.0
  %1361 = vmatprep.subr.mxu0 0.0
  %1362 = vmatpush1.msra.mxu0 0.0
  %1363 = vmatprep.subr.mxu0 0.0
  %1364 = vmatpush1.msra.mxu0 0.0
  %1365 = vmatprep.subr.mxu0 0.0
  %1366 = vmatpush1.msra.mxu0 0.0
  %1367 = vmatprep.subr.mxu0 0.0
  %1368 = vmatpush1.msra.mxu0 0.0
  %1369 = vmatprep.subr.mxu0 0.0
  %1370 = vmatpush1.msra.mxu0 0.0
  %1371 = vmatprep.subr.mxu0 0.0
  %1372 = vmatpush1.msra.mxu0 0.0
  %1373 = vmatprep.subr.mxu0 0.0
  %1374 = vmatpush1.msra.mxu0 0.0
  %1375 = vmatprep.subr.mxu0 0.0
  %1376 = vmatpush1.msra.mxu0 0.0
  %1377 = vmatprep.subr.mxu0 0.0
  %1378 = vmatpush1.msra.mxu0 0.0
  %1379 = vmatprep.mubr.f32.mxu0 %v1310
  %1380 = vmatmul.mubr.f32.gmra.mrb[0].mxu0 %v1220
  %v1381 = vpop.f32.mrb[0].mxu0
  %v1382 = vadd.f32 %v1302, %v1381
  %v1383 = vpop.f32.mrb[0].mxu0
  %v1384 = vadd.f32 %v1302, %v1383
  %1385 = vmatprep.mubr.f32.mxu0 %v1313
  %1386 = vmatmul.mubr.f32.gmra.mrb[0].mxu0 %v1222
  %v1387 = vpop.f32.mrb[0].mxu0
  %v1388 = vadd.f32 %v1307, %v1387
  %v1389 = vpop.f32.mrb[0].mxu0
  %v1390 = vadd.f32 %v1307, %v1389
  %1391 = vdwg.mxu0
  %1392 = vmatprep.subr.mxu0 %v1227
  %1393 = vmatpush1.msra.mxu0 %v1226
  %1394 = vmatprep.subr.mxu0 %v1231
  %1395 = vmatpush1.msra.mxu0 %v1230
  %1396 = vmatprep.subr.mxu0 %v1235
  %1397 = vmatpush1.msra.mxu0 %v1234
  %1398 = vmatprep.subr.mxu0 %v1239
  %1399 = vmatpush1.msra.mxu0 %v1238
  %1400 = vmatprep.subr.mxu0 %v1243
  %1401 = vmatpush1.msra.mxu0 %v1242
  %1402 = vmatprep.subr.mxu0 %v1247
  %1403 = vmatpush1.msra.mxu0 %v1246
  %1404 = vmatprep.subr.mxu0 %v1251
  %1405 = vmatpush1.msra.mxu0 %v1250
  %1406 = vmatprep.subr.mxu0 %v1255
  %1407 = vmatpush1.msra.mxu0 %v1254
  %1408 = vmatprep.subr.mxu0 %v1259
  %1409 = vmatpush1.msra.mxu0 %v1258
  %1410 = vmatprep.subr.mxu0 %v1263
  %1411 = vmatpush1.msra.mxu0 %v1262
  %1412 = vmatprep.subr.mxu0 %v1267
  %1413 = vmatpush1.msra.mxu0 %v1266
  %1414 = vmatprep.subr.mxu0 %v1271
  %1415 = vmatpush1.msra.mxu0 %v1270
  %1416 = vmatprep.subr.mxu0 %v1275
  %1417 = vmatpush1.msra.mxu0 %v1274
  %1418 = vmatprep.subr.mxu0 %v1279
  %1419 = vmatpush1.msra.mxu0 %v1278
  %1420 = vmatprep.subr.mxu0 %v1283
  %1421 = vmatpush1.msra.mxu0 %v1282
  %1422 = vmatprep.subr.mxu0 %v1287
  %1423 = vmatpush1.msra.mxu0 %v1286
  %1424 = vmatprep.subr.mxu0 %v1291
  %1425 = vmatpush1.msra.mxu0 %v1290
  %1426 = vmatprep.subr.mxu0 %v1295
  %1427 = vmatpush1.msra.mxu0 %v1294
  %1428 = vmatprep.subr.mxu0 0.0
  %1429 = vmatpush1.msra.mxu0 0.0
  %1430 = vmatprep.subr.mxu0 0.0
  %1431 = vmatpush1.msra.mxu0 0.0
  %1432 = vmatprep.subr.mxu0 0.0
  %1433 = vmatpush1.msra.mxu0 0.0
  %1434 = vmatprep.subr.mxu0 0.0
  %1435 = vmatpush1.msra.mxu0 0.0
  %1436 = vmatprep.subr.mxu0 0.0
  %1437 = vmatpush1.msra.mxu0 0.0
  %1438 = vmatprep.subr.mxu0 0.0
  %1439 = vmatpush1.msra.mxu0 0.0
  %1440 = vmatprep.subr.mxu0 0.0
  %1441 = vmatpush1.msra.mxu0 0.0
  %1442 = vmatprep.subr.mxu0 0.0
  %1443 = vmatpush1.msra.mxu0 0.0
  %1444 = vmatprep.subr.mxu0 0.0
  %1445 = vmatpush1.msra.mxu0 0.0
  %1446 = vmatprep.subr.mxu0 0.0
  %1447 = vmatpush1.msra.mxu0 0.0
  %1448 = vmatprep.subr.mxu0 0.0
  %1449 = vmatpush1.msra.mxu0 0.0
  %1450 = vmatprep.subr.mxu0 0.0
  %1451 = vmatpush1.msra.mxu0 0.0
  %1452 = vmatprep.subr.mxu0 0.0
  %1453 = vmatpush1.msra.mxu0 0.0
  %1454 = vmatprep.subr.mxu0 0.0
  %1455 = vmatpush1.msra.mxu0 0.0
  %1456 = vmatprep.mubr.f32.mxu0 %v1310
  %1457 = vmatmul.mubr.f32.gmra.mrb[0].mxu0 %v1220
  %v1458 = vpop.f32.mrb[0].mxu0
  %v1459 = vadd.f32 %v1302, %v1458
  %v1460 = vpop.f32.mrb[0].mxu0
  %v1461 = vadd.f32 %v1302, %v1460
  %1462 = vmatprep.mubr.f32.mxu0 %v1313
  %1463 = vmatmul.mubr.f32.gmra.mrb[0].mxu0 %v1222
  %v1464 = vpop.f32.mrb[0].mxu0
  %v1465 = vadd.f32 %v1307, %v1464
  %v1466 = vpop.f32.mrb[0].mxu0
  %v1467 = vadd.f32 %v1307, %v1466
  %1468 = vdwg.mxu0
  %v1469 = vmax.f32 %v1382, 0.0
  %v1470 = vmax.f32 %v1384, 0.0
  %v1471 = vmax.f32 %v1459, 0.0
  %v1472 = vmax.f32 %v1461, 0.0
  %v1473 = vmax.f32 %v1388, 0.0
  %v1474 = vmax.f32 %v1390, 0.0
  %v1475 = vmax.f32 %v1465, 0.0
  %v1476 = vmax.f32 %v1467, 0.0
  %v1477 = vmul.f32 %v1469, %v724
  %v1478 = vmul.f32 %v1470, %v728
  %v1479 = vmul.f32 %v1471, %v732
  %v1480 = vmul.f32 %v1472, %v736
  %v1481 = vmul.f32 %v1473, %v724
  %v1482 = vmul.f32 %v1474, %v728
  %v1483 = vmul.f32 %v1475, %v732
  %v1484 = vmul.f32 %v1476, %v736
  %1489 = vrot.lane.b32.xlu0 %v1477, 17
  %v1490 = vpop.permute.xlu0 %1489
  %1491 = vrot.lane.b32.xlu0 %v1478, 17
  %v1492 = vpop.permute.xlu0 %1491
  %1493 = vrot.lane.b32.xlu0 %v1481, 17
  %v1494 = vpop.permute.xlu0 %1493
  %1495 = vrot.lane.b32.xlu0 %v1482, 17
  %v1496 = vpop.permute.xlu0 %1495
  %v1497 = vsel %vm761, %v1490, %v1492
  %v1498 = vsel %vm761, %v1494, %v1496
  %1505 = vst.msk [vmem:[#allocation2] sm:$0xff] %vm770, %v1490
  %1506 = vst [vmem:[#allocation2 + $0x8] sm:$0xff] %v1497
  %1507 = vst.msk [vmem:[#allocation2 + $0x10] sm:$0xff] %vm761, %v1492
  %1508 = vst.msk [vmem:[#allocation2 + $0x30] sm:$0xff] %vm770, %v1494
  %1509 = vst [vmem:[#allocation2 + $0x38] sm:$0xff] %v1498
  %1510 = vst.msk [vmem:[#allocation2 + $0x40] sm:$0xff] %vm761, %v1496
  %1515 = vrot.lane.b32.xlu0 %v1479, 17
  %v1516 = vpop.permute.xlu0 %1515
  %1517 = vrot.lane.b32.xlu0 %v1480, 17
  %v1518 = vpop.permute.xlu0 %1517
  %1519 = vrot.lane.b32.xlu0 %v1483, 17
  %v1520 = vpop.permute.xlu0 %1519
  %1521 = vrot.lane.b32.xlu0 %v1484, 17
  %v1522 = vpop.permute.xlu0 %1521
  %v1523 = vsel %vm761, %v1516, %v1518
  %v1524 = vsel %vm761, %v1520, %v1522
  %1531 = vst.msk [vmem:[#allocation2 + $0x18] sm:$0xff] %vm770, %v1516
  %1532 = vst [vmem:[#allocation2 + $0x20] sm:$0xff] %v1523
  %1533 = vst.msk [vmem:[#allocation2 + $0x28] sm:$0xff] %vm761, %v1518
  %1534 = vst.msk [vmem:[#allocation2 + $0x48] sm:$0xff] %vm770, %v1520
  %1535 = vst [vmem:[#allocation2 + $0x50] sm:$0xff] %v1524
  %1536 = vst.msk [vmem:[#allocation2 + $0x58] sm:$0xff] %vm761, %v1522
  %v1537 = vld [vmem:[#allocation2] sm:$0xff]
  %v1538 = vld [vmem:[#allocation2 + $0x8] sm:$0xff]
  %v1539 = vld [vmem:[#allocation2 + $0x10] sm:$0xff]
  %v1540 = vld [vmem:[#allocation2 + $0x18] sm:$0xff]
  %v1541 = vld [vmem:[#allocation2 + $0x20] sm:$0xff]
  %v1542 = vld [vmem:[#allocation2 + $0x28] sm:$0xff]
  %v1543 = vld [vmem:[#allocation2 + $0x30] sm:$0xff]
  %v1544 = vld [vmem:[#allocation2 + $0x38] sm:$0xff]
  %v1545 = vld [vmem:[#allocation2 + $0x40] sm:$0xff]
  %v1546 = vld [vmem:[#allocation2 + $0x48] sm:$0xff]
  %v1547 = vld [vmem:[#allocation2 + $0x50] sm:$0xff]
  %v1548 = vld [vmem:[#allocation2 + $0x58] sm:$0xff]
  %1549 = vst [vmem:[#allocation3] sm:$0xff] %v1537
  %1550 = vst [vmem:[#allocation3 + $0x8] sm:$0xff] %v1538
  %1551 = vst [vmem:[#allocation3 + $0x20] sm:$0xff] %v1543
  %1552 = vst [vmem:[#allocation3 + $0x28] sm:$0xff] %v1544
  %1553 = vst [vmem:[#allocation3 + $0x10] sm:$0xff] %v1540
  %1554 = vst [vmem:[#allocation3 + $0x18] sm:$0xff] %v1541
  %1555 = vst [vmem:[#allocation3 + $0x30] sm:$0xff] %v1546
  %1556 = vst [vmem:[#allocation3 + $0x38] sm:$0xff] %v1547
  %1563 = vrot.lane.b32.xlu0 %v1537, 127
  %v1564 = vpop.permute.xlu0 %1563
  %1565 = vrot.lane.b32.xlu0 %v1538, 127
  %v1566 = vpop.permute.xlu0 %1565
  %1567 = vrot.lane.b32.xlu0 %v1539, 127
  %v1568 = vpop.permute.xlu0 %1567
  %1569 = vrot.lane.b32.xlu0 %v1543, 127
  %v1570 = vpop.permute.xlu0 %1569
  %1571 = vrot.lane.b32.xlu0 %v1544, 127
  %v1572 = vpop.permute.xlu0 %1571
  %1573 = vrot.lane.b32.xlu0 %v1545, 127
  %v1574 = vpop.permute.xlu0 %1573
  %v1575 = vsel %vm77, %v1564, %v1566
  %v1576 = vsel %vm77, %v1566, %v1568
  %v1577 = vsel %vm77, %v1570, %v1572
  %v1578 = vsel %vm77, %v1572, %v1574
  %1583 = vst [vmem:[#allocation3 + $0x40] sm:$0xff] %v1575
  %1584 = vst [vmem:[#allocation3 + $0x48] sm:$0xff] %v1576
  %1585 = vst [vmem:[#allocation3 + $0x60] sm:$0xff] %v1577
  %1586 = vst [vmem:[#allocation3 + $0x68] sm:$0xff] %v1578
  %1593 = vrot.lane.b32.xlu0 %v1540, 127
  %v1594 = vpop.permute.xlu0 %1593
  %1595 = vrot.lane.b32.xlu0 %v1541, 127
  %v1596 = vpop.permute.xlu0 %1595
  %1597 = vrot.lane.b32.xlu0 %v1542, 127
  %v1598 = vpop.permute.xlu0 %1597
  %1599 = vrot.lane.b32.xlu0 %v1546, 127
  %v1600 = vpop.permute.xlu0 %1599
  %1601 = vrot.lane.b32.xlu0 %v1547, 127
  %v1602 = vpop.permute.xlu0 %1601
  %1603 = vrot.lane.b32.xlu0 %v1548, 127
  %v1604 = vpop.permute.xlu0 %1603
  %v1605 = vsel %vm77, %v1594, %v1596
  %v1606 = vsel %vm77, %v1596, %v1598
  %v1607 = vsel %vm77, %v1600, %v1602
  %v1608 = vsel %vm77, %v1602, %v1604
  %1613 = vst [vmem:[#allocation3 + $0x50] sm:$0xff] %v1605
  %1614 = vst [vmem:[#allocation3 + $0x58] sm:$0xff] %v1606
  %1615 = vst [vmem:[#allocation3 + $0x70] sm:$0xff] %v1607
  %1616 = vst [vmem:[#allocation3 + $0x78] sm:$0xff] %v1608
  %1617 = vrot.lane.b32.xlu0 %v1537, 126
  %v1618 = vpop.permute.xlu0 %1617
  %1619 = vrot.lane.b32.xlu0 %v1538, 126
  %v1620 = vpop.permute.xlu0 %1619
  %1621 = vrot.lane.b32.xlu0 %v1539, 126
  %v1622 = vpop.permute.xlu0 %1621
  %1623 = vrot.lane.b32.xlu0 %v1543, 126
  %v1624 = vpop.permute.xlu0 %1623
  %1625 = vrot.lane.b32.xlu0 %v1544, 126
  %v1626 = vpop.permute.xlu0 %1625
  %1627 = vrot.lane.b32.xlu0 %v1545, 126
  %v1628 = vpop.permute.xlu0 %1627
  %v1629 = vsel %vm132, %v1618, %v1620
  %v1630 = vsel %vm132, %v1620, %v1622
  %v1631 = vsel %vm132, %v1624, %v1626
  %v1632 = vsel %vm132, %v1626, %v1628
  %1637 = vst [vmem:[#allocation3 + $0x80] sm:$0xff] %v1629
  %1638 = vst [vmem:[#allocation3 + $0x88] sm:$0xff] %v1630
  %1639 = vst [vmem:[#allocation3 + $0xa0] sm:$0xff] %v1631
  %1640 = vst [vmem:[#allocation3 + $0xa8] sm:$0xff] %v1632
  %1641 = vrot.lane.b32.xlu0 %v1540, 126
  %v1642 = vpop.permute.xlu0 %1641
  %1643 = vrot.lane.b32.xlu0 %v1541, 126
  %v1644 = vpop.permute.xlu0 %1643
  %1645 = vrot.lane.b32.xlu0 %v1542, 126
  %v1646 = vpop.permute.xlu0 %1645
  %1647 = vrot.lane.b32.xlu0 %v1546, 126
  %v1648 = vpop.permute.xlu0 %1647
  %1649 = vrot.lane.b32.xlu0 %v1547, 126
  %v1650 = vpop.permute.xlu0 %1649
  %1651 = vrot.lane.b32.xlu0 %v1548, 126
  %v1652 = vpop.permute.xlu0 %1651
  %v1653 = vsel %vm132, %v1642, %v1644
  %v1654 = vsel %vm132, %v1644, %v1646
  %v1655 = vsel %vm132, %v1648, %v1650
  %v1656 = vsel %vm132, %v1650, %v1652
  %1661 = vst [vmem:[#allocation3 + $0x90] sm:$0xff] %v1653
  %1662 = vst [vmem:[#allocation3 + $0x98] sm:$0xff] %v1654
  %1663 = vst [vmem:[#allocation3 + $0xb0] sm:$0xff] %v1655
  %1664 = vst [vmem:[#allocation3 + $0xb8] sm:$0xff] %v1656
  %1665 = vrot.lane.b32.xlu0 %v1537, 112
  %v1666 = vpop.permute.xlu0 %1665
  %1667 = vrot.lane.b32.xlu0 %v1538, 112
  %v1668 = vpop.permute.xlu0 %1667
  %1669 = vrot.lane.b32.xlu0 %v1539, 112
  %v1670 = vpop.permute.xlu0 %1669
  %1671 = vrot.lane.b32.xlu0 %v1543, 112
  %v1672 = vpop.permute.xlu0 %1671
  %1673 = vrot.lane.b32.xlu0 %v1544, 112
  %v1674 = vpop.permute.xlu0 %1673
  %1675 = vrot.lane.b32.xlu0 %v1545, 112
  %v1676 = vpop.permute.xlu0 %1675
  %v1677 = vsel %vm181, %v1666, %v1668
  %v1678 = vsel %vm181, %v1668, %v1670
  %v1679 = vsel %vm181, %v1672, %v1674
  %v1680 = vsel %vm181, %v1674, %v1676
  %1685 = vst [vmem:[#allocation3 + $0xc0] sm:$0xff] %v1677
  %1686 = vst [vmem:[#allocation3 + $0xc8] sm:$0xff] %v1678
  %1687 = vst [vmem:[#allocation3 + $0xe0] sm:$0xff] %v1679
  %1688 = vst [vmem:[#allocation3 + $0xe8] sm:$0xff] %v1680
  %1689 = vrot.lane.b32.xlu0 %v1540, 112
  %v1690 = vpop.permute.xlu0 %1689
  %1691 = vrot.lane.b32.xlu0 %v1541, 112
  %v1692 = vpop.permute.xlu0 %1691
  %1693 = vrot.lane.b32.xlu0 %v1542, 112
  %v1694 = vpop.permute.xlu0 %1693
  %1695 = vrot.lane.b32.xlu0 %v1546, 112
  %v1696 = vpop.permute.xlu0 %1695
  %1697 = vrot.lane.b32.xlu0 %v1547, 112
  %v1698 = vpop.permute.xlu0 %1697
  %1699 = vrot.lane.b32.xlu0 %v1548, 112
  %v1700 = vpop.permute.xlu0 %1699
  %v1701 = vsel %vm181, %v1690, %v1692
  %v1702 = vsel %vm181, %v1692, %v1694
  %v1703 = vsel %vm181, %v1696, %v1698
  %v1704 = vsel %vm181, %v1698, %v1700
  %1709 = vst [vmem:[#allocation3 + $0xd0] sm:$0xff] %v1701
  %1710 = vst [vmem:[#allocation3 + $0xd8] sm:$0xff] %v1702
  %1711 = vst [vmem:[#allocation3 + $0xf0] sm:$0xff] %v1703
  %1712 = vst [vmem:[#allocation3 + $0xf8] sm:$0xff] %v1704
  %1713 = vrot.lane.b32.xlu0 %v1537, 111
  %v1714 = vpop.permute.xlu0 %1713
  %1715 = vrot.lane.b32.xlu0 %v1538, 111
  %v1716 = vpop.permute.xlu0 %1715
  %1717 = vrot.lane.b32.xlu0 %v1539, 111
  %v1718 = vpop.permute.xlu0 %1717
  %1719 = vrot.lane.b32.xlu0 %v1543, 111
  %v1720 = vpop.permute.xlu0 %1719
  %1721 = vrot.lane.b32.xlu0 %v1544, 111
  %v1722 = vpop.permute.xlu0 %1721
  %1723 = vrot.lane.b32.xlu0 %v1545, 111
  %v1724 = vpop.permute.xlu0 %1723
  %v1725 = vsel %vm230, %v1714, %v1716
  %v1726 = vsel %vm230, %v1716, %v1718
  %v1727 = vsel %vm230, %v1720, %v1722
  %v1728 = vsel %vm230, %v1722, %v1724
  %1733 = vst [vmem:[#allocation3 + $0x100] sm:$0xff] %v1725
  %1734 = vst [vmem:[#allocation3 + $0x108] sm:$0xff] %v1726
  %1735 = vst [vmem:[#allocation3 + $0x120] sm:$0xff] %v1727
  %1736 = vst [vmem:[#allocation3 + $0x128] sm:$0xff] %v1728
  %1737 = vrot.lane.b32.xlu0 %v1540, 111
  %v1738 = vpop.permute.xlu0 %1737
  %1739 = vrot.lane.b32.xlu0 %v1541, 111
  %v1740 = vpop.permute.xlu0 %1739
  %1741 = vrot.lane.b32.xlu0 %v1542, 111
  %v1742 = vpop.permute.xlu0 %1741
  %1743 = vrot.lane.b32.xlu0 %v1546, 111
  %v1744 = vpop.permute.xlu0 %1743
  %1745 = vrot.lane.b32.xlu0 %v1547, 111
  %v1746 = vpop.permute.xlu0 %1745
  %1747 = vrot.lane.b32.xlu0 %v1548, 111
  %v1748 = vpop.permute.xlu0 %1747
  %v1749 = vsel %vm230, %v1738, %v1740
  %v1750 = vsel %vm230, %v1740, %v1742
  %v1751 = vsel %vm230, %v1744, %v1746
  %v1752 = vsel %vm230, %v1746, %v1748
  %1757 = vst [vmem:[#allocation3 + $0x110] sm:$0xff] %v1749
  %1758 = vst [vmem:[#allocation3 + $0x118] sm:$0xff] %v1750
  %1759 = vst [vmem:[#allocation3 + $0x130] sm:$0xff] %v1751
  %1760 = vst [vmem:[#allocation3 + $0x138] sm:$0xff] %v1752
  %1761 = vrot.lane.b32.xlu0 %v1537, 110
  %v1762 = vpop.permute.xlu0 %1761
  %1763 = vrot.lane.b32.xlu0 %v1538, 110
  %v1764 = vpop.permute.xlu0 %1763
  %1765 = vrot.lane.b32.xlu0 %v1539, 110
  %v1766 = vpop.permute.xlu0 %1765
  %1767 = vrot.lane.b32.xlu0 %v1543, 110
  %v1768 = vpop.permute.xlu0 %1767
  %1769 = vrot.lane.b32.xlu0 %v1544, 110
  %v1770 = vpop.permute.xlu0 %1769
  %1771 = vrot.lane.b32.xlu0 %v1545, 110
  %v1772 = vpop.permute.xlu0 %1771
  %v1773 = vsel %vm279, %v1762, %v1764
  %v1774 = vsel %vm279, %v1764, %v1766
  %v1775 = vsel %vm279, %v1768, %v1770
  %v1776 = vsel %vm279, %v1770, %v1772
  %1781 = vst [vmem:[#allocation3 + $0x140] sm:$0xff] %v1773
  %1782 = vst [vmem:[#allocation3 + $0x148] sm:$0xff] %v1774
  %1783 = vst [vmem:[#allocation3 + $0x160] sm:$0xff] %v1775
  %1784 = vst [vmem:[#allocation3 + $0x168] sm:$0xff] %v1776
  %1785 = vrot.lane.b32.xlu0 %v1540, 110
  %v1786 = vpop.permute.xlu0 %1785
  %1787 = vrot.lane.b32.xlu0 %v1541, 110
  %v1788 = vpop.permute.xlu0 %1787
  %1789 = vrot.lane.b32.xlu0 %v1542, 110
  %v1790 = vpop.permute.xlu0 %1789
  %1791 = vrot.lane.b32.xlu0 %v1546, 110
  %v1792 = vpop.permute.xlu0 %1791
  %1793 = vrot.lane.b32.xlu0 %v1547, 110
  %v1794 = vpop.permute.xlu0 %1793
  %1795 = vrot.lane.b32.xlu0 %v1548, 110
  %v1796 = vpop.permute.xlu0 %1795
  %v1797 = vsel %vm279, %v1786, %v1788
  %v1798 = vsel %vm279, %v1788, %v1790
  %v1799 = vsel %vm279, %v1792, %v1794
  %v1800 = vsel %vm279, %v1794, %v1796
  %1805 = vst [vmem:[#allocation3 + $0x150] sm:$0xff] %v1797
  %1806 = vst [vmem:[#allocation3 + $0x158] sm:$0xff] %v1798
  %1807 = vst [vmem:[#allocation3 + $0x170] sm:$0xff] %v1799
  %1808 = vst [vmem:[#allocation3 + $0x178] sm:$0xff] %v1800
  %1809 = vrot.lane.b32.xlu0 %v1537, 96
  %v1810 = vpop.permute.xlu0 %1809
  %1811 = vrot.lane.b32.xlu0 %v1538, 96
  %v1812 = vpop.permute.xlu0 %1811
  %1813 = vrot.lane.b32.xlu0 %v1539, 96
  %v1814 = vpop.permute.xlu0 %1813
  %1815 = vrot.lane.b32.xlu0 %v1543, 96
  %v1816 = vpop.permute.xlu0 %1815
  %1817 = vrot.lane.b32.xlu0 %v1544, 96
  %v1818 = vpop.permute.xlu0 %1817
  %1819 = vrot.lane.b32.xlu0 %v1545, 96
  %v1820 = vpop.permute.xlu0 %1819
  %v1821 = vsel %vm328, %v1810, %v1812
  %v1822 = vsel %vm328, %v1812, %v1814
  %v1823 = vsel %vm328, %v1816, %v1818
  %v1824 = vsel %vm328, %v1818, %v1820
  %1829 = vst [vmem:[#allocation3 + $0x180] sm:$0xff] %v1821
  %1830 = vst [vmem:[#allocation3 + $0x188] sm:$0xff] %v1822
  %1831 = vst [vmem:[#allocation3 + $0x1a0] sm:$0xff] %v1823
  %1832 = vst [vmem:[#allocation3 + $0x1a8] sm:$0xff] %v1824
  %1833 = vrot.lane.b32.xlu0 %v1540, 96
  %v1834 = vpop.permute.xlu0 %1833
  %1835 = vrot.lane.b32.xlu0 %v1541, 96
  %v1836 = vpop.permute.xlu0 %1835
  %1837 = vrot.lane.b32.xlu0 %v1542, 96
  %v1838 = vpop.permute.xlu0 %1837
  %1839 = vrot.lane.b32.xlu0 %v1546, 96
  %v1840 = vpop.permute.xlu0 %1839
  %1841 = vrot.lane.b32.xlu0 %v1547, 96
  %v1842 = vpop.permute.xlu0 %1841
  %1843 = vrot.lane.b32.xlu0 %v1548, 96
  %v1844 = vpop.permute.xlu0 %1843
  %v1845 = vsel %vm328, %v1834, %v1836
  %v1846 = vsel %vm328, %v1836, %v1838
  %v1847 = vsel %vm328, %v1840, %v1842
  %v1848 = vsel %vm328, %v1842, %v1844
  %1853 = vst [vmem:[#allocation3 + $0x190] sm:$0xff] %v1845
  %1854 = vst [vmem:[#allocation3 + $0x198] sm:$0xff] %v1846
  %1855 = vst [vmem:[#allocation3 + $0x1b0] sm:$0xff] %v1847
  %1856 = vst [vmem:[#allocation3 + $0x1b8] sm:$0xff] %v1848
  %1857 = vrot.lane.b32.xlu0 %v1537, 95
  %v1858 = vpop.permute.xlu0 %1857
  %1859 = vrot.lane.b32.xlu0 %v1538, 95
  %v1860 = vpop.permute.xlu0 %1859
  %1861 = vrot.lane.b32.xlu0 %v1539, 95
  %v1862 = vpop.permute.xlu0 %1861
  %1863 = vrot.lane.b32.xlu0 %v1543, 95
  %v1864 = vpop.permute.xlu0 %1863
  %1865 = vrot.lane.b32.xlu0 %v1544, 95
  %v1866 = vpop.permute.xlu0 %1865
  %1867 = vrot.lane.b32.xlu0 %v1545, 95
  %v1868 = vpop.permute.xlu0 %1867
  %v1869 = vsel %vm377, %v1858, %v1860
  %v1870 = vsel %vm377, %v1860, %v1862
  %v1871 = vsel %vm377, %v1864, %v1866
  %v1872 = vsel %vm377, %v1866, %v1868
  %1877 = vst [vmem:[#allocation3 + $0x1c0] sm:$0xff] %v1869
  %1878 = vst [vmem:[#allocation3 + $0x1c8] sm:$0xff] %v1870
  %1879 = vst [vmem:[#allocation3 + $0x1e0] sm:$0xff] %v1871
  %1880 = vst [vmem:[#allocation3 + $0x1e8] sm:$0xff] %v1872
  %1881 = vrot.lane.b32.xlu0 %v1540, 95
  %v1882 = vpop.permute.xlu0 %1881
  %1883 = vrot.lane.b32.xlu0 %v1541, 95
  %v1884 = vpop.permute.xlu0 %1883
  %1885 = vrot.lane.b32.xlu0 %v1542, 95
  %v1886 = vpop.permute.xlu0 %1885
  %1887 = vrot.lane.b32.xlu0 %v1546, 95
  %v1888 = vpop.permute.xlu0 %1887
  %1889 = vrot.lane.b32.xlu0 %v1547, 95
  %v1890 = vpop.permute.xlu0 %1889
  %1891 = vrot.lane.b32.xlu0 %v1548, 95
  %v1892 = vpop.permute.xlu0 %1891
  %v1893 = vsel %vm377, %v1882, %v1884
  %v1894 = vsel %vm377, %v1884, %v1886
  %v1895 = vsel %vm377, %v1888, %v1890
  %v1896 = vsel %vm377, %v1890, %v1892
  %1901 = vst [vmem:[#allocation3 + $0x1d0] sm:$0xff] %v1893
  %1902 = vst [vmem:[#allocation3 + $0x1d8] sm:$0xff] %v1894
  %1903 = vst [vmem:[#allocation3 + $0x1f0] sm:$0xff] %v1895
  %1904 = vst [vmem:[#allocation3 + $0x1f8] sm:$0xff] %v1896
  %1905 = vrot.lane.b32.xlu0 %v1537, 94
  %v1906 = vpop.permute.xlu0 %1905
  %1907 = vrot.lane.b32.xlu0 %v1538, 94
  %v1908 = vpop.permute.xlu0 %1907
  %1909 = vrot.lane.b32.xlu0 %v1539, 94
  %v1910 = vpop.permute.xlu0 %1909
  %1911 = vrot.lane.b32.xlu0 %v1543, 94
  %v1912 = vpop.permute.xlu0 %1911
  %1913 = vrot.lane.b32.xlu0 %v1544, 94
  %v1914 = vpop.permute.xlu0 %1913
  %1915 = vrot.lane.b32.xlu0 %v1545, 94
  %v1916 = vpop.permute.xlu0 %1915
  %v1917 = vsel %vm426, %v1906, %v1908
  %v1918 = vsel %vm426, %v1908, %v1910
  %v1919 = vsel %vm426, %v1912, %v1914
  %v1920 = vsel %vm426, %v1914, %v1916
  %1925 = vst [vmem:[#allocation3 + $0x200] sm:$0xff] %v1917
  %1926 = vst [vmem:[#allocation3 + $0x208] sm:$0xff] %v1918
  %1927 = vst [vmem:[#allocation3 + $0x220] sm:$0xff] %v1919
  %1928 = vst [vmem:[#allocation3 + $0x228] sm:$0xff] %v1920
  %1929 = vrot.lane.b32.xlu0 %v1540, 94
  %v1930 = vpop.permute.xlu0 %1929
  %1931 = vrot.lane.b32.xlu0 %v1541, 94
  %v1932 = vpop.permute.xlu0 %1931
  %1933 = vrot.lane.b32.xlu0 %v1542, 94
  %v1934 = vpop.permute.xlu0 %1933
  %1935 = vrot.lane.b32.xlu0 %v1546, 94
  %v1936 = vpop.permute.xlu0 %1935
  %1937 = vrot.lane.b32.xlu0 %v1547, 94
  %v1938 = vpop.permute.xlu0 %1937
  %1939 = vrot.lane.b32.xlu0 %v1548, 94
  %v1940 = vpop.permute.xlu0 %1939
  %v1941 = vsel %vm426, %v1930, %v1932
  %v1942 = vsel %vm426, %v1932, %v1934
  %v1943 = vsel %vm426, %v1936, %v1938
  %v1944 = vsel %vm426, %v1938, %v1940
  %1949 = vst [vmem:[#allocation3 + $0x210] sm:$0xff] %v1941
  %1950 = vst [vmem:[#allocation3 + $0x218] sm:$0xff] %v1942
  %1951 = vst [vmem:[#allocation3 + $0x230] sm:$0xff] %v1943
  %1952 = vst [vmem:[#allocation3 + $0x238] sm:$0xff] %v1944
  %s1953 = scalar_lea.vmem %s1, 64
  %v1954 = vld [vmem:[%s1953] sm:$0xff]
  %v1955 = vld [vmem:[%s1953 + $0x8] sm:$0xff]
  %v1956 = vld [vmem:[%s1953 + $0x10] sm:$0xff]
  %v1957 = vld [vmem:[%s1953 + $0x18] sm:$0xff]
  %v1958 = vld [vmem:[#allocation3] sm:$0xff]
  %v1959 = vld [vmem:[#allocation3 + $0x8] sm:$0xff]
  %v1960 = vld [vmem:[#allocation3 + $0x10] sm:$0xff]
  %v1961 = vld [vmem:[#allocation3 + $0x18] sm:$0xff]
  %v1962 = vld [vmem:[#allocation3 + $0x20] sm:$0xff]
  %v1963 = vld [vmem:[#allocation3 + $0x28] sm:$0xff]
  %v1964 = vld [vmem:[#allocation3 + $0x30] sm:$0xff]
  %v1965 = vld [vmem:[#allocation3 + $0x38] sm:$0xff]
  %v1966 = vld [vmem:[#allocation3 + $0x40] sm:$0xff]
  %v1967 = vld [vmem:[#allocation3 + $0x48] sm:$0xff]
  %v1968 = vld [vmem:[#allocation3 + $0x50] sm:$0xff]
  %v1969 = vld [vmem:[#allocation3 + $0x58] sm:$0xff]
  %v1970 = vld [vmem:[#allocation3 + $0x60] sm:$0xff]
  %v1971 = vld [vmem:[#allocation3 + $0x68] sm:$0xff]
  %v1972 = vld [vmem:[#allocation3 + $0x70] sm:$0xff]
  %v1973 = vld [vmem:[#allocation3 + $0x78] sm:$0xff]
  %v1974 = vld [vmem:[#allocation3 + $0x80] sm:$0xff]
  %v1975 = vld [vmem:[#allocation3 + $0x88] sm:$0xff]
  %v1976 = vld [vmem:[#allocation3 + $0x90] sm:$0xff]
  %v1977 = vld [vmem:[#allocation3 + $0x98] sm:$0xff]
  %v1978 = vld [vmem:[#allocation3 + $0xa0] sm:$0xff]
  %v1979 = vld [vmem:[#allocation3 + $0xa8] sm:$0xff]
  %v1980 = vld [vmem:[#allocation3 + $0xb0] sm:$0xff]
  %v1981 = vld [vmem:[#allocation3 + $0xb8] sm:$0xff]
  %v1982 = vld [vmem:[#allocation3 + $0xc0] sm:$0xff]
  %v1983 = vld [vmem:[#allocation3 + $0xc8] sm:$0xff]
  %v1984 = vld [vmem:[#allocation3 + $0xd0] sm:$0xff]
  %v1985 = vld [vmem:[#allocation3 + $0xd8] sm:$0xff]
  %v1986 = vld [vmem:[#allocation3 + $0xe0] sm:$0xff]
  %v1987 = vld [vmem:[#allocation3 + $0xe8] sm:$0xff]
  %v1988 = vld [vmem:[#allocation3 + $0xf0] sm:$0xff]
  %v1989 = vld [vmem:[#allocation3 + $0xf8] sm:$0xff]
  %v1990 = vld [vmem:[#allocation3 + $0x100] sm:$0xff]
  %v1991 = vld [vmem:[#allocation3 + $0x108] sm:$0xff]
  %v1992 = vld [vmem:[#allocation3 + $0x110] sm:$0xff]
  %v1993 = vld [vmem:[#allocation3 + $0x118] sm:$0xff]
  %v1994 = vld [vmem:[#allocation3 + $0x120] sm:$0xff]
  %v1995 = vld [vmem:[#allocation3 + $0x128] sm:$0xff]
  %v1996 = vld [vmem:[#allocation3 + $0x130] sm:$0xff]
  %v1997 = vld [vmem:[#allocation3 + $0x138] sm:$0xff]
  %v1998 = vld [vmem:[#allocation3 + $0x140] sm:$0xff]
  %v1999 = vld [vmem:[#allocation3 + $0x148] sm:$0xff]
  %v2000 = vld [vmem:[#allocation3 + $0x150] sm:$0xff]
  %v2001 = vld [vmem:[#allocation3 + $0x158] sm:$0xff]
  %v2002 = vld [vmem:[#allocation3 + $0x160] sm:$0xff]
  %v2003 = vld [vmem:[#allocation3 + $0x168] sm:$0xff]
  %v2004 = vld [vmem:[#allocation3 + $0x170] sm:$0xff]
  %v2005 = vld [vmem:[#allocation3 + $0x178] sm:$0xff]
  %v2006 = vld [vmem:[#allocation3 + $0x180] sm:$0xff]
  %v2007 = vld [vmem:[#allocation3 + $0x188] sm:$0xff]
  %v2008 = vld [vmem:[#allocation3 + $0x190] sm:$0xff]
  %v2009 = vld [vmem:[#allocation3 + $0x198] sm:$0xff]
  %v2010 = vld [vmem:[#allocation3 + $0x1a0] sm:$0xff]
  %v2011 = vld [vmem:[#allocation3 + $0x1a8] sm:$0xff]
  %v2012 = vld [vmem:[#allocation3 + $0x1b0] sm:$0xff]
  %v2013 = vld [vmem:[#allocation3 + $0x1b8] sm:$0xff]
  %v2014 = vld [vmem:[#allocation3 + $0x1c0] sm:$0xff]
  %v2015 = vld [vmem:[#allocation3 + $0x1c8] sm:$0xff]
  %v2016 = vld [vmem:[#allocation3 + $0x1d0] sm:$0xff]
  %v2017 = vld [vmem:[#allocation3 + $0x1d8] sm:$0xff]
  %v2018 = vld [vmem:[#allocation3 + $0x1e0] sm:$0xff]
  %v2019 = vld [vmem:[#allocation3 + $0x1e8] sm:$0xff]
  %v2020 = vld [vmem:[#allocation3 + $0x1f0] sm:$0xff]
  %v2021 = vld [vmem:[#allocation3 + $0x1f8] sm:$0xff]
  %v2022 = vld [vmem:[#allocation3 + $0x200] sm:$0xff]
  %v2023 = vld [vmem:[#allocation3 + $0x208] sm:$0xff]
  %v2024 = vld [vmem:[#allocation3 + $0x210] sm:$0xff]
  %v2025 = vld [vmem:[#allocation3 + $0x218] sm:$0xff]
  %v2026 = vld [vmem:[#allocation3 + $0x220] sm:$0xff]
  %v2027 = vld [vmem:[#allocation3 + $0x228] sm:$0xff]
  %v2028 = vld [vmem:[#allocation3 + $0x230] sm:$0xff]
  %v2029 = vld [vmem:[#allocation3 + $0x238] sm:$0xff]
  %s2030 = scalar_lea.vmem %s2, 32
  %v2031 = vld [vmem:[%s2030] sm:$0xff]
  %v2032 = vld [vmem:[%s2030 + $0x8] sm:$0xff]
  %2034 = vset.pattern.permute.xlu0 0
  %2035 = vperm.xlu0 %2034, %v2031
  %v2036 = vpop.permute.xlu0 %2035
  %2039 = vset.pattern.permute.xlu0 0
  %2040 = vperm.xlu0 %2039, %v2032
  %v2041 = vpop.permute.xlu0 %2040
  %v2044 = vsel %vm551, %v1955, 0
  %v2047 = vsel %vm551, %v1957, 0
  %2049 = vmatprep.subr.mxu0 %v1959
  %2050 = vmatpush1.msra.mxu0 %v1958
  %2051 = vmatprep.subr.mxu0 %v1963
  %2052 = vmatpush1.msra.mxu0 %v1962
  %2053 = vmatprep.subr.mxu0 %v1967
  %2054 = vmatpush1.msra.mxu0 %v1966
  %2055 = vmatprep.subr.mxu0 %v1971
  %2056 = vmatpush1.msra.mxu0 %v1970
  %2057 = vmatprep.subr.mxu0 %v1975
  %2058 = vmatpush1.msra.mxu0 %v1974
  %2059 = vmatprep.subr.mxu0 %v1979
  %2060 = vmatpush1.msra.mxu0 %v1978
  %2061 = vmatprep.subr.mxu0 %v1983
  %2062 = vmatpush1.msra.mxu0 %v1982
  %2063 = vmatprep.subr.mxu0 %v1987
  %2064 = vmatpush1.msra.mxu0 %v1986
  %2065 = vmatprep.subr.mxu0 %v1991
  %2066 = vmatpush1.msra.mxu0 %v1990
  %2067 = vmatprep.subr.mxu0 %v1995
  %2068 = vmatpush1.msra.mxu0 %v1994
  %2069 = vmatprep.subr.mxu0 %v1999
  %2070 = vmatpush1.msra.mxu0 %v1998
  %2071 = vmatprep.subr.mxu0 %v2003
  %2072 = vmatpush1.msra.mxu0 %v2002
  %2073 = vmatprep.subr.mxu0 %v2007
  %2074 = vmatpush1.msra.mxu0 %v2006
  %2075 = vmatprep.subr.mxu0 %v2011
  %2076 = vmatpush1.msra.mxu0 %v2010
  %2077 = vmatprep.subr.mxu0 %v2015
  %2078 = vmatpush1.msra.mxu0 %v2014
  %2079 = vmatprep.subr.mxu0 %v2019
  %2080 = vmatpush1.msra.mxu0 %v2018
  %2081 = vmatprep.subr.mxu0 %v2023
  %2082 = vmatpush1.msra.mxu0 %v2022
  %2083 = vmatprep.subr.mxu0 %v2027
  %2084 = vmatpush1.msra.mxu0 %v2026
  %2085 = vmatprep.subr.mxu0 0.0
  %2086 = vmatpush1.msra.mxu0 0.0
  %2087 = vmatprep.subr.mxu0 0.0
  %2088 = vmatpush1.msra.mxu0 0.0
  %2089 = vmatprep.subr.mxu0 0.0
  %2090 = vmatpush1.msra.mxu0 0.0
  %2091 = vmatprep.subr.mxu0 0.0
  %2092 = vmatpush1.msra.mxu0 0.0
  %2093 = vmatprep.subr.mxu0 0.0
  %2094 = vmatpush1.msra.mxu0 0.0
  %2095 = vmatprep.subr.mxu0 0.0
  %2096 = vmatpush1.msra.mxu0 0.0
  %2097 = vmatprep.subr.mxu0 0.0
  %2098 = vmatpush1.msra.mxu0 0.0
  %2099 = vmatprep.subr.mxu0 0.0
  %2100 = vmatpush1.msra.mxu0 0.0
  %2101 = vmatprep.subr.mxu0 0.0
  %2102 = vmatpush1.msra.mxu0 0.0
  %2103 = vmatprep.subr.mxu0 0.0
  %2104 = vmatpush1.msra.mxu0 0.0
  %2105 = vmatprep.subr.mxu0 0.0
  %2106 = vmatpush1.msra.mxu0 0.0
  %2107 = vmatprep.subr.mxu0 0.0
  %2108 = vmatpush1.msra.mxu0 0.0
  %2109 = vmatprep.subr.mxu0 0.0
  %2110 = vmatpush1.msra.mxu0 0.0
  %2111 = vmatprep.subr.mxu0 0.0
  %2112 = vmatpush1.msra.mxu0 0.0
  %2113 = vmatprep.mubr.f32.mxu0 %v2044
  %2114 = vmatmul.mubr.f32.gmra.mrb[0].mxu0 %v1954
  %v2115 = vpop.f32.mrb[0].mxu0
  %v2116 = vadd.f32 %v2036, %v2115
  %v2117 = vpop.f32.mrb[0].mxu0
  %v2118 = vadd.f32 %v2036, %v2117
  %2119 = vmatprep.mubr.f32.mxu0 %v2047
  %2120 = vmatmul.mubr.f32.gmra.mrb[0].mxu0 %v1956
  %v2121 = vpop.f32.mrb[0].mxu0
  %v2122 = vadd.f32 %v2041, %v2121
  %v2123 = vpop.f32.mrb[0].mxu0
  %v2124 = vadd.f32 %v2041, %v2123
  %2125 = vdwg.mxu0
  %2126 = vmatprep.subr.mxu0 %v1961
  %2127 = vmatpush1.msra.mxu0 %v1960
  %2128 = vmatprep.subr.mxu0 %v1965
  %2129 = vmatpush1.msra.mxu0 %v1964
  %2130 = vmatprep.subr.mxu0 %v1969
  %2131 = vmatpush1.msra.mxu0 %v1968
  %2132 = vmatprep.subr.mxu0 %v1973
  %2133 = vmatpush1.msra.mxu0 %v1972
  %2134 = vmatprep.subr.mxu0 %v1977
  %2135 = vmatpush1.msra.mxu0 %v1976
  %2136 = vmatprep.subr.mxu0 %v1981
  %2137 = vmatpush1.msra.mxu0 %v1980
  %2138 = vmatprep.subr.mxu0 %v1985
  %2139 = vmatpush1.msra.mxu0 %v1984
  %2140 = vmatprep.subr.mxu0 %v1989
  %2141 = vmatpush1.msra.mxu0 %v1988
  %2142 = vmatprep.subr.mxu0 %v1993
  %2143 = vmatpush1.msra.mxu0 %v1992
  %2144 = vmatprep.subr.mxu0 %v1997
  %2145 = vmatpush1.msra.mxu0 %v1996
  %2146 = vmatprep.subr.mxu0 %v2001
  %2147 = vmatpush1.msra.mxu0 %v2000
  %2148 = vmatprep.subr.mxu0 %v2005
  %2149 = vmatpush1.msra.mxu0 %v2004
  %2150 = vmatprep.subr.mxu0 %v2009
  %2151 = vmatpush1.msra.mxu0 %v2008
  %2152 = vmatprep.subr.mxu0 %v2013
  %2153 = vmatpush1.msra.mxu0 %v2012
  %2154 = vmatprep.subr.mxu0 %v2017
  %2155 = vmatpush1.msra.mxu0 %v2016
  %2156 = vmatprep.subr.mxu0 %v2021
  %2157 = vmatpush1.msra.mxu0 %v2020
  %2158 = vmatprep.subr.mxu0 %v2025
  %2159 = vmatpush1.msra.mxu0 %v2024
  %2160 = vmatprep.subr.mxu0 %v2029
  %2161 = vmatpush1.msra.mxu0 %v2028
  %2162 = vmatprep.subr.mxu0 0.0
  %2163 = vmatpush1.msra.mxu0 0.0
  %2164 = vmatprep.subr.mxu0 0.0
  %2165 = vmatpush1.msra.mxu0 0.0
  %2166 = vmatprep.subr.mxu0 0.0
  %2167 = vmatpush1.msra.mxu0 0.0
  %2168 = vmatprep.subr.mxu0 0.0
  %2169 = vmatpush1.msra.mxu0 0.0
  %2170 = vmatprep.subr.mxu0 0.0
  %2171 = vmatpush1.msra.mxu0 0.0
  %2172 = vmatprep.subr.mxu0 0.0
  %2173 = vmatpush1.msra.mxu0 0.0
  %2174 = vmatprep.subr.mxu0 0.0
  %2175 = vmatpush1.msra.mxu0 0.0
  %2176 = vmatprep.subr.mxu0 0.0
  %2177 = vmatpush1.msra.mxu0 0.0
  %2178 = vmatprep.subr.mxu0 0.0
  %2179 = vmatpush1.msra.mxu0 0.0
  %2180 = vmatprep.subr.mxu0 0.0
  %2181 = vmatpush1.msra.mxu0 0.0
  %2182 = vmatprep.subr.mxu0 0.0
  %2183 = vmatpush1.msra.mxu0 0.0
  %2184 = vmatprep.subr.mxu0 0.0
  %2185 = vmatpush1.msra.mxu0 0.0
  %2186 = vmatprep.subr.mxu0 0.0
  %2187 = vmatpush1.msra.mxu0 0.0
  %2188 = vmatprep.subr.mxu0 0.0
  %2189 = vmatpush1.msra.mxu0 0.0
  %2190 = vmatprep.mubr.f32.mxu0 %v2044
  %2191 = vmatmul.mubr.f32.gmra.mrb[0].mxu0 %v1954
  %v2192 = vpop.f32.mrb[0].mxu0
  %v2193 = vadd.f32 %v2036, %v2192
  %v2194 = vpop.f32.mrb[0].mxu0
  %v2195 = vadd.f32 %v2036, %v2194
  %2196 = vmatprep.mubr.f32.mxu0 %v2047
  %2197 = vmatmul.mubr.f32.gmra.mrb[0].mxu0 %v1956
  %v2198 = vpop.f32.mrb[0].mxu0
  %v2199 = vadd.f32 %v2041, %v2198
  %v2200 = vpop.f32.mrb[0].mxu0
  %v2201 = vadd.f32 %v2041, %v2200
  %2202 = vdwg.mxu0
  %v2203 = vadd.f32 %v2116, %v741
  %v2204 = vadd.f32 %v2118, %v742
  %v2205 = vadd.f32 %v2193, %v743
  %v2206 = vadd.f32 %v2195, %v744
  %v2207 = vadd.f32 %v2122, %v745
  %v2208 = vadd.f32 %v2124, %v746
  %v2209 = vadd.f32 %v2199, %v747
  %v2210 = vadd.f32 %v2201, %v748
  %v2211 = vmax.f32 %v2203, 0.0
  %v2212 = vmax.f32 %v2204, 0.0
  %v2213 = vmax.f32 %v2205, 0.0
  %v2214 = vmax.f32 %v2206, 0.0
  %v2215 = vmax.f32 %v2207, 0.0
  %v2216 = vmax.f32 %v2208, 0.0
  %v2217 = vmax.f32 %v2209, 0.0
  %v2218 = vmax.f32 %v2210, 0.0
  %v2219 = vmul.f32 %v2211, %v724
  %v2220 = vmul.f32 %v2212, %v728
  %v2221 = vmul.f32 %v2213, %v732
  %v2222 = vmul.f32 %v2214, %v736
  %v2223 = vmul.f32 %v2215, %v724
  %v2224 = vmul.f32 %v2216, %v728
  %v2225 = vmul.f32 %v2217, %v732
  %v2226 = vmul.f32 %v2218, %v736
  %2231 = vrot.lane.b32.xlu0 %v2219, 17
  %v2232 = vpop.permute.xlu0 %2231
  %2233 = vrot.lane.b32.xlu0 %v2220, 17
  %v2234 = vpop.permute.xlu0 %2233
  %2235 = vrot.lane.b32.xlu0 %v2223, 17
  %v2236 = vpop.permute.xlu0 %2235
  %2237 = vrot.lane.b32.xlu0 %v2224, 17
  %v2238 = vpop.permute.xlu0 %2237
  %v2239 = vsel %vm761, %v2232, %v2234
  %v2240 = vsel %vm761, %v2236, %v2238
  %2247 = vst.msk [vmem:[#allocation2] sm:$0xff] %vm770, %v2232
  %2248 = vst [vmem:[#allocation2 + $0x8] sm:$0xff] %v2239
  %2249 = vst.msk [vmem:[#allocation2 + $0x10] sm:$0xff] %vm761, %v2234
  %2250 = vst.msk [vmem:[#allocation2 + $0x30] sm:$0xff] %vm770, %v2236
  %2251 = vst [vmem:[#allocation2 + $0x38] sm:$0xff] %v2240
  %2252 = vst.msk [vmem:[#allocation2 + $0x40] sm:$0xff] %vm761, %v2238
  %2257 = vrot.lane.b32.xlu0 %v2221, 17
  %v2258 = vpop.permute.xlu0 %2257
  %2259 = vrot.lane.b32.xlu0 %v2222, 17
  %v2260 = vpop.permute.xlu0 %2259
  %2261 = vrot.lane.b32.xlu0 %v2225, 17
  %v2262 = vpop.permute.xlu0 %2261
  %2263 = vrot.lane.b32.xlu0 %v2226, 17
  %v2264 = vpop.permute.xlu0 %2263
  %v2265 = vsel %vm761, %v2258, %v2260
  %v2266 = vsel %vm761, %v2262, %v2264
  %2273 = vst.msk [vmem:[#allocation2 + $0x18] sm:$0xff] %vm770, %v2258
  %2274 = vst [vmem:[#allocation2 + $0x20] sm:$0xff] %v2265
  %2275 = vst.msk [vmem:[#allocation2 + $0x28] sm:$0xff] %vm761, %v2260
  %2276 = vst.msk [vmem:[#allocation2 + $0x48] sm:$0xff] %vm770, %v2262
  %2277 = vst [vmem:[#allocation2 + $0x50] sm:$0xff] %v2266
  %2278 = vst.msk [vmem:[#allocation2 + $0x58] sm:$0xff] %vm761, %v2264
  %v2279 = vld [vmem:[#allocation2] sm:$0xff]
  %v2280 = vld [vmem:[#allocation2 + $0x8] sm:$0xff]
  %v2281 = vld [vmem:[#allocation2 + $0x10] sm:$0xff]
  %v2282 = vld [vmem:[#allocation2 + $0x18] sm:$0xff]
  %v2283 = vld [vmem:[#allocation2 + $0x20] sm:$0xff]
  %v2284 = vld [vmem:[#allocation2 + $0x28] sm:$0xff]
  %v2285 = vld [vmem:[#allocation2 + $0x30] sm:$0xff]
  %v2286 = vld [vmem:[#allocation2 + $0x38] sm:$0xff]
  %v2287 = vld [vmem:[#allocation2 + $0x40] sm:$0xff]
  %v2288 = vld [vmem:[#allocation2 + $0x48] sm:$0xff]
  %v2289 = vld [vmem:[#allocation2 + $0x50] sm:$0xff]
  %v2290 = vld [vmem:[#allocation2 + $0x58] sm:$0xff]
  %2291 = vst [vmem:[#allocation3] sm:$0xff] %v2279
  %2292 = vst [vmem:[#allocation3 + $0x8] sm:$0xff] %v2280
  %2293 = vst [vmem:[#allocation3 + $0x20] sm:$0xff] %v2285
  %2294 = vst [vmem:[#allocation3 + $0x28] sm:$0xff] %v2286
  %2295 = vst [vmem:[#allocation3 + $0x10] sm:$0xff] %v2282
  %2296 = vst [vmem:[#allocation3 + $0x18] sm:$0xff] %v2283
  %2297 = vst [vmem:[#allocation3 + $0x30] sm:$0xff] %v2288
  %2298 = vst [vmem:[#allocation3 + $0x38] sm:$0xff] %v2289
  %2305 = vrot.lane.b32.xlu0 %v2279, 127
  %v2306 = vpop.permute.xlu0 %2305
  %2307 = vrot.lane.b32.xlu0 %v2280, 127
  %v2308 = vpop.permute.xlu0 %2307
  %2309 = vrot.lane.b32.xlu0 %v2281, 127
  %v2310 = vpop.permute.xlu0 %2309
  %2311 = vrot.lane.b32.xlu0 %v2285, 127
  %v2312 = vpop.permute.xlu0 %2311
  %2313 = vrot.lane.b32.xlu0 %v2286, 127
  %v2314 = vpop.permute.xlu0 %2313
  %2315 = vrot.lane.b32.xlu0 %v2287, 127
  %v2316 = vpop.permute.xlu0 %2315
  %v2317 = vsel %vm77, %v2306, %v2308
  %v2318 = vsel %vm77, %v2308, %v2310
  %v2319 = vsel %vm77, %v2312, %v2314
  %v2320 = vsel %vm77, %v2314, %v2316
  %2325 = vst [vmem:[#allocation3 + $0x40] sm:$0xff] %v2317
  %2326 = vst [vmem:[#allocation3 + $0x48] sm:$0xff] %v2318
  %2327 = vst [vmem:[#allocation3 + $0x60] sm:$0xff] %v2319
  %2328 = vst [vmem:[#allocation3 + $0x68] sm:$0xff] %v2320
  %2335 = vrot.lane.b32.xlu0 %v2282, 127
  %v2336 = vpop.permute.xlu0 %2335
  %2337 = vrot.lane.b32.xlu0 %v2283, 127
  %v2338 = vpop.permute.xlu0 %2337
  %2339 = vrot.lane.b32.xlu0 %v2284, 127
  %v2340 = vpop.permute.xlu0 %2339
  %2341 = vrot.lane.b32.xlu0 %v2288, 127
  %v2342 = vpop.permute.xlu0 %2341
  %2343 = vrot.lane.b32.xlu0 %v2289, 127
  %v2344 = vpop.permute.xlu0 %2343
  %2345 = vrot.lane.b32.xlu0 %v2290, 127
  %v2346 = vpop.permute.xlu0 %2345
  %v2347 = vsel %vm77, %v2336, %v2338
  %v2348 = vsel %vm77, %v2338, %v2340
  %v2349 = vsel %vm77, %v2342, %v2344
  %v2350 = vsel %vm77, %v2344, %v2346
  %2355 = vst [vmem:[#allocation3 + $0x50] sm:$0xff] %v2347
  %2356 = vst [vmem:[#allocation3 + $0x58] sm:$0xff] %v2348
  %2357 = vst [vmem:[#allocation3 + $0x70] sm:$0xff] %v2349
  %2358 = vst [vmem:[#allocation3 + $0x78] sm:$0xff] %v2350
  %2359 = vrot.lane.b32.xlu0 %v2279, 126
  %v2360 = vpop.permute.xlu0 %2359
  %2361 = vrot.lane.b32.xlu0 %v2280, 126
  %v2362 = vpop.permute.xlu0 %2361
  %2363 = vrot.lane.b32.xlu0 %v2281, 126
  %v2364 = vpop.permute.xlu0 %2363
  %2365 = vrot.lane.b32.xlu0 %v2285, 126
  %v2366 = vpop.permute.xlu0 %2365
  %2367 = vrot.lane.b32.xlu0 %v2286, 126
  %v2368 = vpop.permute.xlu0 %2367
  %2369 = vrot.lane.b32.xlu0 %v2287, 126
  %v2370 = vpop.permute.xlu0 %2369
  %v2371 = vsel %vm132, %v2360, %v2362
  %v2372 = vsel %vm132, %v2362, %v2364
  %v2373 = vsel %vm132, %v2366, %v2368
  %v2374 = vsel %vm132, %v2368, %v2370
  %2379 = vst [vmem:[#allocation3 + $0x80] sm:$0xff] %v2371
  %2380 = vst [vmem:[#allocation3 + $0x88] sm:$0xff] %v2372
  %2381 = vst [vmem:[#allocation3 + $0xa0] sm:$0xff] %v2373
  %2382 = vst [vmem:[#allocation3 + $0xa8] sm:$0xff] %v2374
  %2383 = vrot.lane.b32.xlu0 %v2282, 126
  %v2384 = vpop.permute.xlu0 %2383
  %2385 = vrot.lane.b32.xlu0 %v2283, 126
  %v2386 = vpop.permute.xlu0 %2385
  %2387 = vrot.lane.b32.xlu0 %v2284, 126
  %v2388 = vpop.permute.xlu0 %2387
  %2389 = vrot.lane.b32.xlu0 %v2288, 126
  %v2390 = vpop.permute.xlu0 %2389
  %2391 = vrot.lane.b32.xlu0 %v2289, 126
  %v2392 = vpop.permute.xlu0 %2391
  %2393 = vrot.lane.b32.xlu0 %v2290, 126
  %v2394 = vpop.permute.xlu0 %2393
  %v2395 = vsel %vm132, %v2384, %v2386
  %v2396 = vsel %vm132, %v2386, %v2388
  %v2397 = vsel %vm132, %v2390, %v2392
  %v2398 = vsel %vm132, %v2392, %v2394
  %2403 = vst [vmem:[#allocation3 + $0x90] sm:$0xff] %v2395
  %2404 = vst [vmem:[#allocation3 + $0x98] sm:$0xff] %v2396
  %2405 = vst [vmem:[#allocation3 + $0xb0] sm:$0xff] %v2397
  %2406 = vst [vmem:[#allocation3 + $0xb8] sm:$0xff] %v2398
  %2407 = vrot.lane.b32.xlu0 %v2279, 112
  %v2408 = vpop.permute.xlu0 %2407
  %2409 = vrot.lane.b32.xlu0 %v2280, 112
  %v2410 = vpop.permute.xlu0 %2409
  %2411 = vrot.lane.b32.xlu0 %v2281, 112
  %v2412 = vpop.permute.xlu0 %2411
  %2413 = vrot.lane.b32.xlu0 %v2285, 112
  %v2414 = vpop.permute.xlu0 %2413
  %2415 = vrot.lane.b32.xlu0 %v2286, 112
  %v2416 = vpop.permute.xlu0 %2415
  %2417 = vrot.lane.b32.xlu0 %v2287, 112
  %v2418 = vpop.permute.xlu0 %2417
  %v2419 = vsel %vm181, %v2408, %v2410
  %v2420 = vsel %vm181, %v2410, %v2412
  %v2421 = vsel %vm181, %v2414, %v2416
  %v2422 = vsel %vm181, %v2416, %v2418
  %2427 = vst [vmem:[#allocation3 + $0xc0] sm:$0xff] %v2419
  %2428 = vst [vmem:[#allocation3 + $0xc8] sm:$0xff] %v2420
  %2429 = vst [vmem:[#allocation3 + $0xe0] sm:$0xff] %v2421
  %2430 = vst [vmem:[#allocation3 + $0xe8] sm:$0xff] %v2422
  %2431 = vrot.lane.b32.xlu0 %v2282, 112
  %v2432 = vpop.permute.xlu0 %2431
  %2433 = vrot.lane.b32.xlu0 %v2283, 112
  %v2434 = vpop.permute.xlu0 %2433
  %2435 = vrot.lane.b32.xlu0 %v2284, 112
  %v2436 = vpop.permute.xlu0 %2435
  %2437 = vrot.lane.b32.xlu0 %v2288, 112
  %v2438 = vpop.permute.xlu0 %2437
  %2439 = vrot.lane.b32.xlu0 %v2289, 112
  %v2440 = vpop.permute.xlu0 %2439
  %2441 = vrot.lane.b32.xlu0 %v2290, 112
  %v2442 = vpop.permute.xlu0 %2441
  %v2443 = vsel %vm181, %v2432, %v2434
  %v2444 = vsel %vm181, %v2434, %v2436
  %v2445 = vsel %vm181, %v2438, %v2440
  %v2446 = vsel %vm181, %v2440, %v2442
  %2451 = vst [vmem:[#allocation3 + $0xd0] sm:$0xff] %v2443
  %2452 = vst [vmem:[#allocation3 + $0xd8] sm:$0xff] %v2444
  %2453 = vst [vmem:[#allocation3 + $0xf0] sm:$0xff] %v2445
  %2454 = vst [vmem:[#allocation3 + $0xf8] sm:$0xff] %v2446
  %2455 = vrot.lane.b32.xlu0 %v2279, 111
  %v2456 = vpop.permute.xlu0 %2455
  %2457 = vrot.lane.b32.xlu0 %v2280, 111
  %v2458 = vpop.permute.xlu0 %2457
  %2459 = vrot.lane.b32.xlu0 %v2281, 111
  %v2460 = vpop.permute.xlu0 %2459
  %2461 = vrot.lane.b32.xlu0 %v2285, 111
  %v2462 = vpop.permute.xlu0 %2461
  %2463 = vrot.lane.b32.xlu0 %v2286, 111
  %v2464 = vpop.permute.xlu0 %2463
  %2465 = vrot.lane.b32.xlu0 %v2287, 111
  %v2466 = vpop.permute.xlu0 %2465
  %v2467 = vsel %vm230, %v2456, %v2458
  %v2468 = vsel %vm230, %v2458, %v2460
  %v2469 = vsel %vm230, %v2462, %v2464
  %v2470 = vsel %vm230, %v2464, %v2466
  %2475 = vst [vmem:[#allocation3 + $0x100] sm:$0xff] %v2467
  %2476 = vst [vmem:[#allocation3 + $0x108] sm:$0xff] %v2468
  %2477 = vst [vmem:[#allocation3 + $0x120] sm:$0xff] %v2469
  %2478 = vst [vmem:[#allocation3 + $0x128] sm:$0xff] %v2470
  %2479 = vrot.lane.b32.xlu0 %v2282, 111
  %v2480 = vpop.permute.xlu0 %2479
  %2481 = vrot.lane.b32.xlu0 %v2283, 111
  %v2482 = vpop.permute.xlu0 %2481
  %2483 = vrot.lane.b32.xlu0 %v2284, 111
  %v2484 = vpop.permute.xlu0 %2483
  %2485 = vrot.lane.b32.xlu0 %v2288, 111
  %v2486 = vpop.permute.xlu0 %2485
  %2487 = vrot.lane.b32.xlu0 %v2289, 111
  %v2488 = vpop.permute.xlu0 %2487
  %2489 = vrot.lane.b32.xlu0 %v2290, 111
  %v2490 = vpop.permute.xlu0 %2489
  %v2491 = vsel %vm230, %v2480, %v2482
  %v2492 = vsel %vm230, %v2482, %v2484
  %v2493 = vsel %vm230, %v2486, %v2488
  %v2494 = vsel %vm230, %v2488, %v2490
  %2499 = vst [vmem:[#allocation3 + $0x110] sm:$0xff] %v2491
  %2500 = vst [vmem:[#allocation3 + $0x118] sm:$0xff] %v2492
  %2501 = vst [vmem:[#allocation3 + $0x130] sm:$0xff] %v2493
  %2502 = vst [vmem:[#allocation3 + $0x138] sm:$0xff] %v2494
  %2503 = vrot.lane.b32.xlu0 %v2279, 110
  %v2504 = vpop.permute.xlu0 %2503
  %2505 = vrot.lane.b32.xlu0 %v2280, 110
  %v2506 = vpop.permute.xlu0 %2505
  %2507 = vrot.lane.b32.xlu0 %v2281, 110
  %v2508 = vpop.permute.xlu0 %2507
  %2509 = vrot.lane.b32.xlu0 %v2285, 110
  %v2510 = vpop.permute.xlu0 %2509
  %2511 = vrot.lane.b32.xlu0 %v2286, 110
  %v2512 = vpop.permute.xlu0 %2511
  %2513 = vrot.lane.b32.xlu0 %v2287, 110
  %v2514 = vpop.permute.xlu0 %2513
  %v2515 = vsel %vm279, %v2504, %v2506
  %v2516 = vsel %vm279, %v2506, %v2508
  %v2517 = vsel %vm279, %v2510, %v2512
  %v2518 = vsel %vm279, %v2512, %v2514
  %2523 = vst [vmem:[#allocation3 + $0x140] sm:$0xff] %v2515
  %2524 = vst [vmem:[#allocation3 + $0x148] sm:$0xff] %v2516
  %2525 = vst [vmem:[#allocation3 + $0x160] sm:$0xff] %v2517
  %2526 = vst [vmem:[#allocation3 + $0x168] sm:$0xff] %v2518
  %2527 = vrot.lane.b32.xlu0 %v2282, 110
  %v2528 = vpop.permute.xlu0 %2527
  %2529 = vrot.lane.b32.xlu0 %v2283, 110
  %v2530 = vpop.permute.xlu0 %2529
  %2531 = vrot.lane.b32.xlu0 %v2284, 110
  %v2532 = vpop.permute.xlu0 %2531
  %2533 = vrot.lane.b32.xlu0 %v2288, 110
  %v2534 = vpop.permute.xlu0 %2533
  %2535 = vrot.lane.b32.xlu0 %v2289, 110
  %v2536 = vpop.permute.xlu0 %2535
  %2537 = vrot.lane.b32.xlu0 %v2290, 110
  %v2538 = vpop.permute.xlu0 %2537
  %v2539 = vsel %vm279, %v2528, %v2530
  %v2540 = vsel %vm279, %v2530, %v2532
  %v2541 = vsel %vm279, %v2534, %v2536
  %v2542 = vsel %vm279, %v2536, %v2538
  %2547 = vst [vmem:[#allocation3 + $0x150] sm:$0xff] %v2539
  %2548 = vst [vmem:[#allocation3 + $0x158] sm:$0xff] %v2540
  %2549 = vst [vmem:[#allocation3 + $0x170] sm:$0xff] %v2541
  %2550 = vst [vmem:[#allocation3 + $0x178] sm:$0xff] %v2542
  %2551 = vrot.lane.b32.xlu0 %v2279, 96
  %v2552 = vpop.permute.xlu0 %2551
  %2553 = vrot.lane.b32.xlu0 %v2280, 96
  %v2554 = vpop.permute.xlu0 %2553
  %2555 = vrot.lane.b32.xlu0 %v2281, 96
  %v2556 = vpop.permute.xlu0 %2555
  %2557 = vrot.lane.b32.xlu0 %v2285, 96
  %v2558 = vpop.permute.xlu0 %2557
  %2559 = vrot.lane.b32.xlu0 %v2286, 96
  %v2560 = vpop.permute.xlu0 %2559
  %2561 = vrot.lane.b32.xlu0 %v2287, 96
  %v2562 = vpop.permute.xlu0 %2561
  %v2563 = vsel %vm328, %v2552, %v2554
  %v2564 = vsel %vm328, %v2554, %v2556
  %v2565 = vsel %vm328, %v2558, %v2560
  %v2566 = vsel %vm328, %v2560, %v2562
  %2571 = vst [vmem:[#allocation3 + $0x180] sm:$0xff] %v2563
  %2572 = vst [vmem:[#allocation3 + $0x188] sm:$0xff] %v2564
  %2573 = vst [vmem:[#allocation3 + $0x1a0] sm:$0xff] %v2565
  %2574 = vst [vmem:[#allocation3 + $0x1a8] sm:$0xff] %v2566
  %2575 = vrot.lane.b32.xlu0 %v2282, 96
  %v2576 = vpop.permute.xlu0 %2575
  %2577 = vrot.lane.b32.xlu0 %v2283, 96
  %v2578 = vpop.permute.xlu0 %2577
  %2579 = vrot.lane.b32.xlu0 %v2284, 96
  %v2580 = vpop.permute.xlu0 %2579
  %2581 = vrot.lane.b32.xlu0 %v2288, 96
  %v2582 = vpop.permute.xlu0 %2581
  %2583 = vrot.lane.b32.xlu0 %v2289, 96
  %v2584 = vpop.permute.xlu0 %2583
  %2585 = vrot.lane.b32.xlu0 %v2290, 96
  %v2586 = vpop.permute.xlu0 %2585
  %v2587 = vsel %vm328, %v2576, %v2578
  %v2588 = vsel %vm328, %v2578, %v2580
  %v2589 = vsel %vm328, %v2582, %v2584
  %v2590 = vsel %vm328, %v2584, %v2586
  %2595 = vst [vmem:[#allocation3 + $0x190] sm:$0xff] %v2587
  %2596 = vst [vmem:[#allocation3 + $0x198] sm:$0xff] %v2588
  %2597 = vst [vmem:[#allocation3 + $0x1b0] sm:$0xff] %v2589
  %2598 = vst [vmem:[#allocation3 + $0x1b8] sm:$0xff] %v2590
  %2599 = vrot.lane.b32.xlu0 %v2279, 95
  %v2600 = vpop.permute.xlu0 %2599
  %2601 = vrot.lane.b32.xlu0 %v2280, 95
  %v2602 = vpop.permute.xlu0 %2601
  %2603 = vrot.lane.b32.xlu0 %v2281, 95
  %v2604 = vpop.permute.xlu0 %2603
  %2605 = vrot.lane.b32.xlu0 %v2285, 95
  %v2606 = vpop.permute.xlu0 %2605
  %2607 = vrot.lane.b32.xlu0 %v2286, 95
  %v2608 = vpop.permute.xlu0 %2607
  %2609 = vrot.lane.b32.xlu0 %v2287, 95
  %v2610 = vpop.permute.xlu0 %2609
  %v2611 = vsel %vm377, %v2600, %v2602
  %v2612 = vsel %vm377, %v2602, %v2604
  %v2613 = vsel %vm377, %v2606, %v2608
  %v2614 = vsel %vm377, %v2608, %v2610
  %2619 = vst [vmem:[#allocation3 + $0x1c0] sm:$0xff] %v2611
  %2620 = vst [vmem:[#allocation3 + $0x1c8] sm:$0xff] %v2612
  %2621 = vst [vmem:[#allocation3 + $0x1e0] sm:$0xff] %v2613
  %2622 = vst [vmem:[#allocation3 + $0x1e8] sm:$0xff] %v2614
  %2623 = vrot.lane.b32.xlu0 %v2282, 95
  %v2624 = vpop.permute.xlu0 %2623
  %2625 = vrot.lane.b32.xlu0 %v2283, 95
  %v2626 = vpop.permute.xlu0 %2625
  %2627 = vrot.lane.b32.xlu0 %v2284, 95
  %v2628 = vpop.permute.xlu0 %2627
  %2629 = vrot.lane.b32.xlu0 %v2288, 95
  %v2630 = vpop.permute.xlu0 %2629
  %2631 = vrot.lane.b32.xlu0 %v2289, 95
  %v2632 = vpop.permute.xlu0 %2631
  %2633 = vrot.lane.b32.xlu0 %v2290, 95
  %v2634 = vpop.permute.xlu0 %2633
  %v2635 = vsel %vm377, %v2624, %v2626
  %v2636 = vsel %vm377, %v2626, %v2628
  %v2637 = vsel %vm377, %v2630, %v2632
  %v2638 = vsel %vm377, %v2632, %v2634
  %2643 = vst [vmem:[#allocation3 + $0x1d0] sm:$0xff] %v2635
  %2644 = vst [vmem:[#allocation3 + $0x1d8] sm:$0xff] %v2636
  %2645 = vst [vmem:[#allocation3 + $0x1f0] sm:$0xff] %v2637
  %2646 = vst [vmem:[#allocation3 + $0x1f8] sm:$0xff] %v2638
  %2647 = vrot.lane.b32.xlu0 %v2279, 94
  %v2648 = vpop.permute.xlu0 %2647
  %2649 = vrot.lane.b32.xlu0 %v2280, 94
  %v2650 = vpop.permute.xlu0 %2649
  %2651 = vrot.lane.b32.xlu0 %v2281, 94
  %v2652 = vpop.permute.xlu0 %2651
  %2653 = vrot.lane.b32.xlu0 %v2285, 94
  %v2654 = vpop.permute.xlu0 %2653
  %2655 = vrot.lane.b32.xlu0 %v2286, 94
  %v2656 = vpop.permute.xlu0 %2655
  %2657 = vrot.lane.b32.xlu0 %v2287, 94
  %v2658 = vpop.permute.xlu0 %2657
  %v2659 = vsel %vm426, %v2648, %v2650
  %v2660 = vsel %vm426, %v2650, %v2652
  %v2661 = vsel %vm426, %v2654, %v2656
  %v2662 = vsel %vm426, %v2656, %v2658
  %2667 = vst [vmem:[#allocation3 + $0x200] sm:$0xff] %v2659
  %2668 = vst [vmem:[#allocation3 + $0x208] sm:$0xff] %v2660
  %2669 = vst [vmem:[#allocation3 + $0x220] sm:$0xff] %v2661
  %2670 = vst [vmem:[#allocation3 + $0x228] sm:$0xff] %v2662
  %2671 = vrot.lane.b32.xlu0 %v2282, 94
  %v2672 = vpop.permute.xlu0 %2671
  %2673 = vrot.lane.b32.xlu0 %v2283, 94
  %v2674 = vpop.permute.xlu0 %2673
  %2675 = vrot.lane.b32.xlu0 %v2284, 94
  %v2676 = vpop.permute.xlu0 %2675
  %2677 = vrot.lane.b32.xlu0 %v2288, 94
  %v2678 = vpop.permute.xlu0 %2677
  %2679 = vrot.lane.b32.xlu0 %v2289, 94
  %v2680 = vpop.permute.xlu0 %2679
  %2681 = vrot.lane.b32.xlu0 %v2290, 94
  %v2682 = vpop.permute.xlu0 %2681
  %v2683 = vsel %vm426, %v2672, %v2674
  %v2684 = vsel %vm426, %v2674, %v2676
  %v2685 = vsel %vm426, %v2678, %v2680
  %v2686 = vsel %vm426, %v2680, %v2682
  %2691 = vst [vmem:[#allocation3 + $0x210] sm:$0xff] %v2683
  %2692 = vst [vmem:[#allocation3 + $0x218] sm:$0xff] %v2684
  %2693 = vst [vmem:[#allocation3 + $0x230] sm:$0xff] %v2685
  %2694 = vst [vmem:[#allocation3 + $0x238] sm:$0xff] %v2686
  %s2695 = scalar_lea.vmem %s1, 96
  %v2696 = vld [vmem:[%s2695] sm:$0xff]
  %v2697 = vld [vmem:[%s2695 + $0x8] sm:$0xff]
  %v2698 = vld [vmem:[%s2695 + $0x10] sm:$0xff]
  %v2699 = vld [vmem:[%s2695 + $0x18] sm:$0xff]
  %v2700 = vld [vmem:[#allocation3] sm:$0xff]
  %v2701 = vld [vmem:[#allocation3 + $0x8] sm:$0xff]
  %v2702 = vld [vmem:[#allocation3 + $0x10] sm:$0xff]
  %v2703 = vld [vmem:[#allocation3 + $0x18] sm:$0xff]
  %v2704 = vld [vmem:[#allocation3 + $0x20] sm:$0xff]
  %v2705 = vld [vmem:[#allocation3 + $0x28] sm:$0xff]
  %v2706 = vld [vmem:[#allocation3 + $0x30] sm:$0xff]
  %v2707 = vld [vmem:[#allocation3 + $0x38] sm:$0xff]
  %v2708 = vld [vmem:[#allocation3 + $0x40] sm:$0xff]
  %v2709 = vld [vmem:[#allocation3 + $0x48] sm:$0xff]
  %v2710 = vld [vmem:[#allocation3 + $0x50] sm:$0xff]
  %v2711 = vld [vmem:[#allocation3 + $0x58] sm:$0xff]
  %v2712 = vld [vmem:[#allocation3 + $0x60] sm:$0xff]
  %v2713 = vld [vmem:[#allocation3 + $0x68] sm:$0xff]
  %v2714 = vld [vmem:[#allocation3 + $0x70] sm:$0xff]
  %v2715 = vld [vmem:[#allocation3 + $0x78] sm:$0xff]
  %v2716 = vld [vmem:[#allocation3 + $0x80] sm:$0xff]
  %v2717 = vld [vmem:[#allocation3 + $0x88] sm:$0xff]
  %v2718 = vld [vmem:[#allocation3 + $0x90] sm:$0xff]
  %v2719 = vld [vmem:[#allocation3 + $0x98] sm:$0xff]
  %v2720 = vld [vmem:[#allocation3 + $0xa0] sm:$0xff]
  %v2721 = vld [vmem:[#allocation3 + $0xa8] sm:$0xff]
  %v2722 = vld [vmem:[#allocation3 + $0xb0] sm:$0xff]
  %v2723 = vld [vmem:[#allocation3 + $0xb8] sm:$0xff]
  %v2724 = vld [vmem:[#allocation3 + $0xc0] sm:$0xff]
  %v2725 = vld [vmem:[#allocation3 + $0xc8] sm:$0xff]
  %v2726 = vld [vmem:[#allocation3 + $0xd0] sm:$0xff]
  %v2727 = vld [vmem:[#allocation3 + $0xd8] sm:$0xff]
  %v2728 = vld [vmem:[#allocation3 + $0xe0] sm:$0xff]
  %v2729 = vld [vmem:[#allocation3 + $0xe8] sm:$0xff]
  %v2730 = vld [vmem:[#allocation3 + $0xf0] sm:$0xff]
  %v2731 = vld [vmem:[#allocation3 + $0xf8] sm:$0xff]
  %v2732 = vld [vmem:[#allocation3 + $0x100] sm:$0xff]
  %v2733 = vld [vmem:[#allocation3 + $0x108] sm:$0xff]
  %v2734 = vld [vmem:[#allocation3 + $0x110] sm:$0xff]
  %v2735 = vld [vmem:[#allocation3 + $0x118] sm:$0xff]
  %v2736 = vld [vmem:[#allocation3 + $0x120] sm:$0xff]
  %v2737 = vld [vmem:[#allocation3 + $0x128] sm:$0xff]
  %v2738 = vld [vmem:[#allocation3 + $0x130] sm:$0xff]
  %v2739 = vld [vmem:[#allocation3 + $0x138] sm:$0xff]
  %v2740 = vld [vmem:[#allocation3 + $0x140] sm:$0xff]
  %v2741 = vld [vmem:[#allocation3 + $0x148] sm:$0xff]
  %v2742 = vld [vmem:[#allocation3 + $0x150] sm:$0xff]
  %v2743 = vld [vmem:[#allocation3 + $0x158] sm:$0xff]
  %v2744 = vld [vmem:[#allocation3 + $0x160] sm:$0xff]
  %v2745 = vld [vmem:[#allocation3 + $0x168] sm:$0xff]
  %v2746 = vld [vmem:[#allocation3 + $0x170] sm:$0xff]
  %v2747 = vld [vmem:[#allocation3 + $0x178] sm:$0xff]
  %v2748 = vld [vmem:[#allocation3 + $0x180] sm:$0xff]
  %v2749 = vld [vmem:[#allocation3 + $0x188] sm:$0xff]
  %v2750 = vld [vmem:[#allocation3 + $0x190] sm:$0xff]
  %v2751 = vld [vmem:[#allocation3 + $0x198] sm:$0xff]
  %v2752 = vld [vmem:[#allocation3 + $0x1a0] sm:$0xff]
  %v2753 = vld [vmem:[#allocation3 + $0x1a8] sm:$0xff]
  %v2754 = vld [vmem:[#allocation3 + $0x1b0] sm:$0xff]
  %v2755 = vld [vmem:[#allocation3 + $0x1b8] sm:$0xff]
  %v2756 = vld [vmem:[#allocation3 + $0x1c0] sm:$0xff]
  %v2757 = vld [vmem:[#allocation3 + $0x1c8] sm:$0xff]
  %v2758 = vld [vmem:[#allocation3 + $0x1d0] sm:$0xff]
  %v2759 = vld [vmem:[#allocation3 + $0x1d8] sm:$0xff]
  %v2760 = vld [vmem:[#allocation3 + $0x1e0] sm:$0xff]
  %v2761 = vld [vmem:[#allocation3 + $0x1e8] sm:$0xff]
  %v2762 = vld [vmem:[#allocation3 + $0x1f0] sm:$0xff]
  %v2763 = vld [vmem:[#allocation3 + $0x1f8] sm:$0xff]
  %v2764 = vld [vmem:[#allocation3 + $0x200] sm:$0xff]
  %v2765 = vld [vmem:[#allocation3 + $0x208] sm:$0xff]
  %v2766 = vld [vmem:[#allocation3 + $0x210] sm:$0xff]
  %v2767 = vld [vmem:[#allocation3 + $0x218] sm:$0xff]
  %v2768 = vld [vmem:[#allocation3 + $0x220] sm:$0xff]
  %v2769 = vld [vmem:[#allocation3 + $0x228] sm:$0xff]
  %v2770 = vld [vmem:[#allocation3 + $0x230] sm:$0xff]
  %v2771 = vld [vmem:[#allocation3 + $0x238] sm:$0xff]
  %s2772 = scalar_lea.vmem %s2, 48
  %v2773 = vld [vmem:[%s2772] sm:$0xff]
  %v2774 = vld [vmem:[%s2772 + $0x8] sm:$0xff]
  %2776 = vset.pattern.permute.xlu0 0
  %2777 = vperm.xlu0 %2776, %v2773
  %v2778 = vpop.permute.xlu0 %2777
  %2781 = vset.pattern.permute.xlu0 0
  %2782 = vperm.xlu0 %2781, %v2774
  %v2783 = vpop.permute.xlu0 %2782
  %v2786 = vsel %vm551, %v2697, 0
  %v2789 = vsel %vm551, %v2699, 0
  %2791 = vmatprep.subr.mxu0 %v2701
  %2792 = vmatpush1.msra.mxu0 %v2700
  %2793 = vmatprep.subr.mxu0 %v2705
  %2794 = vmatpush1.msra.mxu0 %v2704
  %2795 = vmatprep.subr.mxu0 %v2709
  %2796 = vmatpush1.msra.mxu0 %v2708
  %2797 = vmatprep.subr.mxu0 %v2713
  %2798 = vmatpush1.msra.mxu0 %v2712
  %2799 = vmatprep.subr.mxu0 %v2717
  %2800 = vmatpush1.msra.mxu0 %v2716
  %2801 = vmatprep.subr.mxu0 %v2721
  %2802 = vmatpush1.msra.mxu0 %v2720
  %2803 = vmatprep.subr.mxu0 %v2725
  %2804 = vmatpush1.msra.mxu0 %v2724
  %2805 = vmatprep.subr.mxu0 %v2729
  %2806 = vmatpush1.msra.mxu0 %v2728
  %2807 = vmatprep.subr.mxu0 %v2733
  %2808 = vmatpush1.msra.mxu0 %v2732
  %2809 = vmatprep.subr.mxu0 %v2737
  %2810 = vmatpush1.msra.mxu0 %v2736
  %2811 = vmatprep.subr.mxu0 %v2741
  %2812 = vmatpush1.msra.mxu0 %v2740
  %2813 = vmatprep.subr.mxu0 %v2745
  %2814 = vmatpush1.msra.mxu0 %v2744
  %2815 = vmatprep.subr.mxu0 %v2749
  %2816 = vmatpush1.msra.mxu0 %v2748
  %2817 = vmatprep.subr.mxu0 %v2753
  %2818 = vmatpush1.msra.mxu0 %v2752
  %2819 = vmatprep.subr.mxu0 %v2757
  %2820 = vmatpush1.msra.mxu0 %v2756
  %2821 = vmatprep.subr.mxu0 %v2761
  %2822 = vmatpush1.msra.mxu0 %v2760
  %2823 = vmatprep.subr.mxu0 %v2765
  %2824 = vmatpush1.msra.mxu0 %v2764
  %2825 = vmatprep.subr.mxu0 %v2769
  %2826 = vmatpush1.msra.mxu0 %v2768
  %2827 = vmatprep.subr.mxu0 0.0
  %2828 = vmatpush1.msra.mxu0 0.0
  %2829 = vmatprep.subr.mxu0 0.0
  %2830 = vmatpush1.msra.mxu0 0.0
  %2831 = vmatprep.subr.mxu0 0.0
  %2832 = vmatpush1.msra.mxu0 0.0
  %2833 = vmatprep.subr.mxu0 0.0
  %2834 = vmatpush1.msra.mxu0 0.0
  %2835 = vmatprep.subr.mxu0 0.0
  %2836 = vmatpush1.msra.mxu0 0.0
  %2837 = vmatprep.subr.mxu0 0.0
  %2838 = vmatpush1.msra.mxu0 0.0
  %2839 = vmatprep.subr.mxu0 0.0
  %2840 = vmatpush1.msra.mxu0 0.0
  %2841 = vmatprep.subr.mxu0 0.0
  %2842 = vmatpush1.msra.mxu0 0.0
  %2843 = vmatprep.subr.mxu0 0.0
  %2844 = vmatpush1.msra.mxu0 0.0
  %2845 = vmatprep.subr.mxu0 0.0
  %2846 = vmatpush1.msra.mxu0 0.0
  %2847 = vmatprep.subr.mxu0 0.0
  %2848 = vmatpush1.msra.mxu0 0.0
  %2849 = vmatprep.subr.mxu0 0.0
  %2850 = vmatpush1.msra.mxu0 0.0
  %2851 = vmatprep.subr.mxu0 0.0
  %2852 = vmatpush1.msra.mxu0 0.0
  %2853 = vmatprep.subr.mxu0 0.0
  %2854 = vmatpush1.msra.mxu0 0.0
  %2855 = vmatprep.mubr.f32.mxu0 %v2786
  %2856 = vmatmul.mubr.f32.gmra.mrb[0].mxu0 %v2696
  %v2857 = vpop.f32.mrb[0].mxu0
  %v2858 = vadd.f32 %v2778, %v2857
  %v2859 = vpop.f32.mrb[0].mxu0
  %v2860 = vadd.f32 %v2778, %v2859
  %2861 = vmatprep.mubr.f32.mxu0 %v2789
  %2862 = vmatmul.mubr.f32.gmra.mrb[0].mxu0 %v2698
  %v2863 = vpop.f32.mrb[0].mxu0
  %v2864 = vadd.f32 %v2783, %v2863
  %v2865 = vpop.f32.mrb[0].mxu0
  %v2866 = vadd.f32 %v2783, %v2865
  %2867 = vdwg.mxu0
  %2868 = vmatprep.subr.mxu0 %v2703
  %2869 = vmatpush1.msra.mxu0 %v2702
  %2870 = vmatprep.subr.mxu0 %v2707
  %2871 = vmatpush1.msra.mxu0 %v2706
  %2872 = vmatprep.subr.mxu0 %v2711
  %2873 = vmatpush1.msra.mxu0 %v2710
  %2874 = vmatprep.subr.mxu0 %v2715
  %2875 = vmatpush1.msra.mxu0 %v2714
  %2876 = vmatprep.subr.mxu0 %v2719
  %2877 = vmatpush1.msra.mxu0 %v2718
  %2878 = vmatprep.subr.mxu0 %v2723
  %2879 = vmatpush1.msra.mxu0 %v2722
  %2880 = vmatprep.subr.mxu0 %v2727
  %2881 = vmatpush1.msra.mxu0 %v2726
  %2882 = vmatprep.subr.mxu0 %v2731
  %2883 = vmatpush1.msra.mxu0 %v2730
  %2884 = vmatprep.subr.mxu0 %v2735
  %2885 = vmatpush1.msra.mxu0 %v2734
  %2886 = vmatprep.subr.mxu0 %v2739
  %2887 = vmatpush1.msra.mxu0 %v2738
  %2888 = vmatprep.subr.mxu0 %v2743
  %2889 = vmatpush1.msra.mxu0 %v2742
  %2890 = vmatprep.subr.mxu0 %v2747
  %2891 = vmatpush1.msra.mxu0 %v2746
  %2892 = vmatprep.subr.mxu0 %v2751
  %2893 = vmatpush1.msra.mxu0 %v2750
  %2894 = vmatprep.subr.mxu0 %v2755
  %2895 = vmatpush1.msra.mxu0 %v2754
  %2896 = vmatprep.subr.mxu0 %v2759
  %2897 = vmatpush1.msra.mxu0 %v2758
  %2898 = vmatprep.subr.mxu0 %v2763
  %2899 = vmatpush1.msra.mxu0 %v2762
  %2900 = vmatprep.subr.mxu0 %v2767
  %2901 = vmatpush1.msra.mxu0 %v2766
  %2902 = vmatprep.subr.mxu0 %v2771
  %2903 = vmatpush1.msra.mxu0 %v2770
  %2904 = vmatprep.subr.mxu0 0.0
  %2905 = vmatpush1.msra.mxu0 0.0
  %2906 = vmatprep.subr.mxu0 0.0
  %2907 = vmatpush1.msra.mxu0 0.0
  %2908 = vmatprep.subr.mxu0 0.0
  %2909 = vmatpush1.msra.mxu0 0.0
  %2910 = vmatprep.subr.mxu0 0.0
  %2911 = vmatpush1.msra.mxu0 0.0
  %2912 = vmatprep.subr.mxu0 0.0
  %2913 = vmatpush1.msra.mxu0 0.0
  %2914 = vmatprep.subr.mxu0 0.0
  %2915 = vmatpush1.msra.mxu0 0.0
  %2916 = vmatprep.subr.mxu0 0.0
  %2917 = vmatpush1.msra.mxu0 0.0
  %2918 = vmatprep.subr.mxu0 0.0
  %2919 = vmatpush1.msra.mxu0 0.0
  %2920 = vmatprep.subr.mxu0 0.0
  %2921 = vmatpush1.msra.mxu0 0.0
  %2922 = vmatprep.subr.mxu0 0.0
  %2923 = vmatpush1.msra.mxu0 0.0
  %2924 = vmatprep.subr.mxu0 0.0
  %2925 = vmatpush1.msra.mxu0 0.0
  %2926 = vmatprep.subr.mxu0 0.0
  %2927 = vmatpush1.msra.mxu0 0.0
  %2928 = vmatprep.subr.mxu0 0.0
  %2929 = vmatpush1.msra.mxu0 0.0
  %2930 = vmatprep.subr.mxu0 0.0
  %2931 = vmatpush1.msra.mxu0 0.0
  %2932 = vmatprep.mubr.f32.mxu0 %v2786
  %2933 = vmatmul.mubr.f32.gmra.mrb[0].mxu0 %v2696
  %v2934 = vpop.f32.mrb[0].mxu0
  %v2935 = vadd.f32 %v2778, %v2934
  %v2936 = vpop.f32.mrb[0].mxu0
  %v2937 = vadd.f32 %v2778, %v2936
  %2938 = vmatprep.mubr.f32.mxu0 %v2789
  %2939 = vmatmul.mubr.f32.gmra.mrb[0].mxu0 %v2698
  %v2940 = vpop.f32.mrb[0].mxu0
  %v2941 = vadd.f32 %v2783, %v2940
  %v2942 = vpop.f32.mrb[0].mxu0
  %v2943 = vadd.f32 %v2783, %v2942
  %2944 = vdwg.mxu0
  %v2945 = vmax.f32 %v2858, 0.0
  %v2946 = vmax.f32 %v2860, 0.0
  %v2947 = vmax.f32 %v2935, 0.0
  %v2948 = vmax.f32 %v2937, 0.0
  %v2949 = vmax.f32 %v2864, 0.0
  %v2950 = vmax.f32 %v2866, 0.0
  %v2951 = vmax.f32 %v2941, 0.0
  %v2952 = vmax.f32 %v2943, 0.0
  %v2953 = vmul.f32 %v2945, %v724
  %v2954 = vmul.f32 %v2946, %v728
  %v2955 = vmul.f32 %v2947, %v732
  %v2956 = vmul.f32 %v2948, %v736
  %v2957 = vmul.f32 %v2949, %v724
  %v2958 = vmul.f32 %v2950, %v728
  %v2959 = vmul.f32 %v2951, %v732
  %v2960 = vmul.f32 %v2952, %v736
  %2965 = vrot.lane.b32.xlu0 %v2953, 17
  %v2966 = vpop.permute.xlu0 %2965
  %2967 = vrot.lane.b32.xlu0 %v2954, 17
  %v2968 = vpop.permute.xlu0 %2967
  %2969 = vrot.lane.b32.xlu0 %v2957, 17
  %v2970 = vpop.permute.xlu0 %2969
  %2971 = vrot.lane.b32.xlu0 %v2958, 17
  %v2972 = vpop.permute.xlu0 %2971
  %v2973 = vsel %vm761, %v2966, %v2968
  %v2974 = vsel %vm761, %v2970, %v2972
  %2981 = vst.msk [vmem:[#allocation2] sm:$0xff] %vm770, %v2966
  %2982 = vst [vmem:[#allocation2 + $0x8] sm:$0xff] %v2973
  %2983 = vst.msk [vmem:[#allocation2 + $0x10] sm:$0xff] %vm761, %v2968
  %2984 = vst.msk [vmem:[#allocation2 + $0x30] sm:$0xff] %vm770, %v2970
  %2985 = vst [vmem:[#allocation2 + $0x38] sm:$0xff] %v2974
  %2986 = vst.msk [vmem:[#allocation2 + $0x40] sm:$0xff] %vm761, %v2972
  %2991 = vrot.lane.b32.xlu0 %v2955, 17
  %v2992 = vpop.permute.xlu0 %2991
  %2993 = vrot.lane.b32.xlu0 %v2956, 17
  %v2994 = vpop.permute.xlu0 %2993
  %2995 = vrot.lane.b32.xlu0 %v2959, 17
  %v2996 = vpop.permute.xlu0 %2995
  %2997 = vrot.lane.b32.xlu0 %v2960, 17
  %v2998 = vpop.permute.xlu0 %2997
  %v2999 = vsel %vm761, %v2992, %v2994
  %v3000 = vsel %vm761, %v2996, %v2998
  %3007 = vst.msk [vmem:[#allocation2 + $0x18] sm:$0xff] %vm770, %v2992
  %3008 = vst [vmem:[#allocation2 + $0x20] sm:$0xff] %v2999
  %3009 = vst.msk [vmem:[#allocation2 + $0x28] sm:$0xff] %vm761, %v2994
  %3010 = vst.msk [vmem:[#allocation2 + $0x48] sm:$0xff] %vm770, %v2996
  %3011 = vst [vmem:[#allocation2 + $0x50] sm:$0xff] %v3000
  %3012 = vst.msk [vmem:[#allocation2 + $0x58] sm:$0xff] %vm761, %v2998
  %v3013 = vld [vmem:[#allocation2] sm:$0xff]
  %v3014 = vld [vmem:[#allocation2 + $0x8] sm:$0xff]
  %v3015 = vld [vmem:[#allocation2 + $0x10] sm:$0xff]
  %v3016 = vld [vmem:[#allocation2 + $0x18] sm:$0xff]
  %v3017 = vld [vmem:[#allocation2 + $0x20] sm:$0xff]
  %v3018 = vld [vmem:[#allocation2 + $0x28] sm:$0xff]
  %v3019 = vld [vmem:[#allocation2 + $0x30] sm:$0xff]
  %v3020 = vld [vmem:[#allocation2 + $0x38] sm:$0xff]
  %v3021 = vld [vmem:[#allocation2 + $0x40] sm:$0xff]
  %v3022 = vld [vmem:[#allocation2 + $0x48] sm:$0xff]
  %v3023 = vld [vmem:[#allocation2 + $0x50] sm:$0xff]
  %v3024 = vld [vmem:[#allocation2 + $0x58] sm:$0xff]
  %3025 = vst [vmem:[#allocation3] sm:$0xff] %v3013
  %3026 = vst [vmem:[#allocation3 + $0x8] sm:$0xff] %v3014
  %3027 = vst [vmem:[#allocation3 + $0x20] sm:$0xff] %v3019
  %3028 = vst [vmem:[#allocation3 + $0x28] sm:$0xff] %v3020
  %3029 = vst [vmem:[#allocation3 + $0x10] sm:$0xff] %v3016
  %3030 = vst [vmem:[#allocation3 + $0x18] sm:$0xff] %v3017
  %3031 = vst [vmem:[#allocation3 + $0x30] sm:$0xff] %v3022
  %3032 = vst [vmem:[#allocation3 + $0x38] sm:$0xff] %v3023
  %3039 = vrot.lane.b32.xlu0 %v3013, 127
  %v3040 = vpop.permute.xlu0 %3039
  %3041 = vrot.lane.b32.xlu0 %v3014, 127
  %v3042 = vpop.permute.xlu0 %3041
  %3043 = vrot.lane.b32.xlu0 %v3015, 127
  %v3044 = vpop.permute.xlu0 %3043
  %3045 = vrot.lane.b32.xlu0 %v3019, 127
  %v3046 = vpop.permute.xlu0 %3045
  %3047 = vrot.lane.b32.xlu0 %v3020, 127
  %v3048 = vpop.permute.xlu0 %3047
  %3049 = vrot.lane.b32.xlu0 %v3021, 127
  %v3050 = vpop.permute.xlu0 %3049
  %v3051 = vsel %vm77, %v3040, %v3042
  %v3052 = vsel %vm77, %v3042, %v3044
  %v3053 = vsel %vm77, %v3046, %v3048
  %v3054 = vsel %vm77, %v3048, %v3050
  %3059 = vst [vmem:[#allocation3 + $0x40] sm:$0xff] %v3051
  %3060 = vst [vmem:[#allocation3 + $0x48] sm:$0xff] %v3052
  %3061 = vst [vmem:[#allocation3 + $0x60] sm:$0xff] %v3053
  %3062 = vst [vmem:[#allocation3 + $0x68] sm:$0xff] %v3054
  %3069 = vrot.lane.b32.xlu0 %v3016, 127
  %v3070 = vpop.permute.xlu0 %3069
  %3071 = vrot.lane.b32.xlu0 %v3017, 127
  %v3072 = vpop.permute.xlu0 %3071
  %3073 = vrot.lane.b32.xlu0 %v3018, 127
  %v3074 = vpop.permute.xlu0 %3073
  %3075 = vrot.lane.b32.xlu0 %v3022, 127
  %v3076 = vpop.permute.xlu0 %3075
  %3077 = vrot.lane.b32.xlu0 %v3023, 127
  %v3078 = vpop.permute.xlu0 %3077
  %3079 = vrot.lane.b32.xlu0 %v3024, 127
  %v3080 = vpop.permute.xlu0 %3079
  %v3081 = vsel %vm77, %v3070, %v3072
  %v3082 = vsel %vm77, %v3072, %v3074
  %v3083 = vsel %vm77, %v3076, %v3078
  %v3084 = vsel %vm77, %v3078, %v3080
  %3089 = vst [vmem:[#allocation3 + $0x50] sm:$0xff] %v3081
  %3090 = vst [vmem:[#allocation3 + $0x58] sm:$0xff] %v3082
  %3091 = vst [vmem:[#allocation3 + $0x70] sm:$0xff] %v3083
  %3092 = vst [vmem:[#allocation3 + $0x78] sm:$0xff] %v3084
  %3093 = vrot.lane.b32.xlu0 %v3013, 126
  %v3094 = vpop.permute.xlu0 %3093
  %3095 = vrot.lane.b32.xlu0 %v3014, 126
  %v3096 = vpop.permute.xlu0 %3095
  %3097 = vrot.lane.b32.xlu0 %v3015, 126
  %v3098 = vpop.permute.xlu0 %3097
  %3099 = vrot.lane.b32.xlu0 %v3019, 126
  %v3100 = vpop.permute.xlu0 %3099
  %3101 = vrot.lane.b32.xlu0 %v3020, 126
  %v3102 = vpop.permute.xlu0 %3101
  %3103 = vrot.lane.b32.xlu0 %v3021, 126
  %v3104 = vpop.permute.xlu0 %3103
  %v3105 = vsel %vm132, %v3094, %v3096
  %v3106 = vsel %vm132, %v3096, %v3098
  %v3107 = vsel %vm132, %v3100, %v3102
  %v3108 = vsel %vm132, %v3102, %v3104
  %3113 = vst [vmem:[#allocation3 + $0x80] sm:$0xff] %v3105
  %3114 = vst [vmem:[#allocation3 + $0x88] sm:$0xff] %v3106
  %3115 = vst [vmem:[#allocation3 + $0xa0] sm:$0xff] %v3107
  %3116 = vst [vmem:[#allocation3 + $0xa8] sm:$0xff] %v3108
  %3117 = vrot.lane.b32.xlu0 %v3016, 126
  %v3118 = vpop.permute.xlu0 %3117
  %3119 = vrot.lane.b32.xlu0 %v3017, 126
  %v3120 = vpop.permute.xlu0 %3119
  %3121 = vrot.lane.b32.xlu0 %v3018, 126
  %v3122 = vpop.permute.xlu0 %3121
  %3123 = vrot.lane.b32.xlu0 %v3022, 126
  %v3124 = vpop.permute.xlu0 %3123
  %3125 = vrot.lane.b32.xlu0 %v3023, 126
  %v3126 = vpop.permute.xlu0 %3125
  %3127 = vrot.lane.b32.xlu0 %v3024, 126
  %v3128 = vpop.permute.xlu0 %3127
  %v3129 = vsel %vm132, %v3118, %v3120
  %v3130 = vsel %vm132, %v3120, %v3122
  %v3131 = vsel %vm132, %v3124, %v3126
  %v3132 = vsel %vm132, %v3126, %v3128
  %3137 = vst [vmem:[#allocation3 + $0x90] sm:$0xff] %v3129
  %3138 = vst [vmem:[#allocation3 + $0x98] sm:$0xff] %v3130
  %3139 = vst [vmem:[#allocation3 + $0xb0] sm:$0xff] %v3131
  %3140 = vst [vmem:[#allocation3 + $0xb8] sm:$0xff] %v3132
  %3141 = vrot.lane.b32.xlu0 %v3013, 112
  %v3142 = vpop.permute.xlu0 %3141
  %3143 = vrot.lane.b32.xlu0 %v3014, 112
  %v3144 = vpop.permute.xlu0 %3143
  %3145 = vrot.lane.b32.xlu0 %v3015, 112
  %v3146 = vpop.permute.xlu0 %3145
  %3147 = vrot.lane.b32.xlu0 %v3019, 112
  %v3148 = vpop.permute.xlu0 %3147
  %3149 = vrot.lane.b32.xlu0 %v3020, 112
  %v3150 = vpop.permute.xlu0 %3149
  %3151 = vrot.lane.b32.xlu0 %v3021, 112
  %v3152 = vpop.permute.xlu0 %3151
  %v3153 = vsel %vm181, %v3142, %v3144
  %v3154 = vsel %vm181, %v3144, %v3146
  %v3155 = vsel %vm181, %v3148, %v3150
  %v3156 = vsel %vm181, %v3150, %v3152
  %3161 = vst [vmem:[#allocation3 + $0xc0] sm:$0xff] %v3153
  %3162 = vst [vmem:[#allocation3 + $0xc8] sm:$0xff] %v3154
  %3163 = vst [vmem:[#allocation3 + $0xe0] sm:$0xff] %v3155
  %3164 = vst [vmem:[#allocation3 + $0xe8] sm:$0xff] %v3156
  %3165 = vrot.lane.b32.xlu0 %v3016, 112
  %v3166 = vpop.permute.xlu0 %3165
  %3167 = vrot.lane.b32.xlu0 %v3017, 112
  %v3168 = vpop.permute.xlu0 %3167
  %3169 = vrot.lane.b32.xlu0 %v3018, 112
  %v3170 = vpop.permute.xlu0 %3169
  %3171 = vrot.lane.b32.xlu0 %v3022, 112
  %v3172 = vpop.permute.xlu0 %3171
  %3173 = vrot.lane.b32.xlu0 %v3023, 112
  %v3174 = vpop.permute.xlu0 %3173
  %3175 = vrot.lane.b32.xlu0 %v3024, 112
  %v3176 = vpop.permute.xlu0 %3175
  %v3177 = vsel %vm181, %v3166, %v3168
  %v3178 = vsel %vm181, %v3168, %v3170
  %v3179 = vsel %vm181, %v3172, %v3174
  %v3180 = vsel %vm181, %v3174, %v3176
  %3185 = vst [vmem:[#allocation3 + $0xd0] sm:$0xff] %v3177
  %3186 = vst [vmem:[#allocation3 + $0xd8] sm:$0xff] %v3178
  %3187 = vst [vmem:[#allocation3 + $0xf0] sm:$0xff] %v3179
  %3188 = vst [vmem:[#allocation3 + $0xf8] sm:$0xff] %v3180
  %3189 = vrot.lane.b32.xlu0 %v3013, 111
  %v3190 = vpop.permute.xlu0 %3189
  %3191 = vrot.lane.b32.xlu0 %v3014, 111
  %v3192 = vpop.permute.xlu0 %3191
  %3193 = vrot.lane.b32.xlu0 %v3015, 111
  %v3194 = vpop.permute.xlu0 %3193
  %3195 = vrot.lane.b32.xlu0 %v3019, 111
  %v3196 = vpop.permute.xlu0 %3195
  %3197 = vrot.lane.b32.xlu0 %v3020, 111
  %v3198 = vpop.permute.xlu0 %3197
  %3199 = vrot.lane.b32.xlu0 %v3021, 111
  %v3200 = vpop.permute.xlu0 %3199
  %v3201 = vsel %vm230, %v3190, %v3192
  %v3202 = vsel %vm230, %v3192, %v3194
  %v3203 = vsel %vm230, %v3196, %v3198
  %v3204 = vsel %vm230, %v3198, %v3200
  %3209 = vst [vmem:[#allocation3 + $0x100] sm:$0xff] %v3201
  %3210 = vst [vmem:[#allocation3 + $0x108] sm:$0xff] %v3202
  %3211 = vst [vmem:[#allocation3 + $0x120] sm:$0xff] %v3203
  %3212 = vst [vmem:[#allocation3 + $0x128] sm:$0xff] %v3204
  %3213 = vrot.lane.b32.xlu0 %v3016, 111
  %v3214 = vpop.permute.xlu0 %3213
  %3215 = vrot.lane.b32.xlu0 %v3017, 111
  %v3216 = vpop.permute.xlu0 %3215
  %3217 = vrot.lane.b32.xlu0 %v3018, 111
  %v3218 = vpop.permute.xlu0 %3217
  %3219 = vrot.lane.b32.xlu0 %v3022, 111
  %v3220 = vpop.permute.xlu0 %3219
  %3221 = vrot.lane.b32.xlu0 %v3023, 111
  %v3222 = vpop.permute.xlu0 %3221
  %3223 = vrot.lane.b32.xlu0 %v3024, 111
  %v3224 = vpop.permute.xlu0 %3223
  %v3225 = vsel %vm230, %v3214, %v3216
  %v3226 = vsel %vm230, %v3216, %v3218
  %v3227 = vsel %vm230, %v3220, %v3222
  %v3228 = vsel %vm230, %v3222, %v3224
  %3233 = vst [vmem:[#allocation3 + $0x110] sm:$0xff] %v3225
  %3234 = vst [vmem:[#allocation3 + $0x118] sm:$0xff] %v3226
  %3235 = vst [vmem:[#allocation3 + $0x130] sm:$0xff] %v3227
  %3236 = vst [vmem:[#allocation3 + $0x138] sm:$0xff] %v3228
  %3237 = vrot.lane.b32.xlu0 %v3013, 110
  %v3238 = vpop.permute.xlu0 %3237
  %3239 = vrot.lane.b32.xlu0 %v3014, 110
  %v3240 = vpop.permute.xlu0 %3239
  %3241 = vrot.lane.b32.xlu0 %v3015, 110
  %v3242 = vpop.permute.xlu0 %3241
  %3243 = vrot.lane.b32.xlu0 %v3019, 110
  %v3244 = vpop.permute.xlu0 %3243
  %3245 = vrot.lane.b32.xlu0 %v3020, 110
  %v3246 = vpop.permute.xlu0 %3245
  %3247 = vrot.lane.b32.xlu0 %v3021, 110
  %v3248 = vpop.permute.xlu0 %3247
  %v3249 = vsel %vm279, %v3238, %v3240
  %v3250 = vsel %vm279, %v3240, %v3242
  %v3251 = vsel %vm279, %v3244, %v3246
  %v3252 = vsel %vm279, %v3246, %v3248
  %3257 = vst [vmem:[#allocation3 + $0x140] sm:$0xff] %v3249
  %3258 = vst [vmem:[#allocation3 + $0x148] sm:$0xff] %v3250
  %3259 = vst [vmem:[#allocation3 + $0x160] sm:$0xff] %v3251
  %3260 = vst [vmem:[#allocation3 + $0x168] sm:$0xff] %v3252
  %3261 = vrot.lane.b32.xlu0 %v3016, 110
  %v3262 = vpop.permute.xlu0 %3261
  %3263 = vrot.lane.b32.xlu0 %v3017, 110
  %v3264 = vpop.permute.xlu0 %3263
  %3265 = vrot.lane.b32.xlu0 %v3018, 110
  %v3266 = vpop.permute.xlu0 %3265
  %3267 = vrot.lane.b32.xlu0 %v3022, 110
  %v3268 = vpop.permute.xlu0 %3267
  %3269 = vrot.lane.b32.xlu0 %v3023, 110
  %v3270 = vpop.permute.xlu0 %3269
  %3271 = vrot.lane.b32.xlu0 %v3024, 110
  %v3272 = vpop.permute.xlu0 %3271
  %v3273 = vsel %vm279, %v3262, %v3264
  %v3274 = vsel %vm279, %v3264, %v3266
  %v3275 = vsel %vm279, %v3268, %v3270
  %v3276 = vsel %vm279, %v3270, %v3272
  %3281 = vst [vmem:[#allocation3 + $0x150] sm:$0xff] %v3273
  %3282 = vst [vmem:[#allocation3 + $0x158] sm:$0xff] %v3274
  %3283 = vst [vmem:[#allocation3 + $0x170] sm:$0xff] %v3275
  %3284 = vst [vmem:[#allocation3 + $0x178] sm:$0xff] %v3276
  %3285 = vrot.lane.b32.xlu0 %v3013, 96
  %v3286 = vpop.permute.xlu0 %3285
  %3287 = vrot.lane.b32.xlu0 %v3014, 96
  %v3288 = vpop.permute.xlu0 %3287
  %3289 = vrot.lane.b32.xlu0 %v3015, 96
  %v3290 = vpop.permute.xlu0 %3289
  %3291 = vrot.lane.b32.xlu0 %v3019, 96
  %v3292 = vpop.permute.xlu0 %3291
  %3293 = vrot.lane.b32.xlu0 %v3020, 96
  %v3294 = vpop.permute.xlu0 %3293
  %3295 = vrot.lane.b32.xlu0 %v3021, 96
  %v3296 = vpop.permute.xlu0 %3295
  %v3297 = vsel %vm328, %v3286, %v3288
  %v3298 = vsel %vm328, %v3288, %v3290
  %v3299 = vsel %vm328, %v3292, %v3294
  %v3300 = vsel %vm328, %v3294, %v3296
  %3305 = vst [vmem:[#allocation3 + $0x180] sm:$0xff] %v3297
  %3306 = vst [vmem:[#allocation3 + $0x188] sm:$0xff] %v3298
  %3307 = vst [vmem:[#allocation3 + $0x1a0] sm:$0xff] %v3299
  %3308 = vst [vmem:[#allocation3 + $0x1a8] sm:$0xff] %v3300
  %3309 = vrot.lane.b32.xlu0 %v3016, 96
  %v3310 = vpop.permute.xlu0 %3309
  %3311 = vrot.lane.b32.xlu0 %v3017, 96
  %v3312 = vpop.permute.xlu0 %3311
  %3313 = vrot.lane.b32.xlu0 %v3018, 96
  %v3314 = vpop.permute.xlu0 %3313
  %3315 = vrot.lane.b32.xlu0 %v3022, 96
  %v3316 = vpop.permute.xlu0 %3315
  %3317 = vrot.lane.b32.xlu0 %v3023, 96
  %v3318 = vpop.permute.xlu0 %3317
  %3319 = vrot.lane.b32.xlu0 %v3024, 96
  %v3320 = vpop.permute.xlu0 %3319
  %v3321 = vsel %vm328, %v3310, %v3312
  %v3322 = vsel %vm328, %v3312, %v3314
  %v3323 = vsel %vm328, %v3316, %v3318
  %v3324 = vsel %vm328, %v3318, %v3320
  %3329 = vst [vmem:[#allocation3 + $0x190] sm:$0xff] %v3321
  %3330 = vst [vmem:[#allocation3 + $0x198] sm:$0xff] %v3322
  %3331 = vst [vmem:[#allocation3 + $0x1b0] sm:$0xff] %v3323
  %3332 = vst [vmem:[#allocation3 + $0x1b8] sm:$0xff] %v3324
  %3333 = vrot.lane.b32.xlu0 %v3013, 95
  %v3334 = vpop.permute.xlu0 %3333
  %3335 = vrot.lane.b32.xlu0 %v3014, 95
  %v3336 = vpop.permute.xlu0 %3335
  %3337 = vrot.lane.b32.xlu0 %v3015, 95
  %v3338 = vpop.permute.xlu0 %3337
  %3339 = vrot.lane.b32.xlu0 %v3019, 95
  %v3340 = vpop.permute.xlu0 %3339
  %3341 = vrot.lane.b32.xlu0 %v3020, 95
  %v3342 = vpop.permute.xlu0 %3341
  %3343 = vrot.lane.b32.xlu0 %v3021, 95
  %v3344 = vpop.permute.xlu0 %3343
  %v3345 = vsel %vm377, %v3334, %v3336
  %v3346 = vsel %vm377, %v3336, %v3338
  %v3347 = vsel %vm377, %v3340, %v3342
  %v3348 = vsel %vm377, %v3342, %v3344
  %3353 = vst [vmem:[#allocation3 + $0x1c0] sm:$0xff] %v3345
  %3354 = vst [vmem:[#allocation3 + $0x1c8] sm:$0xff] %v3346
  %3355 = vst [vmem:[#allocation3 + $0x1e0] sm:$0xff] %v3347
  %3356 = vst [vmem:[#allocation3 + $0x1e8] sm:$0xff] %v3348
  %3357 = vrot.lane.b32.xlu0 %v3016, 95
  %v3358 = vpop.permute.xlu0 %3357
  %3359 = vrot.lane.b32.xlu0 %v3017, 95
  %v3360 = vpop.permute.xlu0 %3359
  %3361 = vrot.lane.b32.xlu0 %v3018, 95
  %v3362 = vpop.permute.xlu0 %3361
  %3363 = vrot.lane.b32.xlu0 %v3022, 95
  %v3364 = vpop.permute.xlu0 %3363
  %3365 = vrot.lane.b32.xlu0 %v3023, 95
  %v3366 = vpop.permute.xlu0 %3365
  %3367 = vrot.lane.b32.xlu0 %v3024, 95
  %v3368 = vpop.permute.xlu0 %3367
  %v3369 = vsel %vm377, %v3358, %v3360
  %v3370 = vsel %vm377, %v3360, %v3362
  %v3371 = vsel %vm377, %v3364, %v3366
  %v3372 = vsel %vm377, %v3366, %v3368
  %3377 = vst [vmem:[#allocation3 + $0x1d0] sm:$0xff] %v3369
  %3378 = vst [vmem:[#allocation3 + $0x1d8] sm:$0xff] %v3370
  %3379 = vst [vmem:[#allocation3 + $0x1f0] sm:$0xff] %v3371
  %3380 = vst [vmem:[#allocation3 + $0x1f8] sm:$0xff] %v3372
  %3381 = vrot.lane.b32.xlu0 %v3013, 94
  %v3382 = vpop.permute.xlu0 %3381
  %3383 = vrot.lane.b32.xlu0 %v3014, 94
  %v3384 = vpop.permute.xlu0 %3383
  %3385 = vrot.lane.b32.xlu0 %v3015, 94
  %v3386 = vpop.permute.xlu0 %3385
  %3387 = vrot.lane.b32.xlu0 %v3019, 94
  %v3388 = vpop.permute.xlu0 %3387
  %3389 = vrot.lane.b32.xlu0 %v3020, 94
  %v3390 = vpop.permute.xlu0 %3389
  %3391 = vrot.lane.b32.xlu0 %v3021, 94
  %v3392 = vpop.permute.xlu0 %3391
  %v3393 = vsel %vm426, %v3382, %v3384
  %v3394 = vsel %vm426, %v3384, %v3386
  %v3395 = vsel %vm426, %v3388, %v3390
  %v3396 = vsel %vm426, %v3390, %v3392
  %3401 = vst [vmem:[#allocation3 + $0x200] sm:$0xff] %v3393
  %3402 = vst [vmem:[#allocation3 + $0x208] sm:$0xff] %v3394
  %3403 = vst [vmem:[#allocation3 + $0x220] sm:$0xff] %v3395
  %3404 = vst [vmem:[#allocation3 + $0x228] sm:$0xff] %v3396
  %3405 = vrot.lane.b32.xlu0 %v3016, 94
  %v3406 = vpop.permute.xlu0 %3405
  %3407 = vrot.lane.b32.xlu0 %v3017, 94
  %v3408 = vpop.permute.xlu0 %3407
  %3409 = vrot.lane.b32.xlu0 %v3018, 94
  %v3410 = vpop.permute.xlu0 %3409
  %3411 = vrot.lane.b32.xlu0 %v3022, 94
  %v3412 = vpop.permute.xlu0 %3411
  %3413 = vrot.lane.b32.xlu0 %v3023, 94
  %v3414 = vpop.permute.xlu0 %3413
  %3415 = vrot.lane.b32.xlu0 %v3024, 94
  %v3416 = vpop.permute.xlu0 %3415
  %v3417 = vsel %vm426, %v3406, %v3408
  %v3418 = vsel %vm426, %v3408, %v3410
  %v3419 = vsel %vm426, %v3412, %v3414
  %v3420 = vsel %vm426, %v3414, %v3416
  %3425 = vst [vmem:[#allocation3 + $0x210] sm:$0xff] %v3417
  %3426 = vst [vmem:[#allocation3 + $0x218] sm:$0xff] %v3418
  %3427 = vst [vmem:[#allocation3 + $0x230] sm:$0xff] %v3419
  %3428 = vst [vmem:[#allocation3 + $0x238] sm:$0xff] %v3420
  %s3429 = scalar_lea.vmem %s1, 128
  %v3430 = vld [vmem:[%s3429] sm:$0xff]
  %v3431 = vld [vmem:[%s3429 + $0x8] sm:$0xff]
  %v3432 = vld [vmem:[%s3429 + $0x10] sm:$0xff]
  %v3433 = vld [vmem:[%s3429 + $0x18] sm:$0xff]
  %v3434 = vld [vmem:[#allocation3] sm:$0xff]
  %v3435 = vld [vmem:[#allocation3 + $0x8] sm:$0xff]
  %v3436 = vld [vmem:[#allocation3 + $0x10] sm:$0xff]
  %v3437 = vld [vmem:[#allocation3 + $0x18] sm:$0xff]
  %v3438 = vld [vmem:[#allocation3 + $0x20] sm:$0xff]
  %v3439 = vld [vmem:[#allocation3 + $0x28] sm:$0xff]
  %v3440 = vld [vmem:[#allocation3 + $0x30] sm:$0xff]
  %v3441 = vld [vmem:[#allocation3 + $0x38] sm:$0xff]
  %v3442 = vld [vmem:[#allocation3 + $0x40] sm:$0xff]
  %v3443 = vld [vmem:[#allocation3 + $0x48] sm:$0xff]
  %v3444 = vld [vmem:[#allocation3 + $0x50] sm:$0xff]
  %v3445 = vld [vmem:[#allocation3 + $0x58] sm:$0xff]
  %v3446 = vld [vmem:[#allocation3 + $0x60] sm:$0xff]
  %v3447 = vld [vmem:[#allocation3 + $0x68] sm:$0xff]
  %v3448 = vld [vmem:[#allocation3 + $0x70] sm:$0xff]
  %v3449 = vld [vmem:[#allocation3 + $0x78] sm:$0xff]
  %v3450 = vld [vmem:[#allocation3 + $0x80] sm:$0xff]
  %v3451 = vld [vmem:[#allocation3 + $0x88] sm:$0xff]
  %v3452 = vld [vmem:[#allocation3 + $0x90] sm:$0xff]
  %v3453 = vld [vmem:[#allocation3 + $0x98] sm:$0xff]
  %v3454 = vld [vmem:[#allocation3 + $0xa0] sm:$0xff]
  %v3455 = vld [vmem:[#allocation3 + $0xa8] sm:$0xff]
  %v3456 = vld [vmem:[#allocation3 + $0xb0] sm:$0xff]
  %v3457 = vld [vmem:[#allocation3 + $0xb8] sm:$0xff]
  %v3458 = vld [vmem:[#allocation3 + $0xc0] sm:$0xff]
  %v3459 = vld [vmem:[#allocation3 + $0xc8] sm:$0xff]
  %v3460 = vld [vmem:[#allocation3 + $0xd0] sm:$0xff]
  %v3461 = vld [vmem:[#allocation3 + $0xd8] sm:$0xff]
  %v3462 = vld [vmem:[#allocation3 + $0xe0] sm:$0xff]
  %v3463 = vld [vmem:[#allocation3 + $0xe8] sm:$0xff]
  %v3464 = vld [vmem:[#allocation3 + $0xf0] sm:$0xff]
  %v3465 = vld [vmem:[#allocation3 + $0xf8] sm:$0xff]
  %v3466 = vld [vmem:[#allocation3 + $0x100] sm:$0xff]
  %v3467 = vld [vmem:[#allocation3 + $0x108] sm:$0xff]
  %v3468 = vld [vmem:[#allocation3 + $0x110] sm:$0xff]
  %v3469 = vld [vmem:[#allocation3 + $0x118] sm:$0xff]
  %v3470 = vld [vmem:[#allocation3 + $0x120] sm:$0xff]
  %v3471 = vld [vmem:[#allocation3 + $0x128] sm:$0xff]
  %v3472 = vld [vmem:[#allocation3 + $0x130] sm:$0xff]
  %v3473 = vld [vmem:[#allocation3 + $0x138] sm:$0xff]
  %v3474 = vld [vmem:[#allocation3 + $0x140] sm:$0xff]
  %v3475 = vld [vmem:[#allocation3 + $0x148] sm:$0xff]
  %v3476 = vld [vmem:[#allocation3 + $0x150] sm:$0xff]
  %v3477 = vld [vmem:[#allocation3 + $0x158] sm:$0xff]
  %v3478 = vld [vmem:[#allocation3 + $0x160] sm:$0xff]
  %v3479 = vld [vmem:[#allocation3 + $0x168] sm:$0xff]
  %v3480 = vld [vmem:[#allocation3 + $0x170] sm:$0xff]
  %v3481 = vld [vmem:[#allocation3 + $0x178] sm:$0xff]
  %v3482 = vld [vmem:[#allocation3 + $0x180] sm:$0xff]
  %v3483 = vld [vmem:[#allocation3 + $0x188] sm:$0xff]
  %v3484 = vld [vmem:[#allocation3 + $0x190] sm:$0xff]
  %v3485 = vld [vmem:[#allocation3 + $0x198] sm:$0xff]
  %v3486 = vld [vmem:[#allocation3 + $0x1a0] sm:$0xff]
  %v3487 = vld [vmem:[#allocation3 + $0x1a8] sm:$0xff]
  %v3488 = vld [vmem:[#allocation3 + $0x1b0] sm:$0xff]
  %v3489 = vld [vmem:[#allocation3 + $0x1b8] sm:$0xff]
  %v3490 = vld [vmem:[#allocation3 + $0x1c0] sm:$0xff]
  %v3491 = vld [vmem:[#allocation3 + $0x1c8] sm:$0xff]
  %v3492 = vld [vmem:[#allocation3 + $0x1d0] sm:$0xff]
  %v3493 = vld [vmem:[#allocation3 + $0x1d8] sm:$0xff]
  %v3494 = vld [vmem:[#allocation3 + $0x1e0] sm:$0xff]
  %v3495 = vld [vmem:[#allocation3 + $0x1e8] sm:$0xff]
  %v3496 = vld [vmem:[#allocation3 + $0x1f0] sm:$0xff]
  %v3497 = vld [vmem:[#allocation3 + $0x1f8] sm:$0xff]
  %v3498 = vld [vmem:[#allocation3 + $0x200] sm:$0xff]
  %v3499 = vld [vmem:[#allocation3 + $0x208] sm:$0xff]
  %v3500 = vld [vmem:[#allocation3 + $0x210] sm:$0xff]
  %v3501 = vld [vmem:[#allocation3 + $0x218] sm:$0xff]
  %v3502 = vld [vmem:[#allocation3 + $0x220] sm:$0xff]
  %v3503 = vld [vmem:[#allocation3 + $0x228] sm:$0xff]
  %v3504 = vld [vmem:[#allocation3 + $0x230] sm:$0xff]
  %v3505 = vld [vmem:[#allocation3 + $0x238] sm:$0xff]
  %s3506 = scalar_lea.vmem %s2, 64
  %v3507 = vld [vmem:[%s3506] sm:$0xff]
  %v3508 = vld [vmem:[%s3506 + $0x8] sm:$0xff]
  %3510 = vset.pattern.permute.xlu0 0
  %3511 = vperm.xlu0 %3510, %v3507
  %v3512 = vpop.permute.xlu0 %3511
  %3515 = vset.pattern.permute.xlu0 0
  %3516 = vperm.xlu0 %3515, %v3508
  %v3517 = vpop.permute.xlu0 %3516
  %v3520 = vsel %vm551, %v3431, 0
  %v3523 = vsel %vm551, %v3433, 0
  %3525 = vmatprep.subr.mxu0 %v3435
  %3526 = vmatpush1.msra.mxu0 %v3434
  %3527 = vmatprep.subr.mxu0 %v3439
  %3528 = vmatpush1.msra.mxu0 %v3438
  %3529 = vmatprep.subr.mxu0 %v3443
  %3530 = vmatpush1.msra.mxu0 %v3442
  %3531 = vmatprep.subr.mxu0 %v3447
  %3532 = vmatpush1.msra.mxu0 %v3446
  %3533 = vmatprep.subr.mxu0 %v3451
  %3534 = vmatpush1.msra.mxu0 %v3450
  %3535 = vmatprep.subr.mxu0 %v3455
  %3536 = vmatpush1.msra.mxu0 %v3454
  %3537 = vmatprep.subr.mxu0 %v3459
  %3538 = vmatpush1.msra.mxu0 %v3458
  %3539 = vmatprep.subr.mxu0 %v3463
  %3540 = vmatpush1.msra.mxu0 %v3462
  %3541 = vmatprep.subr.mxu0 %v3467
  %3542 = vmatpush1.msra.mxu0 %v3466
  %3543 = vmatprep.subr.mxu0 %v3471
  %3544 = vmatpush1.msra.mxu0 %v3470
  %3545 = vmatprep.subr.mxu0 %v3475
  %3546 = vmatpush1.msra.mxu0 %v3474
  %3547 = vmatprep.subr.mxu0 %v3479
  %3548 = vmatpush1.msra.mxu0 %v3478
  %3549 = vmatprep.subr.mxu0 %v3483
  %3550 = vmatpush1.msra.mxu0 %v3482
  %3551 = vmatprep.subr.mxu0 %v3487
  %3552 = vmatpush1.msra.mxu0 %v3486
  %3553 = vmatprep.subr.mxu0 %v3491
  %3554 = vmatpush1.msra.mxu0 %v3490
  %3555 = vmatprep.subr.mxu0 %v3495
  %3556 = vmatpush1.msra.mxu0 %v3494
  %3557 = vmatprep.subr.mxu0 %v3499
  %3558 = vmatpush1.msra.mxu0 %v3498
  %3559 = vmatprep.subr.mxu0 %v3503
  %3560 = vmatpush1.msra.mxu0 %v3502
  %3561 = vmatprep.subr.mxu0 0.0
  %3562 = vmatpush1.msra.mxu0 0.0
  %3563 = vmatprep.subr.mxu0 0.0
  %3564 = vmatpush1.msra.mxu0 0.0
  %3565 = vmatprep.subr.mxu0 0.0
  %3566 = vmatpush1.msra.mxu0 0.0
  %3567 = vmatprep.subr.mxu0 0.0
  %3568 = vmatpush1.msra.mxu0 0.0
  %3569 = vmatprep.subr.mxu0 0.0
  %3570 = vmatpush1.msra.mxu0 0.0
  %3571 = vmatprep.subr.mxu0 0.0
  %3572 = vmatpush1.msra.mxu0 0.0
  %3573 = vmatprep.subr.mxu0 0.0
  %3574 = vmatpush1.msra.mxu0 0.0
  %3575 = vmatprep.subr.mxu0 0.0
  %3576 = vmatpush1.msra.mxu0 0.0
  %3577 = vmatprep.subr.mxu0 0.0
  %3578 = vmatpush1.msra.mxu0 0.0
  %3579 = vmatprep.subr.mxu0 0.0
  %3580 = vmatpush1.msra.mxu0 0.0
  %3581 = vmatprep.subr.mxu0 0.0
  %3582 = vmatpush1.msra.mxu0 0.0
  %3583 = vmatprep.subr.mxu0 0.0
  %3584 = vmatpush1.msra.mxu0 0.0
  %3585 = vmatprep.subr.mxu0 0.0
  %3586 = vmatpush1.msra.mxu0 0.0
  %3587 = vmatprep.subr.mxu0 0.0
  %3588 = vmatpush1.msra.mxu0 0.0
  %3589 = vmatprep.mubr.f32.mxu0 %v3520
  %3590 = vmatmul.mubr.f32.gmra.mrb[0].mxu0 %v3430
  %v3591 = vpop.f32.mrb[0].mxu0
  %v3592 = vadd.f32 %v3512, %v3591
  %v3593 = vpop.f32.mrb[0].mxu0
  %v3594 = vadd.f32 %v3512, %v3593
  %3595 = vmatprep.mubr.f32.mxu0 %v3523
  %3596 = vmatmul.mubr.f32.gmra.mrb[0].mxu0 %v3432
  %v3597 = vpop.f32.mrb[0].mxu0
  %v3598 = vadd.f32 %v3517, %v3597
  %v3599 = vpop.f32.mrb[0].mxu0
  %v3600 = vadd.f32 %v3517, %v3599
  %3601 = vdwg.mxu0
  %3602 = vmatprep.subr.mxu0 %v3437
  %3603 = vmatpush1.msra.mxu0 %v3436
  %3604 = vmatprep.subr.mxu0 %v3441
  %3605 = vmatpush1.msra.mxu0 %v3440
  %3606 = vmatprep.subr.mxu0 %v3445
  %3607 = vmatpush1.msra.mxu0 %v3444
  %3608 = vmatprep.subr.mxu0 %v3449
  %3609 = vmatpush1.msra.mxu0 %v3448
  %3610 = vmatprep.subr.mxu0 %v3453
  %3611 = vmatpush1.msra.mxu0 %v3452
  %3612 = vmatprep.subr.mxu0 %v3457
  %3613 = vmatpush1.msra.mxu0 %v3456
  %3614 = vmatprep.subr.mxu0 %v3461
  %3615 = vmatpush1.msra.mxu0 %v3460
  %3616 = vmatprep.subr.mxu0 %v3465
  %3617 = vmatpush1.msra.mxu0 %v3464
  %3618 = vmatprep.subr.mxu0 %v3469
  %3619 = vmatpush1.msra.mxu0 %v3468
  %3620 = vmatprep.subr.mxu0 %v3473
  %3621 = vmatpush1.msra.mxu0 %v3472
  %3622 = vmatprep.subr.mxu0 %v3477
  %3623 = vmatpush1.msra.mxu0 %v3476
  %3624 = vmatprep.subr.mxu0 %v3481
  %3625 = vmatpush1.msra.mxu0 %v3480
  %3626 = vmatprep.subr.mxu0 %v3485
  %3627 = vmatpush1.msra.mxu0 %v3484
  %3628 = vmatprep.subr.mxu0 %v3489
  %3629 = vmatpush1.msra.mxu0 %v3488
  %3630 = vmatprep.subr.mxu0 %v3493
  %3631 = vmatpush1.msra.mxu0 %v3492
  %3632 = vmatprep.subr.mxu0 %v3497
  %3633 = vmatpush1.msra.mxu0 %v3496
  %3634 = vmatprep.subr.mxu0 %v3501
  %3635 = vmatpush1.msra.mxu0 %v3500
  %3636 = vmatprep.subr.mxu0 %v3505
  %3637 = vmatpush1.msra.mxu0 %v3504
  %3638 = vmatprep.subr.mxu0 0.0
  %3639 = vmatpush1.msra.mxu0 0.0
  %3640 = vmatprep.subr.mxu0 0.0
  %3641 = vmatpush1.msra.mxu0 0.0
  %3642 = vmatprep.subr.mxu0 0.0
  %3643 = vmatpush1.msra.mxu0 0.0
  %3644 = vmatprep.subr.mxu0 0.0
  %3645 = vmatpush1.msra.mxu0 0.0
  %3646 = vmatprep.subr.mxu0 0.0
  %3647 = vmatpush1.msra.mxu0 0.0
  %3648 = vmatprep.subr.mxu0 0.0
  %3649 = vmatpush1.msra.mxu0 0.0
  %3650 = vmatprep.subr.mxu0 0.0
  %3651 = vmatpush1.msra.mxu0 0.0
  %3652 = vmatprep.subr.mxu0 0.0
  %3653 = vmatpush1.msra.mxu0 0.0
  %3654 = vmatprep.subr.mxu0 0.0
  %3655 = vmatpush1.msra.mxu0 0.0
  %3656 = vmatprep.subr.mxu0 0.0
  %3657 = vmatpush1.msra.mxu0 0.0
  %3658 = vmatprep.subr.mxu0 0.0
  %3659 = vmatpush1.msra.mxu0 0.0
  %3660 = vmatprep.subr.mxu0 0.0
  %3661 = vmatpush1.msra.mxu0 0.0
  %3662 = vmatprep.subr.mxu0 0.0
  %3663 = vmatpush1.msra.mxu0 0.0
  %3664 = vmatprep.subr.mxu0 0.0
  %3665 = vmatpush1.msra.mxu0 0.0
  %3666 = vmatprep.mubr.f32.mxu0 %v3520
  %3667 = vmatmul.mubr.f32.gmra.mrb[0].mxu0 %v3430
  %v3668 = vpop.f32.mrb[0].mxu0
  %v3669 = vadd.f32 %v3512, %v3668
  %v3670 = vpop.f32.mrb[0].mxu0
  %v3671 = vadd.f32 %v3512, %v3670
  %3672 = vmatprep.mubr.f32.mxu0 %v3523
  %3673 = vmatmul.mubr.f32.gmra.mrb[0].mxu0 %v3432
  %v3674 = vpop.f32.mrb[0].mxu0
  %v3675 = vadd.f32 %v3517, %v3674
  %v3676 = vpop.f32.mrb[0].mxu0
  %v3677 = vadd.f32 %v3517, %v3676
  %3678 = vdwg.mxu0
  %v3679 = vadd.f32 %v3592, %v2219
  %v3680 = vadd.f32 %v3594, %v2220
  %v3681 = vadd.f32 %v3669, %v2221
  %v3682 = vadd.f32 %v3671, %v2222
  %v3683 = vadd.f32 %v3598, %v2223
  %v3684 = vadd.f32 %v3600, %v2224
  %v3685 = vadd.f32 %v3675, %v2225
  %v3686 = vadd.f32 %v3677, %v2226
  %v3687 = vmax.f32 %v3679, 0.0
  %v3688 = vmax.f32 %v3680, 0.0
  %v3689 = vmax.f32 %v3681, 0.0
  %v3690 = vmax.f32 %v3682, 0.0
  %v3691 = vmax.f32 %v3683, 0.0
  %v3692 = vmax.f32 %v3684, 0.0
  %v3693 = vmax.f32 %v3685, 0.0
  %v3694 = vmax.f32 %v3686, 0.0
  %v3695 = vmul.f32 %v3687, %v724
  %v3696 = vmul.f32 %v3688, %v728
  %v3697 = vmul.f32 %v3689, %v732
  %v3698 = vmul.f32 %v3690, %v736
  %v3699 = vmul.f32 %v3691, %v724
  %v3700 = vmul.f32 %v3692, %v728
  %v3701 = vmul.f32 %v3693, %v732
  %v3702 = vmul.f32 %v3694, %v736
  %3707 = vrot.lane.b32.xlu0 %v3695, 17
  %v3708 = vpop.permute.xlu0 %3707
  %3709 = vrot.lane.b32.xlu0 %v3696, 17
  %v3710 = vpop.permute.xlu0 %3709
  %3711 = vrot.lane.b32.xlu0 %v3699, 17
  %v3712 = vpop.permute.xlu0 %3711
  %3713 = vrot.lane.b32.xlu0 %v3700, 17
  %v3714 = vpop.permute.xlu0 %3713
  %v3715 = vsel %vm761, %v3708, %v3710
  %v3716 = vsel %vm761, %v3712, %v3714
  %3723 = vst.msk [vmem:[#allocation2] sm:$0xff] %vm770, %v3708
  %3724 = vst [vmem:[#allocation2 + $0x8] sm:$0xff] %v3715
  %3725 = vst.msk [vmem:[#allocation2 + $0x10] sm:$0xff] %vm761, %v3710
  %3726 = vst.msk [vmem:[#allocation2 + $0x30] sm:$0xff] %vm770, %v3712
  %3727 = vst [vmem:[#allocation2 + $0x38] sm:$0xff] %v3716
  %3728 = vst.msk [vmem:[#allocation2 + $0x40] sm:$0xff] %vm761, %v3714
  %3733 = vrot.lane.b32.xlu0 %v3697, 17
  %v3734 = vpop.permute.xlu0 %3733
  %3735 = vrot.lane.b32.xlu0 %v3698, 17
  %v3736 = vpop.permute.xlu0 %3735
  %3737 = vrot.lane.b32.xlu0 %v3701, 17
  %v3738 = vpop.permute.xlu0 %3737
  %3739 = vrot.lane.b32.xlu0 %v3702, 17
  %v3740 = vpop.permute.xlu0 %3739
  %v3741 = vsel %vm761, %v3734, %v3736
  %v3742 = vsel %vm761, %v3738, %v3740
  %3749 = vst.msk [vmem:[#allocation2 + $0x18] sm:$0xff] %vm770, %v3734
  %3750 = vst [vmem:[#allocation2 + $0x20] sm:$0xff] %v3741
  %3751 = vst.msk [vmem:[#allocation2 + $0x28] sm:$0xff] %vm761, %v3736
  %3752 = vst.msk [vmem:[#allocation2 + $0x48] sm:$0xff] %vm770, %v3738
  %3753 = vst [vmem:[#allocation2 + $0x50] sm:$0xff] %v3742
  %3754 = vst.msk [vmem:[#allocation2 + $0x58] sm:$0xff] %vm761, %v3740
  %v3755 = vld [vmem:[#allocation2] sm:$0xff]
  %v3756 = vld [vmem:[#allocation2 + $0x8] sm:$0xff]
  %v3757 = vld [vmem:[#allocation2 + $0x10] sm:$0xff]
  %v3758 = vld [vmem:[#allocation2 + $0x18] sm:$0xff]
  %v3759 = vld [vmem:[#allocation2 + $0x20] sm:$0xff]
  %v3760 = vld [vmem:[#allocation2 + $0x28] sm:$0xff]
  %v3761 = vld [vmem:[#allocation2 + $0x30] sm:$0xff]
  %v3762 = vld [vmem:[#allocation2 + $0x38] sm:$0xff]
  %v3763 = vld [vmem:[#allocation2 + $0x40] sm:$0xff]
  %v3764 = vld [vmem:[#allocation2 + $0x48] sm:$0xff]
  %v3765 = vld [vmem:[#allocation2 + $0x50] sm:$0xff]
  %v3766 = vld [vmem:[#allocation2 + $0x58] sm:$0xff]
  %3767 = vst [vmem:[#allocation3] sm:$0xff] %v3755
  %3768 = vst [vmem:[#allocation3 + $0x8] sm:$0xff] %v3756
  %3769 = vst [vmem:[#allocation3 + $0x20] sm:$0xff] %v3761
  %3770 = vst [vmem:[#allocation3 + $0x28] sm:$0xff] %v3762
  %3771 = vst [vmem:[#allocation3 + $0x10] sm:$0xff] %v3758
  %3772 = vst [vmem:[#allocation3 + $0x18] sm:$0xff] %v3759
  %3773 = vst [vmem:[#allocation3 + $0x30] sm:$0xff] %v3764
  %3774 = vst [vmem:[#allocation3 + $0x38] sm:$0xff] %v3765
  %3781 = vrot.lane.b32.xlu0 %v3755, 127
  %v3782 = vpop.permute.xlu0 %3781
  %3783 = vrot.lane.b32.xlu0 %v3756, 127
  %v3784 = vpop.permute.xlu0 %3783
  %3785 = vrot.lane.b32.xlu0 %v3757, 127
  %v3786 = vpop.permute.xlu0 %3785
  %3787 = vrot.lane.b32.xlu0 %v3761, 127
  %v3788 = vpop.permute.xlu0 %3787
  %3789 = vrot.lane.b32.xlu0 %v3762, 127
  %v3790 = vpop.permute.xlu0 %3789
  %3791 = vrot.lane.b32.xlu0 %v3763, 127
  %v3792 = vpop.permute.xlu0 %3791
  %v3793 = vsel %vm77, %v3782, %v3784
  %v3794 = vsel %vm77, %v3784, %v3786
  %v3795 = vsel %vm77, %v3788, %v3790
  %v3796 = vsel %vm77, %v3790, %v3792
  %3801 = vst [vmem:[#allocation3 + $0x40] sm:$0xff] %v3793
  %3802 = vst [vmem:[#allocation3 + $0x48] sm:$0xff] %v3794
  %3803 = vst [vmem:[#allocation3 + $0x60] sm:$0xff] %v3795
  %3804 = vst [vmem:[#allocation3 + $0x68] sm:$0xff] %v3796
  %3811 = vrot.lane.b32.xlu0 %v3758, 127
  %v3812 = vpop.permute.xlu0 %3811
  %3813 = vrot.lane.b32.xlu0 %v3759, 127
  %v3814 = vpop.permute.xlu0 %3813
  %3815 = vrot.lane.b32.xlu0 %v3760, 127
  %v3816 = vpop.permute.xlu0 %3815
  %3817 = vrot.lane.b32.xlu0 %v3764, 127
  %v3818 = vpop.permute.xlu0 %3817
  %3819 = vrot.lane.b32.xlu0 %v3765, 127
  %v3820 = vpop.permute.xlu0 %3819
  %3821 = vrot.lane.b32.xlu0 %v3766, 127
  %v3822 = vpop.permute.xlu0 %3821
  %v3823 = vsel %vm77, %v3812, %v3814
  %v3824 = vsel %vm77, %v3814, %v3816
  %v3825 = vsel %vm77, %v3818, %v3820
  %v3826 = vsel %vm77, %v3820, %v3822
  %3831 = vst [vmem:[#allocation3 + $0x50] sm:$0xff] %v3823
  %3832 = vst [vmem:[#allocation3 + $0x58] sm:$0xff] %v3824
  %3833 = vst [vmem:[#allocation3 + $0x70] sm:$0xff] %v3825
  %3834 = vst [vmem:[#allocation3 + $0x78] sm:$0xff] %v3826
  %3835 = vrot.lane.b32.xlu0 %v3755, 126
  %v3836 = vpop.permute.xlu0 %3835
  %3837 = vrot.lane.b32.xlu0 %v3756, 126
  %v3838 = vpop.permute.xlu0 %3837
  %3839 = vrot.lane.b32.xlu0 %v3757, 126
  %v3840 = vpop.permute.xlu0 %3839
  %3841 = vrot.lane.b32.xlu0 %v3761, 126
  %v3842 = vpop.permute.xlu0 %3841
  %3843 = vrot.lane.b32.xlu0 %v3762, 126
  %v3844 = vpop.permute.xlu0 %3843
  %3845 = vrot.lane.b32.xlu0 %v3763, 126
  %v3846 = vpop.permute.xlu0 %3845
  %v3847 = vsel %vm132, %v3836, %v3838
  %v3848 = vsel %vm132, %v3838, %v3840
  %v3849 = vsel %vm132, %v3842, %v3844
  %v3850 = vsel %vm132, %v3844, %v3846
  %3855 = vst [vmem:[#allocation3 + $0x80] sm:$0xff] %v3847
  %3856 = vst [vmem:[#allocation3 + $0x88] sm:$0xff] %v3848
  %3857 = vst [vmem:[#allocation3 + $0xa0] sm:$0xff] %v3849
  %3858 = vst [vmem:[#allocation3 + $0xa8] sm:$0xff] %v3850
  %3859 = vrot.lane.b32.xlu0 %v3758, 126
  %v3860 = vpop.permute.xlu0 %3859
  %3861 = vrot.lane.b32.xlu0 %v3759, 126
  %v3862 = vpop.permute.xlu0 %3861
  %3863 = vrot.lane.b32.xlu0 %v3760, 126
  %v3864 = vpop.permute.xlu0 %3863
  %3865 = vrot.lane.b32.xlu0 %v3764, 126
  %v3866 = vpop.permute.xlu0 %3865
  %3867 = vrot.lane.b32.xlu0 %v3765, 126
  %v3868 = vpop.permute.xlu0 %3867
  %3869 = vrot.lane.b32.xlu0 %v3766, 126
  %v3870 = vpop.permute.xlu0 %3869
  %v3871 = vsel %vm132, %v3860, %v3862
  %v3872 = vsel %vm132, %v3862, %v3864
  %v3873 = vsel %vm132, %v3866, %v3868
  %v3874 = vsel %vm132, %v3868, %v3870
  %3879 = vst [vmem:[#allocation3 + $0x90] sm:$0xff] %v3871
  %3880 = vst [vmem:[#allocation3 + $0x98] sm:$0xff] %v3872
  %3881 = vst [vmem:[#allocation3 + $0xb0] sm:$0xff] %v3873
  %3882 = vst [vmem:[#allocation3 + $0xb8] sm:$0xff] %v3874
  %3883 = vrot.lane.b32.xlu0 %v3755, 112
  %v3884 = vpop.permute.xlu0 %3883
  %3885 = vrot.lane.b32.xlu0 %v3756, 112
  %v3886 = vpop.permute.xlu0 %3885
  %3887 = vrot.lane.b32.xlu0 %v3757, 112
  %v3888 = vpop.permute.xlu0 %3887
  %3889 = vrot.lane.b32.xlu0 %v3761, 112
  %v3890 = vpop.permute.xlu0 %3889
  %3891 = vrot.lane.b32.xlu0 %v3762, 112
  %v3892 = vpop.permute.xlu0 %3891
  %3893 = vrot.lane.b32.xlu0 %v3763, 112
  %v3894 = vpop.permute.xlu0 %3893
  %v3895 = vsel %vm181, %v3884, %v3886
  %v3896 = vsel %vm181, %v3886, %v3888
  %v3897 = vsel %vm181, %v3890, %v3892
  %v3898 = vsel %vm181, %v3892, %v3894
  %3903 = vst [vmem:[#allocation3 + $0xc0] sm:$0xff] %v3895
  %3904 = vst [vmem:[#allocation3 + $0xc8] sm:$0xff] %v3896
  %3905 = vst [vmem:[#allocation3 + $0xe0] sm:$0xff] %v3897
  %3906 = vst [vmem:[#allocation3 + $0xe8] sm:$0xff] %v3898
  %3907 = vrot.lane.b32.xlu0 %v3758, 112
  %v3908 = vpop.permute.xlu0 %3907
  %3909 = vrot.lane.b32.xlu0 %v3759, 112
  %v3910 = vpop.permute.xlu0 %3909
  %3911 = vrot.lane.b32.xlu0 %v3760, 112
  %v3912 = vpop.permute.xlu0 %3911
  %3913 = vrot.lane.b32.xlu0 %v3764, 112
  %v3914 = vpop.permute.xlu0 %3913
  %3915 = vrot.lane.b32.xlu0 %v3765, 112
  %v3916 = vpop.permute.xlu0 %3915
  %3917 = vrot.lane.b32.xlu0 %v3766, 112
  %v3918 = vpop.permute.xlu0 %3917
  %v3919 = vsel %vm181, %v3908, %v3910
  %v3920 = vsel %vm181, %v3910, %v3912
  %v3921 = vsel %vm181, %v3914, %v3916
  %v3922 = vsel %vm181, %v3916, %v3918
  %3927 = vst [vmem:[#allocation3 + $0xd0] sm:$0xff] %v3919
  %3928 = vst [vmem:[#allocation3 + $0xd8] sm:$0xff] %v3920
  %3929 = vst [vmem:[#allocation3 + $0xf0] sm:$0xff] %v3921
  %3930 = vst [vmem:[#allocation3 + $0xf8] sm:$0xff] %v3922
  %3931 = vrot.lane.b32.xlu0 %v3755, 111
  %v3932 = vpop.permute.xlu0 %3931
  %3933 = vrot.lane.b32.xlu0 %v3756, 111
  %v3934 = vpop.permute.xlu0 %3933
  %3935 = vrot.lane.b32.xlu0 %v3757, 111
  %v3936 = vpop.permute.xlu0 %3935
  %3937 = vrot.lane.b32.xlu0 %v3761, 111
  %v3938 = vpop.permute.xlu0 %3937
  %3939 = vrot.lane.b32.xlu0 %v3762, 111
  %v3940 = vpop.permute.xlu0 %3939
  %3941 = vrot.lane.b32.xlu0 %v3763, 111
  %v3942 = vpop.permute.xlu0 %3941
  %v3943 = vsel %vm230, %v3932, %v3934
  %v3944 = vsel %vm230, %v3934, %v3936
  %v3945 = vsel %vm230, %v3938, %v3940
  %v3946 = vsel %vm230, %v3940, %v3942
  %3951 = vst [vmem:[#allocation3 + $0x100] sm:$0xff] %v3943
  %3952 = vst [vmem:[#allocation3 + $0x108] sm:$0xff] %v3944
  %3953 = vst [vmem:[#allocation3 + $0x120] sm:$0xff] %v3945
  %3954 = vst [vmem:[#allocation3 + $0x128] sm:$0xff] %v3946
  %3955 = vrot.lane.b32.xlu0 %v3758, 111
  %v3956 = vpop.permute.xlu0 %3955
  %3957 = vrot.lane.b32.xlu0 %v3759, 111
  %v3958 = vpop.permute.xlu0 %3957
  %3959 = vrot.lane.b32.xlu0 %v3760, 111
  %v3960 = vpop.permute.xlu0 %3959
  %3961 = vrot.lane.b32.xlu0 %v3764, 111
  %v3962 = vpop.permute.xlu0 %3961
  %3963 = vrot.lane.b32.xlu0 %v3765, 111
  %v3964 = vpop.permute.xlu0 %3963
  %3965 = vrot.lane.b32.xlu0 %v3766, 111
  %v3966 = vpop.permute.xlu0 %3965
  %v3967 = vsel %vm230, %v3956, %v3958
  %v3968 = vsel %vm230, %v3958, %v3960
  %v3969 = vsel %vm230, %v3962, %v3964
  %v3970 = vsel %vm230, %v3964, %v3966
  %3975 = vst [vmem:[#allocation3 + $0x110] sm:$0xff] %v3967
  %3976 = vst [vmem:[#allocation3 + $0x118] sm:$0xff] %v3968
  %3977 = vst [vmem:[#allocation3 + $0x130] sm:$0xff] %v3969
  %3978 = vst [vmem:[#allocation3 + $0x138] sm:$0xff] %v3970
  %3979 = vrot.lane.b32.xlu0 %v3755, 110
  %v3980 = vpop.permute.xlu0 %3979
  %3981 = vrot.lane.b32.xlu0 %v3756, 110
  %v3982 = vpop.permute.xlu0 %3981
  %3983 = vrot.lane.b32.xlu0 %v3757, 110
  %v3984 = vpop.permute.xlu0 %3983
  %3985 = vrot.lane.b32.xlu0 %v3761, 110
  %v3986 = vpop.permute.xlu0 %3985
  %3987 = vrot.lane.b32.xlu0 %v3762, 110
  %v3988 = vpop.permute.xlu0 %3987
  %3989 = vrot.lane.b32.xlu0 %v3763, 110
  %v3990 = vpop.permute.xlu0 %3989
  %v3991 = vsel %vm279, %v3980, %v3982
  %v3992 = vsel %vm279, %v3982, %v3984
  %v3993 = vsel %vm279, %v3986, %v3988
  %v3994 = vsel %vm279, %v3988, %v3990
  %3999 = vst [vmem:[#allocation3 + $0x140] sm:$0xff] %v3991
  %4000 = vst [vmem:[#allocation3 + $0x148] sm:$0xff] %v3992
  %4001 = vst [vmem:[#allocation3 + $0x160] sm:$0xff] %v3993
  %4002 = vst [vmem:[#allocation3 + $0x168] sm:$0xff] %v3994
  %4003 = vrot.lane.b32.xlu0 %v3758, 110
  %v4004 = vpop.permute.xlu0 %4003
  %4005 = vrot.lane.b32.xlu0 %v3759, 110
  %v4006 = vpop.permute.xlu0 %4005
  %4007 = vrot.lane.b32.xlu0 %v3760, 110
  %v4008 = vpop.permute.xlu0 %4007
  %4009 = vrot.lane.b32.xlu0 %v3764, 110
  %v4010 = vpop.permute.xlu0 %4009
  %4011 = vrot.lane.b32.xlu0 %v3765, 110
  %v4012 = vpop.permute.xlu0 %4011
  %4013 = vrot.lane.b32.xlu0 %v3766, 110
  %v4014 = vpop.permute.xlu0 %4013
  %v4015 = vsel %vm279, %v4004, %v4006
  %v4016 = vsel %vm279, %v4006, %v4008
  %v4017 = vsel %vm279, %v4010, %v4012
  %v4018 = vsel %vm279, %v4012, %v4014
  %4023 = vst [vmem:[#allocation3 + $0x150] sm:$0xff] %v4015
  %4024 = vst [vmem:[#allocation3 + $0x158] sm:$0xff] %v4016
  %4025 = vst [vmem:[#allocation3 + $0x170] sm:$0xff] %v4017
  %4026 = vst [vmem:[#allocation3 + $0x178] sm:$0xff] %v4018
  %4027 = vrot.lane.b32.xlu0 %v3755, 96
  %v4028 = vpop.permute.xlu0 %4027
  %4029 = vrot.lane.b32.xlu0 %v3756, 96
  %v4030 = vpop.permute.xlu0 %4029
  %4031 = vrot.lane.b32.xlu0 %v3757, 96
  %v4032 = vpop.permute.xlu0 %4031
  %4033 = vrot.lane.b32.xlu0 %v3761, 96
  %v4034 = vpop.permute.xlu0 %4033
  %4035 = vrot.lane.b32.xlu0 %v3762, 96
  %v4036 = vpop.permute.xlu0 %4035
  %4037 = vrot.lane.b32.xlu0 %v3763, 96
  %v4038 = vpop.permute.xlu0 %4037
  %v4039 = vsel %vm328, %v4028, %v4030
  %v4040 = vsel %vm328, %v4030, %v4032
  %v4041 = vsel %vm328, %v4034, %v4036
  %v4042 = vsel %vm328, %v4036, %v4038
  %4047 = vst [vmem:[#allocation3 + $0x180] sm:$0xff] %v4039
  %4048 = vst [vmem:[#allocation3 + $0x188] sm:$0xff] %v4040
  %4049 = vst [vmem:[#allocation3 + $0x1a0] sm:$0xff] %v4041
  %4050 = vst [vmem:[#allocation3 + $0x1a8] sm:$0xff] %v4042
  %4051 = vrot.lane.b32.xlu0 %v3758, 96
  %v4052 = vpop.permute.xlu0 %4051
  %4053 = vrot.lane.b32.xlu0 %v3759, 96
  %v4054 = vpop.permute.xlu0 %4053
  %4055 = vrot.lane.b32.xlu0 %v3760, 96
  %v4056 = vpop.permute.xlu0 %4055
  %4057 = vrot.lane.b32.xlu0 %v3764, 96
  %v4058 = vpop.permute.xlu0 %4057
  %4059 = vrot.lane.b32.xlu0 %v3765, 96
  %v4060 = vpop.permute.xlu0 %4059
  %4061 = vrot.lane.b32.xlu0 %v3766, 96
  %v4062 = vpop.permute.xlu0 %4061
  %v4063 = vsel %vm328, %v4052, %v4054
  %v4064 = vsel %vm328, %v4054, %v4056
  %v4065 = vsel %vm328, %v4058, %v4060
  %v4066 = vsel %vm328, %v4060, %v4062
  %4071 = vst [vmem:[#allocation3 + $0x190] sm:$0xff] %v4063
  %4072 = vst [vmem:[#allocation3 + $0x198] sm:$0xff] %v4064
  %4073 = vst [vmem:[#allocation3 + $0x1b0] sm:$0xff] %v4065
  %4074 = vst [vmem:[#allocation3 + $0x1b8] sm:$0xff] %v4066
  %4075 = vrot.lane.b32.xlu0 %v3755, 95
  %v4076 = vpop.permute.xlu0 %4075
  %4077 = vrot.lane.b32.xlu0 %v3756, 95
  %v4078 = vpop.permute.xlu0 %4077
  %4079 = vrot.lane.b32.xlu0 %v3757, 95
  %v4080 = vpop.permute.xlu0 %4079
  %4081 = vrot.lane.b32.xlu0 %v3761, 95
  %v4082 = vpop.permute.xlu0 %4081
  %4083 = vrot.lane.b32.xlu0 %v3762, 95
  %v4084 = vpop.permute.xlu0 %4083
  %4085 = vrot.lane.b32.xlu0 %v3763, 95
  %v4086 = vpop.permute.xlu0 %4085
  %v4087 = vsel %vm377, %v4076, %v4078
  %v4088 = vsel %vm377, %v4078, %v4080
  %v4089 = vsel %vm377, %v4082, %v4084
  %v4090 = vsel %vm377, %v4084, %v4086
  %4095 = vst [vmem:[#allocation3 + $0x1c0] sm:$0xff] %v4087
  %4096 = vst [vmem:[#allocation3 + $0x1c8] sm:$0xff] %v4088
  %4097 = vst [vmem:[#allocation3 + $0x1e0] sm:$0xff] %v4089
  %4098 = vst [vmem:[#allocation3 + $0x1e8] sm:$0xff] %v4090
  %4099 = vrot.lane.b32.xlu0 %v3758, 95
  %v4100 = vpop.permute.xlu0 %4099
  %4101 = vrot.lane.b32.xlu0 %v3759, 95
  %v4102 = vpop.permute.xlu0 %4101
  %4103 = vrot.lane.b32.xlu0 %v3760, 95
  %v4104 = vpop.permute.xlu0 %4103
  %4105 = vrot.lane.b32.xlu0 %v3764, 95
  %v4106 = vpop.permute.xlu0 %4105
  %4107 = vrot.lane.b32.xlu0 %v3765, 95
  %v4108 = vpop.permute.xlu0 %4107
  %4109 = vrot.lane.b32.xlu0 %v3766, 95
  %v4110 = vpop.permute.xlu0 %4109
  %v4111 = vsel %vm377, %v4100, %v4102
  %v4112 = vsel %vm377, %v4102, %v4104
  %v4113 = vsel %vm377, %v4106, %v4108
  %v4114 = vsel %vm377, %v4108, %v4110
  %4119 = vst [vmem:[#allocation3 + $0x1d0] sm:$0xff] %v4111
  %4120 = vst [vmem:[#allocation3 + $0x1d8] sm:$0xff] %v4112
  %4121 = vst [vmem:[#allocation3 + $0x1f0] sm:$0xff] %v4113
  %4122 = vst [vmem:[#allocation3 + $0x1f8] sm:$0xff] %v4114
  %4123 = vrot.lane.b32.xlu0 %v3755, 94
  %v4124 = vpop.permute.xlu0 %4123
  %4125 = vrot.lane.b32.xlu0 %v3756, 94
  %v4126 = vpop.permute.xlu0 %4125
  %4127 = vrot.lane.b32.xlu0 %v3757, 94
  %v4128 = vpop.permute.xlu0 %4127
  %4129 = vrot.lane.b32.xlu0 %v3761, 94
  %v4130 = vpop.permute.xlu0 %4129
  %4131 = vrot.lane.b32.xlu0 %v3762, 94
  %v4132 = vpop.permute.xlu0 %4131
  %4133 = vrot.lane.b32.xlu0 %v3763, 94
  %v4134 = vpop.permute.xlu0 %4133
  %v4135 = vsel %vm426, %v4124, %v4126
  %v4136 = vsel %vm426, %v4126, %v4128
  %v4137 = vsel %vm426, %v4130, %v4132
  %v4138 = vsel %vm426, %v4132, %v4134
  %4143 = vst [vmem:[#allocation3 + $0x200] sm:$0xff] %v4135
  %4144 = vst [vmem:[#allocation3 + $0x208] sm:$0xff] %v4136
  %4145 = vst [vmem:[#allocation3 + $0x220] sm:$0xff] %v4137
  %4146 = vst [vmem:[#allocation3 + $0x228] sm:$0xff] %v4138
  %4147 = vrot.lane.b32.xlu0 %v3758, 94
  %v4148 = vpop.permute.xlu0 %4147
  %4149 = vrot.lane.b32.xlu0 %v3759, 94
  %v4150 = vpop.permute.xlu0 %4149
  %4151 = vrot.lane.b32.xlu0 %v3760, 94
  %v4152 = vpop.permute.xlu0 %4151
  %4153 = vrot.lane.b32.xlu0 %v3764, 94
  %v4154 = vpop.permute.xlu0 %4153
  %4155 = vrot.lane.b32.xlu0 %v3765, 94
  %v4156 = vpop.permute.xlu0 %4155
  %4157 = vrot.lane.b32.xlu0 %v3766, 94
  %v4158 = vpop.permute.xlu0 %4157
  %v4159 = vsel %vm426, %v4148, %v4150
  %v4160 = vsel %vm426, %v4150, %v4152
  %v4161 = vsel %vm426, %v4154, %v4156
  %v4162 = vsel %vm426, %v4156, %v4158
  %4167 = vst [vmem:[#allocation3 + $0x210] sm:$0xff] %v4159
  %4168 = vst [vmem:[#allocation3 + $0x218] sm:$0xff] %v4160
  %4169 = vst [vmem:[#allocation3 + $0x230] sm:$0xff] %v4161
  %4170 = vst [vmem:[#allocation3 + $0x238] sm:$0xff] %v4162
  %s4171 = scalar_lea.vmem %s1, 160
  %v4172 = vld [vmem:[%s4171] sm:$0xff]
  %v4173 = vld [vmem:[%s4171 + $0x8] sm:$0xff]
  %v4174 = vld [vmem:[%s4171 + $0x10] sm:$0xff]
  %v4175 = vld [vmem:[%s4171 + $0x18] sm:$0xff]
  %v4176 = vld [vmem:[#allocation3] sm:$0xff]
  %v4177 = vld [vmem:[#allocation3 + $0x8] sm:$0xff]
  %v4178 = vld [vmem:[#allocation3 + $0x10] sm:$0xff]
  %v4179 = vld [vmem:[#allocation3 + $0x18] sm:$0xff]
  %v4180 = vld [vmem:[#allocation3 + $0x20] sm:$0xff]
  %v4181 = vld [vmem:[#allocation3 + $0x28] sm:$0xff]
  %v4182 = vld [vmem:[#allocation3 + $0x30] sm:$0xff]
  %v4183 = vld [vmem:[#allocation3 + $0x38] sm:$0xff]
  %v4184 = vld [vmem:[#allocation3 + $0x40] sm:$0xff]
  %v4185 = vld [vmem:[#allocation3 + $0x48] sm:$0xff]
  %v4186 = vld [vmem:[#allocation3 + $0x50] sm:$0xff]
  %v4187 = vld [vmem:[#allocation3 + $0x58] sm:$0xff]
  %v4188 = vld [vmem:[#allocation3 + $0x60] sm:$0xff]
  %v4189 = vld [vmem:[#allocation3 + $0x68] sm:$0xff]
  %v4190 = vld [vmem:[#allocation3 + $0x70] sm:$0xff]
  %v4191 = vld [vmem:[#allocation3 + $0x78] sm:$0xff]
  %v4192 = vld [vmem:[#allocation3 + $0x80] sm:$0xff]
  %v4193 = vld [vmem:[#allocation3 + $0x88] sm:$0xff]
  %v4194 = vld [vmem:[#allocation3 + $0x90] sm:$0xff]
  %v4195 = vld [vmem:[#allocation3 + $0x98] sm:$0xff]
  %v4196 = vld [vmem:[#allocation3 + $0xa0] sm:$0xff]
  %v4197 = vld [vmem:[#allocation3 + $0xa8] sm:$0xff]
  %v4198 = vld [vmem:[#allocation3 + $0xb0] sm:$0xff]
  %v4199 = vld [vmem:[#allocation3 + $0xb8] sm:$0xff]
  %v4200 = vld [vmem:[#allocation3 + $0xc0] sm:$0xff]
  %v4201 = vld [vmem:[#allocation3 + $0xc8] sm:$0xff]
  %v4202 = vld [vmem:[#allocation3 + $0xd0] sm:$0xff]
  %v4203 = vld [vmem:[#allocation3 + $0xd8] sm:$0xff]
  %v4204 = vld [vmem:[#allocation3 + $0xe0] sm:$0xff]
  %v4205 = vld [vmem:[#allocation3 + $0xe8] sm:$0xff]
  %v4206 = vld [vmem:[#allocation3 + $0xf0] sm:$0xff]
  %v4207 = vld [vmem:[#allocation3 + $0xf8] sm:$0xff]
  %v4208 = vld [vmem:[#allocation3 + $0x100] sm:$0xff]
  %v4209 = vld [vmem:[#allocation3 + $0x108] sm:$0xff]
  %v4210 = vld [vmem:[#allocation3 + $0x110] sm:$0xff]
  %v4211 = vld [vmem:[#allocation3 + $0x118] sm:$0xff]
  %v4212 = vld [vmem:[#allocation3 + $0x120] sm:$0xff]
  %v4213 = vld [vmem:[#allocation3 + $0x128] sm:$0xff]
  %v4214 = vld [vmem:[#allocation3 + $0x130] sm:$0xff]
  %v4215 = vld [vmem:[#allocation3 + $0x138] sm:$0xff]
  %v4216 = vld [vmem:[#allocation3 + $0x140] sm:$0xff]
  %v4217 = vld [vmem:[#allocation3 + $0x148] sm:$0xff]
  %v4218 = vld [vmem:[#allocation3 + $0x150] sm:$0xff]
  %v4219 = vld [vmem:[#allocation3 + $0x158] sm:$0xff]
  %v4220 = vld [vmem:[#allocation3 + $0x160] sm:$0xff]
  %v4221 = vld [vmem:[#allocation3 + $0x168] sm:$0xff]
  %v4222 = vld [vmem:[#allocation3 + $0x170] sm:$0xff]
  %v4223 = vld [vmem:[#allocation3 + $0x178] sm:$0xff]
  %v4224 = vld [vmem:[#allocation3 + $0x180] sm:$0xff]
  %v4225 = vld [vmem:[#allocation3 + $0x188] sm:$0xff]
  %v4226 = vld [vmem:[#allocation3 + $0x190] sm:$0xff]
  %v4227 = vld [vmem:[#allocation3 + $0x198] sm:$0xff]
  %v4228 = vld [vmem:[#allocation3 + $0x1a0] sm:$0xff]
  %v4229 = vld [vmem:[#allocation3 + $0x1a8] sm:$0xff]
  %v4230 = vld [vmem:[#allocation3 + $0x1b0] sm:$0xff]
  %v4231 = vld [vmem:[#allocation3 + $0x1b8] sm:$0xff]
  %v4232 = vld [vmem:[#allocation3 + $0x1c0] sm:$0xff]
  %v4233 = vld [vmem:[#allocation3 + $0x1c8] sm:$0xff]
  %v4234 = vld [vmem:[#allocation3 + $0x1d0] sm:$0xff]
  %v4235 = vld [vmem:[#allocation3 + $0x1d8] sm:$0xff]
  %v4236 = vld [vmem:[#allocation3 + $0x1e0] sm:$0xff]
  %v4237 = vld [vmem:[#allocation3 + $0x1e8] sm:$0xff]
  %v4238 = vld [vmem:[#allocation3 + $0x1f0] sm:$0xff]
  %v4239 = vld [vmem:[#allocation3 + $0x1f8] sm:$0xff]
  %v4240 = vld [vmem:[#allocation3 + $0x200] sm:$0xff]
  %v4241 = vld [vmem:[#allocation3 + $0x208] sm:$0xff]
  %v4242 = vld [vmem:[#allocation3 + $0x210] sm:$0xff]
  %v4243 = vld [vmem:[#allocation3 + $0x218] sm:$0xff]
  %v4244 = vld [vmem:[#allocation3 + $0x220] sm:$0xff]
  %v4245 = vld [vmem:[#allocation3 + $0x228] sm:$0xff]
  %v4246 = vld [vmem:[#allocation3 + $0x230] sm:$0xff]
  %v4247 = vld [vmem:[#allocation3 + $0x238] sm:$0xff]
  %s4248 = scalar_lea.vmem %s2, 80
  %v4249 = vld [vmem:[%s4248] sm:$0xff]
  %v4250 = vld [vmem:[%s4248 + $0x8] sm:$0xff]
  %4252 = vset.pattern.permute.xlu0 0
  %4253 = vperm.xlu0 %4252, %v4249
  %v4254 = vpop.permute.xlu0 %4253
  %4257 = vset.pattern.permute.xlu0 0
  %4258 = vperm.xlu0 %4257, %v4250
  %v4259 = vpop.permute.xlu0 %4258
  %v4262 = vsel %vm551, %v4173, 0
  %v4265 = vsel %vm551, %v4175, 0
  %4267 = vmatprep.subr.mxu0 %v4177
  %4268 = vmatpush1.msra.mxu0 %v4176
  %4269 = vmatprep.subr.mxu0 %v4181
  %4270 = vmatpush1.msra.mxu0 %v4180
  %4271 = vmatprep.subr.mxu0 %v4185
  %4272 = vmatpush1.msra.mxu0 %v4184
  %4273 = vmatprep.subr.mxu0 %v4189
  %4274 = vmatpush1.msra.mxu0 %v4188
  %4275 = vmatprep.subr.mxu0 %v4193
  %4276 = vmatpush1.msra.mxu0 %v4192
  %4277 = vmatprep.subr.mxu0 %v4197
  %4278 = vmatpush1.msra.mxu0 %v4196
  %4279 = vmatprep.subr.mxu0 %v4201
  %4280 = vmatpush1.msra.mxu0 %v4200
  %4281 = vmatprep.subr.mxu0 %v4205
  %4282 = vmatpush1.msra.mxu0 %v4204
  %4283 = vmatprep.subr.mxu0 %v4209
  %4284 = vmatpush1.msra.mxu0 %v4208
  %4285 = vmatprep.subr.mxu0 %v4213
  %4286 = vmatpush1.msra.mxu0 %v4212
  %4287 = vmatprep.subr.mxu0 %v4217
  %4288 = vmatpush1.msra.mxu0 %v4216
  %4289 = vmatprep.subr.mxu0 %v4221
  %4290 = vmatpush1.msra.mxu0 %v4220
  %4291 = vmatprep.subr.mxu0 %v4225
  %4292 = vmatpush1.msra.mxu0 %v4224
  %4293 = vmatprep.subr.mxu0 %v4229
  %4294 = vmatpush1.msra.mxu0 %v4228
  %4295 = vmatprep.subr.mxu0 %v4233
  %4296 = vmatpush1.msra.mxu0 %v4232
  %4297 = vmatprep.subr.mxu0 %v4237
  %4298 = vmatpush1.msra.mxu0 %v4236
  %4299 = vmatprep.subr.mxu0 %v4241
  %4300 = vmatpush1.msra.mxu0 %v4240
  %4301 = vmatprep.subr.mxu0 %v4245
  %4302 = vmatpush1.msra.mxu0 %v4244
  %4303 = vmatprep.subr.mxu0 0.0
  %4304 = vmatpush1.msra.mxu0 0.0
  %4305 = vmatprep.subr.mxu0 0.0
  %4306 = vmatpush1.msra.mxu0 0.0
  %4307 = vmatprep.subr.mxu0 0.0
  %4308 = vmatpush1.msra.mxu0 0.0
  %4309 = vmatprep.subr.mxu0 0.0
  %4310 = vmatpush1.msra.mxu0 0.0
  %4311 = vmatprep.subr.mxu0 0.0
  %4312 = vmatpush1.msra.mxu0 0.0
  %4313 = vmatprep.subr.mxu0 0.0
  %4314 = vmatpush1.msra.mxu0 0.0
  %4315 = vmatprep.subr.mxu0 0.0
  %4316 = vmatpush1.msra.mxu0 0.0
  %4317 = vmatprep.subr.mxu0 0.0
  %4318 = vmatpush1.msra.mxu0 0.0
  %4319 = vmatprep.subr.mxu0 0.0
  %4320 = vmatpush1.msra.mxu0 0.0
  %4321 = vmatprep.subr.mxu0 0.0
  %4322 = vmatpush1.msra.mxu0 0.0
  %4323 = vmatprep.subr.mxu0 0.0
  %4324 = vmatpush1.msra.mxu0 0.0
  %4325 = vmatprep.subr.mxu0 0.0
  %4326 = vmatpush1.msra.mxu0 0.0
  %4327 = vmatprep.subr.mxu0 0.0
  %4328 = vmatpush1.msra.mxu0 0.0
  %4329 = vmatprep.subr.mxu0 0.0
  %4330 = vmatpush1.msra.mxu0 0.0
  %4331 = vmatprep.mubr.f32.mxu0 %v4262
  %4332 = vmatmul.mubr.f32.gmra.mrb[0].mxu0 %v4172
  %v4333 = vpop.f32.mrb[0].mxu0
  %v4334 = vadd.f32 %v4254, %v4333
  %v4335 = vpop.f32.mrb[0].mxu0
  %v4336 = vadd.f32 %v4254, %v4335
  %4337 = vmatprep.mubr.f32.mxu0 %v4265
  %4338 = vmatmul.mubr.f32.gmra.mrb[0].mxu0 %v4174
  %v4339 = vpop.f32.mrb[0].mxu0
  %v4340 = vadd.f32 %v4259, %v4339
  %v4341 = vpop.f32.mrb[0].mxu0
  %v4342 = vadd.f32 %v4259, %v4341
  %4343 = vdwg.mxu0
  %4344 = vmatprep.subr.mxu0 %v4179
  %4345 = vmatpush1.msra.mxu0 %v4178
  %4346 = vmatprep.subr.mxu0 %v4183
  %4347 = vmatpush1.msra.mxu0 %v4182
  %4348 = vmatprep.subr.mxu0 %v4187
  %4349 = vmatpush1.msra.mxu0 %v4186
  %4350 = vmatprep.subr.mxu0 %v4191
  %4351 = vmatpush1.msra.mxu0 %v4190
  %4352 = vmatprep.subr.mxu0 %v4195
  %4353 = vmatpush1.msra.mxu0 %v4194
  %4354 = vmatprep.subr.mxu0 %v4199
  %4355 = vmatpush1.msra.mxu0 %v4198
  %4356 = vmatprep.subr.mxu0 %v4203
  %4357 = vmatpush1.msra.mxu0 %v4202
  %4358 = vmatprep.subr.mxu0 %v4207
  %4359 = vmatpush1.msra.mxu0 %v4206
  %4360 = vmatprep.subr.mxu0 %v4211
  %4361 = vmatpush1.msra.mxu0 %v4210
  %4362 = vmatprep.subr.mxu0 %v4215
  %4363 = vmatpush1.msra.mxu0 %v4214
  %4364 = vmatprep.subr.mxu0 %v4219
  %4365 = vmatpush1.msra.mxu0 %v4218
  %4366 = vmatprep.subr.mxu0 %v4223
  %4367 = vmatpush1.msra.mxu0 %v4222
  %4368 = vmatprep.subr.mxu0 %v4227
  %4369 = vmatpush1.msra.mxu0 %v4226
  %4370 = vmatprep.subr.mxu0 %v4231
  %4371 = vmatpush1.msra.mxu0 %v4230
  %4372 = vmatprep.subr.mxu0 %v4235
  %4373 = vmatpush1.msra.mxu0 %v4234
  %4374 = vmatprep.subr.mxu0 %v4239
  %4375 = vmatpush1.msra.mxu0 %v4238
  %4376 = vmatprep.subr.mxu0 %v4243
  %4377 = vmatpush1.msra.mxu0 %v4242
  %4378 = vmatprep.subr.mxu0 %v4247
  %4379 = vmatpush1.msra.mxu0 %v4246
  %4380 = vmatprep.subr.mxu0 0.0
  %4381 = vmatpush1.msra.mxu0 0.0
  %4382 = vmatprep.subr.mxu0 0.0
  %4383 = vmatpush1.msra.mxu0 0.0
  %4384 = vmatprep.subr.mxu0 0.0
  %4385 = vmatpush1.msra.mxu0 0.0
  %4386 = vmatprep.subr.mxu0 0.0
  %4387 = vmatpush1.msra.mxu0 0.0
  %4388 = vmatprep.subr.mxu0 0.0
  %4389 = vmatpush1.msra.mxu0 0.0
  %4390 = vmatprep.subr.mxu0 0.0
  %4391 = vmatpush1.msra.mxu0 0.0
  %4392 = vmatprep.subr.mxu0 0.0
  %4393 = vmatpush1.msra.mxu0 0.0
  %4394 = vmatprep.subr.mxu0 0.0
  %4395 = vmatpush1.msra.mxu0 0.0
  %4396 = vmatprep.subr.mxu0 0.0
  %4397 = vmatpush1.msra.mxu0 0.0
  %4398 = vmatprep.subr.mxu0 0.0
  %4399 = vmatpush1.msra.mxu0 0.0
  %4400 = vmatprep.subr.mxu0 0.0
  %4401 = vmatpush1.msra.mxu0 0.0
  %4402 = vmatprep.subr.mxu0 0.0
  %4403 = vmatpush1.msra.mxu0 0.0
  %4404 = vmatprep.subr.mxu0 0.0
  %4405 = vmatpush1.msra.mxu0 0.0
  %4406 = vmatprep.subr.mxu0 0.0
  %4407 = vmatpush1.msra.mxu0 0.0
  %4408 = vmatprep.mubr.f32.mxu0 %v4262
  %4409 = vmatmul.mubr.f32.gmra.mrb[0].mxu0 %v4172
  %v4410 = vpop.f32.mrb[0].mxu0
  %v4411 = vadd.f32 %v4254, %v4410
  %v4412 = vpop.f32.mrb[0].mxu0
  %v4413 = vadd.f32 %v4254, %v4412
  %4414 = vmatprep.mubr.f32.mxu0 %v4265
  %4415 = vmatmul.mubr.f32.gmra.mrb[0].mxu0 %v4174
  %v4416 = vpop.f32.mrb[0].mxu0
  %v4417 = vadd.f32 %v4259, %v4416
  %v4418 = vpop.f32.mrb[0].mxu0
  %v4419 = vadd.f32 %v4259, %v4418
  %4420 = vdwg.mxu0
  %v4421 = vmax.f32 %v4334, 0.0
  %v4422 = vmax.f32 %v4336, 0.0
  %v4423 = vmax.f32 %v4411, 0.0
  %v4424 = vmax.f32 %v4413, 0.0
  %v4425 = vmax.f32 %v4340, 0.0
  %v4426 = vmax.f32 %v4342, 0.0
  %v4427 = vmax.f32 %v4417, 0.0
  %v4428 = vmax.f32 %v4419, 0.0
  %v4429 = vmul.f32 %v4421, %v724
  %v4430 = vmul.f32 %v4422, %v728
  %v4431 = vmul.f32 %v4423, %v732
  %v4432 = vmul.f32 %v4424, %v736
  %v4433 = vmul.f32 %v4425, %v724
  %v4434 = vmul.f32 %v4426, %v728
  %v4435 = vmul.f32 %v4427, %v732
  %v4436 = vmul.f32 %v4428, %v736
  %4441 = vrot.lane.b32.xlu0 %v4429, 17
  %v4442 = vpop.permute.xlu0 %4441
  %4443 = vrot.lane.b32.xlu0 %v4430, 17
  %v4444 = vpop.permute.xlu0 %4443
  %4445 = vrot.lane.b32.xlu0 %v4433, 17
  %v4446 = vpop.permute.xlu0 %4445
  %4447 = vrot.lane.b32.xlu0 %v4434, 17
  %v4448 = vpop.permute.xlu0 %4447
  %v4449 = vsel %vm761, %v4442, %v4444
  %v4450 = vsel %vm761, %v4446, %v4448
  %4457 = vst.msk [vmem:[#allocation2] sm:$0xff] %vm770, %v4442
  %4458 = vst [vmem:[#allocation2 + $0x8] sm:$0xff] %v4449
  %4459 = vst.msk [vmem:[#allocation2 + $0x10] sm:$0xff] %vm761, %v4444
  %4460 = vst.msk [vmem:[#allocation2 + $0x30] sm:$0xff] %vm770, %v4446
  %4461 = vst [vmem:[#allocation2 + $0x38] sm:$0xff] %v4450
  %4462 = vst.msk [vmem:[#allocation2 + $0x40] sm:$0xff] %vm761, %v4448
  %4467 = vrot.lane.b32.xlu0 %v4431, 17
  %v4468 = vpop.permute.xlu0 %4467
  %4469 = vrot.lane.b32.xlu0 %v4432, 17
  %v4470 = vpop.permute.xlu0 %4469
  %4471 = vrot.lane.b32.xlu0 %v4435, 17
  %v4472 = vpop.permute.xlu0 %4471
  %4473 = vrot.lane.b32.xlu0 %v4436, 17
  %v4474 = vpop.permute.xlu0 %4473
  %v4475 = vsel %vm761, %v4468, %v4470
  %v4476 = vsel %vm761, %v4472, %v4474
  %4483 = vst.msk [vmem:[#allocation2 + $0x18] sm:$0xff] %vm770, %v4468
  %4484 = vst [vmem:[#allocation2 + $0x20] sm:$0xff] %v4475
  %4485 = vst.msk [vmem:[#allocation2 + $0x28] sm:$0xff] %vm761, %v4470
  %4486 = vst.msk [vmem:[#allocation2 + $0x48] sm:$0xff] %vm770, %v4472
  %4487 = vst [vmem:[#allocation2 + $0x50] sm:$0xff] %v4476
  %4488 = vst.msk [vmem:[#allocation2 + $0x58] sm:$0xff] %vm761, %v4474
  %v4489 = vld [vmem:[#allocation2] sm:$0xff]
  %v4490 = vld [vmem:[#allocation2 + $0x8] sm:$0xff]
  %v4491 = vld [vmem:[#allocation2 + $0x10] sm:$0xff]
  %v4492 = vld [vmem:[#allocation2 + $0x18] sm:$0xff]
  %v4493 = vld [vmem:[#allocation2 + $0x20] sm:$0xff]
  %v4494 = vld [vmem:[#allocation2 + $0x28] sm:$0xff]
  %v4495 = vld [vmem:[#allocation2 + $0x30] sm:$0xff]
  %v4496 = vld [vmem:[#allocation2 + $0x38] sm:$0xff]
  %v4497 = vld [vmem:[#allocation2 + $0x40] sm:$0xff]
  %v4498 = vld [vmem:[#allocation2 + $0x48] sm:$0xff]
  %v4499 = vld [vmem:[#allocation2 + $0x50] sm:$0xff]
  %v4500 = vld [vmem:[#allocation2 + $0x58] sm:$0xff]
  %4501 = vst [vmem:[#allocation3] sm:$0xff] %v4489
  %4502 = vst [vmem:[#allocation3 + $0x8] sm:$0xff] %v4490
  %4503 = vst [vmem:[#allocation3 + $0x20] sm:$0xff] %v4495
  %4504 = vst [vmem:[#allocation3 + $0x28] sm:$0xff] %v4496
  %4505 = vst [vmem:[#allocation3 + $0x10] sm:$0xff] %v4492
  %4506 = vst [vmem:[#allocation3 + $0x18] sm:$0xff] %v4493
  %4507 = vst [vmem:[#allocation3 + $0x30] sm:$0xff] %v4498
  %4508 = vst [vmem:[#allocation3 + $0x38] sm:$0xff] %v4499
  %4515 = vrot.lane.b32.xlu0 %v4489, 127
  %v4516 = vpop.permute.xlu0 %4515
  %4517 = vrot.lane.b32.xlu0 %v4490, 127
  %v4518 = vpop.permute.xlu0 %4517
  %4519 = vrot.lane.b32.xlu0 %v4491, 127
  %v4520 = vpop.permute.xlu0 %4519
  %4521 = vrot.lane.b32.xlu0 %v4495, 127
  %v4522 = vpop.permute.xlu0 %4521
  %4523 = vrot.lane.b32.xlu0 %v4496, 127
  %v4524 = vpop.permute.xlu0 %4523
  %4525 = vrot.lane.b32.xlu0 %v4497, 127
  %v4526 = vpop.permute.xlu0 %4525
  %v4527 = vsel %vm77, %v4516, %v4518
  %v4528 = vsel %vm77, %v4518, %v4520
  %v4529 = vsel %vm77, %v4522, %v4524
  %v4530 = vsel %vm77, %v4524, %v4526
  %4535 = vst [vmem:[#allocation3 + $0x40] sm:$0xff] %v4527
  %4536 = vst [vmem:[#allocation3 + $0x48] sm:$0xff] %v4528
  %4537 = vst [vmem:[#allocation3 + $0x60] sm:$0xff] %v4529
  %4538 = vst [vmem:[#allocation3 + $0x68] sm:$0xff] %v4530
  %4545 = vrot.lane.b32.xlu0 %v4492, 127
  %v4546 = vpop.permute.xlu0 %4545
  %4547 = vrot.lane.b32.xlu0 %v4493, 127
  %v4548 = vpop.permute.xlu0 %4547
  %4549 = vrot.lane.b32.xlu0 %v4494, 127
  %v4550 = vpop.permute.xlu0 %4549
  %4551 = vrot.lane.b32.xlu0 %v4498, 127
  %v4552 = vpop.permute.xlu0 %4551
  %4553 = vrot.lane.b32.xlu0 %v4499, 127
  %v4554 = vpop.permute.xlu0 %4553
  %4555 = vrot.lane.b32.xlu0 %v4500, 127
  %v4556 = vpop.permute.xlu0 %4555
  %v4557 = vsel %vm77, %v4546, %v4548
  %v4558 = vsel %vm77, %v4548, %v4550
  %v4559 = vsel %vm77, %v4552, %v4554
  %v4560 = vsel %vm77, %v4554, %v4556
  %4565 = vst [vmem:[#allocation3 + $0x50] sm:$0xff] %v4557
  %4566 = vst [vmem:[#allocation3 + $0x58] sm:$0xff] %v4558
  %4567 = vst [vmem:[#allocation3 + $0x70] sm:$0xff] %v4559
  %4568 = vst [vmem:[#allocation3 + $0x78] sm:$0xff] %v4560
  %4569 = vrot.lane.b32.xlu0 %v4489, 126
  %v4570 = vpop.permute.xlu0 %4569
  %4571 = vrot.lane.b32.xlu0 %v4490, 126
  %v4572 = vpop.permute.xlu0 %4571
  %4573 = vrot.lane.b32.xlu0 %v4491, 126
  %v4574 = vpop.permute.xlu0 %4573
  %4575 = vrot.lane.b32.xlu0 %v4495, 126
  %v4576 = vpop.permute.xlu0 %4575
  %4577 = vrot.lane.b32.xlu0 %v4496, 126
  %v4578 = vpop.permute.xlu0 %4577
  %4579 = vrot.lane.b32.xlu0 %v4497, 126
  %v4580 = vpop.permute.xlu0 %4579
  %v4581 = vsel %vm132, %v4570, %v4572
  %v4582 = vsel %vm132, %v4572, %v4574
  %v4583 = vsel %vm132, %v4576, %v4578
  %v4584 = vsel %vm132, %v4578, %v4580
  %4589 = vst [vmem:[#allocation3 + $0x80] sm:$0xff] %v4581
  %4590 = vst [vmem:[#allocation3 + $0x88] sm:$0xff] %v4582
  %4591 = vst [vmem:[#allocation3 + $0xa0] sm:$0xff] %v4583
  %4592 = vst [vmem:[#allocation3 + $0xa8] sm:$0xff] %v4584
  %4593 = vrot.lane.b32.xlu0 %v4492, 126
  %v4594 = vpop.permute.xlu0 %4593
  %4595 = vrot.lane.b32.xlu0 %v4493, 126
  %v4596 = vpop.permute.xlu0 %4595
  %4597 = vrot.lane.b32.xlu0 %v4494, 126
  %v4598 = vpop.permute.xlu0 %4597
  %4599 = vrot.lane.b32.xlu0 %v4498, 126
  %v4600 = vpop.permute.xlu0 %4599
  %4601 = vrot.lane.b32.xlu0 %v4499, 126
  %v4602 = vpop.permute.xlu0 %4601
  %4603 = vrot.lane.b32.xlu0 %v4500, 126
  %v4604 = vpop.permute.xlu0 %4603
  %v4605 = vsel %vm132, %v4594, %v4596
  %v4606 = vsel %vm132, %v4596, %v4598
  %v4607 = vsel %vm132, %v4600, %v4602
  %v4608 = vsel %vm132, %v4602, %v4604
  %4613 = vst [vmem:[#allocation3 + $0x90] sm:$0xff] %v4605
  %4614 = vst [vmem:[#allocation3 + $0x98] sm:$0xff] %v4606
  %4615 = vst [vmem:[#allocation3 + $0xb0] sm:$0xff] %v4607
  %4616 = vst [vmem:[#allocation3 + $0xb8] sm:$0xff] %v4608
  %4617 = vrot.lane.b32.xlu0 %v4489, 112
  %v4618 = vpop.permute.xlu0 %4617
  %4619 = vrot.lane.b32.xlu0 %v4490, 112
  %v4620 = vpop.permute.xlu0 %4619
  %4621 = vrot.lane.b32.xlu0 %v4491, 112
  %v4622 = vpop.permute.xlu0 %4621
  %4623 = vrot.lane.b32.xlu0 %v4495, 112
  %v4624 = vpop.permute.xlu0 %4623
  %4625 = vrot.lane.b32.xlu0 %v4496, 112
  %v4626 = vpop.permute.xlu0 %4625
  %4627 = vrot.lane.b32.xlu0 %v4497, 112
  %v4628 = vpop.permute.xlu0 %4627
  %v4629 = vsel %vm181, %v4618, %v4620
  %v4630 = vsel %vm181, %v4620, %v4622
  %v4631 = vsel %vm181, %v4624, %v4626
  %v4632 = vsel %vm181, %v4626, %v4628
  %4637 = vst [vmem:[#allocation3 + $0xc0] sm:$0xff] %v4629
  %4638 = vst [vmem:[#allocation3 + $0xc8] sm:$0xff] %v4630
  %4639 = vst [vmem:[#allocation3 + $0xe0] sm:$0xff] %v4631
  %4640 = vst [vmem:[#allocation3 + $0xe8] sm:$0xff] %v4632
  %4641 = vrot.lane.b32.xlu0 %v4492, 112
  %v4642 = vpop.permute.xlu0 %4641
  %4643 = vrot.lane.b32.xlu0 %v4493, 112
  %v4644 = vpop.permute.xlu0 %4643
  %4645 = vrot.lane.b32.xlu0 %v4494, 112
  %v4646 = vpop.permute.xlu0 %4645
  %4647 = vrot.lane.b32.xlu0 %v4498, 112
  %v4648 = vpop.permute.xlu0 %4647
  %4649 = vrot.lane.b32.xlu0 %v4499, 112
  %v4650 = vpop.permute.xlu0 %4649
  %4651 = vrot.lane.b32.xlu0 %v4500, 112
  %v4652 = vpop.permute.xlu0 %4651
  %v4653 = vsel %vm181, %v4642, %v4644
  %v4654 = vsel %vm181, %v4644, %v4646
  %v4655 = vsel %vm181, %v4648, %v4650
  %v4656 = vsel %vm181, %v4650, %v4652
  %4661 = vst [vmem:[#allocation3 + $0xd0] sm:$0xff] %v4653
  %4662 = vst [vmem:[#allocation3 + $0xd8] sm:$0xff] %v4654
  %4663 = vst [vmem:[#allocation3 + $0xf0] sm:$0xff] %v4655
  %4664 = vst [vmem:[#allocation3 + $0xf8] sm:$0xff] %v4656
  %4665 = vrot.lane.b32.xlu0 %v4489, 111
  %v4666 = vpop.permute.xlu0 %4665
  %4667 = vrot.lane.b32.xlu0 %v4490, 111
  %v4668 = vpop.permute.xlu0 %4667
  %4669 = vrot.lane.b32.xlu0 %v4491, 111
  %v4670 = vpop.permute.xlu0 %4669
  %4671 = vrot.lane.b32.xlu0 %v4495, 111
  %v4672 = vpop.permute.xlu0 %4671
  %4673 = vrot.lane.b32.xlu0 %v4496, 111
  %v4674 = vpop.permute.xlu0 %4673
  %4675 = vrot.lane.b32.xlu0 %v4497, 111
  %v4676 = vpop.permute.xlu0 %4675
  %v4677 = vsel %vm230, %v4666, %v4668
  %v4678 = vsel %vm230, %v4668, %v4670
  %v4679 = vsel %vm230, %v4672, %v4674
  %v4680 = vsel %vm230, %v4674, %v4676
  %4685 = vst [vmem:[#allocation3 + $0x100] sm:$0xff] %v4677
  %4686 = vst [vmem:[#allocation3 + $0x108] sm:$0xff] %v4678
  %4687 = vst [vmem:[#allocation3 + $0x120] sm:$0xff] %v4679
  %4688 = vst [vmem:[#allocation3 + $0x128] sm:$0xff] %v4680
  %4689 = vrot.lane.b32.xlu0 %v4492, 111
  %v4690 = vpop.permute.xlu0 %4689
  %4691 = vrot.lane.b32.xlu0 %v4493, 111
  %v4692 = vpop.permute.xlu0 %4691
  %4693 = vrot.lane.b32.xlu0 %v4494, 111
  %v4694 = vpop.permute.xlu0 %4693
  %4695 = vrot.lane.b32.xlu0 %v4498, 111
  %v4696 = vpop.permute.xlu0 %4695
  %4697 = vrot.lane.b32.xlu0 %v4499, 111
  %v4698 = vpop.permute.xlu0 %4697
  %4699 = vrot.lane.b32.xlu0 %v4500, 111
  %v4700 = vpop.permute.xlu0 %4699
  %v4701 = vsel %vm230, %v4690, %v4692
  %v4702 = vsel %vm230, %v4692, %v4694
  %v4703 = vsel %vm230, %v4696, %v4698
  %v4704 = vsel %vm230, %v4698, %v4700
  %4709 = vst [vmem:[#allocation3 + $0x110] sm:$0xff] %v4701
  %4710 = vst [vmem:[#allocation3 + $0x118] sm:$0xff] %v4702
  %4711 = vst [vmem:[#allocation3 + $0x130] sm:$0xff] %v4703
  %4712 = vst [vmem:[#allocation3 + $0x138] sm:$0xff] %v4704
  %4713 = vrot.lane.b32.xlu0 %v4489, 110
  %v4714 = vpop.permute.xlu0 %4713
  %4715 = vrot.lane.b32.xlu0 %v4490, 110
  %v4716 = vpop.permute.xlu0 %4715
  %4717 = vrot.lane.b32.xlu0 %v4491, 110
  %v4718 = vpop.permute.xlu0 %4717
  %4719 = vrot.lane.b32.xlu0 %v4495, 110
  %v4720 = vpop.permute.xlu0 %4719
  %4721 = vrot.lane.b32.xlu0 %v4496, 110
  %v4722 = vpop.permute.xlu0 %4721
  %4723 = vrot.lane.b32.xlu0 %v4497, 110
  %v4724 = vpop.permute.xlu0 %4723
  %v4725 = vsel %vm279, %v4714, %v4716
  %v4726 = vsel %vm279, %v4716, %v4718
  %v4727 = vsel %vm279, %v4720, %v4722
  %v4728 = vsel %vm279, %v4722, %v4724
  %4733 = vst [vmem:[#allocation3 + $0x140] sm:$0xff] %v4725
  %4734 = vst [vmem:[#allocation3 + $0x148] sm:$0xff] %v4726
  %4735 = vst [vmem:[#allocation3 + $0x160] sm:$0xff] %v4727
  %4736 = vst [vmem:[#allocation3 + $0x168] sm:$0xff] %v4728
  %4737 = vrot.lane.b32.xlu0 %v4492, 110
  %v4738 = vpop.permute.xlu0 %4737
  %4739 = vrot.lane.b32.xlu0 %v4493, 110
  %v4740 = vpop.permute.xlu0 %4739
  %4741 = vrot.lane.b32.xlu0 %v4494, 110
  %v4742 = vpop.permute.xlu0 %4741
  %4743 = vrot.lane.b32.xlu0 %v4498, 110
  %v4744 = vpop.permute.xlu0 %4743
  %4745 = vrot.lane.b32.xlu0 %v4499, 110
  %v4746 = vpop.permute.xlu0 %4745
  %4747 = vrot.lane.b32.xlu0 %v4500, 110
  %v4748 = vpop.permute.xlu0 %4747
  %v4749 = vsel %vm279, %v4738, %v4740
  %v4750 = vsel %vm279, %v4740, %v4742
  %v4751 = vsel %vm279, %v4744, %v4746
  %v4752 = vsel %vm279, %v4746, %v4748
  %4757 = vst [vmem:[#allocation3 + $0x150] sm:$0xff] %v4749
  %4758 = vst [vmem:[#allocation3 + $0x158] sm:$0xff] %v4750
  %4759 = vst [vmem:[#allocation3 + $0x170] sm:$0xff] %v4751
  %4760 = vst [vmem:[#allocation3 + $0x178] sm:$0xff] %v4752
  %4761 = vrot.lane.b32.xlu0 %v4489, 96
  %v4762 = vpop.permute.xlu0 %4761
  %4763 = vrot.lane.b32.xlu0 %v4490, 96
  %v4764 = vpop.permute.xlu0 %4763
  %4765 = vrot.lane.b32.xlu0 %v4491, 96
  %v4766 = vpop.permute.xlu0 %4765
  %4767 = vrot.lane.b32.xlu0 %v4495, 96
  %v4768 = vpop.permute.xlu0 %4767
  %4769 = vrot.lane.b32.xlu0 %v4496, 96
  %v4770 = vpop.permute.xlu0 %4769
  %4771 = vrot.lane.b32.xlu0 %v4497, 96
  %v4772 = vpop.permute.xlu0 %4771
  %v4773 = vsel %vm328, %v4762, %v4764
  %v4774 = vsel %vm328, %v4764, %v4766
  %v4775 = vsel %vm328, %v4768, %v4770
  %v4776 = vsel %vm328, %v4770, %v4772
  %4781 = vst [vmem:[#allocation3 + $0x180] sm:$0xff] %v4773
  %4782 = vst [vmem:[#allocation3 + $0x188] sm:$0xff] %v4774
  %4783 = vst [vmem:[#allocation3 + $0x1a0] sm:$0xff] %v4775
  %4784 = vst [vmem:[#allocation3 + $0x1a8] sm:$0xff] %v4776
  %4785 = vrot.lane.b32.xlu0 %v4492, 96
  %v4786 = vpop.permute.xlu0 %4785
  %4787 = vrot.lane.b32.xlu0 %v4493, 96
  %v4788 = vpop.permute.xlu0 %4787
  %4789 = vrot.lane.b32.xlu0 %v4494, 96
  %v4790 = vpop.permute.xlu0 %4789
  %4791 = vrot.lane.b32.xlu0 %v4498, 96
  %v4792 = vpop.permute.xlu0 %4791
  %4793 = vrot.lane.b32.xlu0 %v4499, 96
  %v4794 = vpop.permute.xlu0 %4793
  %4795 = vrot.lane.b32.xlu0 %v4500, 96
  %v4796 = vpop.permute.xlu0 %4795
  %v4797 = vsel %vm328, %v4786, %v4788
  %v4798 = vsel %vm328, %v4788, %v4790
  %v4799 = vsel %vm328, %v4792, %v4794
  %v4800 = vsel %vm328, %v4794, %v4796
  %4805 = vst [vmem:[#allocation3 + $0x190] sm:$0xff] %v4797
  %4806 = vst [vmem:[#allocation3 + $0x198] sm:$0xff] %v4798
  %4807 = vst [vmem:[#allocation3 + $0x1b0] sm:$0xff] %v4799
  %4808 = vst [vmem:[#allocation3 + $0x1b8] sm:$0xff] %v4800
  %4809 = vrot.lane.b32.xlu0 %v4489, 95
  %v4810 = vpop.permute.xlu0 %4809
  %4811 = vrot.lane.b32.xlu0 %v4490, 95
  %v4812 = vpop.permute.xlu0 %4811
  %4813 = vrot.lane.b32.xlu0 %v4491, 95
  %v4814 = vpop.permute.xlu0 %4813
  %4815 = vrot.lane.b32.xlu0 %v4495, 95
  %v4816 = vpop.permute.xlu0 %4815
  %4817 = vrot.lane.b32.xlu0 %v4496, 95
  %v4818 = vpop.permute.xlu0 %4817
  %4819 = vrot.lane.b32.xlu0 %v4497, 95
  %v4820 = vpop.permute.xlu0 %4819
  %v4821 = vsel %vm377, %v4810, %v4812
  %v4822 = vsel %vm377, %v4812, %v4814
  %v4823 = vsel %vm377, %v4816, %v4818
  %v4824 = vsel %vm377, %v4818, %v4820
  %4829 = vst [vmem:[#allocation3 + $0x1c0] sm:$0xff] %v4821
  %4830 = vst [vmem:[#allocation3 + $0x1c8] sm:$0xff] %v4822
  %4831 = vst [vmem:[#allocation3 + $0x1e0] sm:$0xff] %v4823
  %4832 = vst [vmem:[#allocation3 + $0x1e8] sm:$0xff] %v4824
  %4833 = vrot.lane.b32.xlu0 %v4492, 95
  %v4834 = vpop.permute.xlu0 %4833
  %4835 = vrot.lane.b32.xlu0 %v4493, 95
  %v4836 = vpop.permute.xlu0 %4835
  %4837 = vrot.lane.b32.xlu0 %v4494, 95
  %v4838 = vpop.permute.xlu0 %4837
  %4839 = vrot.lane.b32.xlu0 %v4498, 95
  %v4840 = vpop.permute.xlu0 %4839
  %4841 = vrot.lane.b32.xlu0 %v4499, 95
  %v4842 = vpop.permute.xlu0 %4841
  %4843 = vrot.lane.b32.xlu0 %v4500, 95
  %v4844 = vpop.permute.xlu0 %4843
  %v4845 = vsel %vm377, %v4834, %v4836
  %v4846 = vsel %vm377, %v4836, %v4838
  %v4847 = vsel %vm377, %v4840, %v4842
  %v4848 = vsel %vm377, %v4842, %v4844
  %4853 = vst [vmem:[#allocation3 + $0x1d0] sm:$0xff] %v4845
  %4854 = vst [vmem:[#allocation3 + $0x1d8] sm:$0xff] %v4846
  %4855 = vst [vmem:[#allocation3 + $0x1f0] sm:$0xff] %v4847
  %4856 = vst [vmem:[#allocation3 + $0x1f8] sm:$0xff] %v4848
  %4857 = vrot.lane.b32.xlu0 %v4489, 94
  %v4858 = vpop.permute.xlu0 %4857
  %4859 = vrot.lane.b32.xlu0 %v4490, 94
  %v4860 = vpop.permute.xlu0 %4859
  %4861 = vrot.lane.b32.xlu0 %v4491, 94
  %v4862 = vpop.permute.xlu0 %4861
  %4863 = vrot.lane.b32.xlu0 %v4495, 94
  %v4864 = vpop.permute.xlu0 %4863
  %4865 = vrot.lane.b32.xlu0 %v4496, 94
  %v4866 = vpop.permute.xlu0 %4865
  %4867 = vrot.lane.b32.xlu0 %v4497, 94
  %v4868 = vpop.permute.xlu0 %4867
  %v4869 = vsel %vm426, %v4858, %v4860
  %v4870 = vsel %vm426, %v4860, %v4862
  %v4871 = vsel %vm426, %v4864, %v4866
  %v4872 = vsel %vm426, %v4866, %v4868
  %4877 = vst [vmem:[#allocation3 + $0x200] sm:$0xff] %v4869
  %4878 = vst [vmem:[#allocation3 + $0x208] sm:$0xff] %v4870
  %4879 = vst [vmem:[#allocation3 + $0x220] sm:$0xff] %v4871
  %4880 = vst [vmem:[#allocation3 + $0x228] sm:$0xff] %v4872
  %4881 = vrot.lane.b32.xlu0 %v4492, 94
  %v4882 = vpop.permute.xlu0 %4881
  %4883 = vrot.lane.b32.xlu0 %v4493, 94
  %v4884 = vpop.permute.xlu0 %4883
  %4885 = vrot.lane.b32.xlu0 %v4494, 94
  %v4886 = vpop.permute.xlu0 %4885
  %4887 = vrot.lane.b32.xlu0 %v4498, 94
  %v4888 = vpop.permute.xlu0 %4887
  %4889 = vrot.lane.b32.xlu0 %v4499, 94
  %v4890 = vpop.permute.xlu0 %4889
  %4891 = vrot.lane.b32.xlu0 %v4500, 94
  %v4892 = vpop.permute.xlu0 %4891
  %v4893 = vsel %vm426, %v4882, %v4884
  %v4894 = vsel %vm426, %v4884, %v4886
  %v4895 = vsel %vm426, %v4888, %v4890
  %v4896 = vsel %vm426, %v4890, %v4892
  %4901 = vst [vmem:[#allocation3 + $0x210] sm:$0xff] %v4893
  %4902 = vst [vmem:[#allocation3 + $0x218] sm:$0xff] %v4894
  %4903 = vst [vmem:[#allocation3 + $0x230] sm:$0xff] %v4895
  %4904 = vst [vmem:[#allocation3 + $0x238] sm:$0xff] %v4896
  %s4905 = scalar_lea.vmem %s1, 192
  %v4906 = vld [vmem:[%s4905] sm:$0xff]
  %v4907 = vld [vmem:[%s4905 + $0x8] sm:$0xff]
  %v4908 = vld [vmem:[%s4905 + $0x10] sm:$0xff]
  %v4909 = vld [vmem:[%s4905 + $0x18] sm:$0xff]
  %v4910 = vld [vmem:[#allocation3] sm:$0xff]
  %v4911 = vld [vmem:[#allocation3 + $0x8] sm:$0xff]
  %v4912 = vld [vmem:[#allocation3 + $0x10] sm:$0xff]
  %v4913 = vld [vmem:[#allocation3 + $0x18] sm:$0xff]
  %v4914 = vld [vmem:[#allocation3 + $0x20] sm:$0xff]
  %v4915 = vld [vmem:[#allocation3 + $0x28] sm:$0xff]
  %v4916 = vld [vmem:[#allocation3 + $0x30] sm:$0xff]
  %v4917 = vld [vmem:[#allocation3 + $0x38] sm:$0xff]
  %v4918 = vld [vmem:[#allocation3 + $0x40] sm:$0xff]
  %v4919 = vld [vmem:[#allocation3 + $0x48] sm:$0xff]
  %v4920 = vld [vmem:[#allocation3 + $0x50] sm:$0xff]
  %v4921 = vld [vmem:[#allocation3 + $0x58] sm:$0xff]
  %v4922 = vld [vmem:[#allocation3 + $0x60] sm:$0xff]
  %v4923 = vld [vmem:[#allocation3 + $0x68] sm:$0xff]
  %v4924 = vld [vmem:[#allocation3 + $0x70] sm:$0xff]
  %v4925 = vld [vmem:[#allocation3 + $0x78] sm:$0xff]
  %v4926 = vld [vmem:[#allocation3 + $0x80] sm:$0xff]
  %v4927 = vld [vmem:[#allocation3 + $0x88] sm:$0xff]
  %v4928 = vld [vmem:[#allocation3 + $0x90] sm:$0xff]
  %v4929 = vld [vmem:[#allocation3 + $0x98] sm:$0xff]
  %v4930 = vld [vmem:[#allocation3 + $0xa0] sm:$0xff]
  %v4931 = vld [vmem:[#allocation3 + $0xa8] sm:$0xff]
  %v4932 = vld [vmem:[#allocation3 + $0xb0] sm:$0xff]
  %v4933 = vld [vmem:[#allocation3 + $0xb8] sm:$0xff]
  %v4934 = vld [vmem:[#allocation3 + $0xc0] sm:$0xff]
  %v4935 = vld [vmem:[#allocation3 + $0xc8] sm:$0xff]
  %v4936 = vld [vmem:[#allocation3 + $0xd0] sm:$0xff]
  %v4937 = vld [vmem:[#allocation3 + $0xd8] sm:$0xff]
  %v4938 = vld [vmem:[#allocation3 + $0xe0] sm:$0xff]
  %v4939 = vld [vmem:[#allocation3 + $0xe8] sm:$0xff]
  %v4940 = vld [vmem:[#allocation3 + $0xf0] sm:$0xff]
  %v4941 = vld [vmem:[#allocation3 + $0xf8] sm:$0xff]
  %v4942 = vld [vmem:[#allocation3 + $0x100] sm:$0xff]
  %v4943 = vld [vmem:[#allocation3 + $0x108] sm:$0xff]
  %v4944 = vld [vmem:[#allocation3 + $0x110] sm:$0xff]
  %v4945 = vld [vmem:[#allocation3 + $0x118] sm:$0xff]
  %v4946 = vld [vmem:[#allocation3 + $0x120] sm:$0xff]
  %v4947 = vld [vmem:[#allocation3 + $0x128] sm:$0xff]
  %v4948 = vld [vmem:[#allocation3 + $0x130] sm:$0xff]
  %v4949 = vld [vmem:[#allocation3 + $0x138] sm:$0xff]
  %v4950 = vld [vmem:[#allocation3 + $0x140] sm:$0xff]
  %v4951 = vld [vmem:[#allocation3 + $0x148] sm:$0xff]
  %v4952 = vld [vmem:[#allocation3 + $0x150] sm:$0xff]
  %v4953 = vld [vmem:[#allocation3 + $0x158] sm:$0xff]
  %v4954 = vld [vmem:[#allocation3 + $0x160] sm:$0xff]
  %v4955 = vld [vmem:[#allocation3 + $0x168] sm:$0xff]
  %v4956 = vld [vmem:[#allocation3 + $0x170] sm:$0xff]
  %v4957 = vld [vmem:[#allocation3 + $0x178] sm:$0xff]
  %v4958 = vld [vmem:[#allocation3 + $0x180] sm:$0xff]
  %v4959 = vld [vmem:[#allocation3 + $0x188] sm:$0xff]
  %v4960 = vld [vmem:[#allocation3 + $0x190] sm:$0xff]
  %v4961 = vld [vmem:[#allocation3 + $0x198] sm:$0xff]
  %v4962 = vld [vmem:[#allocation3 + $0x1a0] sm:$0xff]
  %v4963 = vld [vmem:[#allocation3 + $0x1a8] sm:$0xff]
  %v4964 = vld [vmem:[#allocation3 + $0x1b0] sm:$0xff]
  %v4965 = vld [vmem:[#allocation3 + $0x1b8] sm:$0xff]
  %v4966 = vld [vmem:[#allocation3 + $0x1c0] sm:$0xff]
  %v4967 = vld [vmem:[#allocation3 + $0x1c8] sm:$0xff]
  %v4968 = vld [vmem:[#allocation3 + $0x1d0] sm:$0xff]
  %v4969 = vld [vmem:[#allocation3 + $0x1d8] sm:$0xff]
  %v4970 = vld [vmem:[#allocation3 + $0x1e0] sm:$0xff]
  %v4971 = vld [vmem:[#allocation3 + $0x1e8] sm:$0xff]
  %v4972 = vld [vmem:[#allocation3 + $0x1f0] sm:$0xff]
  %v4973 = vld [vmem:[#allocation3 + $0x1f8] sm:$0xff]
  %v4974 = vld [vmem:[#allocation3 + $0x200] sm:$0xff]
  %v4975 = vld [vmem:[#allocation3 + $0x208] sm:$0xff]
  %v4976 = vld [vmem:[#allocation3 + $0x210] sm:$0xff]
  %v4977 = vld [vmem:[#allocation3 + $0x218] sm:$0xff]
  %v4978 = vld [vmem:[#allocation3 + $0x220] sm:$0xff]
  %v4979 = vld [vmem:[#allocation3 + $0x228] sm:$0xff]
  %v4980 = vld [vmem:[#allocation3 + $0x230] sm:$0xff]
  %v4981 = vld [vmem:[#allocation3 + $0x238] sm:$0xff]
  %s4982 = scalar_lea.vmem %s2, 96
  %v4983 = vld [vmem:[%s4982] sm:$0xff]
  %v4984 = vld [vmem:[%s4982 + $0x8] sm:$0xff]
  %4986 = vset.pattern.permute.xlu0 0
  %4987 = vperm.xlu0 %4986, %v4983
  %v4988 = vpop.permute.xlu0 %4987
  %4991 = vset.pattern.permute.xlu0 0
  %4992 = vperm.xlu0 %4991, %v4984
  %v4993 = vpop.permute.xlu0 %4992
  %v4996 = vsel %vm551, %v4907, 0
  %v4999 = vsel %vm551, %v4909, 0
  %5001 = vmatprep.subr.mxu0 %v4911
  %5002 = vmatpush1.msra.mxu0 %v4910
  %5003 = vmatprep.subr.mxu0 %v4915
  %5004 = vmatpush1.msra.mxu0 %v4914
  %5005 = vmatprep.subr.mxu0 %v4919
  %5006 = vmatpush1.msra.mxu0 %v4918
  %5007 = vmatprep.subr.mxu0 %v4923
  %5008 = vmatpush1.msra.mxu0 %v4922
  %5009 = vmatprep.subr.mxu0 %v4927
  %5010 = vmatpush1.msra.mxu0 %v4926
  %5011 = vmatprep.subr.mxu0 %v4931
  %5012 = vmatpush1.msra.mxu0 %v4930
  %5013 = vmatprep.subr.mxu0 %v4935
  %5014 = vmatpush1.msra.mxu0 %v4934
  %5015 = vmatprep.subr.mxu0 %v4939
  %5016 = vmatpush1.msra.mxu0 %v4938
  %5017 = vmatprep.subr.mxu0 %v4943
  %5018 = vmatpush1.msra.mxu0 %v4942
  %5019 = vmatprep.subr.mxu0 %v4947
  %5020 = vmatpush1.msra.mxu0 %v4946
  %5021 = vmatprep.subr.mxu0 %v4951
  %5022 = vmatpush1.msra.mxu0 %v4950
  %5023 = vmatprep.subr.mxu0 %v4955
  %5024 = vmatpush1.msra.mxu0 %v4954
  %5025 = vmatprep.subr.mxu0 %v4959
  %5026 = vmatpush1.msra.mxu0 %v4958
  %5027 = vmatprep.subr.mxu0 %v4963
  %5028 = vmatpush1.msra.mxu0 %v4962
  %5029 = vmatprep.subr.mxu0 %v4967
  %5030 = vmatpush1.msra.mxu0 %v4966
  %5031 = vmatprep.subr.mxu0 %v4971
  %5032 = vmatpush1.msra.mxu0 %v4970
  %5033 = vmatprep.subr.mxu0 %v4975
  %5034 = vmatpush1.msra.mxu0 %v4974
  %5035 = vmatprep.subr.mxu0 %v4979
  %5036 = vmatpush1.msra.mxu0 %v4978
  %5037 = vmatprep.subr.mxu0 0.0
  %5038 = vmatpush1.msra.mxu0 0.0
  %5039 = vmatprep.subr.mxu0 0.0
  %5040 = vmatpush1.msra.mxu0 0.0
  %5041 = vmatprep.subr.mxu0 0.0
  %5042 = vmatpush1.msra.mxu0 0.0
  %5043 = vmatprep.subr.mxu0 0.0
  %5044 = vmatpush1.msra.mxu0 0.0
  %5045 = vmatprep.subr.mxu0 0.0
  %5046 = vmatpush1.msra.mxu0 0.0
  %5047 = vmatprep.subr.mxu0 0.0
  %5048 = vmatpush1.msra.mxu0 0.0
  %5049 = vmatprep.subr.mxu0 0.0
  %5050 = vmatpush1.msra.mxu0 0.0
  %5051 = vmatprep.subr.mxu0 0.0
  %5052 = vmatpush1.msra.mxu0 0.0
  %5053 = vmatprep.subr.mxu0 0.0
  %5054 = vmatpush1.msra.mxu0 0.0
  %5055 = vmatprep.subr.mxu0 0.0
  %5056 = vmatpush1.msra.mxu0 0.0
  %5057 = vmatprep.subr.mxu0 0.0
  %5058 = vmatpush1.msra.mxu0 0.0
  %5059 = vmatprep.subr.mxu0 0.0
  %5060 = vmatpush1.msra.mxu0 0.0
  %5061 = vmatprep.subr.mxu0 0.0
  %5062 = vmatpush1.msra.mxu0 0.0
  %5063 = vmatprep.subr.mxu0 0.0
  %5064 = vmatpush1.msra.mxu0 0.0
  %5065 = vmatprep.mubr.f32.mxu0 %v4996
  %5066 = vmatmul.mubr.f32.gmra.mrb[0].mxu0 %v4906
  %v5067 = vpop.f32.mrb[0].mxu0
  %v5068 = vadd.f32 %v4988, %v5067
  %v5069 = vpop.f32.mrb[0].mxu0
  %v5070 = vadd.f32 %v4988, %v5069
  %5071 = vmatprep.mubr.f32.mxu0 %v4999
  %5072 = vmatmul.mubr.f32.gmra.mrb[0].mxu0 %v4908
  %v5073 = vpop.f32.mrb[0].mxu0
  %v5074 = vadd.f32 %v4993, %v5073
  %v5075 = vpop.f32.mrb[0].mxu0
  %v5076 = vadd.f32 %v4993, %v5075
  %5077 = vdwg.mxu0
  %5078 = vmatprep.subr.mxu0 %v4913
  %5079 = vmatpush1.msra.mxu0 %v4912
  %5080 = vmatprep.subr.mxu0 %v4917
  %5081 = vmatpush1.msra.mxu0 %v4916
  %5082 = vmatprep.subr.mxu0 %v4921
  %5083 = vmatpush1.msra.mxu0 %v4920
  %5084 = vmatprep.subr.mxu0 %v4925
  %5085 = vmatpush1.msra.mxu0 %v4924
  %5086 = vmatprep.subr.mxu0 %v4929
  %5087 = vmatpush1.msra.mxu0 %v4928
  %5088 = vmatprep.subr.mxu0 %v4933
  %5089 = vmatpush1.msra.mxu0 %v4932
  %5090 = vmatprep.subr.mxu0 %v4937
  %5091 = vmatpush1.msra.mxu0 %v4936
  %5092 = vmatprep.subr.mxu0 %v4941
  %5093 = vmatpush1.msra.mxu0 %v4940
  %5094 = vmatprep.subr.mxu0 %v4945
  %5095 = vmatpush1.msra.mxu0 %v4944
  %5096 = vmatprep.subr.mxu0 %v4949
  %5097 = vmatpush1.msra.mxu0 %v4948
  %5098 = vmatprep.subr.mxu0 %v4953
  %5099 = vmatpush1.msra.mxu0 %v4952
  %5100 = vmatprep.subr.mxu0 %v4957
  %5101 = vmatpush1.msra.mxu0 %v4956
  %5102 = vmatprep.subr.mxu0 %v4961
  %5103 = vmatpush1.msra.mxu0 %v4960
  %5104 = vmatprep.subr.mxu0 %v4965
  %5105 = vmatpush1.msra.mxu0 %v4964
  %5106 = vmatprep.subr.mxu0 %v4969
  %5107 = vmatpush1.msra.mxu0 %v4968
  %5108 = vmatprep.subr.mxu0 %v4973
  %5109 = vmatpush1.msra.mxu0 %v4972
  %5110 = vmatprep.subr.mxu0 %v4977
  %5111 = vmatpush1.msra.mxu0 %v4976
  %5112 = vmatprep.subr.mxu0 %v4981
  %5113 = vmatpush1.msra.mxu0 %v4980
  %5114 = vmatprep.subr.mxu0 0.0
  %5115 = vmatpush1.msra.mxu0 0.0
  %5116 = vmatprep.subr.mxu0 0.0
  %5117 = vmatpush1.msra.mxu0 0.0
  %5118 = vmatprep.subr.mxu0 0.0
  %5119 = vmatpush1.msra.mxu0 0.0
  %5120 = vmatprep.subr.mxu0 0.0
  %5121 = vmatpush1.msra.mxu0 0.0
  %5122 = vmatprep.subr.mxu0 0.0
  %5123 = vmatpush1.msra.mxu0 0.0
  %5124 = vmatprep.subr.mxu0 0.0
  %5125 = vmatpush1.msra.mxu0 0.0
  %5126 = vmatprep.subr.mxu0 0.0
  %5127 = vmatpush1.msra.mxu0 0.0
  %5128 = vmatprep.subr.mxu0 0.0
  %5129 = vmatpush1.msra.mxu0 0.0
  %5130 = vmatprep.subr.mxu0 0.0
  %5131 = vmatpush1.msra.mxu0 0.0
  %5132 = vmatprep.subr.mxu0 0.0
  %5133 = vmatpush1.msra.mxu0 0.0
  %5134 = vmatprep.subr.mxu0 0.0
  %5135 = vmatpush1.msra.mxu0 0.0
  %5136 = vmatprep.subr.mxu0 0.0
  %5137 = vmatpush1.msra.mxu0 0.0
  %5138 = vmatprep.subr.mxu0 0.0
  %5139 = vmatpush1.msra.mxu0 0.0
  %5140 = vmatprep.subr.mxu0 0.0
  %5141 = vmatpush1.msra.mxu0 0.0
  %5142 = vmatprep.mubr.f32.mxu0 %v4996
  %5143 = vmatmul.mubr.f32.gmra.mrb[0].mxu0 %v4906
  %v5144 = vpop.f32.mrb[0].mxu0
  %v5145 = vadd.f32 %v4988, %v5144
  %v5146 = vpop.f32.mrb[0].mxu0
  %v5147 = vadd.f32 %v4988, %v5146
  %5148 = vmatprep.mubr.f32.mxu0 %v4999
  %5149 = vmatmul.mubr.f32.gmra.mrb[0].mxu0 %v4908
  %v5150 = vpop.f32.mrb[0].mxu0
  %v5151 = vadd.f32 %v4993, %v5150
  %v5152 = vpop.f32.mrb[0].mxu0
  %v5153 = vadd.f32 %v4993, %v5152
  %5154 = vdwg.mxu0
  %v5155 = vadd.f32 %v5068, %v3695
  %v5156 = vadd.f32 %v5070, %v3696
  %v5157 = vadd.f32 %v5145, %v3697
  %v5158 = vadd.f32 %v5147, %v3698
  %v5159 = vadd.f32 %v5074, %v3699
  %v5160 = vadd.f32 %v5076, %v3700
  %v5161 = vadd.f32 %v5151, %v3701
  %v5162 = vadd.f32 %v5153, %v3702
  %v5163 = vmax.f32 %v5155, 0.0
  %v5164 = vmax.f32 %v5156, 0.0
  %v5165 = vmax.f32 %v5157, 0.0
  %v5166 = vmax.f32 %v5158, 0.0
  %v5167 = vmax.f32 %v5159, 0.0
  %v5168 = vmax.f32 %v5160, 0.0
  %v5169 = vmax.f32 %v5161, 0.0
  %v5170 = vmax.f32 %v5162, 0.0
  %v5171 = vmul.f32 %v5163, %v724
  %v5172 = vmul.f32 %v5164, %v728
  %v5173 = vmul.f32 %v5165, %v732
  %v5174 = vmul.f32 %v5166, %v736
  %v5175 = vmul.f32 %v5167, %v724
  %v5176 = vmul.f32 %v5168, %v728
  %v5177 = vmul.f32 %v5169, %v732
  %v5178 = vmul.f32 %v5170, %v736
  %5183 = vrot.lane.b32.xlu0 %v5171, 17
  %v5184 = vpop.permute.xlu0 %5183
  %5185 = vrot.lane.b32.xlu0 %v5172, 17
  %v5186 = vpop.permute.xlu0 %5185
  %5187 = vrot.lane.b32.xlu0 %v5175, 17
  %v5188 = vpop.permute.xlu0 %5187
  %5189 = vrot.lane.b32.xlu0 %v5176, 17
  %v5190 = vpop.permute.xlu0 %5189
  %v5191 = vsel %vm761, %v5184, %v5186
  %v5192 = vsel %vm761, %v5188, %v5190
  %5199 = vst.msk [vmem:[#allocation2] sm:$0xff] %vm770, %v5184
  %5200 = vst [vmem:[#allocation2 + $0x8] sm:$0xff] %v5191
  %5201 = vst.msk [vmem:[#allocation2 + $0x10] sm:$0xff] %vm761, %v5186
  %5202 = vst.msk [vmem:[#allocation2 + $0x30] sm:$0xff] %vm770, %v5188
  %5203 = vst [vmem:[#allocation2 + $0x38] sm:$0xff] %v5192
  %5204 = vst.msk [vmem:[#allocation2 + $0x40] sm:$0xff] %vm761, %v5190
  %5209 = vrot.lane.b32.xlu0 %v5173, 17
  %v5210 = vpop.permute.xlu0 %5209
  %5211 = vrot.lane.b32.xlu0 %v5174, 17
  %v5212 = vpop.permute.xlu0 %5211
  %5213 = vrot.lane.b32.xlu0 %v5177, 17
  %v5214 = vpop.permute.xlu0 %5213
  %5215 = vrot.lane.b32.xlu0 %v5178, 17
  %v5216 = vpop.permute.xlu0 %5215
  %v5217 = vsel %vm761, %v5210, %v5212
  %v5218 = vsel %vm761, %v5214, %v5216
  %5225 = vst.msk [vmem:[#allocation2 + $0x18] sm:$0xff] %vm770, %v5210
  %5226 = vst [vmem:[#allocation2 + $0x20] sm:$0xff] %v5217
  %5227 = vst.msk [vmem:[#allocation2 + $0x28] sm:$0xff] %vm761, %v5212
  %5228 = vst.msk [vmem:[#allocation2 + $0x48] sm:$0xff] %vm770, %v5214
  %5229 = vst [vmem:[#allocation2 + $0x50] sm:$0xff] %v5218
  %5230 = vst.msk [vmem:[#allocation2 + $0x58] sm:$0xff] %vm761, %v5216
  %v5231 = vld [vmem:[#allocation2] sm:$0xff]
  %v5232 = vld [vmem:[#allocation2 + $0x8] sm:$0xff]
  %v5233 = vld [vmem:[#allocation2 + $0x10] sm:$0xff]
  %v5234 = vld [vmem:[#allocation2 + $0x18] sm:$0xff]
  %v5235 = vld [vmem:[#allocation2 + $0x20] sm:$0xff]
  %v5236 = vld [vmem:[#allocation2 + $0x28] sm:$0xff]
  %v5237 = vld [vmem:[#allocation2 + $0x30] sm:$0xff]
  %v5238 = vld [vmem:[#allocation2 + $0x38] sm:$0xff]
  %v5239 = vld [vmem:[#allocation2 + $0x40] sm:$0xff]
  %v5240 = vld [vmem:[#allocation2 + $0x48] sm:$0xff]
  %v5241 = vld [vmem:[#allocation2 + $0x50] sm:$0xff]
  %v5242 = vld [vmem:[#allocation2 + $0x58] sm:$0xff]
  %5243 = vst [vmem:[#allocation3] sm:$0xff] %v5231
  %5244 = vst [vmem:[#allocation3 + $0x8] sm:$0xff] %v5232
  %5245 = vst [vmem:[#allocation3 + $0x20] sm:$0xff] %v5237
  %5246 = vst [vmem:[#allocation3 + $0x28] sm:$0xff] %v5238
  %5247 = vst [vmem:[#allocation3 + $0x10] sm:$0xff] %v5234
  %5248 = vst [vmem:[#allocation3 + $0x18] sm:$0xff] %v5235
  %5249 = vst [vmem:[#allocation3 + $0x30] sm:$0xff] %v5240
  %5250 = vst [vmem:[#allocation3 + $0x38] sm:$0xff] %v5241
  %5257 = vrot.lane.b32.xlu0 %v5231, 127
  %v5258 = vpop.permute.xlu0 %5257
  %5259 = vrot.lane.b32.xlu0 %v5232, 127
  %v5260 = vpop.permute.xlu0 %5259
  %5261 = vrot.lane.b32.xlu0 %v5233, 127
  %v5262 = vpop.permute.xlu0 %5261
  %5263 = vrot.lane.b32.xlu0 %v5237, 127
  %v5264 = vpop.permute.xlu0 %5263
  %5265 = vrot.lane.b32.xlu0 %v5238, 127
  %v5266 = vpop.permute.xlu0 %5265
  %5267 = vrot.lane.b32.xlu0 %v5239, 127
  %v5268 = vpop.permute.xlu0 %5267
  %v5269 = vsel %vm77, %v5258, %v5260
  %v5270 = vsel %vm77, %v5260, %v5262
  %v5271 = vsel %vm77, %v5264, %v5266
  %v5272 = vsel %vm77, %v5266, %v5268
  %5277 = vst [vmem:[#allocation3 + $0x40] sm:$0xff] %v5269
  %5278 = vst [vmem:[#allocation3 + $0x48] sm:$0xff] %v5270
  %5279 = vst [vmem:[#allocation3 + $0x60] sm:$0xff] %v5271
  %5280 = vst [vmem:[#allocation3 + $0x68] sm:$0xff] %v5272
  %5287 = vrot.lane.b32.xlu0 %v5234, 127
  %v5288 = vpop.permute.xlu0 %5287
  %5289 = vrot.lane.b32.xlu0 %v5235, 127
  %v5290 = vpop.permute.xlu0 %5289
  %5291 = vrot.lane.b32.xlu0 %v5236, 127
  %v5292 = vpop.permute.xlu0 %5291
  %5293 = vrot.lane.b32.xlu0 %v5240, 127
  %v5294 = vpop.permute.xlu0 %5293
  %5295 = vrot.lane.b32.xlu0 %v5241, 127
  %v5296 = vpop.permute.xlu0 %5295
  %5297 = vrot.lane.b32.xlu0 %v5242, 127
  %v5298 = vpop.permute.xlu0 %5297
  %v5299 = vsel %vm77, %v5288, %v5290
  %v5300 = vsel %vm77, %v5290, %v5292
  %v5301 = vsel %vm77, %v5294, %v5296
  %v5302 = vsel %vm77, %v5296, %v5298
  %5307 = vst [vmem:[#allocation3 + $0x50] sm:$0xff] %v5299
  %5308 = vst [vmem:[#allocation3 + $0x58] sm:$0xff] %v5300
  %5309 = vst [vmem:[#allocation3 + $0x70] sm:$0xff] %v5301
  %5310 = vst [vmem:[#allocation3 + $0x78] sm:$0xff] %v5302
  %5311 = vrot.lane.b32.xlu0 %v5231, 126
  %v5312 = vpop.permute.xlu0 %5311
  %5313 = vrot.lane.b32.xlu0 %v5232, 126
  %v5314 = vpop.permute.xlu0 %5313
  %5315 = vrot.lane.b32.xlu0 %v5233, 126
  %v5316 = vpop.permute.xlu0 %5315
  %5317 = vrot.lane.b32.xlu0 %v5237, 126
  %v5318 = vpop.permute.xlu0 %5317
  %5319 = vrot.lane.b32.xlu0 %v5238, 126
  %v5320 = vpop.permute.xlu0 %5319
  %5321 = vrot.lane.b32.xlu0 %v5239, 126
  %v5322 = vpop.permute.xlu0 %5321
  %v5323 = vsel %vm132, %v5312, %v5314
  %v5324 = vsel %vm132, %v5314, %v5316
  %v5325 = vsel %vm132, %v5318, %v5320
  %v5326 = vsel %vm132, %v5320, %v5322
  %5331 = vst [vmem:[#allocation3 + $0x80] sm:$0xff] %v5323
  %5332 = vst [vmem:[#allocation3 + $0x88] sm:$0xff] %v5324
  %5333 = vst [vmem:[#allocation3 + $0xa0] sm:$0xff] %v5325
  %5334 = vst [vmem:[#allocation3 + $0xa8] sm:$0xff] %v5326
  %5335 = vrot.lane.b32.xlu0 %v5234, 126
  %v5336 = vpop.permute.xlu0 %5335
  %5337 = vrot.lane.b32.xlu0 %v5235, 126
  %v5338 = vpop.permute.xlu0 %5337
  %5339 = vrot.lane.b32.xlu0 %v5236, 126
  %v5340 = vpop.permute.xlu0 %5339
  %5341 = vrot.lane.b32.xlu0 %v5240, 126
  %v5342 = vpop.permute.xlu0 %5341
  %5343 = vrot.lane.b32.xlu0 %v5241, 126
  %v5344 = vpop.permute.xlu0 %5343
  %5345 = vrot.lane.b32.xlu0 %v5242, 126
  %v5346 = vpop.permute.xlu0 %5345
  %v5347 = vsel %vm132, %v5336, %v5338
  %v5348 = vsel %vm132, %v5338, %v5340
  %v5349 = vsel %vm132, %v5342, %v5344
  %v5350 = vsel %vm132, %v5344, %v5346
  %5355 = vst [vmem:[#allocation3 + $0x90] sm:$0xff] %v5347
  %5356 = vst [vmem:[#allocation3 + $0x98] sm:$0xff] %v5348
  %5357 = vst [vmem:[#allocation3 + $0xb0] sm:$0xff] %v5349
  %5358 = vst [vmem:[#allocation3 + $0xb8] sm:$0xff] %v5350
  %5359 = vrot.lane.b32.xlu0 %v5231, 112
  %v5360 = vpop.permute.xlu0 %5359
  %5361 = vrot.lane.b32.xlu0 %v5232, 112
  %v5362 = vpop.permute.xlu0 %5361
  %5363 = vrot.lane.b32.xlu0 %v5233, 112
  %v5364 = vpop.permute.xlu0 %5363
  %5365 = vrot.lane.b32.xlu0 %v5237, 112
  %v5366 = vpop.permute.xlu0 %5365
  %5367 = vrot.lane.b32.xlu0 %v5238, 112
  %v5368 = vpop.permute.xlu0 %5367
  %5369 = vrot.lane.b32.xlu0 %v5239, 112
  %v5370 = vpop.permute.xlu0 %5369
  %v5371 = vsel %vm181, %v5360, %v5362
  %v5372 = vsel %vm181, %v5362, %v5364
  %v5373 = vsel %vm181, %v5366, %v5368
  %v5374 = vsel %vm181, %v5368, %v5370
  %5379 = vst [vmem:[#allocation3 + $0xc0] sm:$0xff] %v5371
  %5380 = vst [vmem:[#allocation3 + $0xc8] sm:$0xff] %v5372
  %5381 = vst [vmem:[#allocation3 + $0xe0] sm:$0xff] %v5373
  %5382 = vst [vmem:[#allocation3 + $0xe8] sm:$0xff] %v5374
  %5383 = vrot.lane.b32.xlu0 %v5234, 112
  %v5384 = vpop.permute.xlu0 %5383
  %5385 = vrot.lane.b32.xlu0 %v5235, 112
  %v5386 = vpop.permute.xlu0 %5385
  %5387 = vrot.lane.b32.xlu0 %v5236, 112
  %v5388 = vpop.permute.xlu0 %5387
  %5389 = vrot.lane.b32.xlu0 %v5240, 112
  %v5390 = vpop.permute.xlu0 %5389
  %5391 = vrot.lane.b32.xlu0 %v5241, 112
  %v5392 = vpop.permute.xlu0 %5391
  %5393 = vrot.lane.b32.xlu0 %v5242, 112
  %v5394 = vpop.permute.xlu0 %5393
  %v5395 = vsel %vm181, %v5384, %v5386
  %v5396 = vsel %vm181, %v5386, %v5388
  %v5397 = vsel %vm181, %v5390, %v5392
  %v5398 = vsel %vm181, %v5392, %v5394
  %5403 = vst [vmem:[#allocation3 + $0xd0] sm:$0xff] %v5395
  %5404 = vst [vmem:[#allocation3 + $0xd8] sm:$0xff] %v5396
  %5405 = vst [vmem:[#allocation3 + $0xf0] sm:$0xff] %v5397
  %5406 = vst [vmem:[#allocation3 + $0xf8] sm:$0xff] %v5398
  %5407 = vrot.lane.b32.xlu0 %v5231, 111
  %v5408 = vpop.permute.xlu0 %5407
  %5409 = vrot.lane.b32.xlu0 %v5232, 111
  %v5410 = vpop.permute.xlu0 %5409
  %5411 = vrot.lane.b32.xlu0 %v5233, 111
  %v5412 = vpop.permute.xlu0 %5411
  %5413 = vrot.lane.b32.xlu0 %v5237, 111
  %v5414 = vpop.permute.xlu0 %5413
  %5415 = vrot.lane.b32.xlu0 %v5238, 111
  %v5416 = vpop.permute.xlu0 %5415
  %5417 = vrot.lane.b32.xlu0 %v5239, 111
  %v5418 = vpop.permute.xlu0 %5417
  %v5419 = vsel %vm230, %v5408, %v5410
  %v5420 = vsel %vm230, %v5410, %v5412
  %v5421 = vsel %vm230, %v5414, %v5416
  %v5422 = vsel %vm230, %v5416, %v5418
  %5427 = vst [vmem:[#allocation3 + $0x100] sm:$0xff] %v5419
  %5428 = vst [vmem:[#allocation3 + $0x108] sm:$0xff] %v5420
  %5429 = vst [vmem:[#allocation3 + $0x120] sm:$0xff] %v5421
  %5430 = vst [vmem:[#allocation3 + $0x128] sm:$0xff] %v5422
  %5431 = vrot.lane.b32.xlu0 %v5234, 111
  %v5432 = vpop.permute.xlu0 %5431
  %5433 = vrot.lane.b32.xlu0 %v5235, 111
  %v5434 = vpop.permute.xlu0 %5433
  %5435 = vrot.lane.b32.xlu0 %v5236, 111
  %v5436 = vpop.permute.xlu0 %5435
  %5437 = vrot.lane.b32.xlu0 %v5240, 111
  %v5438 = vpop.permute.xlu0 %5437
  %5439 = vrot.lane.b32.xlu0 %v5241, 111
  %v5440 = vpop.permute.xlu0 %5439
  %5441 = vrot.lane.b32.xlu0 %v5242, 111
  %v5442 = vpop.permute.xlu0 %5441
  %v5443 = vsel %vm230, %v5432, %v5434
  %v5444 = vsel %vm230, %v5434, %v5436
  %v5445 = vsel %vm230, %v5438, %v5440
  %v5446 = vsel %vm230, %v5440, %v5442
  %5451 = vst [vmem:[#allocation3 + $0x110] sm:$0xff] %v5443
  %5452 = vst [vmem:[#allocation3 + $0x118] sm:$0xff] %v5444
  %5453 = vst [vmem:[#allocation3 + $0x130] sm:$0xff] %v5445
  %5454 = vst [vmem:[#allocation3 + $0x138] sm:$0xff] %v5446
  %5455 = vrot.lane.b32.xlu0 %v5231, 110
  %v5456 = vpop.permute.xlu0 %5455
  %5457 = vrot.lane.b32.xlu0 %v5232, 110
  %v5458 = vpop.permute.xlu0 %5457
  %5459 = vrot.lane.b32.xlu0 %v5233, 110
  %v5460 = vpop.permute.xlu0 %5459
  %5461 = vrot.lane.b32.xlu0 %v5237, 110
  %v5462 = vpop.permute.xlu0 %5461
  %5463 = vrot.lane.b32.xlu0 %v5238, 110
  %v5464 = vpop.permute.xlu0 %5463
  %5465 = vrot.lane.b32.xlu0 %v5239, 110
  %v5466 = vpop.permute.xlu0 %5465
  %v5467 = vsel %vm279, %v5456, %v5458
  %v5468 = vsel %vm279, %v5458, %v5460
  %v5469 = vsel %vm279, %v5462, %v5464
  %v5470 = vsel %vm279, %v5464, %v5466
  %5475 = vst [vmem:[#allocation3 + $0x140] sm:$0xff] %v5467
  %5476 = vst [vmem:[#allocation3 + $0x148] sm:$0xff] %v5468
  %5477 = vst [vmem:[#allocation3 + $0x160] sm:$0xff] %v5469
  %5478 = vst [vmem:[#allocation3 + $0x168] sm:$0xff] %v5470
  %5479 = vrot.lane.b32.xlu0 %v5234, 110
  %v5480 = vpop.permute.xlu0 %5479
  %5481 = vrot.lane.b32.xlu0 %v5235, 110
  %v5482 = vpop.permute.xlu0 %5481
  %5483 = vrot.lane.b32.xlu0 %v5236, 110
  %v5484 = vpop.permute.xlu0 %5483
  %5485 = vrot.lane.b32.xlu0 %v5240, 110
  %v5486 = vpop.permute.xlu0 %5485
  %5487 = vrot.lane.b32.xlu0 %v5241, 110
  %v5488 = vpop.permute.xlu0 %5487
  %5489 = vrot.lane.b32.xlu0 %v5242, 110
  %v5490 = vpop.permute.xlu0 %5489
  %v5491 = vsel %vm279, %v5480, %v5482
  %v5492 = vsel %vm279, %v5482, %v5484
  %v5493 = vsel %vm279, %v5486, %v5488
  %v5494 = vsel %vm279, %v5488, %v5490
  %5499 = vst [vmem:[#allocation3 + $0x150] sm:$0xff] %v5491
  %5500 = vst [vmem:[#allocation3 + $0x158] sm:$0xff] %v5492
  %5501 = vst [vmem:[#allocation3 + $0x170] sm:$0xff] %v5493
  %5502 = vst [vmem:[#allocation3 + $0x178] sm:$0xff] %v5494
  %5503 = vrot.lane.b32.xlu0 %v5231, 96
  %v5504 = vpop.permute.xlu0 %5503
  %5505 = vrot.lane.b32.xlu0 %v5232, 96
  %v5506 = vpop.permute.xlu0 %5505
  %5507 = vrot.lane.b32.xlu0 %v5233, 96
  %v5508 = vpop.permute.xlu0 %5507
  %5509 = vrot.lane.b32.xlu0 %v5237, 96
  %v5510 = vpop.permute.xlu0 %5509
  %5511 = vrot.lane.b32.xlu0 %v5238, 96
  %v5512 = vpop.permute.xlu0 %5511
  %5513 = vrot.lane.b32.xlu0 %v5239, 96
  %v5514 = vpop.permute.xlu0 %5513
  %v5515 = vsel %vm328, %v5504, %v5506
  %v5516 = vsel %vm328, %v5506, %v5508
  %v5517 = vsel %vm328, %v5510, %v5512
  %v5518 = vsel %vm328, %v5512, %v5514
  %5523 = vst [vmem:[#allocation3 + $0x180] sm:$0xff] %v5515
  %5524 = vst [vmem:[#allocation3 + $0x188] sm:$0xff] %v5516
  %5525 = vst [vmem:[#allocation3 + $0x1a0] sm:$0xff] %v5517
  %5526 = vst [vmem:[#allocation3 + $0x1a8] sm:$0xff] %v5518
  %5527 = vrot.lane.b32.xlu0 %v5234, 96
  %v5528 = vpop.permute.xlu0 %5527
  %5529 = vrot.lane.b32.xlu0 %v5235, 96
  %v5530 = vpop.permute.xlu0 %5529
  %5531 = vrot.lane.b32.xlu0 %v5236, 96
  %v5532 = vpop.permute.xlu0 %5531
  %5533 = vrot.lane.b32.xlu0 %v5240, 96
  %v5534 = vpop.permute.xlu0 %5533
  %5535 = vrot.lane.b32.xlu0 %v5241, 96
  %v5536 = vpop.permute.xlu0 %5535
  %5537 = vrot.lane.b32.xlu0 %v5242, 96
  %v5538 = vpop.permute.xlu0 %5537
  %v5539 = vsel %vm328, %v5528, %v5530
  %v5540 = vsel %vm328, %v5530, %v5532
  %v5541 = vsel %vm328, %v5534, %v5536
  %v5542 = vsel %vm328, %v5536, %v5538
  %5547 = vst [vmem:[#allocation3 + $0x190] sm:$0xff] %v5539
  %5548 = vst [vmem:[#allocation3 + $0x198] sm:$0xff] %v5540
  %5549 = vst [vmem:[#allocation3 + $0x1b0] sm:$0xff] %v5541
  %5550 = vst [vmem:[#allocation3 + $0x1b8] sm:$0xff] %v5542
  %5551 = vrot.lane.b32.xlu0 %v5231, 95
  %v5552 = vpop.permute.xlu0 %5551
  %5553 = vrot.lane.b32.xlu0 %v5232, 95
  %v5554 = vpop.permute.xlu0 %5553
  %5555 = vrot.lane.b32.xlu0 %v5233, 95
  %v5556 = vpop.permute.xlu0 %5555
  %5557 = vrot.lane.b32.xlu0 %v5237, 95
  %v5558 = vpop.permute.xlu0 %5557
  %5559 = vrot.lane.b32.xlu0 %v5238, 95
  %v5560 = vpop.permute.xlu0 %5559
  %5561 = vrot.lane.b32.xlu0 %v5239, 95
  %v5562 = vpop.permute.xlu0 %5561
  %v5563 = vsel %vm377, %v5552, %v5554
  %v5564 = vsel %vm377, %v5554, %v5556
  %v5565 = vsel %vm377, %v5558, %v5560
  %v5566 = vsel %vm377, %v5560, %v5562
  %5571 = vst [vmem:[#allocation3 + $0x1c0] sm:$0xff] %v5563
  %5572 = vst [vmem:[#allocation3 + $0x1c8] sm:$0xff] %v5564
  %5573 = vst [vmem:[#allocation3 + $0x1e0] sm:$0xff] %v5565
  %5574 = vst [vmem:[#allocation3 + $0x1e8] sm:$0xff] %v5566
  %5575 = vrot.lane.b32.xlu0 %v5234, 95
  %v5576 = vpop.permute.xlu0 %5575
  %5577 = vrot.lane.b32.xlu0 %v5235, 95
  %v5578 = vpop.permute.xlu0 %5577
  %5579 = vrot.lane.b32.xlu0 %v5236, 95
  %v5580 = vpop.permute.xlu0 %5579
  %5581 = vrot.lane.b32.xlu0 %v5240, 95
  %v5582 = vpop.permute.xlu0 %5581
  %5583 = vrot.lane.b32.xlu0 %v5241, 95
  %v5584 = vpop.permute.xlu0 %5583
  %5585 = vrot.lane.b32.xlu0 %v5242, 95
  %v5586 = vpop.permute.xlu0 %5585
  %v5587 = vsel %vm377, %v5576, %v5578
  %v5588 = vsel %vm377, %v5578, %v5580
  %v5589 = vsel %vm377, %v5582, %v5584
  %v5590 = vsel %vm377, %v5584, %v5586
  %5595 = vst [vmem:[#allocation3 + $0x1d0] sm:$0xff] %v5587
  %5596 = vst [vmem:[#allocation3 + $0x1d8] sm:$0xff] %v5588
  %5597 = vst [vmem:[#allocation3 + $0x1f0] sm:$0xff] %v5589
  %5598 = vst [vmem:[#allocation3 + $0x1f8] sm:$0xff] %v5590
  %5599 = vrot.lane.b32.xlu0 %v5231, 94
  %v5600 = vpop.permute.xlu0 %5599
  %5601 = vrot.lane.b32.xlu0 %v5232, 94
  %v5602 = vpop.permute.xlu0 %5601
  %5603 = vrot.lane.b32.xlu0 %v5233, 94
  %v5604 = vpop.permute.xlu0 %5603
  %5605 = vrot.lane.b32.xlu0 %v5237, 94
  %v5606 = vpop.permute.xlu0 %5605
  %5607 = vrot.lane.b32.xlu0 %v5238, 94
  %v5608 = vpop.permute.xlu0 %5607
  %5609 = vrot.lane.b32.xlu0 %v5239, 94
  %v5610 = vpop.permute.xlu0 %5609
  %v5611 = vsel %vm426, %v5600, %v5602
  %v5612 = vsel %vm426, %v5602, %v5604
  %v5613 = vsel %vm426, %v5606, %v5608
  %v5614 = vsel %vm426, %v5608, %v5610
  %5619 = vst [vmem:[#allocation3 + $0x200] sm:$0xff] %v5611
  %5620 = vst [vmem:[#allocation3 + $0x208] sm:$0xff] %v5612
  %5621 = vst [vmem:[#allocation3 + $0x220] sm:$0xff] %v5613
  %5622 = vst [vmem:[#allocation3 + $0x228] sm:$0xff] %v5614
  %5623 = vrot.lane.b32.xlu0 %v5234, 94
  %v5624 = vpop.permute.xlu0 %5623
  %5625 = vrot.lane.b32.xlu0 %v5235, 94
  %v5626 = vpop.permute.xlu0 %5625
  %5627 = vrot.lane.b32.xlu0 %v5236, 94
  %v5628 = vpop.permute.xlu0 %5627
  %5629 = vrot.lane.b32.xlu0 %v5240, 94
  %v5630 = vpop.permute.xlu0 %5629
  %5631 = vrot.lane.b32.xlu0 %v5241, 94
  %v5632 = vpop.permute.xlu0 %5631
  %5633 = vrot.lane.b32.xlu0 %v5242, 94
  %v5634 = vpop.permute.xlu0 %5633
  %v5635 = vsel %vm426, %v5624, %v5626
  %v5636 = vsel %vm426, %v5626, %v5628
  %v5637 = vsel %vm426, %v5630, %v5632
  %v5638 = vsel %vm426, %v5632, %v5634
  %5643 = vst [vmem:[#allocation3 + $0x210] sm:$0xff] %v5635
  %5644 = vst [vmem:[#allocation3 + $0x218] sm:$0xff] %v5636
  %5645 = vst [vmem:[#allocation3 + $0x230] sm:$0xff] %v5637
  %5646 = vst [vmem:[#allocation3 + $0x238] sm:$0xff] %v5638
  %s5647 = scalar_lea.vmem %s1, 224
  %v5648 = vld [vmem:[%s5647] sm:$0xff]
  %v5649 = vld [vmem:[%s5647 + $0x8] sm:$0xff]
  %v5650 = vld [vmem:[%s5647 + $0x10] sm:$0xff]
  %v5651 = vld [vmem:[%s5647 + $0x18] sm:$0xff]
  %v5652 = vld [vmem:[#allocation3] sm:$0xff]
  %v5653 = vld [vmem:[#allocation3 + $0x8] sm:$0xff]
  %v5654 = vld [vmem:[#allocation3 + $0x10] sm:$0xff]
  %v5655 = vld [vmem:[#allocation3 + $0x18] sm:$0xff]
  %v5656 = vld [vmem:[#allocation3 + $0x20] sm:$0xff]
  %v5657 = vld [vmem:[#allocation3 + $0x28] sm:$0xff]
  %v5658 = vld [vmem:[#allocation3 + $0x30] sm:$0xff]
  %v5659 = vld [vmem:[#allocation3 + $0x38] sm:$0xff]
  %v5660 = vld [vmem:[#allocation3 + $0x40] sm:$0xff]
  %v5661 = vld [vmem:[#allocation3 + $0x48] sm:$0xff]
  %v5662 = vld [vmem:[#allocation3 + $0x50] sm:$0xff]
  %v5663 = vld [vmem:[#allocation3 + $0x58] sm:$0xff]
  %v5664 = vld [vmem:[#allocation3 + $0x60] sm:$0xff]
  %v5665 = vld [vmem:[#allocation3 + $0x68] sm:$0xff]
  %v5666 = vld [vmem:[#allocation3 + $0x70] sm:$0xff]
  %v5667 = vld [vmem:[#allocation3 + $0x78] sm:$0xff]
  %v5668 = vld [vmem:[#allocation3 + $0x80] sm:$0xff]
  %v5669 = vld [vmem:[#allocation3 + $0x88] sm:$0xff]
  %v5670 = vld [vmem:[#allocation3 + $0x90] sm:$0xff]
  %v5671 = vld [vmem:[#allocation3 + $0x98] sm:$0xff]
  %v5672 = vld [vmem:[#allocation3 + $0xa0] sm:$0xff]
  %v5673 = vld [vmem:[#allocation3 + $0xa8] sm:$0xff]
  %v5674 = vld [vmem:[#allocation3 + $0xb0] sm:$0xff]
  %v5675 = vld [vmem:[#allocation3 + $0xb8] sm:$0xff]
  %v5676 = vld [vmem:[#allocation3 + $0xc0] sm:$0xff]
  %v5677 = vld [vmem:[#allocation3 + $0xc8] sm:$0xff]
  %v5678 = vld [vmem:[#allocation3 + $0xd0] sm:$0xff]
  %v5679 = vld [vmem:[#allocation3 + $0xd8] sm:$0xff]
  %v5680 = vld [vmem:[#allocation3 + $0xe0] sm:$0xff]
  %v5681 = vld [vmem:[#allocation3 + $0xe8] sm:$0xff]
  %v5682 = vld [vmem:[#allocation3 + $0xf0] sm:$0xff]
  %v5683 = vld [vmem:[#allocation3 + $0xf8] sm:$0xff]
  %v5684 = vld [vmem:[#allocation3 + $0x100] sm:$0xff]
  %v5685 = vld [vmem:[#allocation3 + $0x108] sm:$0xff]
  %v5686 = vld [vmem:[#allocation3 + $0x110] sm:$0xff]
  %v5687 = vld [vmem:[#allocation3 + $0x118] sm:$0xff]
  %v5688 = vld [vmem:[#allocation3 + $0x120] sm:$0xff]
  %v5689 = vld [vmem:[#allocation3 + $0x128] sm:$0xff]
  %v5690 = vld [vmem:[#allocation3 + $0x130] sm:$0xff]
  %v5691 = vld [vmem:[#allocation3 + $0x138] sm:$0xff]
  %v5692 = vld [vmem:[#allocation3 + $0x140] sm:$0xff]
  %v5693 = vld [vmem:[#allocation3 + $0x148] sm:$0xff]
  %v5694 = vld [vmem:[#allocation3 + $0x150] sm:$0xff]
  %v5695 = vld [vmem:[#allocation3 + $0x158] sm:$0xff]
  %v5696 = vld [vmem:[#allocation3 + $0x160] sm:$0xff]
  %v5697 = vld [vmem:[#allocation3 + $0x168] sm:$0xff]
  %v5698 = vld [vmem:[#allocation3 + $0x170] sm:$0xff]
  %v5699 = vld [vmem:[#allocation3 + $0x178] sm:$0xff]
  %v5700 = vld [vmem:[#allocation3 + $0x180] sm:$0xff]
  %v5701 = vld [vmem:[#allocation3 + $0x188] sm:$0xff]
  %v5702 = vld [vmem:[#allocation3 + $0x190] sm:$0xff]
  %v5703 = vld [vmem:[#allocation3 + $0x198] sm:$0xff]
  %v5704 = vld [vmem:[#allocation3 + $0x1a0] sm:$0xff]
  %v5705 = vld [vmem:[#allocation3 + $0x1a8] sm:$0xff]
  %v5706 = vld [vmem:[#allocation3 + $0x1b0] sm:$0xff]
  %v5707 = vld [vmem:[#allocation3 + $0x1b8] sm:$0xff]
  %v5708 = vld [vmem:[#allocation3 + $0x1c0] sm:$0xff]
  %v5709 = vld [vmem:[#allocation3 + $0x1c8] sm:$0xff]
  %v5710 = vld [vmem:[#allocation3 + $0x1d0] sm:$0xff]
  %v5711 = vld [vmem:[#allocation3 + $0x1d8] sm:$0xff]
  %v5712 = vld [vmem:[#allocation3 + $0x1e0] sm:$0xff]
  %v5713 = vld [vmem:[#allocation3 + $0x1e8] sm:$0xff]
  %v5714 = vld [vmem:[#allocation3 + $0x1f0] sm:$0xff]
  %v5715 = vld [vmem:[#allocation3 + $0x1f8] sm:$0xff]
  %v5716 = vld [vmem:[#allocation3 + $0x200] sm:$0xff]
  %v5717 = vld [vmem:[#allocation3 + $0x208] sm:$0xff]
  %v5718 = vld [vmem:[#allocation3 + $0x210] sm:$0xff]
  %v5719 = vld [vmem:[#allocation3 + $0x218] sm:$0xff]
  %v5720 = vld [vmem:[#allocation3 + $0x220] sm:$0xff]
  %v5721 = vld [vmem:[#allocation3 + $0x228] sm:$0xff]
  %v5722 = vld [vmem:[#allocation3 + $0x230] sm:$0xff]
  %v5723 = vld [vmem:[#allocation3 + $0x238] sm:$0xff]
  %s5724 = scalar_lea.vmem %s2, 112
  %v5725 = vld [vmem:[%s5724] sm:$0xff]
  %v5726 = vld [vmem:[%s5724 + $0x8] sm:$0xff]
  %5728 = vset.pattern.permute.xlu0 0
  %5729 = vperm.xlu0 %5728, %v5725
  %v5730 = vpop.permute.xlu0 %5729
  %5733 = vset.pattern.permute.xlu0 0
  %5734 = vperm.xlu0 %5733, %v5726
  %v5735 = vpop.permute.xlu0 %5734
  %v5738 = vsel %vm551, %v5649, 0
  %v5741 = vsel %vm551, %v5651, 0
  %5743 = vmatprep.subr.mxu0 %v5653
  %5744 = vmatpush1.msra.mxu0 %v5652
  %5745 = vmatprep.subr.mxu0 %v5657
  %5746 = vmatpush1.msra.mxu0 %v5656
  %5747 = vmatprep.subr.mxu0 %v5661
  %5748 = vmatpush1.msra.mxu0 %v5660
  %5749 = vmatprep.subr.mxu0 %v5665
  %5750 = vmatpush1.msra.mxu0 %v5664
  %5751 = vmatprep.subr.mxu0 %v5669
  %5752 = vmatpush1.msra.mxu0 %v5668
  %5753 = vmatprep.subr.mxu0 %v5673
  %5754 = vmatpush1.msra.mxu0 %v5672
  %5755 = vmatprep.subr.mxu0 %v5677
  %5756 = vmatpush1.msra.mxu0 %v5676
  %5757 = vmatprep.subr.mxu0 %v5681
  %5758 = vmatpush1.msra.mxu0 %v5680
  %5759 = vmatprep.subr.mxu0 %v5685
  %5760 = vmatpush1.msra.mxu0 %v5684
  %5761 = vmatprep.subr.mxu0 %v5689
  %5762 = vmatpush1.msra.mxu0 %v5688
  %5763 = vmatprep.subr.mxu0 %v5693
  %5764 = vmatpush1.msra.mxu0 %v5692
  %5765 = vmatprep.subr.mxu0 %v5697
  %5766 = vmatpush1.msra.mxu0 %v5696
  %5767 = vmatprep.subr.mxu0 %v5701
  %5768 = vmatpush1.msra.mxu0 %v5700
  %5769 = vmatprep.subr.mxu0 %v5705
  %5770 = vmatpush1.msra.mxu0 %v5704
  %5771 = vmatprep.subr.mxu0 %v5709
  %5772 = vmatpush1.msra.mxu0 %v5708
  %5773 = vmatprep.subr.mxu0 %v5713
  %5774 = vmatpush1.msra.mxu0 %v5712
  %5775 = vmatprep.subr.mxu0 %v5717
  %5776 = vmatpush1.msra.mxu0 %v5716
  %5777 = vmatprep.subr.mxu0 %v5721
  %5778 = vmatpush1.msra.mxu0 %v5720
  %5779 = vmatprep.subr.mxu0 0.0
  %5780 = vmatpush1.msra.mxu0 0.0
  %5781 = vmatprep.subr.mxu0 0.0
  %5782 = vmatpush1.msra.mxu0 0.0
  %5783 = vmatprep.subr.mxu0 0.0
  %5784 = vmatpush1.msra.mxu0 0.0
  %5785 = vmatprep.subr.mxu0 0.0
  %5786 = vmatpush1.msra.mxu0 0.0
  %5787 = vmatprep.subr.mxu0 0.0
  %5788 = vmatpush1.msra.mxu0 0.0
  %5789 = vmatprep.subr.mxu0 0.0
  %5790 = vmatpush1.msra.mxu0 0.0
  %5791 = vmatprep.subr.mxu0 0.0
  %5792 = vmatpush1.msra.mxu0 0.0
  %5793 = vmatprep.subr.mxu0 0.0
  %5794 = vmatpush1.msra.mxu0 0.0
  %5795 = vmatprep.subr.mxu0 0.0
  %5796 = vmatpush1.msra.mxu0 0.0
  %5797 = vmatprep.subr.mxu0 0.0
  %5798 = vmatpush1.msra.mxu0 0.0
  %5799 = vmatprep.subr.mxu0 0.0
  %5800 = vmatpush1.msra.mxu0 0.0
  %5801 = vmatprep.subr.mxu0 0.0
  %5802 = vmatpush1.msra.mxu0 0.0
  %5803 = vmatprep.subr.mxu0 0.0
  %5804 = vmatpush1.msra.mxu0 0.0
  %5805 = vmatprep.subr.mxu0 0.0
  %5806 = vmatpush1.msra.mxu0 0.0
  %5807 = vmatprep.mubr.f32.mxu0 %v5738
  %5808 = vmatmul.mubr.f32.gmra.mrb[0].mxu0 %v5648
  %v5809 = vpop.f32.mrb[0].mxu0
  %v5810 = vadd.f32 %v5730, %v5809
  %v5811 = vpop.f32.mrb[0].mxu0
  %v5812 = vadd.f32 %v5730, %v5811
  %5813 = vmatprep.mubr.f32.mxu0 %v5741
  %5814 = vmatmul.mubr.f32.gmra.mrb[0].mxu0 %v5650
  %v5815 = vpop.f32.mrb[0].mxu0
  %v5816 = vadd.f32 %v5735, %v5815
  %v5817 = vpop.f32.mrb[0].mxu0
  %v5818 = vadd.f32 %v5735, %v5817
  %5819 = vdwg.mxu0
  %5820 = vmatprep.subr.mxu0 %v5655
  %5821 = vmatpush1.msra.mxu0 %v5654
  %5822 = vmatprep.subr.mxu0 %v5659
  %5823 = vmatpush1.msra.mxu0 %v5658
  %5824 = vmatprep.subr.mxu0 %v5663
  %5825 = vmatpush1.msra.mxu0 %v5662
  %5826 = vmatprep.subr.mxu0 %v5667
  %5827 = vmatpush1.msra.mxu0 %v5666
  %5828 = vmatprep.subr.mxu0 %v5671
  %5829 = vmatpush1.msra.mxu0 %v5670
  %5830 = vmatprep.subr.mxu0 %v5675
  %5831 = vmatpush1.msra.mxu0 %v5674
  %5832 = vmatprep.subr.mxu0 %v5679
  %5833 = vmatpush1.msra.mxu0 %v5678
  %5834 = vmatprep.subr.mxu0 %v5683
  %5835 = vmatpush1.msra.mxu0 %v5682
  %5836 = vmatprep.subr.mxu0 %v5687
  %5837 = vmatpush1.msra.mxu0 %v5686
  %5838 = vmatprep.subr.mxu0 %v5691
  %5839 = vmatpush1.msra.mxu0 %v5690
  %5840 = vmatprep.subr.mxu0 %v5695
  %5841 = vmatpush1.msra.mxu0 %v5694
  %5842 = vmatprep.subr.mxu0 %v5699
  %5843 = vmatpush1.msra.mxu0 %v5698
  %5844 = vmatprep.subr.mxu0 %v5703
  %5845 = vmatpush1.msra.mxu0 %v5702
  %5846 = vmatprep.subr.mxu0 %v5707
  %5847 = vmatpush1.msra.mxu0 %v5706
  %5848 = vmatprep.subr.mxu0 %v5711
  %5849 = vmatpush1.msra.mxu0 %v5710
  %5850 = vmatprep.subr.mxu0 %v5715
  %5851 = vmatpush1.msra.mxu0 %v5714
  %5852 = vmatprep.subr.mxu0 %v5719
  %5853 = vmatpush1.msra.mxu0 %v5718
  %5854 = vmatprep.subr.mxu0 %v5723
  %5855 = vmatpush1.msra.mxu0 %v5722
  %5856 = vmatprep.subr.mxu0 0.0
  %5857 = vmatpush1.msra.mxu0 0.0
  %5858 = vmatprep.subr.mxu0 0.0
  %5859 = vmatpush1.msra.mxu0 0.0
  %5860 = vmatprep.subr.mxu0 0.0
  %5861 = vmatpush1.msra.mxu0 0.0
  %5862 = vmatprep.subr.mxu0 0.0
  %5863 = vmatpush1.msra.mxu0 0.0
  %5864 = vmatprep.subr.mxu0 0.0
  %5865 = vmatpush1.msra.mxu0 0.0
  %5866 = vmatprep.subr.mxu0 0.0
  %5867 = vmatpush1.msra.mxu0 0.0
  %5868 = vmatprep.subr.mxu0 0.0
  %5869 = vmatpush1.msra.mxu0 0.0
  %5870 = vmatprep.subr.mxu0 0.0
  %5871 = vmatpush1.msra.mxu0 0.0
  %5872 = vmatprep.subr.mxu0 0.0
  %5873 = vmatpush1.msra.mxu0 0.0
  %5874 = vmatprep.subr.mxu0 0.0
  %5875 = vmatpush1.msra.mxu0 0.0
  %5876 = vmatprep.subr.mxu0 0.0
  %5877 = vmatpush1.msra.mxu0 0.0
  %5878 = vmatprep.subr.mxu0 0.0
  %5879 = vmatpush1.msra.mxu0 0.0
  %5880 = vmatprep.subr.mxu0 0.0
  %5881 = vmatpush1.msra.mxu0 0.0
  %5882 = vmatprep.subr.mxu0 0.0
  %5883 = vmatpush1.msra.mxu0 0.0
  %5884 = vmatprep.mubr.f32.mxu0 %v5738
  %5885 = vmatmul.mubr.f32.gmra.mrb[0].mxu0 %v5648
  %v5886 = vpop.f32.mrb[0].mxu0
  %v5887 = vadd.f32 %v5730, %v5886
  %v5888 = vpop.f32.mrb[0].mxu0
  %v5889 = vadd.f32 %v5730, %v5888
  %5890 = vmatprep.mubr.f32.mxu0 %v5741
  %5891 = vmatmul.mubr.f32.gmra.mrb[0].mxu0 %v5650
  %v5892 = vpop.f32.mrb[0].mxu0
  %v5893 = vadd.f32 %v5735, %v5892
  %v5894 = vpop.f32.mrb[0].mxu0
  %v5895 = vadd.f32 %v5735, %v5894
  %5896 = vdwg.mxu0
  %v5897 = vmax.f32 %v5810, 0.0
  %v5898 = vmax.f32 %v5812, 0.0
  %v5899 = vmax.f32 %v5887, 0.0
  %v5900 = vmax.f32 %v5889, 0.0
  %v5901 = vmax.f32 %v5816, 0.0
  %v5902 = vmax.f32 %v5818, 0.0
  %v5903 = vmax.f32 %v5893, 0.0
  %v5904 = vmax.f32 %v5895, 0.0
  %v5905 = vmul.f32 %v5897, %v724
  %v5906 = vmul.f32 %v5898, %v728
  %v5907 = vmul.f32 %v5899, %v732
  %v5908 = vmul.f32 %v5900, %v736
  %v5909 = vmul.f32 %v5901, %v724
  %v5910 = vmul.f32 %v5902, %v728
  %v5911 = vmul.f32 %v5903, %v732
  %v5912 = vmul.f32 %v5904, %v736
  %5917 = vrot.lane.b32.xlu0 %v5905, 17
  %v5918 = vpop.permute.xlu0 %5917
  %5919 = vrot.lane.b32.xlu0 %v5906, 17
  %v5920 = vpop.permute.xlu0 %5919
  %5921 = vrot.lane.b32.xlu0 %v5909, 17
  %v5922 = vpop.permute.xlu0 %5921
  %5923 = vrot.lane.b32.xlu0 %v5910, 17
  %v5924 = vpop.permute.xlu0 %5923
  %v5925 = vsel %vm761, %v5918, %v5920
  %v5926 = vsel %vm761, %v5922, %v5924
  %5933 = vst.msk [vmem:[#allocation2] sm:$0xff] %vm770, %v5918
  %5934 = vst [vmem:[#allocation2 + $0x8] sm:$0xff] %v5925
  %5935 = vst.msk [vmem:[#allocation2 + $0x10] sm:$0xff] %vm761, %v5920
  %5936 = vst.msk [vmem:[#allocation2 + $0x30] sm:$0xff] %vm770, %v5922
  %5937 = vst [vmem:[#allocation2 + $0x38] sm:$0xff] %v5926
  %5938 = vst.msk [vmem:[#allocation2 + $0x40] sm:$0xff] %vm761, %v5924
  %5943 = vrot.lane.b32.xlu0 %v5907, 17
  %v5944 = vpop.permute.xlu0 %5943
  %5945 = vrot.lane.b32.xlu0 %v5908, 17
  %v5946 = vpop.permute.xlu0 %5945
  %5947 = vrot.lane.b32.xlu0 %v5911, 17
  %v5948 = vpop.permute.xlu0 %5947
  %5949 = vrot.lane.b32.xlu0 %v5912, 17
  %v5950 = vpop.permute.xlu0 %5949
  %v5951 = vsel %vm761, %v5944, %v5946
  %v5952 = vsel %vm761, %v5948, %v5950
  %5959 = vst.msk [vmem:[#allocation2 + $0x18] sm:$0xff] %vm770, %v5944
  %5960 = vst [vmem:[#allocation2 + $0x20] sm:$0xff] %v5951
  %5961 = vst.msk [vmem:[#allocation2 + $0x28] sm:$0xff] %vm761, %v5946
  %5962 = vst.msk [vmem:[#allocation2 + $0x48] sm:$0xff] %vm770, %v5948
  %5963 = vst [vmem:[#allocation2 + $0x50] sm:$0xff] %v5952
  %5964 = vst.msk [vmem:[#allocation2 + $0x58] sm:$0xff] %vm761, %v5950
  %v5965 = vld [vmem:[#allocation2] sm:$0xff]
  %v5966 = vld [vmem:[#allocation2 + $0x8] sm:$0xff]
  %v5967 = vld [vmem:[#allocation2 + $0x10] sm:$0xff]
  %v5968 = vld [vmem:[#allocation2 + $0x18] sm:$0xff]
  %v5969 = vld [vmem:[#allocation2 + $0x20] sm:$0xff]
  %v5970 = vld [vmem:[#allocation2 + $0x28] sm:$0xff]
  %v5971 = vld [vmem:[#allocation2 + $0x30] sm:$0xff]
  %v5972 = vld [vmem:[#allocation2 + $0x38] sm:$0xff]
  %v5973 = vld [vmem:[#allocation2 + $0x40] sm:$0xff]
  %v5974 = vld [vmem:[#allocation2 + $0x48] sm:$0xff]
  %v5975 = vld [vmem:[#allocation2 + $0x50] sm:$0xff]
  %v5976 = vld [vmem:[#allocation2 + $0x58] sm:$0xff]
  %5977 = vst [vmem:[#allocation3] sm:$0xff] %v5965
  %5978 = vst [vmem:[#allocation3 + $0x8] sm:$0xff] %v5966
  %5979 = vst [vmem:[#allocation3 + $0x20] sm:$0xff] %v5971
  %5980 = vst [vmem:[#allocation3 + $0x28] sm:$0xff] %v5972
  %5981 = vst [vmem:[#allocation3 + $0x10] sm:$0xff] %v5968
  %5982 = vst [vmem:[#allocation3 + $0x18] sm:$0xff] %v5969
  %5983 = vst [vmem:[#allocation3 + $0x30] sm:$0xff] %v5974
  %5984 = vst [vmem:[#allocation3 + $0x38] sm:$0xff] %v5975
  %5991 = vrot.lane.b32.xlu0 %v5965, 127
  %v5992 = vpop.permute.xlu0 %5991
  %5993 = vrot.lane.b32.xlu0 %v5966, 127
  %v5994 = vpop.permute.xlu0 %5993
  %5995 = vrot.lane.b32.xlu0 %v5967, 127
  %v5996 = vpop.permute.xlu0 %5995
  %5997 = vrot.lane.b32.xlu0 %v5971, 127
  %v5998 = vpop.permute.xlu0 %5997
  %5999 = vrot.lane.b32.xlu0 %v5972, 127
  %v6000 = vpop.permute.xlu0 %5999
  %6001 = vrot.lane.b32.xlu0 %v5973, 127
  %v6002 = vpop.permute.xlu0 %6001
  %v6003 = vsel %vm77, %v5992, %v5994
  %v6004 = vsel %vm77, %v5994, %v5996
  %v6005 = vsel %vm77, %v5998, %v6000
  %v6006 = vsel %vm77, %v6000, %v6002
  %6011 = vst [vmem:[#allocation3 + $0x40] sm:$0xff] %v6003
  %6012 = vst [vmem:[#allocation3 + $0x48] sm:$0xff] %v6004
  %6013 = vst [vmem:[#allocation3 + $0x60] sm:$0xff] %v6005
  %6014 = vst [vmem:[#allocation3 + $0x68] sm:$0xff] %v6006
  %6021 = vrot.lane.b32.xlu0 %v5968, 127
  %v6022 = vpop.permute.xlu0 %6021
  %6023 = vrot.lane.b32.xlu0 %v5969, 127
  %v6024 = vpop.permute.xlu0 %6023
  %6025 = vrot.lane.b32.xlu0 %v5970, 127
  %v6026 = vpop.permute.xlu0 %6025
  %6027 = vrot.lane.b32.xlu0 %v5974, 127
  %v6028 = vpop.permute.xlu0 %6027
  %6029 = vrot.lane.b32.xlu0 %v5975, 127
  %v6030 = vpop.permute.xlu0 %6029
  %6031 = vrot.lane.b32.xlu0 %v5976, 127
  %v6032 = vpop.permute.xlu0 %6031
  %v6033 = vsel %vm77, %v6022, %v6024
  %v6034 = vsel %vm77, %v6024, %v6026
  %v6035 = vsel %vm77, %v6028, %v6030
  %v6036 = vsel %vm77, %v6030, %v6032
  %6041 = vst [vmem:[#allocation3 + $0x50] sm:$0xff] %v6033
  %6042 = vst [vmem:[#allocation3 + $0x58] sm:$0xff] %v6034
  %6043 = vst [vmem:[#allocation3 + $0x70] sm:$0xff] %v6035
  %6044 = vst [vmem:[#allocation3 + $0x78] sm:$0xff] %v6036
  %6045 = vrot.lane.b32.xlu0 %v5965, 126
  %v6046 = vpop.permute.xlu0 %6045
  %6047 = vrot.lane.b32.xlu0 %v5966, 126
  %v6048 = vpop.permute.xlu0 %6047
  %6049 = vrot.lane.b32.xlu0 %v5967, 126
  %v6050 = vpop.permute.xlu0 %6049
  %6051 = vrot.lane.b32.xlu0 %v5971, 126
  %v6052 = vpop.permute.xlu0 %6051
  %6053 = vrot.lane.b32.xlu0 %v5972, 126
  %v6054 = vpop.permute.xlu0 %6053
  %6055 = vrot.lane.b32.xlu0 %v5973, 126
  %v6056 = vpop.permute.xlu0 %6055
  %v6057 = vsel %vm132, %v6046, %v6048
  %v6058 = vsel %vm132, %v6048, %v6050
  %v6059 = vsel %vm132, %v6052, %v6054
  %v6060 = vsel %vm132, %v6054, %v6056
  %6065 = vst [vmem:[#allocation3 + $0x80] sm:$0xff] %v6057
  %6066 = vst [vmem:[#allocation3 + $0x88] sm:$0xff] %v6058
  %6067 = vst [vmem:[#allocation3 + $0xa0] sm:$0xff] %v6059
  %6068 = vst [vmem:[#allocation3 + $0xa8] sm:$0xff] %v6060
  %6069 = vrot.lane.b32.xlu0 %v5968, 126
  %v6070 = vpop.permute.xlu0 %6069
  %6071 = vrot.lane.b32.xlu0 %v5969, 126
  %v6072 = vpop.permute.xlu0 %6071
  %6073 = vrot.lane.b32.xlu0 %v5970, 126
  %v6074 = vpop.permute.xlu0 %6073
  %6075 = vrot.lane.b32.xlu0 %v5974, 126
  %v6076 = vpop.permute.xlu0 %6075
  %6077 = vrot.lane.b32.xlu0 %v5975, 126
  %v6078 = vpop.permute.xlu0 %6077
  %6079 = vrot.lane.b32.xlu0 %v5976, 126
  %v6080 = vpop.permute.xlu0 %6079
  %v6081 = vsel %vm132, %v6070, %v6072
  %v6082 = vsel %vm132, %v6072, %v6074
  %v6083 = vsel %vm132, %v6076, %v6078
  %v6084 = vsel %vm132, %v6078, %v6080
  %6089 = vst [vmem:[#allocation3 + $0x90] sm:$0xff] %v6081
  %6090 = vst [vmem:[#allocation3 + $0x98] sm:$0xff] %v6082
  %6091 = vst [vmem:[#allocation3 + $0xb0] sm:$0xff] %v6083
  %6092 = vst [vmem:[#allocation3 + $0xb8] sm:$0xff] %v6084
  %6093 = vrot.lane.b32.xlu0 %v5965, 112
  %v6094 = vpop.permute.xlu0 %6093
  %6095 = vrot.lane.b32.xlu0 %v5966, 112
  %v6096 = vpop.permute.xlu0 %6095
  %6097 = vrot.lane.b32.xlu0 %v5967, 112
  %v6098 = vpop.permute.xlu0 %6097
  %6099 = vrot.lane.b32.xlu0 %v5971, 112
  %v6100 = vpop.permute.xlu0 %6099
  %6101 = vrot.lane.b32.xlu0 %v5972, 112
  %v6102 = vpop.permute.xlu0 %6101
  %6103 = vrot.lane.b32.xlu0 %v5973, 112
  %v6104 = vpop.permute.xlu0 %6103
  %v6105 = vsel %vm181, %v6094, %v6096
  %v6106 = vsel %vm181, %v6096, %v6098
  %v6107 = vsel %vm181, %v6100, %v6102
  %v6108 = vsel %vm181, %v6102, %v6104
  %6113 = vst [vmem:[#allocation3 + $0xc0] sm:$0xff] %v6105
  %6114 = vst [vmem:[#allocation3 + $0xc8] sm:$0xff] %v6106
  %6115 = vst [vmem:[#allocation3 + $0xe0] sm:$0xff] %v6107
  %6116 = vst [vmem:[#allocation3 + $0xe8] sm:$0xff] %v6108
  %6117 = vrot.lane.b32.xlu0 %v5968, 112
  %v6118 = vpop.permute.xlu0 %6117
  %6119 = vrot.lane.b32.xlu0 %v5969, 112
  %v6120 = vpop.permute.xlu0 %6119
  %6121 = vrot.lane.b32.xlu0 %v5970, 112
  %v6122 = vpop.permute.xlu0 %6121
  %6123 = vrot.lane.b32.xlu0 %v5974, 112
  %v6124 = vpop.permute.xlu0 %6123
  %6125 = vrot.lane.b32.xlu0 %v5975, 112
  %v6126 = vpop.permute.xlu0 %6125
  %6127 = vrot.lane.b32.xlu0 %v5976, 112
  %v6128 = vpop.permute.xlu0 %6127
  %v6129 = vsel %vm181, %v6118, %v6120
  %v6130 = vsel %vm181, %v6120, %v6122
  %v6131 = vsel %vm181, %v6124, %v6126
  %v6132 = vsel %vm181, %v6126, %v6128
  %6137 = vst [vmem:[#allocation3 + $0xd0] sm:$0xff] %v6129
  %6138 = vst [vmem:[#allocation3 + $0xd8] sm:$0xff] %v6130
  %6139 = vst [vmem:[#allocation3 + $0xf0] sm:$0xff] %v6131
  %6140 = vst [vmem:[#allocation3 + $0xf8] sm:$0xff] %v6132
  %6141 = vrot.lane.b32.xlu0 %v5965, 111
  %v6142 = vpop.permute.xlu0 %6141
  %6143 = vrot.lane.b32.xlu0 %v5966, 111
  %v6144 = vpop.permute.xlu0 %6143
  %6145 = vrot.lane.b32.xlu0 %v5967, 111
  %v6146 = vpop.permute.xlu0 %6145
  %6147 = vrot.lane.b32.xlu0 %v5971, 111
  %v6148 = vpop.permute.xlu0 %6147
  %6149 = vrot.lane.b32.xlu0 %v5972, 111
  %v6150 = vpop.permute.xlu0 %6149
  %6151 = vrot.lane.b32.xlu0 %v5973, 111
  %v6152 = vpop.permute.xlu0 %6151
  %v6153 = vsel %vm230, %v6142, %v6144
  %v6154 = vsel %vm230, %v6144, %v6146
  %v6155 = vsel %vm230, %v6148, %v6150
  %v6156 = vsel %vm230, %v6150, %v6152
  %6161 = vst [vmem:[#allocation3 + $0x100] sm:$0xff] %v6153
  %6162 = vst [vmem:[#allocation3 + $0x108] sm:$0xff] %v6154
  %6163 = vst [vmem:[#allocation3 + $0x120] sm:$0xff] %v6155
  %6164 = vst [vmem:[#allocation3 + $0x128] sm:$0xff] %v6156
  %6165 = vrot.lane.b32.xlu0 %v5968, 111
  %v6166 = vpop.permute.xlu0 %6165
  %6167 = vrot.lane.b32.xlu0 %v5969, 111
  %v6168 = vpop.permute.xlu0 %6167
  %6169 = vrot.lane.b32.xlu0 %v5970, 111
  %v6170 = vpop.permute.xlu0 %6169
  %6171 = vrot.lane.b32.xlu0 %v5974, 111
  %v6172 = vpop.permute.xlu0 %6171
  %6173 = vrot.lane.b32.xlu0 %v5975, 111
  %v6174 = vpop.permute.xlu0 %6173
  %6175 = vrot.lane.b32.xlu0 %v5976, 111
  %v6176 = vpop.permute.xlu0 %6175
  %v6177 = vsel %vm230, %v6166, %v6168
  %v6178 = vsel %vm230, %v6168, %v6170
  %v6179 = vsel %vm230, %v6172, %v6174
  %v6180 = vsel %vm230, %v6174, %v6176
  %6185 = vst [vmem:[#allocation3 + $0x110] sm:$0xff] %v6177
  %6186 = vst [vmem:[#allocation3 + $0x118] sm:$0xff] %v6178
  %6187 = vst [vmem:[#allocation3 + $0x130] sm:$0xff] %v6179
  %6188 = vst [vmem:[#allocation3 + $0x138] sm:$0xff] %v6180
  %6189 = vrot.lane.b32.xlu0 %v5965, 110
  %v6190 = vpop.permute.xlu0 %6189
  %6191 = vrot.lane.b32.xlu0 %v5966, 110
  %v6192 = vpop.permute.xlu0 %6191
  %6193 = vrot.lane.b32.xlu0 %v5967, 110
  %v6194 = vpop.permute.xlu0 %6193
  %6195 = vrot.lane.b32.xlu0 %v5971, 110
  %v6196 = vpop.permute.xlu0 %6195
  %6197 = vrot.lane.b32.xlu0 %v5972, 110
  %v6198 = vpop.permute.xlu0 %6197
  %6199 = vrot.lane.b32.xlu0 %v5973, 110
  %v6200 = vpop.permute.xlu0 %6199
  %v6201 = vsel %vm279, %v6190, %v6192
  %v6202 = vsel %vm279, %v6192, %v6194
  %v6203 = vsel %vm279, %v6196, %v6198
  %v6204 = vsel %vm279, %v6198, %v6200
  %6209 = vst [vmem:[#allocation3 + $0x140] sm:$0xff] %v6201
  %6210 = vst [vmem:[#allocation3 + $0x148] sm:$0xff] %v6202
  %6211 = vst [vmem:[#allocation3 + $0x160] sm:$0xff] %v6203
  %6212 = vst [vmem:[#allocation3 + $0x168] sm:$0xff] %v6204
  %6213 = vrot.lane.b32.xlu0 %v5968, 110
  %v6214 = vpop.permute.xlu0 %6213
  %6215 = vrot.lane.b32.xlu0 %v5969, 110
  %v6216 = vpop.permute.xlu0 %6215
  %6217 = vrot.lane.b32.xlu0 %v5970, 110
  %v6218 = vpop.permute.xlu0 %6217
  %6219 = vrot.lane.b32.xlu0 %v5974, 110
  %v6220 = vpop.permute.xlu0 %6219
  %6221 = vrot.lane.b32.xlu0 %v5975, 110
  %v6222 = vpop.permute.xlu0 %6221
  %6223 = vrot.lane.b32.xlu0 %v5976, 110
  %v6224 = vpop.permute.xlu0 %6223
  %v6225 = vsel %vm279, %v6214, %v6216
  %v6226 = vsel %vm279, %v6216, %v6218
  %v6227 = vsel %vm279, %v6220, %v6222
  %v6228 = vsel %vm279, %v6222, %v6224
  %6233 = vst [vmem:[#allocation3 + $0x150] sm:$0xff] %v6225
  %6234 = vst [vmem:[#allocation3 + $0x158] sm:$0xff] %v6226
  %6235 = vst [vmem:[#allocation3 + $0x170] sm:$0xff] %v6227
  %6236 = vst [vmem:[#allocation3 + $0x178] sm:$0xff] %v6228
  %6237 = vrot.lane.b32.xlu0 %v5965, 96
  %v6238 = vpop.permute.xlu0 %6237
  %6239 = vrot.lane.b32.xlu0 %v5966, 96
  %v6240 = vpop.permute.xlu0 %6239
  %6241 = vrot.lane.b32.xlu0 %v5967, 96
  %v6242 = vpop.permute.xlu0 %6241
  %6243 = vrot.lane.b32.xlu0 %v5971, 96
  %v6244 = vpop.permute.xlu0 %6243
  %6245 = vrot.lane.b32.xlu0 %v5972, 96
  %v6246 = vpop.permute.xlu0 %6245
  %6247 = vrot.lane.b32.xlu0 %v5973, 96
  %v6248 = vpop.permute.xlu0 %6247
  %v6249 = vsel %vm328, %v6238, %v6240
  %v6250 = vsel %vm328, %v6240, %v6242
  %v6251 = vsel %vm328, %v6244, %v6246
  %v6252 = vsel %vm328, %v6246, %v6248
  %6257 = vst [vmem:[#allocation3 + $0x180] sm:$0xff] %v6249
  %6258 = vst [vmem:[#allocation3 + $0x188] sm:$0xff] %v6250
  %6259 = vst [vmem:[#allocation3 + $0x1a0] sm:$0xff] %v6251
  %6260 = vst [vmem:[#allocation3 + $0x1a8] sm:$0xff] %v6252
  %6261 = vrot.lane.b32.xlu0 %v5968, 96
  %v6262 = vpop.permute.xlu0 %6261
  %6263 = vrot.lane.b32.xlu0 %v5969, 96
  %v6264 = vpop.permute.xlu0 %6263
  %6265 = vrot.lane.b32.xlu0 %v5970, 96
  %v6266 = vpop.permute.xlu0 %6265
  %6267 = vrot.lane.b32.xlu0 %v5974, 96
  %v6268 = vpop.permute.xlu0 %6267
  %6269 = vrot.lane.b32.xlu0 %v5975, 96
  %v6270 = vpop.permute.xlu0 %6269
  %6271 = vrot.lane.b32.xlu0 %v5976, 96
  %v6272 = vpop.permute.xlu0 %6271
  %v6273 = vsel %vm328, %v6262, %v6264
  %v6274 = vsel %vm328, %v6264, %v6266
  %v6275 = vsel %vm328, %v6268, %v6270
  %v6276 = vsel %vm328, %v6270, %v6272
  %6281 = vst [vmem:[#allocation3 + $0x190] sm:$0xff] %v6273
  %6282 = vst [vmem:[#allocation3 + $0x198] sm:$0xff] %v6274
  %6283 = vst [vmem:[#allocation3 + $0x1b0] sm:$0xff] %v6275
  %6284 = vst [vmem:[#allocation3 + $0x1b8] sm:$0xff] %v6276
  %6285 = vrot.lane.b32.xlu0 %v5965, 95
  %v6286 = vpop.permute.xlu0 %6285
  %6287 = vrot.lane.b32.xlu0 %v5966, 95
  %v6288 = vpop.permute.xlu0 %6287
  %6289 = vrot.lane.b32.xlu0 %v5967, 95
  %v6290 = vpop.permute.xlu0 %6289
  %6291 = vrot.lane.b32.xlu0 %v5971, 95
  %v6292 = vpop.permute.xlu0 %6291
  %6293 = vrot.lane.b32.xlu0 %v5972, 95
  %v6294 = vpop.permute.xlu0 %6293
  %6295 = vrot.lane.b32.xlu0 %v5973, 95
  %v6296 = vpop.permute.xlu0 %6295
  %v6297 = vsel %vm377, %v6286, %v6288
  %v6298 = vsel %vm377, %v6288, %v6290
  %v6299 = vsel %vm377, %v6292, %v6294
  %v6300 = vsel %vm377, %v6294, %v6296
  %6305 = vst [vmem:[#allocation3 + $0x1c0] sm:$0xff] %v6297
  %6306 = vst [vmem:[#allocation3 + $0x1c8] sm:$0xff] %v6298
  %6307 = vst [vmem:[#allocation3 + $0x1e0] sm:$0xff] %v6299
  %6308 = vst [vmem:[#allocation3 + $0x1e8] sm:$0xff] %v6300
  %6309 = vrot.lane.b32.xlu0 %v5968, 95
  %v6310 = vpop.permute.xlu0 %6309
  %6311 = vrot.lane.b32.xlu0 %v5969, 95
  %v6312 = vpop.permute.xlu0 %6311
  %6313 = vrot.lane.b32.xlu0 %v5970, 95
  %v6314 = vpop.permute.xlu0 %6313
  %6315 = vrot.lane.b32.xlu0 %v5974, 95
  %v6316 = vpop.permute.xlu0 %6315
  %6317 = vrot.lane.b32.xlu0 %v5975, 95
  %v6318 = vpop.permute.xlu0 %6317
  %6319 = vrot.lane.b32.xlu0 %v5976, 95
  %v6320 = vpop.permute.xlu0 %6319
  %v6321 = vsel %vm377, %v6310, %v6312
  %v6322 = vsel %vm377, %v6312, %v6314
  %v6323 = vsel %vm377, %v6316, %v6318
  %v6324 = vsel %vm377, %v6318, %v6320
  %6329 = vst [vmem:[#allocation3 + $0x1d0] sm:$0xff] %v6321
  %6330 = vst [vmem:[#allocation3 + $0x1d8] sm:$0xff] %v6322
  %6331 = vst [vmem:[#allocation3 + $0x1f0] sm:$0xff] %v6323
  %6332 = vst [vmem:[#allocation3 + $0x1f8] sm:$0xff] %v6324
  %6333 = vrot.lane.b32.xlu0 %v5965, 94
  %v6334 = vpop.permute.xlu0 %6333
  %6335 = vrot.lane.b32.xlu0 %v5966, 94
  %v6336 = vpop.permute.xlu0 %6335
  %6337 = vrot.lane.b32.xlu0 %v5967, 94
  %v6338 = vpop.permute.xlu0 %6337
  %6339 = vrot.lane.b32.xlu0 %v5971, 94
  %v6340 = vpop.permute.xlu0 %6339
  %6341 = vrot.lane.b32.xlu0 %v5972, 94
  %v6342 = vpop.permute.xlu0 %6341
  %6343 = vrot.lane.b32.xlu0 %v5973, 94
  %v6344 = vpop.permute.xlu0 %6343
  %v6345 = vsel %vm426, %v6334, %v6336
  %v6346 = vsel %vm426, %v6336, %v6338
  %v6347 = vsel %vm426, %v6340, %v6342
  %v6348 = vsel %vm426, %v6342, %v6344
  %6353 = vst [vmem:[#allocation3 + $0x200] sm:$0xff] %v6345
  %6354 = vst [vmem:[#allocation3 + $0x208] sm:$0xff] %v6346
  %6355 = vst [vmem:[#allocation3 + $0x220] sm:$0xff] %v6347
  %6356 = vst [vmem:[#allocation3 + $0x228] sm:$0xff] %v6348
  %6357 = vrot.lane.b32.xlu0 %v5968, 94
  %v6358 = vpop.permute.xlu0 %6357
  %6359 = vrot.lane.b32.xlu0 %v5969, 94
  %v6360 = vpop.permute.xlu0 %6359
  %6361 = vrot.lane.b32.xlu0 %v5970, 94
  %v6362 = vpop.permute.xlu0 %6361
  %6363 = vrot.lane.b32.xlu0 %v5974, 94
  %v6364 = vpop.permute.xlu0 %6363
  %6365 = vrot.lane.b32.xlu0 %v5975, 94
  %v6366 = vpop.permute.xlu0 %6365
  %6367 = vrot.lane.b32.xlu0 %v5976, 94
  %v6368 = vpop.permute.xlu0 %6367
  %v6369 = vsel %vm426, %v6358, %v6360
  %v6370 = vsel %vm426, %v6360, %v6362
  %v6371 = vsel %vm426, %v6364, %v6366
  %v6372 = vsel %vm426, %v6366, %v6368
  %6377 = vst [vmem:[#allocation3 + $0x210] sm:$0xff] %v6369
  %6378 = vst [vmem:[#allocation3 + $0x218] sm:$0xff] %v6370
  %6379 = vst [vmem:[#allocation3 + $0x230] sm:$0xff] %v6371
  %6380 = vst [vmem:[#allocation3 + $0x238] sm:$0xff] %v6372
  %s6381 = scalar_lea.vmem %s1, 256
  %v6382 = vld [vmem:[%s6381] sm:$0xff]
  %v6383 = vld [vmem:[%s6381 + $0x8] sm:$0xff]
  %v6384 = vld [vmem:[%s6381 + $0x10] sm:$0xff]
  %v6385 = vld [vmem:[%s6381 + $0x18] sm:$0xff]
  %v6386 = vld [vmem:[#allocation3] sm:$0xff]
  %v6387 = vld [vmem:[#allocation3 + $0x8] sm:$0xff]
  %v6388 = vld [vmem:[#allocation3 + $0x10] sm:$0xff]
  %v6389 = vld [vmem:[#allocation3 + $0x18] sm:$0xff]
  %v6390 = vld [vmem:[#allocation3 + $0x20] sm:$0xff]
  %v6391 = vld [vmem:[#allocation3 + $0x28] sm:$0xff]
  %v6392 = vld [vmem:[#allocation3 + $0x30] sm:$0xff]
  %v6393 = vld [vmem:[#allocation3 + $0x38] sm:$0xff]
  %v6394 = vld [vmem:[#allocation3 + $0x40] sm:$0xff]
  %v6395 = vld [vmem:[#allocation3 + $0x48] sm:$0xff]
  %v6396 = vld [vmem:[#allocation3 + $0x50] sm:$0xff]
  %v6397 = vld [vmem:[#allocation3 + $0x58] sm:$0xff]
  %v6398 = vld [vmem:[#allocation3 + $0x60] sm:$0xff]
  %v6399 = vld [vmem:[#allocation3 + $0x68] sm:$0xff]
  %v6400 = vld [vmem:[#allocation3 + $0x70] sm:$0xff]
  %v6401 = vld [vmem:[#allocation3 + $0x78] sm:$0xff]
  %v6402 = vld [vmem:[#allocation3 + $0x80] sm:$0xff]
  %v6403 = vld [vmem:[#allocation3 + $0x88] sm:$0xff]
  %v6404 = vld [vmem:[#allocation3 + $0x90] sm:$0xff]
  %v6405 = vld [vmem:[#allocation3 + $0x98] sm:$0xff]
  %v6406 = vld [vmem:[#allocation3 + $0xa0] sm:$0xff]
  %v6407 = vld [vmem:[#allocation3 + $0xa8] sm:$0xff]
  %v6408 = vld [vmem:[#allocation3 + $0xb0] sm:$0xff]
  %v6409 = vld [vmem:[#allocation3 + $0xb8] sm:$0xff]
  %v6410 = vld [vmem:[#allocation3 + $0xc0] sm:$0xff]
  %v6411 = vld [vmem:[#allocation3 + $0xc8] sm:$0xff]
  %v6412 = vld [vmem:[#allocation3 + $0xd0] sm:$0xff]
  %v6413 = vld [vmem:[#allocation3 + $0xd8] sm:$0xff]
  %v6414 = vld [vmem:[#allocation3 + $0xe0] sm:$0xff]
  %v6415 = vld [vmem:[#allocation3 + $0xe8] sm:$0xff]
  %v6416 = vld [vmem:[#allocation3 + $0xf0] sm:$0xff]
  %v6417 = vld [vmem:[#allocation3 + $0xf8] sm:$0xff]
  %v6418 = vld [vmem:[#allocation3 + $0x100] sm:$0xff]
  %v6419 = vld [vmem:[#allocation3 + $0x108] sm:$0xff]
  %v6420 = vld [vmem:[#allocation3 + $0x110] sm:$0xff]
  %v6421 = vld [vmem:[#allocation3 + $0x118] sm:$0xff]
  %v6422 = vld [vmem:[#allocation3 + $0x120] sm:$0xff]
  %v6423 = vld [vmem:[#allocation3 + $0x128] sm:$0xff]
  %v6424 = vld [vmem:[#allocation3 + $0x130] sm:$0xff]
  %v6425 = vld [vmem:[#allocation3 + $0x138] sm:$0xff]
  %v6426 = vld [vmem:[#allocation3 + $0x140] sm:$0xff]
  %v6427 = vld [vmem:[#allocation3 + $0x148] sm:$0xff]
  %v6428 = vld [vmem:[#allocation3 + $0x150] sm:$0xff]
  %v6429 = vld [vmem:[#allocation3 + $0x158] sm:$0xff]
  %v6430 = vld [vmem:[#allocation3 + $0x160] sm:$0xff]
  %v6431 = vld [vmem:[#allocation3 + $0x168] sm:$0xff]
  %v6432 = vld [vmem:[#allocation3 + $0x170] sm:$0xff]
  %v6433 = vld [vmem:[#allocation3 + $0x178] sm:$0xff]
  %v6434 = vld [vmem:[#allocation3 + $0x180] sm:$0xff]
  %v6435 = vld [vmem:[#allocation3 + $0x188] sm:$0xff]
  %v6436 = vld [vmem:[#allocation3 + $0x190] sm:$0xff]
  %v6437 = vld [vmem:[#allocation3 + $0x198] sm:$0xff]
  %v6438 = vld [vmem:[#allocation3 + $0x1a0] sm:$0xff]
  %v6439 = vld [vmem:[#allocation3 + $0x1a8] sm:$0xff]
  %v6440 = vld [vmem:[#allocation3 + $0x1b0] sm:$0xff]
  %v6441 = vld [vmem:[#allocation3 + $0x1b8] sm:$0xff]
  %v6442 = vld [vmem:[#allocation3 + $0x1c0] sm:$0xff]
  %v6443 = vld [vmem:[#allocation3 + $0x1c8] sm:$0xff]
  %v6444 = vld [vmem:[#allocation3 + $0x1d0] sm:$0xff]
  %v6445 = vld [vmem:[#allocation3 + $0x1d8] sm:$0xff]
  %v6446 = vld [vmem:[#allocation3 + $0x1e0] sm:$0xff]
  %v6447 = vld [vmem:[#allocation3 + $0x1e8] sm:$0xff]
  %v6448 = vld [vmem:[#allocation3 + $0x1f0] sm:$0xff]
  %v6449 = vld [vmem:[#allocation3 + $0x1f8] sm:$0xff]
  %v6450 = vld [vmem:[#allocation3 + $0x200] sm:$0xff]
  %v6451 = vld [vmem:[#allocation3 + $0x208] sm:$0xff]
  %v6452 = vld [vmem:[#allocation3 + $0x210] sm:$0xff]
  %v6453 = vld [vmem:[#allocation3 + $0x218] sm:$0xff]
  %v6454 = vld [vmem:[#allocation3 + $0x220] sm:$0xff]
  %v6455 = vld [vmem:[#allocation3 + $0x228] sm:$0xff]
  %v6456 = vld [vmem:[#allocation3 + $0x230] sm:$0xff]
  %v6457 = vld [vmem:[#allocation3 + $0x238] sm:$0xff]
  %s6458 = scalar_lea.vmem %s2, 128
  %v6459 = vld [vmem:[%s6458] sm:$0xff]
  %v6460 = vld [vmem:[%s6458 + $0x8] sm:$0xff]
  %6462 = vset.pattern.permute.xlu0 0
  %6463 = vperm.xlu0 %6462, %v6459
  %v6464 = vpop.permute.xlu0 %6463
  %6467 = vset.pattern.permute.xlu0 0
  %6468 = vperm.xlu0 %6467, %v6460
  %v6469 = vpop.permute.xlu0 %6468
  %v6472 = vsel %vm551, %v6383, 0
  %v6475 = vsel %vm551, %v6385, 0
  %6477 = vmatprep.subr.mxu0 %v6387
  %6478 = vmatpush1.msra.mxu0 %v6386
  %6479 = vmatprep.subr.mxu0 %v6391
  %6480 = vmatpush1.msra.mxu0 %v6390
  %6481 = vmatprep.subr.mxu0 %v6395
  %6482 = vmatpush1.msra.mxu0 %v6394
  %6483 = vmatprep.subr.mxu0 %v6399
  %6484 = vmatpush1.msra.mxu0 %v6398
  %6485 = vmatprep.subr.mxu0 %v6403
  %6486 = vmatpush1.msra.mxu0 %v6402
  %6487 = vmatprep.subr.mxu0 %v6407
  %6488 = vmatpush1.msra.mxu0 %v6406
  %6489 = vmatprep.subr.mxu0 %v6411
  %6490 = vmatpush1.msra.mxu0 %v6410
  %6491 = vmatprep.subr.mxu0 %v6415
  %6492 = vmatpush1.msra.mxu0 %v6414
  %6493 = vmatprep.subr.mxu0 %v6419
  %6494 = vmatpush1.msra.mxu0 %v6418
  %6495 = vmatprep.subr.mxu0 %v6423
  %6496 = vmatpush1.msra.mxu0 %v6422
  %6497 = vmatprep.subr.mxu0 %v6427
  %6498 = vmatpush1.msra.mxu0 %v6426
  %6499 = vmatprep.subr.mxu0 %v6431
  %6500 = vmatpush1.msra.mxu0 %v6430
  %6501 = vmatprep.subr.mxu0 %v6435
  %6502 = vmatpush1.msra.mxu0 %v6434
  %6503 = vmatprep.subr.mxu0 %v6439
  %6504 = vmatpush1.msra.mxu0 %v6438
  %6505 = vmatprep.subr.mxu0 %v6443
  %6506 = vmatpush1.msra.mxu0 %v6442
  %6507 = vmatprep.subr.mxu0 %v6447
  %6508 = vmatpush1.msra.mxu0 %v6446
  %6509 = vmatprep.subr.mxu0 %v6451
  %6510 = vmatpush1.msra.mxu0 %v6450
  %6511 = vmatprep.subr.mxu0 %v6455
  %6512 = vmatpush1.msra.mxu0 %v6454
  %6513 = vmatprep.subr.mxu0 0.0
  %6514 = vmatpush1.msra.mxu0 0.0
  %6515 = vmatprep.subr.mxu0 0.0
  %6516 = vmatpush1.msra.mxu0 0.0
  %6517 = vmatprep.subr.mxu0 0.0
  %6518 = vmatpush1.msra.mxu0 0.0
  %6519 = vmatprep.subr.mxu0 0.0
  %6520 = vmatpush1.msra.mxu0 0.0
  %6521 = vmatprep.subr.mxu0 0.0
  %6522 = vmatpush1.msra.mxu0 0.0
  %6523 = vmatprep.subr.mxu0 0.0
  %6524 = vmatpush1.msra.mxu0 0.0
  %6525 = vmatprep.subr.mxu0 0.0
  %6526 = vmatpush1.msra.mxu0 0.0
  %6527 = vmatprep.subr.mxu0 0.0
  %6528 = vmatpush1.msra.mxu0 0.0
  %6529 = vmatprep.subr.mxu0 0.0
  %6530 = vmatpush1.msra.mxu0 0.0
  %6531 = vmatprep.subr.mxu0 0.0
  %6532 = vmatpush1.msra.mxu0 0.0
  %6533 = vmatprep.subr.mxu0 0.0
  %6534 = vmatpush1.msra.mxu0 0.0
  %6535 = vmatprep.subr.mxu0 0.0
  %6536 = vmatpush1.msra.mxu0 0.0
  %6537 = vmatprep.subr.mxu0 0.0
  %6538 = vmatpush1.msra.mxu0 0.0
  %6539 = vmatprep.subr.mxu0 0.0
  %6540 = vmatpush1.msra.mxu0 0.0
  %6541 = vmatprep.mubr.f32.mxu0 %v6472
  %6542 = vmatmul.mubr.f32.gmra.mrb[0].mxu0 %v6382
  %v6543 = vpop.f32.mrb[0].mxu0
  %v6544 = vadd.f32 %v6464, %v6543
  %v6545 = vpop.f32.mrb[0].mxu0
  %v6546 = vadd.f32 %v6464, %v6545
  %6547 = vmatprep.mubr.f32.mxu0 %v6475
  %6548 = vmatmul.mubr.f32.gmra.mrb[0].mxu0 %v6384
  %v6549 = vpop.f32.mrb[0].mxu0
  %v6550 = vadd.f32 %v6469, %v6549
  %v6551 = vpop.f32.mrb[0].mxu0
  %v6552 = vadd.f32 %v6469, %v6551
  %6553 = vdwg.mxu0
  %6554 = vmatprep.subr.mxu0 %v6389
  %6555 = vmatpush1.msra.mxu0 %v6388
  %6556 = vmatprep.subr.mxu0 %v6393
  %6557 = vmatpush1.msra.mxu0 %v6392
  %6558 = vmatprep.subr.mxu0 %v6397
  %6559 = vmatpush1.msra.mxu0 %v6396
  %6560 = vmatprep.subr.mxu0 %v6401
  %6561 = vmatpush1.msra.mxu0 %v6400
  %6562 = vmatprep.subr.mxu0 %v6405
  %6563 = vmatpush1.msra.mxu0 %v6404
  %6564 = vmatprep.subr.mxu0 %v6409
  %6565 = vmatpush1.msra.mxu0 %v6408
  %6566 = vmatprep.subr.mxu0 %v6413
  %6567 = vmatpush1.msra.mxu0 %v6412
  %6568 = vmatprep.subr.mxu0 %v6417
  %6569 = vmatpush1.msra.mxu0 %v6416
  %6570 = vmatprep.subr.mxu0 %v6421
  %6571 = vmatpush1.msra.mxu0 %v6420
  %6572 = vmatprep.subr.mxu0 %v6425
  %6573 = vmatpush1.msra.mxu0 %v6424
  %6574 = vmatprep.subr.mxu0 %v6429
  %6575 = vmatpush1.msra.mxu0 %v6428
  %6576 = vmatprep.subr.mxu0 %v6433
  %6577 = vmatpush1.msra.mxu0 %v6432
  %6578 = vmatprep.subr.mxu0 %v6437
  %6579 = vmatpush1.msra.mxu0 %v6436
  %6580 = vmatprep.subr.mxu0 %v6441
  %6581 = vmatpush1.msra.mxu0 %v6440
  %6582 = vmatprep.subr.mxu0 %v6445
  %6583 = vmatpush1.msra.mxu0 %v6444
  %6584 = vmatprep.subr.mxu0 %v6449
  %6585 = vmatpush1.msra.mxu0 %v6448
  %6586 = vmatprep.subr.mxu0 %v6453
  %6587 = vmatpush1.msra.mxu0 %v6452
  %6588 = vmatprep.subr.mxu0 %v6457
  %6589 = vmatpush1.msra.mxu0 %v6456
  %6590 = vmatprep.subr.mxu0 0.0
  %6591 = vmatpush1.msra.mxu0 0.0
  %6592 = vmatprep.subr.mxu0 0.0
  %6593 = vmatpush1.msra.mxu0 0.0
  %6594 = vmatprep.subr.mxu0 0.0
  %6595 = vmatpush1.msra.mxu0 0.0
  %6596 = vmatprep.subr.mxu0 0.0
  %6597 = vmatpush1.msra.mxu0 0.0
  %6598 = vmatprep.subr.mxu0 0.0
  %6599 = vmatpush1.msra.mxu0 0.0
  %6600 = vmatprep.subr.mxu0 0.0
  %6601 = vmatpush1.msra.mxu0 0.0
  %6602 = vmatprep.subr.mxu0 0.0
  %6603 = vmatpush1.msra.mxu0 0.0
  %6604 = vmatprep.subr.mxu0 0.0
  %6605 = vmatpush1.msra.mxu0 0.0
  %6606 = vmatprep.subr.mxu0 0.0
  %6607 = vmatpush1.msra.mxu0 0.0
  %6608 = vmatprep.subr.mxu0 0.0
  %6609 = vmatpush1.msra.mxu0 0.0
  %6610 = vmatprep.subr.mxu0 0.0
  %6611 = vmatpush1.msra.mxu0 0.0
  %6612 = vmatprep.subr.mxu0 0.0
  %6613 = vmatpush1.msra.mxu0 0.0
  %6614 = vmatprep.subr.mxu0 0.0
  %6615 = vmatpush1.msra.mxu0 0.0
  %6616 = vmatprep.subr.mxu0 0.0
  %6617 = vmatpush1.msra.mxu0 0.0
  %6618 = vmatprep.mubr.f32.mxu0 %v6472
  %6619 = vmatmul.mubr.f32.gmra.mrb[0].mxu0 %v6382
  %v6620 = vpop.f32.mrb[0].mxu0
  %v6621 = vadd.f32 %v6464, %v6620
  %v6622 = vpop.f32.mrb[0].mxu0
  %v6623 = vadd.f32 %v6464, %v6622
  %6624 = vmatprep.mubr.f32.mxu0 %v6475
  %6625 = vmatmul.mubr.f32.gmra.mrb[0].mxu0 %v6384
  %v6626 = vpop.f32.mrb[0].mxu0
  %v6627 = vadd.f32 %v6469, %v6626
  %v6628 = vpop.f32.mrb[0].mxu0
  %v6629 = vadd.f32 %v6469, %v6628
  %6630 = vdwg.mxu0
  %v6631 = vadd.f32 %v6544, %v5171
  %v6632 = vadd.f32 %v6546, %v5172
  %v6633 = vadd.f32 %v6621, %v5173
  %v6634 = vadd.f32 %v6623, %v5174
  %v6635 = vadd.f32 %v6550, %v5175
  %v6636 = vadd.f32 %v6552, %v5176
  %v6637 = vadd.f32 %v6627, %v5177
  %v6638 = vadd.f32 %v6629, %v5178
  %v6639 = vmax.f32 %v6631, 0.0
  %v6640 = vmax.f32 %v6632, 0.0
  %v6641 = vmax.f32 %v6633, 0.0
  %v6642 = vmax.f32 %v6634, 0.0
  %v6643 = vmax.f32 %v6635, 0.0
  %v6644 = vmax.f32 %v6636, 0.0
  %v6645 = vmax.f32 %v6637, 0.0
  %v6646 = vmax.f32 %v6638, 0.0
  %v6647 = vmul.f32 %v6639, %v724
  %v6648 = vmul.f32 %v6640, %v728
  %v6649 = vmul.f32 %v6641, %v732
  %v6650 = vmul.f32 %v6642, %v736
  %v6651 = vmul.f32 %v6643, %v724
  %v6652 = vmul.f32 %v6644, %v728
  %v6653 = vmul.f32 %v6645, %v732
  %v6654 = vmul.f32 %v6646, %v736
  %v6655 = vld [vmem:[%s5] sm:$0xff]
  %v6656 = vld [vmem:[%s5 + $0x8] sm:$0xff]
  %v6657 = vld [vmem:[%s5 + $0x10] sm:$0xff]
  %v6658 = vld [vmem:[%s5 + $0x18] sm:$0xff]
  %v6659 = vld [vmem:[%s5 + $0x20] sm:$0xff]
  %v6660 = vld [vmem:[%s5 + $0x28] sm:$0xff]
  %v6661 = vld [vmem:[%s5 + $0x30] sm:$0xff]
  %v6662 = vld [vmem:[%s5 + $0x38] sm:$0xff]
  %v6663 = vld [vmem:[%s5 + $0x40] sm:$0xff]
  %v6664 = vld [vmem:[%s5 + $0x48] sm:$0xff]
  %v6665 = vld [vmem:[%s5 + $0x50] sm:$0xff]
  %v6666 = vld [vmem:[%s5 + $0x58] sm:$0xff]
  %v6667 = vld [vmem:[%s5 + $0x60] sm:$0xff]
  %v6668 = vld [vmem:[%s5 + $0x68] sm:$0xff]
  %v6669 = vld [vmem:[%s5 + $0x70] sm:$0xff]
  %v6670 = vld [vmem:[%s5 + $0x78] sm:$0xff]
  %v6671 = vld [vmem:[%s5 + $0x80] sm:$0xff]
  %v6672 = vld [vmem:[%s5 + $0x88] sm:$0xff]
  %v6673 = vld [vmem:[%s5 + $0x90] sm:$0xff]
  %v6674 = vld [vmem:[%s5 + $0x98] sm:$0xff]
  %v6675 = vld [vmem:[%s5 + $0xa0] sm:$0xff]
  %v6676 = vld [vmem:[%s5 + $0xa8] sm:$0xff]
  %v6677 = vld [vmem:[%s5 + $0xb0] sm:$0xff]
  %v6678 = vld [vmem:[%s5 + $0xb8] sm:$0xff]
  %v6679 = vld [vmem:[%s5 + $0xc0] sm:$0xff]
  %v6680 = vld [vmem:[%s5 + $0xc8] sm:$0xff]
  %v6681 = vld [vmem:[%s5 + $0xd0] sm:$0xff]
  %v6682 = vld [vmem:[%s5 + $0xd8] sm:$0xff]
  %v6683 = vld [vmem:[%s5 + $0xe0] sm:$0xff]
  %v6684 = vld [vmem:[%s5 + $0xe8] sm:$0xff]
  %v6685 = vld [vmem:[%s5 + $0xf0] sm:$0xff]
  %v6686 = vld [vmem:[%s5 + $0xf8] sm:$0xff]
  %v6687 = vld [vmem:[%s5 + $0x100] sm:$0xff]
  %v6688 = vld [vmem:[%s5 + $0x108] sm:$0xff]
  %v6689 = vld [vmem:[%s5 + $0x110] sm:$0xff]
  %v6690 = vld [vmem:[%s5 + $0x118] sm:$0xff]
  %v6691 = vld [vmem:[%s5 + $0x120] sm:$0xff]
  %v6692 = vld [vmem:[%s5 + $0x128] sm:$0xff]
  %v6693 = vld [vmem:[%s5 + $0x130] sm:$0xff]
  %v6694 = vld [vmem:[%s5 + $0x138] sm:$0xff]
  %v6695 = vld [vmem:[%s5 + $0x140] sm:$0xff]
  %v6696 = vld [vmem:[%s5 + $0x148] sm:$0xff]
  %v6697 = vld [vmem:[%s5 + $0x150] sm:$0xff]
  %v6698 = vld [vmem:[%s5 + $0x158] sm:$0xff]
  %v6699 = vld [vmem:[%s5 + $0x160] sm:$0xff]
  %v6700 = vld [vmem:[%s5 + $0x168] sm:$0xff]
  %v6701 = vld [vmem:[%s5 + $0x170] sm:$0xff]
  %v6702 = vld [vmem:[%s5 + $0x178] sm:$0xff]
  %v6703 = vld [vmem:[%s5 + $0x180] sm:$0xff]
  %v6704 = vld [vmem:[%s5 + $0x188] sm:$0xff]
  %v6705 = vld [vmem:[%s5 + $0x190] sm:$0xff]
  %v6706 = vld [vmem:[%s5 + $0x198] sm:$0xff]
  %v6707 = vld [vmem:[%s5 + $0x1a0] sm:$0xff]
  %v6708 = vld [vmem:[%s5 + $0x1a8] sm:$0xff]
  %v6709 = vld [vmem:[%s5 + $0x1b0] sm:$0xff]
  %v6710 = vld [vmem:[%s5 + $0x1b8] sm:$0xff]
  %v6711 = vld [vmem:[%s5 + $0x1c0] sm:$0xff]
  %v6712 = vld [vmem:[%s5 + $0x1c8] sm:$0xff]
  %v6713 = vld [vmem:[%s5 + $0x1d0] sm:$0xff]
  %v6714 = vld [vmem:[%s5 + $0x1d8] sm:$0xff]
  %v6715 = vld [vmem:[%s5 + $0x1e0] sm:$0xff]
  %v6716 = vld [vmem:[%s5 + $0x1e8] sm:$0xff]
  %v6717 = vld [vmem:[%s5 + $0x1f0] sm:$0xff]
  %v6718 = vld [vmem:[%s5 + $0x1f8] sm:$0xff]
  %6719 = vmatprep.subr.mxu0 0.0
  %6720 = vmatpush1.msra.mxu0 %v6655
  %6721 = vmatprep.subr.mxu0 0.0
  %6722 = vmatpush1.msra.mxu0 %v6656
  %6723 = vmatprep.subr.mxu0 0.0
  %6724 = vmatpush1.msra.mxu0 %v6657
  %6725 = vmatprep.subr.mxu0 0.0
  %6726 = vmatpush1.msra.mxu0 %v6658
  %6727 = vmatprep.subr.mxu0 0.0
  %6728 = vmatpush1.msra.mxu0 %v6659
  %6729 = vmatprep.subr.mxu0 0.0
  %6730 = vmatpush1.msra.mxu0 %v6660
  %6731 = vmatprep.subr.mxu0 0.0
  %6732 = vmatpush1.msra.mxu0 %v6661
  %6733 = vmatprep.subr.mxu0 0.0
  %6734 = vmatpush1.msra.mxu0 %v6662
  %6735 = vmatprep.subr.mxu0 0.0
  %6736 = vmatpush1.msra.mxu0 %v6663
  %6737 = vmatprep.subr.mxu0 0.0
  %6738 = vmatpush1.msra.mxu0 %v6664
  %6739 = vmatprep.subr.mxu0 0.0
  %6740 = vmatpush1.msra.mxu0 %v6665
  %6741 = vmatprep.subr.mxu0 0.0
  %6742 = vmatpush1.msra.mxu0 %v6666
  %6743 = vmatprep.subr.mxu0 0.0
  %6744 = vmatpush1.msra.mxu0 %v6667
  %6745 = vmatprep.subr.mxu0 0.0
  %6746 = vmatpush1.msra.mxu0 %v6668
  %6747 = vmatprep.subr.mxu0 0.0
  %6748 = vmatpush1.msra.mxu0 %v6669
  %6749 = vmatprep.subr.mxu0 0.0
  %6750 = vmatpush1.msra.mxu0 %v6670
  %6751 = vmatprep.subr.mxu0 0.0
  %6752 = vmatpush1.msra.mxu0 %v6671
  %6753 = vmatprep.subr.mxu0 0.0
  %6754 = vmatpush1.msra.mxu0 %v6672
  %6755 = vmatprep.subr.mxu0 0.0
  %6756 = vmatpush1.msra.mxu0 %v6673
  %6757 = vmatprep.subr.mxu0 0.0
  %6758 = vmatpush1.msra.mxu0 %v6674
  %6759 = vmatprep.subr.mxu0 0.0
  %6760 = vmatpush1.msra.mxu0 %v6675
  %6761 = vmatprep.subr.mxu0 0.0
  %6762 = vmatpush1.msra.mxu0 %v6676
  %6763 = vmatprep.subr.mxu0 0.0
  %6764 = vmatpush1.msra.mxu0 %v6677
  %6765 = vmatprep.subr.mxu0 0.0
  %6766 = vmatpush1.msra.mxu0 %v6678
  %6767 = vmatprep.subr.mxu0 0.0
  %6768 = vmatpush1.msra.mxu0 %v6679
  %6769 = vmatprep.subr.mxu0 0.0
  %6770 = vmatpush1.msra.mxu0 %v6680
  %6771 = vmatprep.subr.mxu0 0.0
  %6772 = vmatpush1.msra.mxu0 %v6681
  %6773 = vmatprep.subr.mxu0 0.0
  %6774 = vmatpush1.msra.mxu0 %v6682
  %6775 = vmatprep.subr.mxu0 0.0
  %6776 = vmatpush1.msra.mxu0 %v6683
  %6777 = vmatprep.subr.mxu0 0.0
  %6778 = vmatpush1.msra.mxu0 %v6684
  %6779 = vmatprep.subr.mxu0 0.0
  %6780 = vmatpush1.msra.mxu0 %v6685
  %6781 = vmatprep.subr.mxu0 0.0
  %6782 = vmatpush1.msra.mxu0 %v6686
  %6783 = vmatprep.mubr.f32.mxu0 %v6648
  %6784 = vmatmul.mubr.f32.gmra.mrb[0].mxu0 %v6647
  %v6785 = vpop.f32.mrb[0].mxu0
  %v6786 = vadd.f32 0.0, %v6785
  %v6787 = vpop.f32.mrb[0].mxu0
  %6788 = vmatprep.mubr.f32.mxu0 %v6652
  %6789 = vmatmul.mubr.f32.gmra.mrb[0].mxu0 %v6651
  %v6790 = vpop.f32.mrb[0].mxu0
  %v6791 = vadd.f32 0.0, %v6790
  %v6792 = vpop.f32.mrb[0].mxu0
  %6793 = vdwg.mxu0
  %6794 = vmatprep.subr.mxu0 0.0
  %6795 = vmatpush1.msra.mxu0 %v6687
  %6796 = vmatprep.subr.mxu0 0.0
  %6797 = vmatpush1.msra.mxu0 %v6688
  %6798 = vmatprep.subr.mxu0 0.0
  %6799 = vmatpush1.msra.mxu0 %v6689
  %6800 = vmatprep.subr.mxu0 0.0
  %6801 = vmatpush1.msra.mxu0 %v6690
  %6802 = vmatprep.subr.mxu0 0.0
  %6803 = vmatpush1.msra.mxu0 %v6691
  %6804 = vmatprep.subr.mxu0 0.0
  %6805 = vmatpush1.msra.mxu0 %v6692
  %6806 = vmatprep.subr.mxu0 0.0
  %6807 = vmatpush1.msra.mxu0 %v6693
  %6808 = vmatprep.subr.mxu0 0.0
  %6809 = vmatpush1.msra.mxu0 %v6694
  %6810 = vmatprep.subr.mxu0 0.0
  %6811 = vmatpush1.msra.mxu0 %v6695
  %6812 = vmatprep.subr.mxu0 0.0
  %6813 = vmatpush1.msra.mxu0 %v6696
  %6814 = vmatprep.subr.mxu0 0.0
  %6815 = vmatpush1.msra.mxu0 %v6697
  %6816 = vmatprep.subr.mxu0 0.0
  %6817 = vmatpush1.msra.mxu0 %v6698
  %6818 = vmatprep.subr.mxu0 0.0
  %6819 = vmatpush1.msra.mxu0 %v6699
  %6820 = vmatprep.subr.mxu0 0.0
  %6821 = vmatpush1.msra.mxu0 %v6700
  %6822 = vmatprep.subr.mxu0 0.0
  %6823 = vmatpush1.msra.mxu0 %v6701
  %6824 = vmatprep.subr.mxu0 0.0
  %6825 = vmatpush1.msra.mxu0 %v6702
  %6826 = vmatprep.subr.mxu0 0.0
  %6827 = vmatpush1.msra.mxu0 %v6703
  %6828 = vmatprep.subr.mxu0 0.0
  %6829 = vmatpush1.msra.mxu0 %v6704
  %6830 = vmatprep.subr.mxu0 0.0
  %6831 = vmatpush1.msra.mxu0 %v6705
  %6832 = vmatprep.subr.mxu0 0.0
  %6833 = vmatpush1.msra.mxu0 %v6706
  %6834 = vmatprep.subr.mxu0 0.0
  %6835 = vmatpush1.msra.mxu0 %v6707
  %6836 = vmatprep.subr.mxu0 0.0
  %6837 = vmatpush1.msra.mxu0 %v6708
  %6838 = vmatprep.subr.mxu0 0.0
  %6839 = vmatpush1.msra.mxu0 %v6709
  %6840 = vmatprep.subr.mxu0 0.0
  %6841 = vmatpush1.msra.mxu0 %v6710
  %6842 = vmatprep.subr.mxu0 0.0
  %6843 = vmatpush1.msra.mxu0 %v6711
  %6844 = vmatprep.subr.mxu0 0.0
  %6845 = vmatpush1.msra.mxu0 %v6712
  %6846 = vmatprep.subr.mxu0 0.0
  %6847 = vmatpush1.msra.mxu0 %v6713
  %6848 = vmatprep.subr.mxu0 0.0
  %6849 = vmatpush1.msra.mxu0 %v6714
  %6850 = vmatprep.subr.mxu0 0.0
  %6851 = vmatpush1.msra.mxu0 %v6715
  %6852 = vmatprep.subr.mxu0 0.0
  %6853 = vmatpush1.msra.mxu0 %v6716
  %6854 = vmatprep.subr.mxu0 0.0
  %6855 = vmatpush1.msra.mxu0 %v6717
  %6856 = vmatprep.subr.mxu0 0.0
  %6857 = vmatpush1.msra.mxu0 %v6718
  %6858 = vmatprep.mubr.f32.mxu0 %v6650
  %6859 = vmatmul.mubr.f32.gmra.mrb[0].mxu0 %v6649
  %v6860 = vpop.f32.mrb[0].mxu0
  %v6861 = vadd.f32 %v6786, %v6860
  %v6862 = vpop.f32.mrb[0].mxu0
  %6863 = vmatprep.mubr.f32.mxu0 %v6654
  %6864 = vmatmul.mubr.f32.gmra.mrb[0].mxu0 %v6653
  %v6865 = vpop.f32.mrb[0].mxu0
  %v6866 = vadd.f32 %v6791, %v6865
  %v6867 = vpop.f32.mrb[0].mxu0
  %6868 = vdwg.mxu0
  %v6869 = vld [vmem:[%s3] sm:$0xff]
  %v6871 = vsel %vm551, %v6869, 0
  %6873 = vmatprep.subr.mxu0 0.0
  %6874 = vmatpush1.msra.mxu0 %v6861
  %6875 = vmatprep.subr.mxu0 0.0
  %6876 = vmatpush1.msra.mxu0 %v6866
  %6877 = vmatprep.subr.mxu0 0.0
  %6878 = vmatpush1.msra.mxu0 0.0
  %6879 = vmatprep.subr.mxu0 0.0
  %6880 = vmatpush1.msra.mxu0 0.0
  %6881 = vmatprep.subr.mxu0 0.0
  %6882 = vmatpush1.msra.mxu0 0.0
  %6883 = vmatprep.subr.mxu0 0.0
  %6884 = vmatpush1.msra.mxu0 0.0
  %6885 = vmatprep.subr.mxu0 0.0
  %6886 = vmatpush1.msra.mxu0 0.0
  %6887 = vmatprep.subr.mxu0 0.0
  %6888 = vmatpush1.msra.mxu0 0.0
  %6889 = vmatprep.subr.mxu0 0.0
  %6890 = vmatpush1.msra.mxu0 0.0
  %6891 = vmatprep.subr.mxu0 0.0
  %6892 = vmatpush1.msra.mxu0 0.0
  %6893 = vmatprep.subr.mxu0 0.0
  %6894 = vmatpush1.msra.mxu0 0.0
  %6895 = vmatprep.subr.mxu0 0.0
  %6896 = vmatpush1.msra.mxu0 0.0
  %6897 = vmatprep.subr.mxu0 0.0
  %6898 = vmatpush1.msra.mxu0 0.0
  %6899 = vmatprep.subr.mxu0 0.0
  %6900 = vmatpush1.msra.mxu0 0.0
  %6901 = vmatprep.subr.mxu0 0.0
  %6902 = vmatpush1.msra.mxu0 0.0
  %6903 = vmatprep.subr.mxu0 0.0
  %6904 = vmatpush1.msra.mxu0 0.0
  %6905 = vmatprep.subr.mxu0 0.0
  %6906 = vmatpush1.msra.mxu0 0.0
  %6907 = vmatprep.subr.mxu0 0.0
  %6908 = vmatpush1.msra.mxu0 0.0
  %6909 = vmatprep.subr.mxu0 0.0
  %6910 = vmatpush1.msra.mxu0 0.0
  %6911 = vmatprep.subr.mxu0 0.0
  %6912 = vmatpush1.msra.mxu0 0.0
  %6913 = vmatprep.subr.mxu0 0.0
  %6914 = vmatpush1.msra.mxu0 0.0
  %6915 = vmatprep.subr.mxu0 0.0
  %6916 = vmatpush1.msra.mxu0 0.0
  %6917 = vmatprep.subr.mxu0 0.0
  %6918 = vmatpush1.msra.mxu0 0.0
  %6919 = vmatprep.subr.mxu0 0.0
  %6920 = vmatpush1.msra.mxu0 0.0
  %6921 = vmatprep.subr.mxu0 0.0
  %6922 = vmatpush1.msra.mxu0 0.0
  %6923 = vmatprep.subr.mxu0 0.0
  %6924 = vmatpush1.msra.mxu0 0.0
  %6925 = vmatprep.subr.mxu0 0.0
  %6926 = vmatpush1.msra.mxu0 0.0
  %6927 = vmatprep.subr.mxu0 0.0
  %6928 = vmatpush1.msra.mxu0 0.0
  %6929 = vmatprep.subr.mxu0 0.0
  %6930 = vmatpush1.msra.mxu0 0.0
  %6931 = vmatprep.subr.mxu0 0.0
  %6932 = vmatpush1.msra.mxu0 0.0
  %6933 = vmatprep.subr.mxu0 0.0
  %6934 = vmatpush1.msra.mxu0 0.0
  %6935 = vmatprep.subr.mxu0 0.0
  %6936 = vmatpush1.msra.mxu0 0.0
  %6937 = vmatprep.mubr.f32.mxu0 0.0
  %6938 = vmatmul.mubr.f32.gmra.mrb[0].mxu0 %v6871
  %v6939 = vpop.f32.mrb[0].mxu0
  %v6940 = vadd.f32 0.0, %v6939
  %v6941 = vpop.f32.mrb[0].mxu0
  %6942 = vdwg.mxu0
  %v6943 = vtanh.pop %v6940
  %v6944 = vld [vmem:[%s4] sm:$0xf]
  %vm6945 = vcmask 64512
  %v6947 = vsel %vm6945, %v6944, 0
  %6949 = vmatprep.subr.mxu0 0.0
  %6950 = vmatpush1.msra.mxu0 %v6943
  %6951 = vmatprep.subr.mxu0 0.0
  %6952 = vmatpush1.msra.mxu0 0.0
  %6953 = vmatprep.subr.mxu0 0.0
  %6954 = vmatpush1.msra.mxu0 0.0
  %6955 = vmatprep.subr.mxu0 0.0
  %6956 = vmatpush1.msra.mxu0 0.0
  %6957 = vmatprep.subr.mxu0 0.0
  %6958 = vmatpush1.msra.mxu0 0.0
  %6959 = vmatprep.subr.mxu0 0.0
  %6960 = vmatpush1.msra.mxu0 0.0
  %6961 = vmatprep.subr.mxu0 0.0
  %6962 = vmatpush1.msra.mxu0 0.0
  %6963 = vmatprep.subr.mxu0 0.0
  %6964 = vmatpush1.msra.mxu0 0.0
  %6965 = vmatprep.subr.mxu0 0.0
  %6966 = vmatpush1.msra.mxu0 0.0
  %6967 = vmatprep.subr.mxu0 0.0
  %6968 = vmatpush1.msra.mxu0 0.0
  %6969 = vmatprep.subr.mxu0 0.0
  %6970 = vmatpush1.msra.mxu0 0.0
  %6971 = vmatprep.subr.mxu0 0.0
  %6972 = vmatpush1.msra.mxu0 0.0
  %6973 = vmatprep.subr.mxu0 0.0
  %6974 = vmatpush1.msra.mxu0 0.0
  %6975 = vmatprep.subr.mxu0 0.0
  %6976 = vmatpush1.msra.mxu0 0.0
  %6977 = vmatprep.subr.mxu0 0.0
  %6978 = vmatpush1.msra.mxu0 0.0
  %6979 = vmatprep.subr.mxu0 0.0
  %6980 = vmatpush1.msra.mxu0 0.0
  %6981 = vmatprep.subr.mxu0 0.0
  %6982 = vmatpush1.msra.mxu0 0.0
  %6983 = vmatprep.subr.mxu0 0.0
  %6984 = vmatpush1.msra.mxu0 0.0
  %6985 = vmatprep.subr.mxu0 0.0
  %6986 = vmatpush1.msra.mxu0 0.0
  %6987 = vmatprep.subr.mxu0 0.0
  %6988 = vmatpush1.msra.mxu0 0.0
  %6989 = vmatprep.subr.mxu0 0.0
  %6990 = vmatpush1.msra.mxu0 0.0
  %6991 = vmatprep.subr.mxu0 0.0
  %6992 = vmatpush1.msra.mxu0 0.0
  %6993 = vmatprep.subr.mxu0 0.0
  %6994 = vmatpush1.msra.mxu0 0.0
  %6995 = vmatprep.subr.mxu0 0.0
  %6996 = vmatpush1.msra.mxu0 0.0
  %6997 = vmatprep.subr.mxu0 0.0
  %6998 = vmatpush1.msra.mxu0 0.0
  %6999 = vmatprep.subr.mxu0 0.0
  %7000 = vmatpush1.msra.mxu0 0.0
  %7001 = vmatprep.subr.mxu0 0.0
  %7002 = vmatpush1.msra.mxu0 0.0
  %7003 = vmatprep.subr.mxu0 0.0
  %7004 = vmatpush1.msra.mxu0 0.0
  %7005 = vmatprep.subr.mxu0 0.0
  %7006 = vmatpush1.msra.mxu0 0.0
  %7007 = vmatprep.subr.mxu0 0.0
  %7008 = vmatpush1.msra.mxu0 0.0
  %7009 = vmatprep.subr.mxu0 0.0
  %7010 = vmatpush1.msra.mxu0 0.0
  %7011 = vmatprep.subr.mxu0 0.0
  %7012 = vmatpush1.msra.mxu0 0.0
  %7013 = vmatprep.mubr.f32.mxu0 0.0
  %7014 = vmatmul.mubr.f32.gmra.mrb[0].mxu0 %v6947
  %v7015 = vpop.f32.mrb[0].mxu0
  %v7016 = vadd.f32 0.0, %v7015
  %v7017 = vpop.f32.mrb[0].mxu0
  %7018 = vdwg.mxu0
  %vm7019 = vcmask 109568
  %v7020 = vsel %vm7019, %v7016, -inf
  %7021 = vmax.xlane.f32.xlu0 %v7020
  %v7022 = vpop.xlane.xlu0 %7021
  %v7023 = vsub.f32 %v7016, %v7022
  %v7024 = vmul.f32 %v7023, 1.442695
  %v7025 = vpow.pop %v7024
  %v7026 = vsel %vm7019, %v7025, 0.0
  %7027 = vadd.xlane.f32.xlu0 %v7026
  %v7028 = vpop.xlane.xlu0 %7027
  %v7029 = vrcp.pop %v7028
  %v7030 = vmul.f32 %v7025, %v7029
  %v7031 = vsel %vm7019, %v7030, 0.0
  %v7032 = vrot.slane %v7031, 4
  %v7033 = vadd.f32 %v7031, %v7032
  %v7034 = vrot.slane %v7033, 2
  %v7035 = vadd.f32 %v7033, %v7034
  %v7036 = vrot.slane %v7035, 1
  %v7037 = vadd.f32 %v7035, %v7036
  %v7038 = vmul.f32 %v6861, %v7037
  %v7039 = vmul.f32 %v6866, %v7037
  %vm7040 = vcmask 113664
  %v7041 = vsel %vm7040, %v7038, 0.0
  %7042 = vadd.xlane.f32.xlu0 %v7041
  %v7043 = vpop.xlane.xlu0 %7042
  %v7044 = vsel %vm7040, %v7039, 0.0
  %7045 = vadd.xlane.f32.xlu0 %v7044
  %v7046 = vpop.xlane.xlu0 %7045
  %v7047 = vmul.f32 %v7043, 0.25
  %v7048 = vmul.f32 %v7046, 0.25
  %7051 = vrot.lane.b32.xlu0 %v6861, 114
  %v7052 = vpop.permute.xlu0 %7051
  %7053 = vrot.lane.b32.xlu0 %v6866, 114
  %v7054 = vpop.permute.xlu0 %7053
  %7057 = vmatprep.subr.mxu0 0.0
  %7058 = vmatpush1.msra.mxu0 %v7052
  %7059 = vmatprep.subr.mxu0 0.0
  %7060 = vmatpush1.msra.mxu0 %v7054
  %7061 = vmatprep.subr.mxu0 0.0
  %7062 = vmatpush1.msra.mxu0 0.0
  %7063 = vmatprep.subr.mxu0 0.0
  %7064 = vmatpush1.msra.mxu0 0.0
  %7065 = vmatprep.subr.mxu0 0.0
  %7066 = vmatpush1.msra.mxu0 0.0
  %7067 = vmatprep.subr.mxu0 0.0
  %7068 = vmatpush1.msra.mxu0 0.0
  %7069 = vmatprep.subr.mxu0 0.0
  %7070 = vmatpush1.msra.mxu0 0.0
  %7071 = vmatprep.subr.mxu0 0.0
  %7072 = vmatpush1.msra.mxu0 0.0
  %7073 = vmatprep.subr.mxu0 0.0
  %7074 = vmatpush1.msra.mxu0 0.0
  %7075 = vmatprep.subr.mxu0 0.0
  %7076 = vmatpush1.msra.mxu0 0.0
  %7077 = vmatprep.subr.mxu0 0.0
  %7078 = vmatpush1.msra.mxu0 0.0
  %7079 = vmatprep.subr.mxu0 0.0
  %7080 = vmatpush1.msra.mxu0 0.0
  %7081 = vmatprep.subr.mxu0 0.0
  %7082 = vmatpush1.msra.mxu0 0.0
  %7083 = vmatprep.subr.mxu0 0.0
  %7084 = vmatpush1.msra.mxu0 0.0
  %7085 = vmatprep.subr.mxu0 0.0
  %7086 = vmatpush1.msra.mxu0 0.0
  %7087 = vmatprep.subr.mxu0 0.0
  %7088 = vmatpush1.msra.mxu0 0.0
  %7089 = vmatprep.subr.mxu0 0.0
  %7090 = vmatpush1.msra.mxu0 0.0
  %7091 = vmatprep.subr.mxu0 0.0
  %7092 = vmatpush1.msra.mxu0 0.0
  %7093 = vmatprep.subr.mxu0 0.0
  %7094 = vmatpush1.msra.mxu0 0.0
  %7095 = vmatprep.subr.mxu0 0.0
  %7096 = vmatpush1.msra.mxu0 0.0
  %7097 = vmatprep.subr.mxu0 0.0
  %7098 = vmatpush1.msra.mxu0 0.0
  %7099 = vmatprep.subr.mxu0 0.0
  %7100 = vmatpush1.msra.mxu0 0.0
  %7101 = vmatprep.subr.mxu0 0.0
  %7102 = vmatpush1.msra.mxu0 0.0
  %7103 = vmatprep.subr.mxu0 0.0
  %7104 = vmatpush1.msra.mxu0 0.0
  %7105 = vmatprep.subr.mxu0 0.0
  %7106 = vmatpush1.msra.mxu0 0.0
  %7107 = vmatprep.subr.mxu0 0.0
  %7108 = vmatpush1.msra.mxu0 0.0
  %7109 = vmatprep.subr.mxu0 0.0
  %7110 = vmatpush1.msra.mxu0 0.0
  %7111 = vmatprep.subr.mxu0 0.0
  %7112 = vmatpush1.msra.mxu0 0.0
  %7113 = vmatprep.subr.mxu0 0.0
  %7114 = vmatpush1.msra.mxu0 0.0
  %7115 = vmatprep.subr.mxu0 0.0
  %7116 = vmatpush1.msra.mxu0 0.0
  %7117 = vmatprep.subr.mxu0 0.0
  %7118 = vmatpush1.msra.mxu0 0.0
  %7119 = vmatprep.subr.mxu0 0.0
  %7120 = vmatpush1.msra.mxu0 0.0
  %7121 = vmatprep.mubr.f32.mxu0 0.0
  %7122 = vmatmul.mubr.f32.gmra.mrb[0].mxu0 %v6871
  %v7123 = vpop.f32.mrb[0].mxu0
  %v7124 = vadd.f32 0.0, %v7123
  %v7125 = vpop.f32.mrb[0].mxu0
  %7126 = vdwg.mxu0
  %v7127 = vtanh.pop %v7124
  %7128 = vmatprep.subr.mxu0 0.0
  %7129 = vmatpush1.msra.mxu0 %v7127
  %7130 = vmatprep.subr.mxu0 0.0
  %7131 = vmatpush1.msra.mxu0 0.0
  %7132 = vmatprep.subr.mxu0 0.0
  %7133 = vmatpush1.msra.mxu0 0.0
  %7134 = vmatprep.subr.mxu0 0.0
  %7135 = vmatpush1.msra.mxu0 0.0
  %7136 = vmatprep.subr.mxu0 0.0
  %7137 = vmatpush1.msra.mxu0 0.0
  %7138 = vmatprep.subr.mxu0 0.0
  %7139 = vmatpush1.msra.mxu0 0.0
  %7140 = vmatprep.subr.mxu0 0.0
  %7141 = vmatpush1.msra.mxu0 0.0
  %7142 = vmatprep.subr.mxu0 0.0
  %7143 = vmatpush1.msra.mxu0 0.0
  %7144 = vmatprep.subr.mxu0 0.0
  %7145 = vmatpush1.msra.mxu0 0.0
  %7146 = vmatprep.subr.mxu0 0.0
  %7147 = vmatpush1.msra.mxu0 0.0
  %7148 = vmatprep.subr.mxu0 0.0
  %7149 = vmatpush1.msra.mxu0 0.0
  %7150 = vmatprep.subr.mxu0 0.0
  %7151 = vmatpush1.msra.mxu0 0.0
  %7152 = vmatprep.subr.mxu0 0.0
  %7153 = vmatpush1.msra.mxu0 0.0
  %7154 = vmatprep.subr.mxu0 0.0
  %7155 = vmatpush1.msra.mxu0 0.0
  %7156 = vmatprep.subr.mxu0 0.0
  %7157 = vmatpush1.msra.mxu0 0.0
  %7158 = vmatprep.subr.mxu0 0.0
  %7159 = vmatpush1.msra.mxu0 0.0
  %7160 = vmatprep.subr.mxu0 0.0
  %7161 = vmatpush1.msra.mxu0 0.0
  %7162 = vmatprep.subr.mxu0 0.0
  %7163 = vmatpush1.msra.mxu0 0.0
  %7164 = vmatprep.subr.mxu0 0.0
  %7165 = vmatpush1.msra.mxu0 0.0
  %7166 = vmatprep.subr.mxu0 0.0
  %7167 = vmatpush1.msra.mxu0 0.0
  %7168 = vmatprep.subr.mxu0 0.0
  %7169 = vmatpush1.msra.mxu0 0.0
  %7170 = vmatprep.subr.mxu0 0.0
  %7171 = vmatpush1.msra.mxu0 0.0
  %7172 = vmatprep.subr.mxu0 0.0
  %7173 = vmatpush1.msra.mxu0 0.0
  %7174 = vmatprep.subr.mxu0 0.0
  %7175 = vmatpush1.msra.mxu0 0.0
  %7176 = vmatprep.subr.mxu0 0.0
  %7177 = vmatpush1.msra.mxu0 0.0
  %7178 = vmatprep.subr.mxu0 0.0
  %7179 = vmatpush1.msra.mxu0 0.0
  %7180 = vmatprep.subr.mxu0 0.0
  %7181 = vmatpush1.msra.mxu0 0.0
  %7182 = vmatprep.subr.mxu0 0.0
  %7183 = vmatpush1.msra.mxu0 0.0
  %7184 = vmatprep.subr.mxu0 0.0
  %7185 = vmatpush1.msra.mxu0 0.0
  %7186 = vmatprep.subr.mxu0 0.0
  %7187 = vmatpush1.msra.mxu0 0.0
  %7188 = vmatprep.subr.mxu0 0.0
  %7189 = vmatpush1.msra.mxu0 0.0
  %7190 = vmatprep.subr.mxu0 0.0
  %7191 = vmatpush1.msra.mxu0 0.0
  %7192 = vmatprep.mubr.f32.mxu0 0.0
  %7193 = vmatmul.mubr.f32.gmra.mrb[0].mxu0 %v6947
  %v7194 = vpop.f32.mrb[0].mxu0
  %v7195 = vadd.f32 0.0, %v7194
  %v7196 = vpop.f32.mrb[0].mxu0
  %7197 = vdwg.mxu0
  %v7198 = vsel %vm7019, %v7195, -inf
  %7199 = vmax.xlane.f32.xlu0 %v7198
  %v7200 = vpop.xlane.xlu0 %7199
  %v7201 = vsub.f32 %v7195, %v7200
  %v7202 = vmul.f32 %v7201, 1.442695
  %v7203 = vpow.pop %v7202
  %v7204 = vsel %vm7019, %v7203, 0.0
  %7205 = vadd.xlane.f32.xlu0 %v7204
  %v7206 = vpop.xlane.xlu0 %7205
  %v7207 = vrcp.pop %v7206
  %v7208 = vmul.f32 %v7203, %v7207
  %v7209 = vsel %vm7019, %v7208, 0.0
  %v7210 = vrot.slane %v7209, 4
  %v7211 = vadd.f32 %v7209, %v7210
  %v7212 = vrot.slane %v7211, 2
  %v7213 = vadd.f32 %v7211, %v7212
  %v7214 = vrot.slane %v7213, 1
  %v7215 = vadd.f32 %v7213, %v7214
  %7217 = vrot.lane.b32.xlu0 %v7215, 14
  %v7218 = vpop.permute.xlu0 %7217
  %v7220 = vmul.f32 %v6861, %v7218
  %v7221 = vmul.f32 %v6866, %v7218
  %7224 = vrot.lane.b32.xlu0 %v7220, 114
  %v7225 = vpop.permute.xlu0 %7224
  %7226 = vrot.lane.b32.xlu0 %v7221, 114
  %v7227 = vpop.permute.xlu0 %7226
  %v7230 = vsel %vm7040, %v7225, 0.0
  %7231 = vadd.xlane.f32.xlu0 %v7230
  %v7232 = vpop.xlane.xlu0 %7231
  %v7233 = vsel %vm7040, %v7227, 0.0
  %7234 = vadd.xlane.f32.xlu0 %v7233
  %v7235 = vpop.xlane.xlu0 %7234
  %v7236 = vmul.f32 %v7232, 0.25
  %v7237 = vmul.f32 %v7235, 0.25
  %vm7238 = vcmask 7168
  %v7239 = vsel %vm7238, %v7047, %v7236
  %v7240 = vsel %vm7238, %v7048, %v7237
  %vm7241 = vcmask 15360
  %7242 = vst.msk [vmem:[%s7] sm:$0xff] %vm7241, %v7239
  %7243 = vst.msk [vmem:[%s7 + $0x8] sm:$0xff] %vm7241, %v7240
  // Predicated region
  $region30: #{drugvqa_protein_encoder.1} parent=0 // pred_check
    _
  $region31: #{drugvqa_protein_encoder.1} parent=0 // pred_check_branch
    %7245 = sbr.rel (0) target = $region33
  $region32: #{drugvqa_protein_encoder.1} parent=0 // pred_region
    _
  $region33: #{drugvqa_protein_encoder.1} parent=0 // pred_fallthru
    _
  // Predicated region
  $region34: #{drugvqa_protein_encoder.1} parent=0 // pred_check
    _
  $region35: #{drugvqa_protein_encoder.1} parent=0 // pred_check_branch
    %7247 = sbr.rel (0) target = $region37
  $region36: #{drugvqa_protein_encoder.1} parent=0 // pred_region
    _
  $region37: #{drugvqa_protein_encoder.1} parent=0 // pred_fallthru
    _

</llo_original>
